<compile_context>
chip_gen: v5e
topology: v5e:2x2
jax: 0.10.0
libtpu: 0.0.40
codegen_flags: <defaults>
</compile_context>

<pallas_src>
import functools

import jax
import jax.numpy as jnp
from jax.experimental import pallas as pl
from jax.experimental.pallas import tpu as pltpu


_C_PAD = 128  # internal channel width (lane width)


# ----------------------------- Fused Pallas kernel -------------------------


def _fused_backbone_kernel(x_ref, w1_ref, w2_ref, w3_ref, sb_ref, masks_ref,
                           out_ref, h1_ref, h2_ref, *, H, W, C):
    """Whole headless backbone for one image, fully resident in VMEM.

    x_ref:     (1, H*W, C)   channel-padded input image (f32)
    w*_ref:    (9*C, C)      im2col-reshaped conv weights
    sb_ref:    (6, C)        rows: s1, b1, s2, b2, s3, b3 (folded BN)
    masks_ref: (H*W, 4)      f32 boundary masks: [i>=1, i<=H-2, j>=1, j<=W-2]
    out_ref:   (1, 1, C)     pooled features
    h1_ref/h2_ref: VMEM scratch (H*W, C) for the intermediate activations
    """
    HW = H * W
    sb = sb_ref[...]                       # (6, C)
    masks = masks_ref[...]                 # (HW, 4)
    m_up, m_down = masks[:, 0:1], masks[:, 1:2]
    m_left, m_right = masks[:, 2:3], masks[:, 3:4]

    # Per-tap (shift, multiplicative mask) built ONCE and reused by all three
    # convolutions (avoids re-broadcasting masks per layer).
    tap_params = []
    for dy in range(3):
        for dx in range(3):
            oy, ox = dy - 1, dx - 1
            m = None
            if oy == -1:
                m = m_up
            elif oy == 1:
                m = m_down
            if ox == -1:
                m = m_left if m is None else m * m_left
            elif ox == 1:
                m = m_right if m is None else m * m_right
            shift = (-(oy * W + ox)) % HW   # flattened-row shift for (oy, ox)
            tap_params.append((shift, m))

    def conv3x3(a, w_ref, scale, bias, relu, residual=None):
        # Build the (HW, 9*C) im2col patch matrix with aligned sublane rolls
        # (XLU) + boundary masks (VPU), then ONE MXU matmul with K = 9*C.
        taps = []
        for shift, m in tap_params:
            t = a if shift == 0 else pltpu.roll(a, shift=shift, axis=0)
            if m is not None:
                t = t * m                  # zero out-of-bounds (SAME padding)
            taps.append(t)
        patches = jnp.concatenate(taps, axis=-1)            # (HW, 9*C)
        y = jnp.dot(patches, w_ref[...],
                    preferred_element_type=jnp.float32)      # (HW, C)
        y = y * scale + bias                                  # folded BN
        if residual is not None:
            y = y + residual
        if relu:
            y = jnp.maximum(y, 0.0)
        return y

    x = x_ref[0]                                             # (HW, C)

    # Stem: conv3x3 + BN + ReLU  (kept resident in VMEM scratch).
    h1_ref[...] = conv3x3(x, w1_ref, sb[0:1], sb[1:2], relu=True)
    # Residual block: conv-BN-ReLU, conv-BN, +skip, ReLU.
    h2_ref[...] = conv3x3(h1_ref[...], w2_ref, sb[2:3], sb[3:4], relu=True)
    y3 = conv3x3(h2_ref[...], w3_ref, sb[4:5], sb[5:6], relu=True,
                 residual=h1_ref[...])
    # Fused global average pool -> (1, C); classifier head removed.
    out_ref[0] = jnp.sum(y3, axis=0, keepdims=True) * (1.0 / HW)


# ------------------------------ Wrapper -------------------------------------


def _pad_conv_weight(w, c_pad):
    """(3,3,ci,co) -> zero-pad channels to c_pad -> (9*c_pad, c_pad)."""
    kh, kw, ci, co = w.shape
    wp = jnp.pad(w, ((0, 0), (0, 0), (0, c_pad - ci), (0, c_pad - co)))
    return wp.reshape(kh * kw * c_pad, c_pad)


def _pad_vec(v, c_pad, fill):
    return jnp.pad(v, (0, c_pad - v.shape[0]), constant_values=fill)


@jax.jit
def pretrained_models_feature(x_nchw, params):
    """Forward pass: headless backbone -> (N, C_feat) features."""
    N, cin, H, W = x_nchw.shape
    c_feat = params["w1"].shape[-1]
    C = _C_PAD
    HW = H * W

    # NCHW (PyTorch) -> flattened NHWC with channels padded to lane width.
    x = jnp.transpose(x_nchw, (0, 2, 3, 1)).astype(jnp.float32)
    x = x.reshape(N, HW, cin)
    x = jnp.pad(x, ((0, 0), (0, 0), (0, C - cin)))

    # im2col-reshaped, channel-padded weights and packed folded-BN params.
    w1 = _pad_conv_weight(params["w1"], C)
    w2 = _pad_conv_weight(params["w2"], C)
    w3 = _pad_conv_weight(params["w3"], C)
    sb = jnp.stack([
        _pad_vec(params["s1"], C, 1.0), _pad_vec(params["b1"], C, 0.0),
        _pad_vec(params["s2"], C, 1.0), _pad_vec(params["b2"], C, 0.0),
        _pad_vec(params["s3"], C, 1.0), _pad_vec(params["b3"], C, 0.0),
    ])

    # Boundary masks for SAME padding (constant-folded by XLA under jit).
    ii = jnp.arange(HW, dtype=jnp.int32) // W
    jj = jnp.arange(HW, dtype=jnp.int32) % W
    masks = jnp.stack(
        [ii >= 1, ii <= H - 2, jj >= 1, jj <= W - 2], axis=1
    ).astype(jnp.float32)                                     # (HW, 4)

    kern = functools.partial(_fused_backbone_kernel, H=H, W=W, C=C)
    out = pl.pallas_call(
        kern,
        out_shape=jax.ShapeDtypeStruct((N, 1, C), jnp.float32),
        grid=(N,),
        in_specs=[
            pl.BlockSpec((1, HW, C), lambda n: (n, 0, 0)),
            pl.BlockSpec((9 * C, C), lambda n: (0, 0)),
            pl.BlockSpec((9 * C, C), lambda n: (0, 0)),
            pl.BlockSpec((9 * C, C), lambda n: (0, 0)),
            pl.BlockSpec((6, C), lambda n: (0, 0)),
            pl.BlockSpec((HW, 4), lambda n: (0, 0)),
        ],
        out_specs=pl.BlockSpec((1, 1, C), lambda n: (n, 0, 0)),
        scratch_shapes=[
            pltpu.VMEM((HW, C), jnp.float32),   # h1 (also residual)
            pltpu.VMEM((HW, C), jnp.float32),   # h2
        ],
        compiler_params=pltpu.CompilerParams(
            dimension_semantics=("parallel",)),
    )(x, w1, w2, w3, sb, masks)

    return out[:, 0, :c_feat]


def init_params(key, cin=4, c_feat=32):
    """Deterministic synthetic weights (BN folded into scale/bias)."""
    ks = jax.random.split(key, 3)

    def conv_w(k, ci, co):
        return (jax.random.normal(k, (3, 3, ci, co), jnp.float32)
                * (1.0 / jnp.sqrt(9.0 * ci)))

    return {
        "w1": conv_w(ks[0], cin, c_feat),
        "s1": jnp.ones((c_feat,), jnp.float32),
        "b1": jnp.zeros((c_feat,), jnp.float32),
        "w2": conv_w(ks[1], c_feat, c_feat),
        "s2": jnp.full((c_feat,), 0.9, jnp.float32),
        "b2": jnp.full((c_feat,), 0.05, jnp.float32),
        "w3": conv_w(ks[2], c_feat, c_feat),
        "s3": jnp.full((c_feat,), 1.1, jnp.float32),
        "b3": jnp.full((c_feat,), -0.02, jnp.float32),
    }


# ---------------------------- Pure-JAX reference ----------------------------


def _ref_conv(x, w, s, b, relu=True, residual=None):
    y = jax.lax.conv_general_dilated(
        x, w, window_strides=(1, 1), padding="SAME",
        dimension_numbers=("NHWC", "HWIO", "NHWC"))
    y = y * s[None, None, None, :] + b[None, None, None, :]
    if residual is not None:
        y = y + residual
    if relu or residual is not None:
        y = jnp.maximum(y, 0.0)
    return y


def _ref_forward(x_nchw, p):
    x = jnp.transpose(x_nchw, (0, 2, 3, 1)).astype(jnp.float32)
    h1 = _ref_conv(x, p["w1"], p["s1"], p["b1"])
    h2 = _ref_conv(h1, p["w2"], p["s2"], p["b2"])
    h3 = _ref_conv(h2, p["w3"], p["s3"], p["b3"], relu=False, residual=h1)
    return jnp.mean(h3, axis=(1, 2))


# --------------------------------- Main --------------------------------------


if __name__ == "__main__":
    key = jax.random.PRNGKey(0)
    k_x, k_p = jax.random.split(key)

    # Small NCHW image batch, consistent with the torchvision-backbone input.
    x = jax.random.normal(k_x, (2, 4, 16, 16), jnp.float32)
    params = init_params(k_p, cin=4, c_feat=32)

    feats = pretrained_models_feature(x, params)
    feats = jax.block_until_ready(feats)

    ref = _ref_forward(x, params)
    assert feats.shape == (2, 32), feats.shape
    assert bool(jnp.all(jnp.isfinite(feats)))
    assert jnp.allclose(feats, ref, atol=1e-4, rtol=1e-4), (
        float(jnp.max(jnp.abs(feats - ref))))

    print("KERNEL_OK")
</pallas_src>

<mosaic_0001>
module attributes {stable_mosaic.version = 11 : i64} {
  func.func @_fused_backbone_kernel(%arg0: i32, %arg1: memref<1x256x128xf32, #tpu.memory_space<vmem>>, %arg2: memref<1152x128xf32, #tpu.memory_space<vmem>>, %arg3: memref<1152x128xf32, #tpu.memory_space<vmem>>, %arg4: memref<1152x128xf32, #tpu.memory_space<vmem>>, %arg5: memref<6x128xf32, #tpu.memory_space<vmem>>, %arg6: memref<256x4xf32, #tpu.memory_space<vmem>>, %arg7: memref<1x1x128xf32, #tpu.memory_space<vmem>>, %arg8: memref<256x128xf32, #tpu.memory_space<vmem>>, %arg9: memref<256x128xf32, #tpu.memory_space<vmem>>) attributes {dimension_semantics = [#tpu.dimension_semantics<parallel>], iteration_bounds = array<i64: 2>, scalar_prefetch = 0 : i64, scratch_operands = 2 : i64, tpu.core_type = #tpu.core_type<tc>, window_params = [{transform_indices = @transform_0, window_bounds = array<i64: 1, 256, 128>}, {pipeline_mode = #tpu.pipeline_mode<synchronous>, transform_indices = @transform_1, window_bounds = array<i64: 1152, 128>}, {pipeline_mode = #tpu.pipeline_mode<synchronous>, transform_indices = @transform_2, window_bounds = array<i64: 1152, 128>}, {pipeline_mode = #tpu.pipeline_mode<synchronous>, transform_indices = @transform_3, window_bounds = array<i64: 1152, 128>}, {pipeline_mode = #tpu.pipeline_mode<synchronous>, transform_indices = @transform_4, window_bounds = array<i64: 6, 128>}, {pipeline_mode = #tpu.pipeline_mode<synchronous>, transform_indices = @transform_5, window_bounds = array<i64: 256, 4>}, {transform_indices = @transform_6, window_bounds = array<i64: 1, 1, 128>}]} {
    %c0 = arith.constant 0 : index
    %c0_0 = arith.constant 0 : index
    %0 = vector.load %arg5[%c0, %c0_0] : memref<6x128xf32, #tpu.memory_space<vmem>>, vector<6x128xf32>
    %c0_1 = arith.constant 0 : index
    %c0_2 = arith.constant 0 : index
    %1 = vector.load %arg6[%c0_1, %c0_2] : memref<256x4xf32, #tpu.memory_space<vmem>>, vector<256x4xf32>
    %2 = vector.extract_strided_slice %1 {offsets = [0, 0], sizes = [256, 1], strides = [1, 1]} : vector<256x4xf32> to vector<256x1xf32>
    %3 = vector.extract_strided_slice %1 {offsets = [0, 1], sizes = [256, 1], strides = [1, 1]} : vector<256x4xf32> to vector<256x1xf32>
    %4 = vector.extract_strided_slice %1 {offsets = [0, 2], sizes = [256, 1], strides = [1, 1]} : vector<256x4xf32> to vector<256x1xf32>
    %5 = vector.extract_strided_slice %1 {offsets = [0, 3], sizes = [256, 1], strides = [1, 1]} : vector<256x4xf32> to vector<256x1xf32>
    %6 = arith.mulf %2, %4 : vector<256x1xf32>
    %7 = arith.mulf %2, %5 : vector<256x1xf32>
    %8 = arith.mulf %3, %4 : vector<256x1xf32>
    %9 = arith.mulf %3, %5 : vector<256x1xf32>
    %c0_3 = arith.constant 0 : index
    %c0_4 = arith.constant 0 : index
    %c0_5 = arith.constant 0 : index
    %10 = vector.load %arg1[%c0_3, %c0_4, %c0_5] : memref<1x256x128xf32, #tpu.memory_space<vmem>>, vector<1x256x128xf32>
    %11 = vector.shape_cast %10 : vector<1x256x128xf32> to vector<256x128xf32>
    %12 = vector.extract_strided_slice %0 {offsets = [0, 0], sizes = [1, 128], strides = [1, 1]} : vector<6x128xf32> to vector<1x128xf32>
    %13 = vector.extract_strided_slice %0 {offsets = [1, 0], sizes = [1, 128], strides = [1, 1]} : vector<6x128xf32> to vector<1x128xf32>
    %c17_i32 = arith.constant 17 : i32
    %14 = tpu.dynamic_rotate %11 by %c17_i32 dim 0 : vector<256x128xf32>, i32 -> vector<256x128xf32>
    %15 = vector.broadcast %6 : vector<256x1xf32> to vector<256x128xf32>
    %16 = arith.mulf %14, %15 : vector<256x128xf32>
    %c16_i32 = arith.constant 16 : i32
    %17 = tpu.dynamic_rotate %11 by %c16_i32 dim 0 : vector<256x128xf32>, i32 -> vector<256x128xf32>
    %18 = vector.broadcast %2 : vector<256x1xf32> to vector<256x128xf32>
    %19 = arith.mulf %17, %18 : vector<256x128xf32>
    %c15_i32 = arith.constant 15 : i32
    %20 = tpu.dynamic_rotate %11 by %c15_i32 dim 0 : vector<256x128xf32>, i32 -> vector<256x128xf32>
    %21 = vector.broadcast %7 : vector<256x1xf32> to vector<256x128xf32>
    %22 = arith.mulf %20, %21 : vector<256x128xf32>
    %c1_i32 = arith.constant 1 : i32
    %23 = tpu.dynamic_rotate %11 by %c1_i32 dim 0 : vector<256x128xf32>, i32 -> vector<256x128xf32>
    %24 = vector.broadcast %4 : vector<256x1xf32> to vector<256x128xf32>
    %25 = arith.mulf %23, %24 : vector<256x128xf32>
    %c255_i32 = arith.constant 255 : i32
    %26 = tpu.dynamic_rotate %11 by %c255_i32 dim 0 : vector<256x128xf32>, i32 -> vector<256x128xf32>
    %27 = vector.broadcast %5 : vector<256x1xf32> to vector<256x128xf32>
    %28 = arith.mulf %26, %27 : vector<256x128xf32>
    %c241_i32 = arith.constant 241 : i32
    %29 = tpu.dynamic_rotate %11 by %c241_i32 dim 0 : vector<256x128xf32>, i32 -> vector<256x128xf32>
    %30 = vector.broadcast %8 : vector<256x1xf32> to vector<256x128xf32>
    %31 = arith.mulf %29, %30 : vector<256x128xf32>
    %c240_i32 = arith.constant 240 : i32
    %32 = tpu.dynamic_rotate %11 by %c240_i32 dim 0 : vector<256x128xf32>, i32 -> vector<256x128xf32>
    %33 = vector.broadcast %3 : vector<256x1xf32> to vector<256x128xf32>
    %34 = arith.mulf %32, %33 : vector<256x128xf32>
    %c239_i32 = arith.constant 239 : i32
    %35 = tpu.dynamic_rotate %11 by %c239_i32 dim 0 : vector<256x128xf32>, i32 -> vector<256x128xf32>
    %36 = vector.broadcast %9 : vector<256x1xf32> to vector<256x128xf32>
    %37 = arith.mulf %35, %36 : vector<256x128xf32>
    %38 = tpu.concatenate %16, %19, %22, %25, %11, %28, %31, %34, %37 in 1 : vector<256x128xf32>, vector<256x128xf32>, vector<256x128xf32>, vector<256x128xf32>, vector<256x128xf32>, vector<256x128xf32>, vector<256x128xf32>, vector<256x128xf32>, vector<256x128xf32> -> vector<256x1152xf32>
    %c0_6 = arith.constant 0 : index
    %c0_7 = arith.constant 0 : index
    %39 = vector.load %arg2[%c0_6, %c0_7] : memref<1152x128xf32, #tpu.memory_space<vmem>>, vector<1152x128xf32>
    %cst = arith.constant dense<0.000000e+00> : vector<256x128xf32>
    %40 = tpu.matmul %38, %39, %cst {dimension_numbers = #tpu.dot_dimension_numbers<[1], [0], [0], [1], [0, 0, 1, 1], [], []>} : vector<256x1152xf32>, vector<1152x128xf32>, vector<256x128xf32> -> vector<256x128xf32>
    %41 = vector.broadcast %12 : vector<1x128xf32> to vector<256x128xf32>
    %42 = arith.mulf %40, %41 : vector<256x128xf32>
    %43 = vector.broadcast %13 : vector<1x128xf32> to vector<256x128xf32>
    %44 = arith.addf %42, %43 : vector<256x128xf32>
    %cst_8 = arith.constant 0.000000e+00 : f32
    %45 = vector.broadcast %cst_8 : f32 to vector<256x128xf32>
    %46 = arith.maximumf %44, %45 : vector<256x128xf32>
    %c0_9 = arith.constant 0 : index
    %c0_10 = arith.constant 0 : index
    %47 = vector.load %arg8[%c0_9, %c0_10] : memref<256x128xf32, #tpu.memory_space<vmem>>, vector<256x128xf32>
    tpu.vector_store %arg8[%c0_9, %c0_10], %46 {strides = array<i32>} : memref<256x128xf32, #tpu.memory_space<vmem>>, vector<256x128xf32>,
    %c0_11 = arith.constant 0 : index
    %c0_12 = arith.constant 0 : index
    %48 = vector.load %arg8[%c0_11, %c0_12] : memref<256x128xf32, #tpu.memory_space<vmem>>, vector<256x128xf32>
    %49 = vector.extract_strided_slice %0 {offsets = [2, 0], sizes = [1, 128], strides = [1, 1]} : vector<6x128xf32> to vector<1x128xf32>
    %50 = vector.extract_strided_slice %0 {offsets = [3, 0], sizes = [1, 128], strides = [1, 1]} : vector<6x128xf32> to vector<1x128xf32>
    %c17_i32_13 = arith.constant 17 : i32
    %51 = tpu.dynamic_rotate %48 by %c17_i32_13 dim 0 : vector<256x128xf32>, i32 -> vector<256x128xf32>
    %52 = vector.broadcast %6 : vector<256x1xf32> to vector<256x128xf32>
    %53 = arith.mulf %51, %52 : vector<256x128xf32>
    %c16_i32_14 = arith.constant 16 : i32
    %54 = tpu.dynamic_rotate %48 by %c16_i32_14 dim 0 : vector<256x128xf32>, i32 -> vector<256x128xf32>
    %55 = vector.broadcast %2 : vector<256x1xf32> to vector<256x128xf32>
    %56 = arith.mulf %54, %55 : vector<256x128xf32>
    %c15_i32_15 = arith.constant 15 : i32
    %57 = tpu.dynamic_rotate %48 by %c15_i32_15 dim 0 : vector<256x128xf32>, i32 -> vector<256x128xf32>
    %58 = vector.broadcast %7 : vector<256x1xf32> to vector<256x128xf32>
    %59 = arith.mulf %57, %58 : vector<256x128xf32>
    %c1_i32_16 = arith.constant 1 : i32
    %60 = tpu.dynamic_rotate %48 by %c1_i32_16 dim 0 : vector<256x128xf32>, i32 -> vector<256x128xf32>
    %61 = vector.broadcast %4 : vector<256x1xf32> to vector<256x128xf32>
    %62 = arith.mulf %60, %61 : vector<256x128xf32>
    %c255_i32_17 = arith.constant 255 : i32
    %63 = tpu.dynamic_rotate %48 by %c255_i32_17 dim 0 : vector<256x128xf32>, i32 -> vector<256x128xf32>
    %64 = vector.broadcast %5 : vector<256x1xf32> to vector<256x128xf32>
    %65 = arith.mulf %63, %64 : vector<256x128xf32>
    %c241_i32_18 = arith.constant 241 : i32
    %66 = tpu.dynamic_rotate %48 by %c241_i32_18 dim 0 : vector<256x128xf32>, i32 -> vector<256x128xf32>
    %67 = vector.broadcast %8 : vector<256x1xf32> to vector<256x128xf32>
    %68 = arith.mulf %66, %67 : vector<256x128xf32>
    %c240_i32_19 = arith.constant 240 : i32
    %69 = tpu.dynamic_rotate %48 by %c240_i32_19 dim 0 : vector<256x128xf32>, i32 -> vector<256x128xf32>
    %70 = vector.broadcast %3 : vector<256x1xf32> to vector<256x128xf32>
    %71 = arith.mulf %69, %70 : vector<256x128xf32>
    %c239_i32_20 = arith.constant 239 : i32
    %72 = tpu.dynamic_rotate %48 by %c239_i32_20 dim 0 : vector<256x128xf32>, i32 -> vector<256x128xf32>
    %73 = vector.broadcast %9 : vector<256x1xf32> to vector<256x128xf32>
    %74 = arith.mulf %72, %73 : vector<256x128xf32>
    %75 = tpu.concatenate %53, %56, %59, %62, %48, %65, %68, %71, %74 in 1 : vector<256x128xf32>, vector<256x128xf32>, vector<256x128xf32>, vector<256x128xf32>, vector<256x128xf32>, vector<256x128xf32>, vector<256x128xf32>, vector<256x128xf32>, vector<256x128xf32> -> vector<256x1152xf32>
    %c0_21 = arith.constant 0 : index
    %c0_22 = arith.constant 0 : index
    %76 = vector.load %arg3[%c0_21, %c0_22] : memref<1152x128xf32, #tpu.memory_space<vmem>>, vector<1152x128xf32>
    %cst_23 = arith.constant dense<0.000000e+00> : vector<256x128xf32>
    %77 = tpu.matmul %75, %76, %cst_23 {dimension_numbers = #tpu.dot_dimension_numbers<[1], [0], [0], [1], [0, 0, 1, 1], [], []>} : vector<256x1152xf32>, vector<1152x128xf32>, vector<256x128xf32> -> vector<256x128xf32>
    %78 = vector.broadcast %49 : vector<1x128xf32> to vector<256x128xf32>
    %79 = arith.mulf %77, %78 : vector<256x128xf32>
    %80 = vector.broadcast %50 : vector<1x128xf32> to vector<256x128xf32>
    %81 = arith.addf %79, %80 : vector<256x128xf32>
    %cst_24 = arith.constant 0.000000e+00 : f32
    %82 = vector.broadcast %cst_24 : f32 to vector<256x128xf32>
    %83 = arith.maximumf %81, %82 : vector<256x128xf32>
    %c0_25 = arith.constant 0 : index
    %c0_26 = arith.constant 0 : index
    %84 = vector.load %arg9[%c0_25, %c0_26] : memref<256x128xf32, #tpu.memory_space<vmem>>, vector<256x128xf32>
    tpu.vector_store %arg9[%c0_25, %c0_26], %83 {strides = array<i32>} : memref<256x128xf32, #tpu.memory_space<vmem>>, vector<256x128xf32>,
    %c0_27 = arith.constant 0 : index
    %c0_28 = arith.constant 0 : index
    %85 = vector.load %arg9[%c0_27, %c0_28] : memref<256x128xf32, #tpu.memory_space<vmem>>, vector<256x128xf32>
    %86 = vector.extract_strided_slice %0 {offsets = [4, 0], sizes = [1, 128], strides = [1, 1]} : vector<6x128xf32> to vector<1x128xf32>
    %87 = vector.extract_strided_slice %0 {offsets = [5, 0], sizes = [1, 128], strides = [1, 1]} : vector<6x128xf32> to vector<1x128xf32>
    %c0_29 = arith.constant 0 : index
    %c0_30 = arith.constant 0 : index
    %88 = vector.load %arg8[%c0_29, %c0_30] : memref<256x128xf32, #tpu.memory_space<vmem>>, vector<256x128xf32>
    %c17_i32_31 = arith.constant 17 : i32
    %89 = tpu.dynamic_rotate %85 by %c17_i32_31 dim 0 : vector<256x128xf32>, i32 -> vector<256x128xf32>
    %90 = vector.broadcast %6 : vector<256x1xf32> to vector<256x128xf32>
    %91 = arith.mulf %89, %90 : vector<256x128xf32>
    %c16_i32_32 = arith.constant 16 : i32
    %92 = tpu.dynamic_rotate %85 by %c16_i32_32 dim 0 : vector<256x128xf32>, i32 -> vector<256x128xf32>
    %93 = vector.broadcast %2 : vector<256x1xf32> to vector<256x128xf32>
    %94 = arith.mulf %92, %93 : vector<256x128xf32>
    %c15_i32_33 = arith.constant 15 : i32
    %95 = tpu.dynamic_rotate %85 by %c15_i32_33 dim 0 : vector<256x128xf32>, i32 -> vector<256x128xf32>
    %96 = vector.broadcast %7 : vector<256x1xf32> to vector<256x128xf32>
    %97 = arith.mulf %95, %96 : vector<256x128xf32>
    %c1_i32_34 = arith.constant 1 : i32
    %98 = tpu.dynamic_rotate %85 by %c1_i32_34 dim 0 : vector<256x128xf32>, i32 -> vector<256x128xf32>
    %99 = vector.broadcast %4 : vector<256x1xf32> to vector<256x128xf32>
    %100 = arith.mulf %98, %99 : vector<256x128xf32>
    %c255_i32_35 = arith.constant 255 : i32
    %101 = tpu.dynamic_rotate %85 by %c255_i32_35 dim 0 : vector<256x128xf32>, i32 -> vector<256x128xf32>
    %102 = vector.broadcast %5 : vector<256x1xf32> to vector<256x128xf32>
    %103 = arith.mulf %101, %102 : vector<256x128xf32>
    %c241_i32_36 = arith.constant 241 : i32
    %104 = tpu.dynamic_rotate %85 by %c241_i32_36 dim 0 : vector<256x128xf32>, i32 -> vector<256x128xf32>
    %105 = vector.broadcast %8 : vector<256x1xf32> to vector<256x128xf32>
    %106 = arith.mulf %104, %105 : vector<256x128xf32>
    %c240_i32_37 = arith.constant 240 : i32
    %107 = tpu.dynamic_rotate %85 by %c240_i32_37 dim 0 : vector<256x128xf32>, i32 -> vector<256x128xf32>
    %108 = vector.broadcast %3 : vector<256x1xf32> to vector<256x128xf32>
    %109 = arith.mulf %107, %108 : vector<256x128xf32>
    %c239_i32_38 = arith.constant 239 : i32
    %110 = tpu.dynamic_rotate %85 by %c239_i32_38 dim 0 : vector<256x128xf32>, i32 -> vector<256x128xf32>
    %111 = vector.broadcast %9 : vector<256x1xf32> to vector<256x128xf32>
    %112 = arith.mulf %110, %111 : vector<256x128xf32>
    %113 = tpu.concatenate %91, %94, %97, %100, %85, %103, %106, %109, %112 in 1 : vector<256x128xf32>, vector<256x128xf32>, vector<256x128xf32>, vector<256x128xf32>, vector<256x128xf32>, vector<256x128xf32>, vector<256x128xf32>, vector<256x128xf32>, vector<256x128xf32> -> vector<256x1152xf32>
    %c0_39 = arith.constant 0 : index
    %c0_40 = arith.constant 0 : index
    %114 = vector.load %arg4[%c0_39, %c0_40] : memref<1152x128xf32, #tpu.memory_space<vmem>>, vector<1152x128xf32>
    %cst_41 = arith.constant dense<0.000000e+00> : vector<256x128xf32>
    %115 = tpu.matmul %113, %114, %cst_41 {dimension_numbers = #tpu.dot_dimension_numbers<[1], [0], [0], [1], [0, 0, 1, 1], [], []>} : vector<256x1152xf32>, vector<1152x128xf32>, vector<256x128xf32> -> vector<256x128xf32>
    %116 = vector.broadcast %86 : vector<1x128xf32> to vector<256x128xf32>
    %117 = arith.mulf %115, %116 : vector<256x128xf32>
    %118 = vector.broadcast %87 : vector<1x128xf32> to vector<256x128xf32>
    %119 = arith.addf %117, %118 : vector<256x128xf32>
    %120 = arith.addf %119, %88 : vector<256x128xf32>
    %cst_42 = arith.constant 0.000000e+00 : f32
    %121 = vector.broadcast %cst_42 : f32 to vector<256x128xf32>
    %122 = arith.maximumf %120, %121 : vector<256x128xf32>
    %cst_43 = arith.constant dense<0.000000e+00> : vector<128xf32>
    %123 = vector.multi_reduction <add>, %122, %cst_43 [0] : vector<256x128xf32> to vector<128xf32>
    %124 = vector.shape_cast %123 : vector<128xf32> to vector<1x128xf32>
    %cst_44 = arith.constant 3.906250e-03 : f32
    %125 = vector.broadcast %cst_44 : f32 to vector<1x128xf32>
    %126 = arith.mulf %124, %125 : vector<1x128xf32>
    %c0_45 = arith.constant 0 : index
    %c0_46 = arith.constant 0 : index
    %c0_47 = arith.constant 0 : index
    %127 = vector.load %arg7[%c0_45, %c0_46, %c0_47] : memref<1x1x128xf32, #tpu.memory_space<vmem>>, vector<1x1x128xf32>
    %128 = vector.shape_cast %127 : vector<1x1x128xf32> to vector<1x128xf32>
    %129 = vector.shape_cast %126 : vector<1x128xf32> to vector<1x1x128xf32>
    tpu.vector_store %arg7[%c0_45, %c0_46, %c0_47], %129 {strides = array<i32>} : memref<1x1x128xf32, #tpu.memory_space<vmem>>, vector<1x1x128xf32>,
    return
  }
  func.func @transform_0(%arg0: i32) -> (i32, i32, i32) {
    %c0_i32 = arith.constant 0 : i32
    %c0_i32_0 = arith.constant 0 : i32
    %c0_i32_1 = arith.constant 0 : i32
    return %arg0, %c0_i32, %c0_i32_0 : i32, i32, i32
  }
  func.func @transform_1(%arg0: i32) -> (i32, i32) {
    %c0_i32 = arith.constant 0 : i32
    %c0_i32_0 = arith.constant 0 : i32
    %c0_i32_1 = arith.constant 0 : i32
    return %c0_i32, %c0_i32_0 : i32, i32
  }
  func.func @transform_2(%arg0: i32) -> (i32, i32) {
    %c0_i32 = arith.constant 0 : i32
    %c0_i32_0 = arith.constant 0 : i32
    %c0_i32_1 = arith.constant 0 : i32
    return %c0_i32, %c0_i32_0 : i32, i32
  }
  func.func @transform_3(%arg0: i32) -> (i32, i32) {
    %c0_i32 = arith.constant 0 : i32
    %c0_i32_0 = arith.constant 0 : i32
    %c0_i32_1 = arith.constant 0 : i32
    return %c0_i32, %c0_i32_0 : i32, i32
  }
  func.func @transform_4(%arg0: i32) -> (i32, i32) {
    %c0_i32 = arith.constant 0 : i32
    %c0_i32_0 = arith.constant 0 : i32
    %c0_i32_1 = arith.constant 0 : i32
    return %c0_i32, %c0_i32_0 : i32, i32
  }
  func.func @transform_5(%arg0: i32) -> (i32, i32) {
    %c0_i32 = arith.constant 0 : i32
    %c0_i32_0 = arith.constant 0 : i32
    %c0_i32_1 = arith.constant 0 : i32
    return %c0_i32, %c0_i32_0 : i32, i32
  }
  func.func @transform_6(%arg0: i32) -> (i32, i32, i32) {
    %c0_i32 = arith.constant 0 : i32
    %c0_i32_0 = arith.constant 0 : i32
    %c0_i32_1 = arith.constant 0 : i32
    return %arg0, %c0_i32, %c0_i32_0 : i32, i32, i32
  }
}

</mosaic_0001>

<llo_original>
// kernel: pretrained_models_feature.1
$region0: #{pretrained_models_feature.1}
  #allocation0 [shape = 'u32[]', space=smem, size = 0x4, offset = 0x4, fixed_abs, tag = 'smem constant byte address 0x4 - core index']
  #allocation1 [shape = 'u32[72,128]{1,0:T(1,128)}', space=vmem, size = 0x9000, scoped, tag = 'internal scratch']
  #allocation2 [shape = 'f32[256,128]{1,0:T(8,128)}', space=vmem, size = 0x20000, scoped, tag = 'scratch operand']
  #allocation3 [shape = 'f32[256,128]{1,0:T(8,128)}', space=vmem, size = 0x20000, scoped, tag = 'scratch operand']
  %s0 = inlined_call_operand.vmem [shape: f32[2,256,128], index: 0, kind: input, shape index: {}]
  %s1 = inlined_call_operand.vmem [shape: f32[1152,128], index: 1, kind: input, shape index: {}]
  %s2 = inlined_call_operand.vmem [shape: f32[1152,128], index: 2, kind: input, shape index: {}]
  %s3 = inlined_call_operand.vmem [shape: f32[1152,128], index: 3, kind: input, shape index: {}]
  %s4 = inlined_call_operand.vmem [shape: f32[6,128], index: 4, kind: input, shape index: {}]
  %s5 = inlined_call_operand.vmem [shape: f32[256,4], index: 5, kind: input, shape index: {}]
  %s6 = inlined_call_operand.hbm [shape: f32[2,1,128], index: 6, kind: output, shape index: {}]
  %s7 = sld [smem:[#allocation0]]
  $region57: #{pretrained_models_feature.1} parent=0
    _
  %s9 = ssub.s32 1, %s7
  %s10 = scalar_select 0, %s9, %s7
  $region1: #{pretrained_models_feature.1} parent=0
    #allocation4 [shape = 'u8[1024]{0}', space=vmem, size = 0x400, scoped, tag = 'output window, operand 0']
    #allocation5 [shape = 's32[2]{0}', space=sflag, size = 0x8, scoped, tag = 'scoped memory for pretrained_models_feature.1']
    %11 = vsyncpa [#allocation5], 0
    %s12 = scalar_lea.sflag [#allocation5], 1
    %13 = vsyncpa %s12, 0
    loop: start=0, step=1, limit=4
    $region2: #{pretrained_models_feature.1} parent=1 // loop_pre_header
      _
    $region3: #{pretrained_models_feature.1} parent=1 // loop_header
      %s15 = sphi 0, %s19
      %p16 = scmp.ge.s32.totalorder %s15, 4
      %s25 = sphi 0, %s27
      %s28 = sphi 0, %s25
      %s29 = sphi 0, %s28
      %s45 = sphi 0, %s29
      %s49 = sphi 0, %s49
      %s51 = sphi 0, %s49
      %s52 = sphi 0, %s51
      %s66 = sphi 0, %s52
      %s70 = sphi 0, %s70
      %s72 = sphi 0, %s70
      %s73 = sphi 0, %s72
      %s87 = sphi 0, %s73
      %s91 = sphi 0, %s91
      %s93 = sphi 0, %s91
      %s94 = sphi 0, %s93
      %s108 = sphi 0, %s94
      %s112 = sphi 0, %s112
      %s114 = sphi 0, %s112
      %s115 = sphi 0, %s114
      %s129 = sphi 0, %s115
      %s133 = sphi 0, %s133
      %s135 = sphi 0, %s133
      %s136 = sphi 0, %s135
      %s150 = sphi 0, %s136
      %s156 = sphi 0, %s158
      %s159 = sphi 0, %s156
      %s160 = sphi 0, %s159
      %s176 = sphi 0, %s160
    $region4: #{pretrained_models_feature.1} parent=1 // loop_header_branch
      %18 = sbr.rel (%p16) target = $region8
    $region5: #{pretrained_models_feature.1} parent=1 // loop_body
      %s20 = ssub.s32 %s15, 1
      %s21 = ssub.s32 %s15, 2
      %s22 = sadd.s32 %s15, 1
      %s23 = ssub.s32 %s15, %s22
      %p24 = scmp.eq.s32.totalorder %s23, 0
      %s26 = sadd.s32 %s25, 1
      %s27 = scalar_select %p24, %s25, %s26
      %p30 = pneg %p24
      %p31 = scmp.eq.s32.totalorder %s15, 1
      %p32 = por %p30, %p31
      %p33 = scmp.ne.s32.totalorder %s25, %s28
      %p34 = scmp.eq.s32.totalorder %s15, 0
      %p35 = por %p33, %p34
      %p36 = scmp.ne.s32.totalorder %s25, %s28
      %p37 = scmp.eq.s32.totalorder %s20, 1
      %p38 = por %p36, %p37
      %p39 = scmp.ne.s32.totalorder %s28, %s29
      %p40 = scmp.eq.s32.totalorder %s20, 0
      %p41 = por %p39, %p40
      %p42 = scmp.ne.s32.totalorder %s28, %s29
      %p43 = scmp.eq.s32.totalorder %s21, 1
      %p44 = por %p42, %p43
      %p46 = scmp.ne.s32.totalorder %s29, %s45
      %p47 = scmp.eq.s32.totalorder %s21, 0
      %p48 = por %p46, %p47
      %s50 = sadd.s32 %s49, 1
      %p53 = scmp.eq.s32.totalorder %s15, 1
      %p54 = scmp.ne.s32.totalorder %s49, %s51
      %p55 = scmp.eq.s32.totalorder %s15, 0
      %p56 = por %p54, %p55
      %p57 = scmp.ne.s32.totalorder %s49, %s51
      %p58 = scmp.eq.s32.totalorder %s20, 1
      %p59 = por %p57, %p58
      %p60 = scmp.ne.s32.totalorder %s51, %s52
      %p61 = scmp.eq.s32.totalorder %s20, 0
      %p62 = por %p60, %p61
      %p63 = scmp.ne.s32.totalorder %s51, %s52
      %p64 = scmp.eq.s32.totalorder %s21, 1
      %p65 = por %p63, %p64
      %p67 = scmp.ne.s32.totalorder %s52, %s66
      %p68 = scmp.eq.s32.totalorder %s21, 0
      %p69 = por %p67, %p68
      %s71 = sadd.s32 %s70, 1
      %p74 = scmp.eq.s32.totalorder %s15, 1
      %p75 = scmp.ne.s32.totalorder %s70, %s72
      %p76 = scmp.eq.s32.totalorder %s15, 0
      %p77 = por %p75, %p76
      %p78 = scmp.ne.s32.totalorder %s70, %s72
      %p79 = scmp.eq.s32.totalorder %s20, 1
      %p80 = por %p78, %p79
      %p81 = scmp.ne.s32.totalorder %s72, %s73
      %p82 = scmp.eq.s32.totalorder %s20, 0
      %p83 = por %p81, %p82
      %p84 = scmp.ne.s32.totalorder %s72, %s73
      %p85 = scmp.eq.s32.totalorder %s21, 1
      %p86 = por %p84, %p85
      %p88 = scmp.ne.s32.totalorder %s73, %s87
      %p89 = scmp.eq.s32.totalorder %s21, 0
      %p90 = por %p88, %p89
      %s92 = sadd.s32 %s91, 1
      %p95 = scmp.eq.s32.totalorder %s15, 1
      %p96 = scmp.ne.s32.totalorder %s91, %s93
      %p97 = scmp.eq.s32.totalorder %s15, 0
      %p98 = por %p96, %p97
      %p99 = scmp.ne.s32.totalorder %s91, %s93
      %p100 = scmp.eq.s32.totalorder %s20, 1
      %p101 = por %p99, %p100
      %p102 = scmp.ne.s32.totalorder %s93, %s94
      %p103 = scmp.eq.s32.totalorder %s20, 0
      %p104 = por %p102, %p103
      %p105 = scmp.ne.s32.totalorder %s93, %s94
      %p106 = scmp.eq.s32.totalorder %s21, 1
      %p107 = por %p105, %p106
      %p109 = scmp.ne.s32.totalorder %s94, %s108
      %p110 = scmp.eq.s32.totalorder %s21, 0
      %p111 = por %p109, %p110
      %s113 = sadd.s32 %s112, 1
      %p116 = scmp.eq.s32.totalorder %s15, 1
      %p117 = scmp.ne.s32.totalorder %s112, %s114
      %p118 = scmp.eq.s32.totalorder %s15, 0
      %p119 = por %p117, %p118
      %p120 = scmp.ne.s32.totalorder %s112, %s114
      %p121 = scmp.eq.s32.totalorder %s20, 1
      %p122 = por %p120, %p121
      %p123 = scmp.ne.s32.totalorder %s114, %s115
      %p124 = scmp.eq.s32.totalorder %s20, 0
      %p125 = por %p123, %p124
      %p126 = scmp.ne.s32.totalorder %s114, %s115
      %p127 = scmp.eq.s32.totalorder %s21, 1
      %p128 = por %p126, %p127
      %p130 = scmp.ne.s32.totalorder %s115, %s129
      %p131 = scmp.eq.s32.totalorder %s21, 0
      %p132 = por %p130, %p131
      %s134 = sadd.s32 %s133, 1
      %p137 = scmp.eq.s32.totalorder %s15, 1
      %p138 = scmp.ne.s32.totalorder %s133, %s135
      %p139 = scmp.eq.s32.totalorder %s15, 0
      %p140 = por %p138, %p139
      %p141 = scmp.ne.s32.totalorder %s133, %s135
      %p142 = scmp.eq.s32.totalorder %s20, 1
      %p143 = por %p141, %p142
      %p144 = scmp.ne.s32.totalorder %s135, %s136
      %p145 = scmp.eq.s32.totalorder %s20, 0
      %p146 = por %p144, %p145
      %p147 = scmp.ne.s32.totalorder %s135, %s136
      %p148 = scmp.eq.s32.totalorder %s21, 1
      %p149 = por %p147, %p148
      %p151 = scmp.ne.s32.totalorder %s136, %s150
      %p152 = scmp.eq.s32.totalorder %s21, 0
      %p153 = por %p151, %p152
      %s154 = ssub.s32 %s15, %s22
      %p155 = scmp.eq.s32.totalorder %s154, 0
      %s157 = sadd.s32 %s156, 1
      %s158 = scalar_select %p155, %s156, %s157
      %p161 = pneg %p155
      %p162 = scmp.eq.s32.totalorder %s15, 1
      %p163 = por %p161, %p162
      %p164 = scmp.ne.s32.totalorder %s156, %s159
      %p165 = scmp.eq.s32.totalorder %s15, 0
      %p166 = por %p164, %p165
      %p167 = scmp.ne.s32.totalorder %s156, %s159
      %p168 = scmp.eq.s32.totalorder %s20, 1
      %p169 = por %p167, %p168
      %p170 = scmp.ne.s32.totalorder %s159, %s160
      %p171 = scmp.eq.s32.totalorder %s20, 0
      %p172 = por %p170, %p171
      %p173 = scmp.ne.s32.totalorder %s159, %s160
      %p174 = scmp.eq.s32.totalorder %s21, 1
      %p175 = por %p173, %p174
      %p177 = scmp.ne.s32.totalorder %s160, %s176
      %p178 = scmp.eq.s32.totalorder %s21, 0
      %p179 = por %p177, %p178
      %p180 = scmp.le.s32.totalorder 1, %s15
      %p181 = scmp.lt.s32.totalorder %s15, 3
      %p182 = pnand %p180, %p181
      %p183 = pneg %p182
      // Predicated region
      $region9: #{pretrained_models_feature.1} parent=5 // pred_check
        _
      $region10: #{pretrained_models_feature.1} parent=5 // pred_check_branch
        %185 = sbr.rel (%p182) target = $region12
      $region11: #{pretrained_models_feature.1} parent=5 // pred_region
        %s186 = ssub.s32 %s15, 1
        // Predicated region
        $region13: #{pretrained_models_feature.1} parent=11 // pred_check
          %p187 = pneg %p62
        $region14: #{pretrained_models_feature.1} parent=11 // pred_check_branch
          %189 = sbr.rel (%p187) target = $region16
        $region15: #{pretrained_models_feature.1} parent=11 // pred_region
          _
        $region16: #{pretrained_models_feature.1} parent=11 // pred_fallthru
          _
        // Predicated region
        $region17: #{pretrained_models_feature.1} parent=11 // pred_check
          %p190 = pneg %p83
        $region18: #{pretrained_models_feature.1} parent=11 // pred_check_branch
          %192 = sbr.rel (%p190) target = $region20
        $region19: #{pretrained_models_feature.1} parent=11 // pred_region
          _
        $region20: #{pretrained_models_feature.1} parent=11 // pred_fallthru
          _
        // Predicated region
        $region21: #{pretrained_models_feature.1} parent=11 // pred_check
          %p193 = pneg %p104
        $region22: #{pretrained_models_feature.1} parent=11 // pred_check_branch
          %195 = sbr.rel (%p193) target = $region24
        $region23: #{pretrained_models_feature.1} parent=11 // pred_region
          _
        $region24: #{pretrained_models_feature.1} parent=11 // pred_fallthru
          _
        // Predicated region
        $region25: #{pretrained_models_feature.1} parent=11 // pred_check
          %p196 = pneg %p125
        $region26: #{pretrained_models_feature.1} parent=11 // pred_check_branch
          %198 = sbr.rel (%p196) target = $region28
        $region27: #{pretrained_models_feature.1} parent=11 // pred_region
          _
        $region28: #{pretrained_models_feature.1} parent=11 // pred_fallthru
          _
        // Predicated region
        $region29: #{pretrained_models_feature.1} parent=11 // pred_check
          %p199 = pneg %p146
        $region30: #{pretrained_models_feature.1} parent=11 // pred_check_branch
          %201 = sbr.rel (%p199) target = $region32
        $region31: #{pretrained_models_feature.1} parent=11 // pred_region
          _
        $region32: #{pretrained_models_feature.1} parent=11 // pred_fallthru
          _
      $region12: #{pretrained_models_feature.1} parent=5 // pred_fallthru
        _
      %p202 = scmp.lt.s32.totalorder %s15, 2
      // Predicated region
      $region33: #{pretrained_models_feature.1} parent=5 // pred_check
        %p203 = pneg %p202
      $region34: #{pretrained_models_feature.1} parent=5 // pred_check_branch
        %205 = sbr.rel (%p203) target = $region36
      $region35: #{pretrained_models_feature.1} parent=5 // pred_region
        // Predicated region
        $region37: #{pretrained_models_feature.1} parent=35 // pred_check
          %p206 = pneg %p35
        $region38: #{pretrained_models_feature.1} parent=35 // pred_check_branch
          %208 = sbr.rel (%p206) target = $region40
        $region39: #{pretrained_models_feature.1} parent=35 // pred_region
          %p209 = scmp.lt.s32.totalorder %s15, 1
          %s210 = scalar_select %p209, %s15, 1
          %s211 = smul.addr %s210, 32
          %s212 = smul.addr %s211, 8
          %s213 = scalar_lea.vmem %s0, %s212
        $region40: #{pretrained_models_feature.1} parent=35 // pred_fallthru
          _
      $region36: #{pretrained_models_feature.1} parent=5 // pred_fallthru
        _
      %p214 = scmp.le.s32.totalorder 1, %s15
      %p215 = scmp.lt.s32.totalorder %s15, 3
      %p216 = pnand %p214, %p215
      %p217 = pneg %p216
      // Predicated region
      $region41: #{pretrained_models_feature.1} parent=5 // pred_check
        _
      $region42: #{pretrained_models_feature.1} parent=5 // pred_check_branch
        %219 = sbr.rel (%p216) target = $region44
      $region43: #{pretrained_models_feature.1} parent=5 // pred_region
        %s220 = ssub.s32 %s15, 1
        %p221 = scmp.lt.s32.totalorder %s20, 1
        %s222 = scalar_select %p221, %s20, 1
        %s223 = smul.addr %s222, 32
        %s224 = smul.addr %s223, 8
        %s225 = scalar_lea.vmem %s0, %s224
        %p226 = pneg %p41
        %p227 = pneg %p38
        %p228 = pneg %p62
        %p229 = pneg %p59
        %p230 = pneg %p83
        %p231 = pneg %p80
        %p232 = pneg %p104
        %p233 = pneg %p101
        %p234 = pneg %p125
        %p235 = pneg %p122
        %p236 = pneg %p146
        %p237 = pneg %p143
        %p238 = pneg %p172
        %p239 = pneg %p169
        %s240 = sand.u32 %s159, 1
        %s241 = scalar_lea.sflag [#allocation5], %s240
        %s242 = sand.u32 %s159, 1
        %s243 = scalar_lea.vmem [#allocation4], %s242
        %p244 = scmp.lt.s32.totalorder %s20, 1
        %s245 = scalar_select %p244, %s20, 1
        %s246 = smul.addr %s245, 32
        %s247 = smul.addr %s246, 8
        %s248 = scalar_lea.vmem %s0, %s247
        %v249 = vld [vmem:[%s4] sm:$0x3f]
        %v250 = vld [vmem:[%s5] sm:$0xff]
        %v251 = vld [vmem:[%s5 + $0x8] sm:$0xff]
        %v252 = vld [vmem:[%s5 + $0x10] sm:$0xff]
        %v253 = vld [vmem:[%s5 + $0x18] sm:$0xff]
        %v254 = vld [vmem:[%s5 + $0x20] sm:$0xff]
        %v255 = vld [vmem:[%s5 + $0x28] sm:$0xff]
        %v256 = vld [vmem:[%s5 + $0x30] sm:$0xff]
        %v257 = vld [vmem:[%s5 + $0x38] sm:$0xff]
        %v258 = vld [vmem:[%s5 + $0x40] sm:$0xff]
        %v259 = vld [vmem:[%s5 + $0x48] sm:$0xff]
        %v260 = vld [vmem:[%s5 + $0x50] sm:$0xff]
        %v261 = vld [vmem:[%s5 + $0x58] sm:$0xff]
        %v262 = vld [vmem:[%s5 + $0x60] sm:$0xff]
        %v263 = vld [vmem:[%s5 + $0x68] sm:$0xff]
        %v264 = vld [vmem:[%s5 + $0x70] sm:$0xff]
        %v265 = vld [vmem:[%s5 + $0x78] sm:$0xff]
        %v266 = vld [vmem:[%s5 + $0x80] sm:$0xff]
        %v267 = vld [vmem:[%s5 + $0x88] sm:$0xff]
        %v268 = vld [vmem:[%s5 + $0x90] sm:$0xff]
        %v269 = vld [vmem:[%s5 + $0x98] sm:$0xff]
        %v270 = vld [vmem:[%s5 + $0xa0] sm:$0xff]
        %v271 = vld [vmem:[%s5 + $0xa8] sm:$0xff]
        %v272 = vld [vmem:[%s5 + $0xb0] sm:$0xff]
        %v273 = vld [vmem:[%s5 + $0xb8] sm:$0xff]
        %v274 = vld [vmem:[%s5 + $0xc0] sm:$0xff]
        %v275 = vld [vmem:[%s5 + $0xc8] sm:$0xff]
        %v276 = vld [vmem:[%s5 + $0xd0] sm:$0xff]
        %v277 = vld [vmem:[%s5 + $0xd8] sm:$0xff]
        %v278 = vld [vmem:[%s5 + $0xe0] sm:$0xff]
        %v279 = vld [vmem:[%s5 + $0xe8] sm:$0xff]
        %v280 = vld [vmem:[%s5 + $0xf0] sm:$0xff]
        %v281 = vld [vmem:[%s5 + $0xf8] sm:$0xff]
        %314 = vrot.lane.b32.xlu0 %v250, 126
        %v315 = vpop.permute.xlu0 %314
        %316 = vrot.lane.b32.xlu0 %v251, 126
        %v317 = vpop.permute.xlu0 %316
        %318 = vrot.lane.b32.xlu0 %v252, 126
        %v319 = vpop.permute.xlu0 %318
        %320 = vrot.lane.b32.xlu0 %v253, 126
        %v321 = vpop.permute.xlu0 %320
        %322 = vrot.lane.b32.xlu0 %v254, 126
        %v323 = vpop.permute.xlu0 %322
        %324 = vrot.lane.b32.xlu0 %v255, 126
        %v325 = vpop.permute.xlu0 %324
        %326 = vrot.lane.b32.xlu0 %v256, 126
        %v327 = vpop.permute.xlu0 %326
        %328 = vrot.lane.b32.xlu0 %v257, 126
        %v329 = vpop.permute.xlu0 %328
        %330 = vrot.lane.b32.xlu0 %v258, 126
        %v331 = vpop.permute.xlu0 %330
        %332 = vrot.lane.b32.xlu0 %v259, 126
        %v333 = vpop.permute.xlu0 %332
        %334 = vrot.lane.b32.xlu0 %v260, 126
        %v335 = vpop.permute.xlu0 %334
        %336 = vrot.lane.b32.xlu0 %v261, 126
        %v337 = vpop.permute.xlu0 %336
        %338 = vrot.lane.b32.xlu0 %v262, 126
        %v339 = vpop.permute.xlu0 %338
        %340 = vrot.lane.b32.xlu0 %v263, 126
        %v341 = vpop.permute.xlu0 %340
        %342 = vrot.lane.b32.xlu0 %v264, 126
        %v343 = vpop.permute.xlu0 %342
        %344 = vrot.lane.b32.xlu0 %v265, 126
        %v345 = vpop.permute.xlu0 %344
        %346 = vrot.lane.b32.xlu0 %v266, 126
        %v347 = vpop.permute.xlu0 %346
        %348 = vrot.lane.b32.xlu0 %v267, 126
        %v349 = vpop.permute.xlu0 %348
        %350 = vrot.lane.b32.xlu0 %v268, 126
        %v351 = vpop.permute.xlu0 %350
        %352 = vrot.lane.b32.xlu0 %v269, 126
        %v353 = vpop.permute.xlu0 %352
        %354 = vrot.lane.b32.xlu0 %v270, 126
        %v355 = vpop.permute.xlu0 %354
        %356 = vrot.lane.b32.xlu0 %v271, 126
        %v357 = vpop.permute.xlu0 %356
        %358 = vrot.lane.b32.xlu0 %v272, 126
        %v359 = vpop.permute.xlu0 %358
        %360 = vrot.lane.b32.xlu0 %v273, 126
        %v361 = vpop.permute.xlu0 %360
        %362 = vrot.lane.b32.xlu0 %v274, 126
        %v363 = vpop.permute.xlu0 %362
        %364 = vrot.lane.b32.xlu0 %v275, 126
        %v365 = vpop.permute.xlu0 %364
        %366 = vrot.lane.b32.xlu0 %v276, 126
        %v367 = vpop.permute.xlu0 %366
        %368 = vrot.lane.b32.xlu0 %v277, 126
        %v369 = vpop.permute.xlu0 %368
        %370 = vrot.lane.b32.xlu0 %v278, 126
        %v371 = vpop.permute.xlu0 %370
        %372 = vrot.lane.b32.xlu0 %v279, 126
        %v373 = vpop.permute.xlu0 %372
        %374 = vrot.lane.b32.xlu0 %v280, 126
        %v375 = vpop.permute.xlu0 %374
        %376 = vrot.lane.b32.xlu0 %v281, 126
        %v377 = vpop.permute.xlu0 %376
        %v410 = vmul.f32 %v250, %v315
        %v411 = vmul.f32 %v251, %v317
        %v412 = vmul.f32 %v252, %v319
        %v413 = vmul.f32 %v253, %v321
        %v414 = vmul.f32 %v254, %v323
        %v415 = vmul.f32 %v255, %v325
        %v416 = vmul.f32 %v256, %v327
        %v417 = vmul.f32 %v257, %v329
        %v418 = vmul.f32 %v258, %v331
        %v419 = vmul.f32 %v259, %v333
        %v420 = vmul.f32 %v260, %v335
        %v421 = vmul.f32 %v261, %v337
        %v422 = vmul.f32 %v262, %v339
        %v423 = vmul.f32 %v263, %v341
        %v424 = vmul.f32 %v264, %v343
        %v425 = vmul.f32 %v265, %v345
        %v426 = vmul.f32 %v266, %v347
        %v427 = vmul.f32 %v267, %v349
        %v428 = vmul.f32 %v268, %v351
        %v429 = vmul.f32 %v269, %v353
        %v430 = vmul.f32 %v270, %v355
        %v431 = vmul.f32 %v271, %v357
        %v432 = vmul.f32 %v272, %v359
        %v433 = vmul.f32 %v273, %v361
        %v434 = vmul.f32 %v274, %v363
        %v435 = vmul.f32 %v275, %v365
        %v436 = vmul.f32 %v276, %v367
        %v437 = vmul.f32 %v277, %v369
        %v438 = vmul.f32 %v278, %v371
        %v439 = vmul.f32 %v279, %v373
        %v440 = vmul.f32 %v280, %v375
        %v441 = vmul.f32 %v281, %v377
        %442 = vrot.lane.b32.xlu0 %v250, 125
        %v443 = vpop.permute.xlu0 %442
        %444 = vrot.lane.b32.xlu0 %v251, 125
        %v445 = vpop.permute.xlu0 %444
        %446 = vrot.lane.b32.xlu0 %v252, 125
        %v447 = vpop.permute.xlu0 %446
        %448 = vrot.lane.b32.xlu0 %v253, 125
        %v449 = vpop.permute.xlu0 %448
        %450 = vrot.lane.b32.xlu0 %v254, 125
        %v451 = vpop.permute.xlu0 %450
        %452 = vrot.lane.b32.xlu0 %v255, 125
        %v453 = vpop.permute.xlu0 %452
        %454 = vrot.lane.b32.xlu0 %v256, 125
        %v455 = vpop.permute.xlu0 %454
        %456 = vrot.lane.b32.xlu0 %v257, 125
        %v457 = vpop.permute.xlu0 %456
        %458 = vrot.lane.b32.xlu0 %v258, 125
        %v459 = vpop.permute.xlu0 %458
        %460 = vrot.lane.b32.xlu0 %v259, 125
        %v461 = vpop.permute.xlu0 %460
        %462 = vrot.lane.b32.xlu0 %v260, 125
        %v463 = vpop.permute.xlu0 %462
        %464 = vrot.lane.b32.xlu0 %v261, 125
        %v465 = vpop.permute.xlu0 %464
        %466 = vrot.lane.b32.xlu0 %v262, 125
        %v467 = vpop.permute.xlu0 %466
        %468 = vrot.lane.b32.xlu0 %v263, 125
        %v469 = vpop.permute.xlu0 %468
        %470 = vrot.lane.b32.xlu0 %v264, 125
        %v471 = vpop.permute.xlu0 %470
        %472 = vrot.lane.b32.xlu0 %v265, 125
        %v473 = vpop.permute.xlu0 %472
        %474 = vrot.lane.b32.xlu0 %v266, 125
        %v475 = vpop.permute.xlu0 %474
        %476 = vrot.lane.b32.xlu0 %v267, 125
        %v477 = vpop.permute.xlu0 %476
        %478 = vrot.lane.b32.xlu0 %v268, 125
        %v479 = vpop.permute.xlu0 %478
        %480 = vrot.lane.b32.xlu0 %v269, 125
        %v481 = vpop.permute.xlu0 %480
        %482 = vrot.lane.b32.xlu0 %v270, 125
        %v483 = vpop.permute.xlu0 %482
        %484 = vrot.lane.b32.xlu0 %v271, 125
        %v485 = vpop.permute.xlu0 %484
        %486 = vrot.lane.b32.xlu0 %v272, 125
        %v487 = vpop.permute.xlu0 %486
        %488 = vrot.lane.b32.xlu0 %v273, 125
        %v489 = vpop.permute.xlu0 %488
        %490 = vrot.lane.b32.xlu0 %v274, 125
        %v491 = vpop.permute.xlu0 %490
        %492 = vrot.lane.b32.xlu0 %v275, 125
        %v493 = vpop.permute.xlu0 %492
        %494 = vrot.lane.b32.xlu0 %v276, 125
        %v495 = vpop.permute.xlu0 %494
        %496 = vrot.lane.b32.xlu0 %v277, 125
        %v497 = vpop.permute.xlu0 %496
        %498 = vrot.lane.b32.xlu0 %v278, 125
        %v499 = vpop.permute.xlu0 %498
        %500 = vrot.lane.b32.xlu0 %v279, 125
        %v501 = vpop.permute.xlu0 %500
        %502 = vrot.lane.b32.xlu0 %v280, 125
        %v503 = vpop.permute.xlu0 %502
        %504 = vrot.lane.b32.xlu0 %v281, 125
        %v505 = vpop.permute.xlu0 %504
        %v538 = vmul.f32 %v250, %v443
        %v539 = vmul.f32 %v251, %v445
        %v540 = vmul.f32 %v252, %v447
        %v541 = vmul.f32 %v253, %v449
        %v542 = vmul.f32 %v254, %v451
        %v543 = vmul.f32 %v255, %v453
        %v544 = vmul.f32 %v256, %v455
        %v545 = vmul.f32 %v257, %v457
        %v546 = vmul.f32 %v258, %v459
        %v547 = vmul.f32 %v259, %v461
        %v548 = vmul.f32 %v260, %v463
        %v549 = vmul.f32 %v261, %v465
        %v550 = vmul.f32 %v262, %v467
        %v551 = vmul.f32 %v263, %v469
        %v552 = vmul.f32 %v264, %v471
        %v553 = vmul.f32 %v265, %v473
        %v554 = vmul.f32 %v266, %v475
        %v555 = vmul.f32 %v267, %v477
        %v556 = vmul.f32 %v268, %v479
        %v557 = vmul.f32 %v269, %v481
        %v558 = vmul.f32 %v270, %v483
        %v559 = vmul.f32 %v271, %v485
        %v560 = vmul.f32 %v272, %v487
        %v561 = vmul.f32 %v273, %v489
        %v562 = vmul.f32 %v274, %v491
        %v563 = vmul.f32 %v275, %v493
        %v564 = vmul.f32 %v276, %v495
        %v565 = vmul.f32 %v277, %v497
        %v566 = vmul.f32 %v278, %v499
        %v567 = vmul.f32 %v279, %v501
        %v568 = vmul.f32 %v280, %v503
        %v569 = vmul.f32 %v281, %v505
        %570 = vrot.lane.b32.xlu0 %v250, 127
        %v571 = vpop.permute.xlu0 %570
        %572 = vrot.lane.b32.xlu0 %v251, 127
        %v573 = vpop.permute.xlu0 %572
        %574 = vrot.lane.b32.xlu0 %v252, 127
        %v575 = vpop.permute.xlu0 %574
        %576 = vrot.lane.b32.xlu0 %v253, 127
        %v577 = vpop.permute.xlu0 %576
        %578 = vrot.lane.b32.xlu0 %v254, 127
        %v579 = vpop.permute.xlu0 %578
        %580 = vrot.lane.b32.xlu0 %v255, 127
        %v581 = vpop.permute.xlu0 %580
        %582 = vrot.lane.b32.xlu0 %v256, 127
        %v583 = vpop.permute.xlu0 %582
        %584 = vrot.lane.b32.xlu0 %v257, 127
        %v585 = vpop.permute.xlu0 %584
        %586 = vrot.lane.b32.xlu0 %v258, 127
        %v587 = vpop.permute.xlu0 %586
        %588 = vrot.lane.b32.xlu0 %v259, 127
        %v589 = vpop.permute.xlu0 %588
        %590 = vrot.lane.b32.xlu0 %v260, 127
        %v591 = vpop.permute.xlu0 %590
        %592 = vrot.lane.b32.xlu0 %v261, 127
        %v593 = vpop.permute.xlu0 %592
        %594 = vrot.lane.b32.xlu0 %v262, 127
        %v595 = vpop.permute.xlu0 %594
        %596 = vrot.lane.b32.xlu0 %v263, 127
        %v597 = vpop.permute.xlu0 %596
        %598 = vrot.lane.b32.xlu0 %v264, 127
        %v599 = vpop.permute.xlu0 %598
        %600 = vrot.lane.b32.xlu0 %v265, 127
        %v601 = vpop.permute.xlu0 %600
        %602 = vrot.lane.b32.xlu0 %v266, 127
        %v603 = vpop.permute.xlu0 %602
        %604 = vrot.lane.b32.xlu0 %v267, 127
        %v605 = vpop.permute.xlu0 %604
        %606 = vrot.lane.b32.xlu0 %v268, 127
        %v607 = vpop.permute.xlu0 %606
        %608 = vrot.lane.b32.xlu0 %v269, 127
        %v609 = vpop.permute.xlu0 %608
        %610 = vrot.lane.b32.xlu0 %v270, 127
        %v611 = vpop.permute.xlu0 %610
        %612 = vrot.lane.b32.xlu0 %v271, 127
        %v613 = vpop.permute.xlu0 %612
        %614 = vrot.lane.b32.xlu0 %v272, 127
        %v615 = vpop.permute.xlu0 %614
        %616 = vrot.lane.b32.xlu0 %v273, 127
        %v617 = vpop.permute.xlu0 %616
        %618 = vrot.lane.b32.xlu0 %v274, 127
        %v619 = vpop.permute.xlu0 %618
        %620 = vrot.lane.b32.xlu0 %v275, 127
        %v621 = vpop.permute.xlu0 %620
        %622 = vrot.lane.b32.xlu0 %v276, 127
        %v623 = vpop.permute.xlu0 %622
        %624 = vrot.lane.b32.xlu0 %v277, 127
        %v625 = vpop.permute.xlu0 %624
        %626 = vrot.lane.b32.xlu0 %v278, 127
        %v627 = vpop.permute.xlu0 %626
        %628 = vrot.lane.b32.xlu0 %v279, 127
        %v629 = vpop.permute.xlu0 %628
        %630 = vrot.lane.b32.xlu0 %v280, 127
        %v631 = vpop.permute.xlu0 %630
        %632 = vrot.lane.b32.xlu0 %v281, 127
        %v633 = vpop.permute.xlu0 %632
        %v666 = vmul.f32 %v250, %v571
        %v667 = vmul.f32 %v251, %v573
        %v668 = vmul.f32 %v252, %v575
        %v669 = vmul.f32 %v253, %v577
        %v670 = vmul.f32 %v254, %v579
        %v671 = vmul.f32 %v255, %v581
        %v672 = vmul.f32 %v256, %v583
        %v673 = vmul.f32 %v257, %v585
        %v674 = vmul.f32 %v258, %v587
        %v675 = vmul.f32 %v259, %v589
        %v676 = vmul.f32 %v260, %v591
        %v677 = vmul.f32 %v261, %v593
        %v678 = vmul.f32 %v262, %v595
        %v679 = vmul.f32 %v263, %v597
        %v680 = vmul.f32 %v264, %v599
        %v681 = vmul.f32 %v265, %v601
        %v682 = vmul.f32 %v266, %v603
        %v683 = vmul.f32 %v267, %v605
        %v684 = vmul.f32 %v268, %v607
        %v685 = vmul.f32 %v269, %v609
        %v686 = vmul.f32 %v270, %v611
        %v687 = vmul.f32 %v271, %v613
        %v688 = vmul.f32 %v272, %v615
        %v689 = vmul.f32 %v273, %v617
        %v690 = vmul.f32 %v274, %v619
        %v691 = vmul.f32 %v275, %v621
        %v692 = vmul.f32 %v276, %v623
        %v693 = vmul.f32 %v277, %v625
        %v694 = vmul.f32 %v278, %v627
        %v695 = vmul.f32 %v279, %v629
        %v696 = vmul.f32 %v280, %v631
        %v697 = vmul.f32 %v281, %v633
        %v698 = vld [vmem:[%s248] sm:$0xff]
        %v699 = vld [vmem:[%s248 + $0x8] sm:$0xff]
        %v700 = vld [vmem:[%s248 + $0x10] sm:$0xff]
        %v701 = vld [vmem:[%s248 + $0x18] sm:$0xff]
        %v702 = vld [vmem:[%s248 + $0x20] sm:$0xff]
        %v703 = vld [vmem:[%s248 + $0x28] sm:$0xff]
        %v704 = vld [vmem:[%s248 + $0x30] sm:$0xff]
        %v705 = vld [vmem:[%s248 + $0x38] sm:$0xff]
        %v706 = vld [vmem:[%s248 + $0x40] sm:$0xff]
        %v707 = vld [vmem:[%s248 + $0x48] sm:$0xff]
        %v708 = vld [vmem:[%s248 + $0x50] sm:$0xff]
        %v709 = vld [vmem:[%s248 + $0x58] sm:$0xff]
        %v710 = vld [vmem:[%s248 + $0x60] sm:$0xff]
        %v711 = vld [vmem:[%s248 + $0x68] sm:$0xff]
        %v712 = vld [vmem:[%s248 + $0x70] sm:$0xff]
        %v713 = vld [vmem:[%s248 + $0x78] sm:$0xff]
        %v714 = vld [vmem:[%s248 + $0x80] sm:$0xff]
        %v715 = vld [vmem:[%s248 + $0x88] sm:$0xff]
        %v716 = vld [vmem:[%s248 + $0x90] sm:$0xff]
        %v717 = vld [vmem:[%s248 + $0x98] sm:$0xff]
        %v718 = vld [vmem:[%s248 + $0xa0] sm:$0xff]
        %v719 = vld [vmem:[%s248 + $0xa8] sm:$0xff]
        %v720 = vld [vmem:[%s248 + $0xb0] sm:$0xff]
        %v721 = vld [vmem:[%s248 + $0xb8] sm:$0xff]
        %v722 = vld [vmem:[%s248 + $0xc0] sm:$0xff]
        %v723 = vld [vmem:[%s248 + $0xc8] sm:$0xff]
        %v724 = vld [vmem:[%s248 + $0xd0] sm:$0xff]
        %v725 = vld [vmem:[%s248 + $0xd8] sm:$0xff]
        %v726 = vld [vmem:[%s248 + $0xe0] sm:$0xff]
        %v727 = vld [vmem:[%s248 + $0xe8] sm:$0xff]
        %v728 = vld [vmem:[%s248 + $0xf0] sm:$0xff]
        %v729 = vld [vmem:[%s248 + $0xf8] sm:$0xff]
        %v730 = vrot.slane %v698, 7
        %v731 = vrot.slane %v699, 7
        %v732 = vrot.slane %v700, 7
        %v733 = vrot.slane %v701, 7
        %v734 = vrot.slane %v702, 7
        %v735 = vrot.slane %v703, 7
        %v736 = vrot.slane %v704, 7
        %v737 = vrot.slane %v705, 7
        %v738 = vrot.slane %v706, 7
        %v739 = vrot.slane %v707, 7
        %v740 = vrot.slane %v708, 7
        %v741 = vrot.slane %v709, 7
        %v742 = vrot.slane %v710, 7
        %v743 = vrot.slane %v711, 7
        %v744 = vrot.slane %v712, 7
        %v745 = vrot.slane %v713, 7
        %v746 = vrot.slane %v714, 7
        %v747 = vrot.slane %v715, 7
        %v748 = vrot.slane %v716, 7
        %v749 = vrot.slane %v717, 7
        %v750 = vrot.slane %v718, 7
        %v751 = vrot.slane %v719, 7
        %v752 = vrot.slane %v720, 7
        %v753 = vrot.slane %v721, 7
        %v754 = vrot.slane %v722, 7
        %v755 = vrot.slane %v723, 7
        %v756 = vrot.slane %v724, 7
        %v757 = vrot.slane %v725, 7
        %v758 = vrot.slane %v726, 7
        %v759 = vrot.slane %v727, 7
        %v760 = vrot.slane %v728, 7
        %v761 = vrot.slane %v729, 7
        %v762 = vlaneseq
        %v763 = vshrl.u32 %v762, 7
        %vm764 = vcmp.lt.s32.totalorder %v763, 1
        %v765 = vsel %vm764, %v760, %v761
        %v766 = vsel %vm764, %v759, %v760
        %v767 = vsel %vm764, %v758, %v759
        %v768 = vsel %vm764, %v757, %v758
        %v769 = vsel %vm764, %v756, %v757
        %v770 = vsel %vm764, %v755, %v756
        %v771 = vsel %vm764, %v754, %v755
        %v772 = vsel %vm764, %v753, %v754
        %v773 = vsel %vm764, %v752, %v753
        %v774 = vsel %vm764, %v751, %v752
        %v775 = vsel %vm764, %v750, %v751
        %v776 = vsel %vm764, %v749, %v750
        %v777 = vsel %vm764, %v748, %v749
        %v778 = vsel %vm764, %v747, %v748
        %v779 = vsel %vm764, %v746, %v747
        %v780 = vsel %vm764, %v745, %v746
        %v781 = vsel %vm764, %v744, %v745
        %v782 = vsel %vm764, %v743, %v744
        %v783 = vsel %vm764, %v742, %v743
        %v784 = vsel %vm764, %v741, %v742
        %v785 = vsel %vm764, %v740, %v741
        %v786 = vsel %vm764, %v739, %v740
        %v787 = vsel %vm764, %v738, %v739
        %v788 = vsel %vm764, %v737, %v738
        %v789 = vsel %vm764, %v736, %v737
        %v790 = vsel %vm764, %v735, %v736
        %v791 = vsel %vm764, %v734, %v735
        %v792 = vsel %vm764, %v733, %v734
        %v793 = vsel %vm764, %v732, %v733
        %v794 = vsel %vm764, %v731, %v732
        %v795 = vsel %vm764, %v730, %v731
        %v796 = vsel %vm764, %v761, %v730
        %798 = vset.pattern.permute.xlu0 0
        %799 = vperm.xlu0 %798, %v410
        %v800 = vpop.permute.xlu0 %799
        %803 = vset.pattern.permute.xlu0 0
        %804 = vperm.xlu0 %803, %v411
        %v805 = vpop.permute.xlu0 %804
        %808 = vset.pattern.permute.xlu0 0
        %809 = vperm.xlu0 %808, %v412
        %v810 = vpop.permute.xlu0 %809
        %813 = vset.pattern.permute.xlu0 0
        %814 = vperm.xlu0 %813, %v413
        %v815 = vpop.permute.xlu0 %814
        %818 = vset.pattern.permute.xlu0 0
        %819 = vperm.xlu0 %818, %v414
        %v820 = vpop.permute.xlu0 %819
        %823 = vset.pattern.permute.xlu0 0
        %824 = vperm.xlu0 %823, %v415
        %v825 = vpop.permute.xlu0 %824
        %828 = vset.pattern.permute.xlu0 0
        %829 = vperm.xlu0 %828, %v416
        %v830 = vpop.permute.xlu0 %829
        %833 = vset.pattern.permute.xlu0 0
        %834 = vperm.xlu0 %833, %v417
        %v835 = vpop.permute.xlu0 %834
        %838 = vset.pattern.permute.xlu0 0
        %839 = vperm.xlu0 %838, %v418
        %v840 = vpop.permute.xlu0 %839
        %843 = vset.pattern.permute.xlu0 0
        %844 = vperm.xlu0 %843, %v419
        %v845 = vpop.permute.xlu0 %844
        %848 = vset.pattern.permute.xlu0 0
        %849 = vperm.xlu0 %848, %v420
        %v850 = vpop.permute.xlu0 %849
        %853 = vset.pattern.permute.xlu0 0
        %854 = vperm.xlu0 %853, %v421
        %v855 = vpop.permute.xlu0 %854
        %858 = vset.pattern.permute.xlu0 0
        %859 = vperm.xlu0 %858, %v422
        %v860 = vpop.permute.xlu0 %859
        %863 = vset.pattern.permute.xlu0 0
        %864 = vperm.xlu0 %863, %v423
        %v865 = vpop.permute.xlu0 %864
        %868 = vset.pattern.permute.xlu0 0
        %869 = vperm.xlu0 %868, %v424
        %v870 = vpop.permute.xlu0 %869
        %873 = vset.pattern.permute.xlu0 0
        %874 = vperm.xlu0 %873, %v425
        %v875 = vpop.permute.xlu0 %874
        %878 = vset.pattern.permute.xlu0 0
        %879 = vperm.xlu0 %878, %v426
        %v880 = vpop.permute.xlu0 %879
        %883 = vset.pattern.permute.xlu0 0
        %884 = vperm.xlu0 %883, %v427
        %v885 = vpop.permute.xlu0 %884
        %888 = vset.pattern.permute.xlu0 0
        %889 = vperm.xlu0 %888, %v428
        %v890 = vpop.permute.xlu0 %889
        %893 = vset.pattern.permute.xlu0 0
        %894 = vperm.xlu0 %893, %v429
        %v895 = vpop.permute.xlu0 %894
        %898 = vset.pattern.permute.xlu0 0
        %899 = vperm.xlu0 %898, %v430
        %v900 = vpop.permute.xlu0 %899
        %903 = vset.pattern.permute.xlu0 0
        %904 = vperm.xlu0 %903, %v431
        %v905 = vpop.permute.xlu0 %904
        %908 = vset.pattern.permute.xlu0 0
        %909 = vperm.xlu0 %908, %v432
        %v910 = vpop.permute.xlu0 %909
        %913 = vset.pattern.permute.xlu0 0
        %914 = vperm.xlu0 %913, %v433
        %v915 = vpop.permute.xlu0 %914
        %918 = vset.pattern.permute.xlu0 0
        %919 = vperm.xlu0 %918, %v434
        %v920 = vpop.permute.xlu0 %919
        %923 = vset.pattern.permute.xlu0 0
        %924 = vperm.xlu0 %923, %v435
        %v925 = vpop.permute.xlu0 %924
        %928 = vset.pattern.permute.xlu0 0
        %929 = vperm.xlu0 %928, %v436
        %v930 = vpop.permute.xlu0 %929
        %933 = vset.pattern.permute.xlu0 0
        %934 = vperm.xlu0 %933, %v437
        %v935 = vpop.permute.xlu0 %934
        %938 = vset.pattern.permute.xlu0 0
        %939 = vperm.xlu0 %938, %v438
        %v940 = vpop.permute.xlu0 %939
        %943 = vset.pattern.permute.xlu0 0
        %944 = vperm.xlu0 %943, %v439
        %v945 = vpop.permute.xlu0 %944
        %948 = vset.pattern.permute.xlu0 0
        %949 = vperm.xlu0 %948, %v440
        %v950 = vpop.permute.xlu0 %949
        %953 = vset.pattern.permute.xlu0 0
        %954 = vperm.xlu0 %953, %v441
        %v955 = vpop.permute.xlu0 %954
        %v957 = vmul.f32 %v766, %v800
        %v958 = vmul.f32 %v765, %v805
        %v959 = vmul.f32 %v796, %v810
        %v960 = vmul.f32 %v795, %v815
        %v961 = vmul.f32 %v794, %v820
        %v962 = vmul.f32 %v793, %v825
        %v963 = vmul.f32 %v792, %v830
        %v964 = vmul.f32 %v791, %v835
        %v965 = vmul.f32 %v790, %v840
        %v966 = vmul.f32 %v789, %v845
        %v967 = vmul.f32 %v788, %v850
        %v968 = vmul.f32 %v787, %v855
        %v969 = vmul.f32 %v786, %v860
        %v970 = vmul.f32 %v785, %v865
        %v971 = vmul.f32 %v784, %v870
        %v972 = vmul.f32 %v783, %v875
        %v973 = vmul.f32 %v782, %v880
        %v974 = vmul.f32 %v781, %v885
        %v975 = vmul.f32 %v780, %v890
        %v976 = vmul.f32 %v779, %v895
        %v977 = vmul.f32 %v778, %v900
        %v978 = vmul.f32 %v777, %v905
        %v979 = vmul.f32 %v776, %v910
        %v980 = vmul.f32 %v775, %v915
        %v981 = vmul.f32 %v774, %v920
        %v982 = vmul.f32 %v773, %v925
        %v983 = vmul.f32 %v772, %v930
        %v984 = vmul.f32 %v771, %v935
        %v985 = vmul.f32 %v770, %v940
        %v986 = vmul.f32 %v769, %v945
        %v987 = vmul.f32 %v768, %v950
        %v988 = vmul.f32 %v767, %v955
        %989 = vset.pattern.permute.xlu0 0
        %990 = vperm.xlu0 %989, %v250
        %v991 = vpop.permute.xlu0 %990
        %993 = vset.pattern.permute.xlu0 0
        %994 = vperm.xlu0 %993, %v251
        %v995 = vpop.permute.xlu0 %994
        %997 = vset.pattern.permute.xlu0 0
        %998 = vperm.xlu0 %997, %v252
        %v999 = vpop.permute.xlu0 %998
        %1001 = vset.pattern.permute.xlu0 0
        %1002 = vperm.xlu0 %1001, %v253
        %v1003 = vpop.permute.xlu0 %1002
        %1005 = vset.pattern.permute.xlu0 0
        %1006 = vperm.xlu0 %1005, %v254
        %v1007 = vpop.permute.xlu0 %1006
        %1009 = vset.pattern.permute.xlu0 0
        %1010 = vperm.xlu0 %1009, %v255
        %v1011 = vpop.permute.xlu0 %1010
        %1013 = vset.pattern.permute.xlu0 0
        %1014 = vperm.xlu0 %1013, %v256
        %v1015 = vpop.permute.xlu0 %1014
        %1017 = vset.pattern.permute.xlu0 0
        %1018 = vperm.xlu0 %1017, %v257
        %v1019 = vpop.permute.xlu0 %1018
        %1021 = vset.pattern.permute.xlu0 0
        %1022 = vperm.xlu0 %1021, %v258
        %v1023 = vpop.permute.xlu0 %1022
        %1025 = vset.pattern.permute.xlu0 0
        %1026 = vperm.xlu0 %1025, %v259
        %v1027 = vpop.permute.xlu0 %1026
        %1029 = vset.pattern.permute.xlu0 0
        %1030 = vperm.xlu0 %1029, %v260
        %v1031 = vpop.permute.xlu0 %1030
        %1033 = vset.pattern.permute.xlu0 0
        %1034 = vperm.xlu0 %1033, %v261
        %v1035 = vpop.permute.xlu0 %1034
        %1037 = vset.pattern.permute.xlu0 0
        %1038 = vperm.xlu0 %1037, %v262
        %v1039 = vpop.permute.xlu0 %1038
        %1041 = vset.pattern.permute.xlu0 0
        %1042 = vperm.xlu0 %1041, %v263
        %v1043 = vpop.permute.xlu0 %1042
        %1045 = vset.pattern.permute.xlu0 0
        %1046 = vperm.xlu0 %1045, %v264
        %v1047 = vpop.permute.xlu0 %1046
        %1049 = vset.pattern.permute.xlu0 0
        %1050 = vperm.xlu0 %1049, %v265
        %v1051 = vpop.permute.xlu0 %1050
        %1053 = vset.pattern.permute.xlu0 0
        %1054 = vperm.xlu0 %1053, %v266
        %v1055 = vpop.permute.xlu0 %1054
        %1057 = vset.pattern.permute.xlu0 0
        %1058 = vperm.xlu0 %1057, %v267
        %v1059 = vpop.permute.xlu0 %1058
        %1061 = vset.pattern.permute.xlu0 0
        %1062 = vperm.xlu0 %1061, %v268
        %v1063 = vpop.permute.xlu0 %1062
        %1065 = vset.pattern.permute.xlu0 0
        %1066 = vperm.xlu0 %1065, %v269
        %v1067 = vpop.permute.xlu0 %1066
        %1069 = vset.pattern.permute.xlu0 0
        %1070 = vperm.xlu0 %1069, %v270
        %v1071 = vpop.permute.xlu0 %1070
        %1073 = vset.pattern.permute.xlu0 0
        %1074 = vperm.xlu0 %1073, %v271
        %v1075 = vpop.permute.xlu0 %1074
        %1077 = vset.pattern.permute.xlu0 0
        %1078 = vperm.xlu0 %1077, %v272
        %v1079 = vpop.permute.xlu0 %1078
        %1081 = vset.pattern.permute.xlu0 0
        %1082 = vperm.xlu0 %1081, %v273
        %v1083 = vpop.permute.xlu0 %1082
        %1085 = vset.pattern.permute.xlu0 0
        %1086 = vperm.xlu0 %1085, %v274
        %v1087 = vpop.permute.xlu0 %1086
        %1089 = vset.pattern.permute.xlu0 0
        %1090 = vperm.xlu0 %1089, %v275
        %v1091 = vpop.permute.xlu0 %1090
        %1093 = vset.pattern.permute.xlu0 0
        %1094 = vperm.xlu0 %1093, %v276
        %v1095 = vpop.permute.xlu0 %1094
        %1097 = vset.pattern.permute.xlu0 0
        %1098 = vperm.xlu0 %1097, %v277
        %v1099 = vpop.permute.xlu0 %1098
        %1101 = vset.pattern.permute.xlu0 0
        %1102 = vperm.xlu0 %1101, %v278
        %v1103 = vpop.permute.xlu0 %1102
        %1105 = vset.pattern.permute.xlu0 0
        %1106 = vperm.xlu0 %1105, %v279
        %v1107 = vpop.permute.xlu0 %1106
        %1109 = vset.pattern.permute.xlu0 0
        %1110 = vperm.xlu0 %1109, %v280
        %v1111 = vpop.permute.xlu0 %1110
        %1113 = vset.pattern.permute.xlu0 0
        %1114 = vperm.xlu0 %1113, %v281
        %v1115 = vpop.permute.xlu0 %1114
        %v1117 = vmul.f32 %v728, %v991
        %v1118 = vmul.f32 %v729, %v995
        %v1119 = vmul.f32 %v698, %v999
        %v1120 = vmul.f32 %v699, %v1003
        %v1121 = vmul.f32 %v700, %v1007
        %v1122 = vmul.f32 %v701, %v1011
        %v1123 = vmul.f32 %v702, %v1015
        %v1124 = vmul.f32 %v703, %v1019
        %v1125 = vmul.f32 %v704, %v1023
        %v1126 = vmul.f32 %v705, %v1027
        %v1127 = vmul.f32 %v706, %v1031
        %v1128 = vmul.f32 %v707, %v1035
        %v1129 = vmul.f32 %v708, %v1039
        %v1130 = vmul.f32 %v709, %v1043
        %v1131 = vmul.f32 %v710, %v1047
        %v1132 = vmul.f32 %v711, %v1051
        %v1133 = vmul.f32 %v712, %v1055
        %v1134 = vmul.f32 %v713, %v1059
        %v1135 = vmul.f32 %v714, %v1063
        %v1136 = vmul.f32 %v715, %v1067
        %v1137 = vmul.f32 %v716, %v1071
        %v1138 = vmul.f32 %v717, %v1075
        %v1139 = vmul.f32 %v718, %v1079
        %v1140 = vmul.f32 %v719, %v1083
        %v1141 = vmul.f32 %v720, %v1087
        %v1142 = vmul.f32 %v721, %v1091
        %v1143 = vmul.f32 %v722, %v1095
        %v1144 = vmul.f32 %v723, %v1099
        %v1145 = vmul.f32 %v724, %v1103
        %v1146 = vmul.f32 %v725, %v1107
        %v1147 = vmul.f32 %v726, %v1111
        %v1148 = vmul.f32 %v727, %v1115
        %v1149 = vrot.slane %v698, 1
        %v1150 = vrot.slane %v699, 1
        %v1151 = vrot.slane %v700, 1
        %v1152 = vrot.slane %v701, 1
        %v1153 = vrot.slane %v702, 1
        %v1154 = vrot.slane %v703, 1
        %v1155 = vrot.slane %v704, 1
        %v1156 = vrot.slane %v705, 1
        %v1157 = vrot.slane %v706, 1
        %v1158 = vrot.slane %v707, 1
        %v1159 = vrot.slane %v708, 1
        %v1160 = vrot.slane %v709, 1
        %v1161 = vrot.slane %v710, 1
        %v1162 = vrot.slane %v711, 1
        %v1163 = vrot.slane %v712, 1
        %v1164 = vrot.slane %v713, 1
        %v1165 = vrot.slane %v714, 1
        %v1166 = vrot.slane %v715, 1
        %v1167 = vrot.slane %v716, 1
        %v1168 = vrot.slane %v717, 1
        %v1169 = vrot.slane %v718, 1
        %v1170 = vrot.slane %v719, 1
        %v1171 = vrot.slane %v720, 1
        %v1172 = vrot.slane %v721, 1
        %v1173 = vrot.slane %v722, 1
        %v1174 = vrot.slane %v723, 1
        %v1175 = vrot.slane %v724, 1
        %v1176 = vrot.slane %v725, 1
        %v1177 = vrot.slane %v726, 1
        %v1178 = vrot.slane %v727, 1
        %v1179 = vrot.slane %v728, 1
        %v1180 = vrot.slane %v729, 1
        %vm1181 = vcmp.lt.s32.totalorder %v763, 7
        %v1182 = vsel %vm1181, %v1179, %v1180
        %v1183 = vsel %vm1181, %v1178, %v1179
        %v1184 = vsel %vm1181, %v1177, %v1178
        %v1185 = vsel %vm1181, %v1176, %v1177
        %v1186 = vsel %vm1181, %v1175, %v1176
        %v1187 = vsel %vm1181, %v1174, %v1175
        %v1188 = vsel %vm1181, %v1173, %v1174
        %v1189 = vsel %vm1181, %v1172, %v1173
        %v1190 = vsel %vm1181, %v1171, %v1172
        %v1191 = vsel %vm1181, %v1170, %v1171
        %v1192 = vsel %vm1181, %v1169, %v1170
        %v1193 = vsel %vm1181, %v1168, %v1169
        %v1194 = vsel %vm1181, %v1167, %v1168
        %v1195 = vsel %vm1181, %v1166, %v1167
        %v1196 = vsel %vm1181, %v1165, %v1166
        %v1197 = vsel %vm1181, %v1164, %v1165
        %v1198 = vsel %vm1181, %v1163, %v1164
        %v1199 = vsel %vm1181, %v1162, %v1163
        %v1200 = vsel %vm1181, %v1161, %v1162
        %v1201 = vsel %vm1181, %v1160, %v1161
        %v1202 = vsel %vm1181, %v1159, %v1160
        %v1203 = vsel %vm1181, %v1158, %v1159
        %v1204 = vsel %vm1181, %v1157, %v1158
        %v1205 = vsel %vm1181, %v1156, %v1157
        %v1206 = vsel %vm1181, %v1155, %v1156
        %v1207 = vsel %vm1181, %v1154, %v1155
        %v1208 = vsel %vm1181, %v1153, %v1154
        %v1209 = vsel %vm1181, %v1152, %v1153
        %v1210 = vsel %vm1181, %v1151, %v1152
        %v1211 = vsel %vm1181, %v1150, %v1151
        %v1212 = vsel %vm1181, %v1149, %v1150
        %v1213 = vsel %vm1181, %v1180, %v1149
        %1215 = vset.pattern.permute.xlu0 0
        %1216 = vperm.xlu0 %1215, %v538
        %v1217 = vpop.permute.xlu0 %1216
        %1220 = vset.pattern.permute.xlu0 0
        %1221 = vperm.xlu0 %1220, %v539
        %v1222 = vpop.permute.xlu0 %1221
        %1225 = vset.pattern.permute.xlu0 0
        %1226 = vperm.xlu0 %1225, %v540
        %v1227 = vpop.permute.xlu0 %1226
        %1230 = vset.pattern.permute.xlu0 0
        %1231 = vperm.xlu0 %1230, %v541
        %v1232 = vpop.permute.xlu0 %1231
        %1235 = vset.pattern.permute.xlu0 0
        %1236 = vperm.xlu0 %1235, %v542
        %v1237 = vpop.permute.xlu0 %1236
        %1240 = vset.pattern.permute.xlu0 0
        %1241 = vperm.xlu0 %1240, %v543
        %v1242 = vpop.permute.xlu0 %1241
        %1245 = vset.pattern.permute.xlu0 0
        %1246 = vperm.xlu0 %1245, %v544
        %v1247 = vpop.permute.xlu0 %1246
        %1250 = vset.pattern.permute.xlu0 0
        %1251 = vperm.xlu0 %1250, %v545
        %v1252 = vpop.permute.xlu0 %1251
        %1255 = vset.pattern.permute.xlu0 0
        %1256 = vperm.xlu0 %1255, %v546
        %v1257 = vpop.permute.xlu0 %1256
        %1260 = vset.pattern.permute.xlu0 0
        %1261 = vperm.xlu0 %1260, %v547
        %v1262 = vpop.permute.xlu0 %1261
        %1265 = vset.pattern.permute.xlu0 0
        %1266 = vperm.xlu0 %1265, %v548
        %v1267 = vpop.permute.xlu0 %1266
        %1270 = vset.pattern.permute.xlu0 0
        %1271 = vperm.xlu0 %1270, %v549
        %v1272 = vpop.permute.xlu0 %1271
        %1275 = vset.pattern.permute.xlu0 0
        %1276 = vperm.xlu0 %1275, %v550
        %v1277 = vpop.permute.xlu0 %1276
        %1280 = vset.pattern.permute.xlu0 0
        %1281 = vperm.xlu0 %1280, %v551
        %v1282 = vpop.permute.xlu0 %1281
        %1285 = vset.pattern.permute.xlu0 0
        %1286 = vperm.xlu0 %1285, %v552
        %v1287 = vpop.permute.xlu0 %1286
        %1290 = vset.pattern.permute.xlu0 0
        %1291 = vperm.xlu0 %1290, %v553
        %v1292 = vpop.permute.xlu0 %1291
        %1295 = vset.pattern.permute.xlu0 0
        %1296 = vperm.xlu0 %1295, %v554
        %v1297 = vpop.permute.xlu0 %1296
        %1300 = vset.pattern.permute.xlu0 0
        %1301 = vperm.xlu0 %1300, %v555
        %v1302 = vpop.permute.xlu0 %1301
        %1305 = vset.pattern.permute.xlu0 0
        %1306 = vperm.xlu0 %1305, %v556
        %v1307 = vpop.permute.xlu0 %1306
        %1310 = vset.pattern.permute.xlu0 0
        %1311 = vperm.xlu0 %1310, %v557
        %v1312 = vpop.permute.xlu0 %1311
        %1315 = vset.pattern.permute.xlu0 0
        %1316 = vperm.xlu0 %1315, %v558
        %v1317 = vpop.permute.xlu0 %1316
        %1320 = vset.pattern.permute.xlu0 0
        %1321 = vperm.xlu0 %1320, %v559
        %v1322 = vpop.permute.xlu0 %1321
        %1325 = vset.pattern.permute.xlu0 0
        %1326 = vperm.xlu0 %1325, %v560
        %v1327 = vpop.permute.xlu0 %1326
        %1330 = vset.pattern.permute.xlu0 0
        %1331 = vperm.xlu0 %1330, %v561
        %v1332 = vpop.permute.xlu0 %1331
        %1335 = vset.pattern.permute.xlu0 0
        %1336 = vperm.xlu0 %1335, %v562
        %v1337 = vpop.permute.xlu0 %1336
        %1340 = vset.pattern.permute.xlu0 0
        %1341 = vperm.xlu0 %1340, %v563
        %v1342 = vpop.permute.xlu0 %1341
        %1345 = vset.pattern.permute.xlu0 0
        %1346 = vperm.xlu0 %1345, %v564
        %v1347 = vpop.permute.xlu0 %1346
        %1350 = vset.pattern.permute.xlu0 0
        %1351 = vperm.xlu0 %1350, %v565
        %v1352 = vpop.permute.xlu0 %1351
        %1355 = vset.pattern.permute.xlu0 0
        %1356 = vperm.xlu0 %1355, %v566
        %v1357 = vpop.permute.xlu0 %1356
        %1360 = vset.pattern.permute.xlu0 0
        %1361 = vperm.xlu0 %1360, %v567
        %v1362 = vpop.permute.xlu0 %1361
        %1365 = vset.pattern.permute.xlu0 0
        %1366 = vperm.xlu0 %1365, %v568
        %v1367 = vpop.permute.xlu0 %1366
        %1370 = vset.pattern.permute.xlu0 0
        %1371 = vperm.xlu0 %1370, %v569
        %v1372 = vpop.permute.xlu0 %1371
        %v1374 = vmul.f32 %v1182, %v1217
        %v1375 = vmul.f32 %v1213, %v1222
        %v1376 = vmul.f32 %v1212, %v1227
        %v1377 = vmul.f32 %v1211, %v1232
        %v1378 = vmul.f32 %v1210, %v1237
        %v1379 = vmul.f32 %v1209, %v1242
        %v1380 = vmul.f32 %v1208, %v1247
        %v1381 = vmul.f32 %v1207, %v1252
        %v1382 = vmul.f32 %v1206, %v1257
        %v1383 = vmul.f32 %v1205, %v1262
        %v1384 = vmul.f32 %v1204, %v1267
        %v1385 = vmul.f32 %v1203, %v1272
        %v1386 = vmul.f32 %v1202, %v1277
        %v1387 = vmul.f32 %v1201, %v1282
        %v1388 = vmul.f32 %v1200, %v1287
        %v1389 = vmul.f32 %v1199, %v1292
        %v1390 = vmul.f32 %v1198, %v1297
        %v1391 = vmul.f32 %v1197, %v1302
        %v1392 = vmul.f32 %v1196, %v1307
        %v1393 = vmul.f32 %v1195, %v1312
        %v1394 = vmul.f32 %v1194, %v1317
        %v1395 = vmul.f32 %v1193, %v1322
        %v1396 = vmul.f32 %v1192, %v1327
        %v1397 = vmul.f32 %v1191, %v1332
        %v1398 = vmul.f32 %v1190, %v1337
        %v1399 = vmul.f32 %v1189, %v1342
        %v1400 = vmul.f32 %v1188, %v1347
        %v1401 = vmul.f32 %v1187, %v1352
        %v1402 = vmul.f32 %v1186, %v1357
        %v1403 = vmul.f32 %v1185, %v1362
        %v1404 = vmul.f32 %v1184, %v1367
        %v1405 = vmul.f32 %v1183, %v1372
        %1406 = vset.pattern.permute.xlu0 2
        %1407 = vperm.xlu0 %1406, %v250
        %v1408 = vpop.permute.xlu0 %1407
        %1410 = vset.pattern.permute.xlu0 2
        %1411 = vperm.xlu0 %1410, %v251
        %v1412 = vpop.permute.xlu0 %1411
        %1414 = vset.pattern.permute.xlu0 2
        %1415 = vperm.xlu0 %1414, %v252
        %v1416 = vpop.permute.xlu0 %1415
        %1418 = vset.pattern.permute.xlu0 2
        %1419 = vperm.xlu0 %1418, %v253
        %v1420 = vpop.permute.xlu0 %1419
        %1422 = vset.pattern.permute.xlu0 2
        %1423 = vperm.xlu0 %1422, %v254
        %v1424 = vpop.permute.xlu0 %1423
        %1426 = vset.pattern.permute.xlu0 2
        %1427 = vperm.xlu0 %1426, %v255
        %v1428 = vpop.permute.xlu0 %1427
        %1430 = vset.pattern.permute.xlu0 2
        %1431 = vperm.xlu0 %1430, %v256
        %v1432 = vpop.permute.xlu0 %1431
        %1434 = vset.pattern.permute.xlu0 2
        %1435 = vperm.xlu0 %1434, %v257
        %v1436 = vpop.permute.xlu0 %1435
        %1438 = vset.pattern.permute.xlu0 2
        %1439 = vperm.xlu0 %1438, %v258
        %v1440 = vpop.permute.xlu0 %1439
        %1442 = vset.pattern.permute.xlu0 2
        %1443 = vperm.xlu0 %1442, %v259
        %v1444 = vpop.permute.xlu0 %1443
        %1446 = vset.pattern.permute.xlu0 2
        %1447 = vperm.xlu0 %1446, %v260
        %v1448 = vpop.permute.xlu0 %1447
        %1450 = vset.pattern.permute.xlu0 2
        %1451 = vperm.xlu0 %1450, %v261
        %v1452 = vpop.permute.xlu0 %1451
        %1454 = vset.pattern.permute.xlu0 2
        %1455 = vperm.xlu0 %1454, %v262
        %v1456 = vpop.permute.xlu0 %1455
        %1458 = vset.pattern.permute.xlu0 2
        %1459 = vperm.xlu0 %1458, %v263
        %v1460 = vpop.permute.xlu0 %1459
        %1462 = vset.pattern.permute.xlu0 2
        %1463 = vperm.xlu0 %1462, %v264
        %v1464 = vpop.permute.xlu0 %1463
        %1466 = vset.pattern.permute.xlu0 2
        %1467 = vperm.xlu0 %1466, %v265
        %v1468 = vpop.permute.xlu0 %1467
        %1470 = vset.pattern.permute.xlu0 2
        %1471 = vperm.xlu0 %1470, %v266
        %v1472 = vpop.permute.xlu0 %1471
        %1474 = vset.pattern.permute.xlu0 2
        %1475 = vperm.xlu0 %1474, %v267
        %v1476 = vpop.permute.xlu0 %1475
        %1478 = vset.pattern.permute.xlu0 2
        %1479 = vperm.xlu0 %1478, %v268
        %v1480 = vpop.permute.xlu0 %1479
        %1482 = vset.pattern.permute.xlu0 2
        %1483 = vperm.xlu0 %1482, %v269
        %v1484 = vpop.permute.xlu0 %1483
        %1486 = vset.pattern.permute.xlu0 2
        %1487 = vperm.xlu0 %1486, %v270
        %v1488 = vpop.permute.xlu0 %1487
        %1490 = vset.pattern.permute.xlu0 2
        %1491 = vperm.xlu0 %1490, %v271
        %v1492 = vpop.permute.xlu0 %1491
        %1494 = vset.pattern.permute.xlu0 2
        %1495 = vperm.xlu0 %1494, %v272
        %v1496 = vpop.permute.xlu0 %1495
        %1498 = vset.pattern.permute.xlu0 2
        %1499 = vperm.xlu0 %1498, %v273
        %v1500 = vpop.permute.xlu0 %1499
        %1502 = vset.pattern.permute.xlu0 2
        %1503 = vperm.xlu0 %1502, %v274
        %v1504 = vpop.permute.xlu0 %1503
        %1506 = vset.pattern.permute.xlu0 2
        %1507 = vperm.xlu0 %1506, %v275
        %v1508 = vpop.permute.xlu0 %1507
        %1510 = vset.pattern.permute.xlu0 2
        %1511 = vperm.xlu0 %1510, %v276
        %v1512 = vpop.permute.xlu0 %1511
        %1514 = vset.pattern.permute.xlu0 2
        %1515 = vperm.xlu0 %1514, %v277
        %v1516 = vpop.permute.xlu0 %1515
        %1518 = vset.pattern.permute.xlu0 2
        %1519 = vperm.xlu0 %1518, %v278
        %v1520 = vpop.permute.xlu0 %1519
        %1522 = vset.pattern.permute.xlu0 2
        %1523 = vperm.xlu0 %1522, %v279
        %v1524 = vpop.permute.xlu0 %1523
        %1526 = vset.pattern.permute.xlu0 2
        %1527 = vperm.xlu0 %1526, %v280
        %v1528 = vpop.permute.xlu0 %1527
        %1530 = vset.pattern.permute.xlu0 2
        %1531 = vperm.xlu0 %1530, %v281
        %v1532 = vpop.permute.xlu0 %1531
        %v1534 = vmul.f32 %v796, %v1408
        %v1535 = vmul.f32 %v795, %v1412
        %v1536 = vmul.f32 %v794, %v1416
        %v1537 = vmul.f32 %v793, %v1420
        %v1538 = vmul.f32 %v792, %v1424
        %v1539 = vmul.f32 %v791, %v1428
        %v1540 = vmul.f32 %v790, %v1432
        %v1541 = vmul.f32 %v789, %v1436
        %v1542 = vmul.f32 %v788, %v1440
        %v1543 = vmul.f32 %v787, %v1444
        %v1544 = vmul.f32 %v786, %v1448
        %v1545 = vmul.f32 %v785, %v1452
        %v1546 = vmul.f32 %v784, %v1456
        %v1547 = vmul.f32 %v783, %v1460
        %v1548 = vmul.f32 %v782, %v1464
        %v1549 = vmul.f32 %v781, %v1468
        %v1550 = vmul.f32 %v780, %v1472
        %v1551 = vmul.f32 %v779, %v1476
        %v1552 = vmul.f32 %v778, %v1480
        %v1553 = vmul.f32 %v777, %v1484
        %v1554 = vmul.f32 %v776, %v1488
        %v1555 = vmul.f32 %v775, %v1492
        %v1556 = vmul.f32 %v774, %v1496
        %v1557 = vmul.f32 %v773, %v1500
        %v1558 = vmul.f32 %v772, %v1504
        %v1559 = vmul.f32 %v771, %v1508
        %v1560 = vmul.f32 %v770, %v1512
        %v1561 = vmul.f32 %v769, %v1516
        %v1562 = vmul.f32 %v768, %v1520
        %v1563 = vmul.f32 %v767, %v1524
        %v1564 = vmul.f32 %v766, %v1528
        %v1565 = vmul.f32 %v765, %v1532
        %1566 = vset.pattern.permute.xlu0 3
        %1567 = vperm.xlu0 %1566, %v250
        %v1568 = vpop.permute.xlu0 %1567
        %1570 = vset.pattern.permute.xlu0 3
        %1571 = vperm.xlu0 %1570, %v251
        %v1572 = vpop.permute.xlu0 %1571
        %1574 = vset.pattern.permute.xlu0 3
        %1575 = vperm.xlu0 %1574, %v252
        %v1576 = vpop.permute.xlu0 %1575
        %1578 = vset.pattern.permute.xlu0 3
        %1579 = vperm.xlu0 %1578, %v253
        %v1580 = vpop.permute.xlu0 %1579
        %1582 = vset.pattern.permute.xlu0 3
        %1583 = vperm.xlu0 %1582, %v254
        %v1584 = vpop.permute.xlu0 %1583
        %1586 = vset.pattern.permute.xlu0 3
        %1587 = vperm.xlu0 %1586, %v255
        %v1588 = vpop.permute.xlu0 %1587
        %1590 = vset.pattern.permute.xlu0 3
        %1591 = vperm.xlu0 %1590, %v256
        %v1592 = vpop.permute.xlu0 %1591
        %1594 = vset.pattern.permute.xlu0 3
        %1595 = vperm.xlu0 %1594, %v257
        %v1596 = vpop.permute.xlu0 %1595
        %1598 = vset.pattern.permute.xlu0 3
        %1599 = vperm.xlu0 %1598, %v258
        %v1600 = vpop.permute.xlu0 %1599
        %1602 = vset.pattern.permute.xlu0 3
        %1603 = vperm.xlu0 %1602, %v259
        %v1604 = vpop.permute.xlu0 %1603
        %1606 = vset.pattern.permute.xlu0 3
        %1607 = vperm.xlu0 %1606, %v260
        %v1608 = vpop.permute.xlu0 %1607
        %1610 = vset.pattern.permute.xlu0 3
        %1611 = vperm.xlu0 %1610, %v261
        %v1612 = vpop.permute.xlu0 %1611
        %1614 = vset.pattern.permute.xlu0 3
        %1615 = vperm.xlu0 %1614, %v262
        %v1616 = vpop.permute.xlu0 %1615
        %1618 = vset.pattern.permute.xlu0 3
        %1619 = vperm.xlu0 %1618, %v263
        %v1620 = vpop.permute.xlu0 %1619
        %1622 = vset.pattern.permute.xlu0 3
        %1623 = vperm.xlu0 %1622, %v264
        %v1624 = vpop.permute.xlu0 %1623
        %1626 = vset.pattern.permute.xlu0 3
        %1627 = vperm.xlu0 %1626, %v265
        %v1628 = vpop.permute.xlu0 %1627
        %1630 = vset.pattern.permute.xlu0 3
        %1631 = vperm.xlu0 %1630, %v266
        %v1632 = vpop.permute.xlu0 %1631
        %1634 = vset.pattern.permute.xlu0 3
        %1635 = vperm.xlu0 %1634, %v267
        %v1636 = vpop.permute.xlu0 %1635
        %1638 = vset.pattern.permute.xlu0 3
        %1639 = vperm.xlu0 %1638, %v268
        %v1640 = vpop.permute.xlu0 %1639
        %1642 = vset.pattern.permute.xlu0 3
        %1643 = vperm.xlu0 %1642, %v269
        %v1644 = vpop.permute.xlu0 %1643
        %1646 = vset.pattern.permute.xlu0 3
        %1647 = vperm.xlu0 %1646, %v270
        %v1648 = vpop.permute.xlu0 %1647
        %1650 = vset.pattern.permute.xlu0 3
        %1651 = vperm.xlu0 %1650, %v271
        %v1652 = vpop.permute.xlu0 %1651
        %1654 = vset.pattern.permute.xlu0 3
        %1655 = vperm.xlu0 %1654, %v272
        %v1656 = vpop.permute.xlu0 %1655
        %1658 = vset.pattern.permute.xlu0 3
        %1659 = vperm.xlu0 %1658, %v273
        %v1660 = vpop.permute.xlu0 %1659
        %1662 = vset.pattern.permute.xlu0 3
        %1663 = vperm.xlu0 %1662, %v274
        %v1664 = vpop.permute.xlu0 %1663
        %1666 = vset.pattern.permute.xlu0 3
        %1667 = vperm.xlu0 %1666, %v275
        %v1668 = vpop.permute.xlu0 %1667
        %1670 = vset.pattern.permute.xlu0 3
        %1671 = vperm.xlu0 %1670, %v276
        %v1672 = vpop.permute.xlu0 %1671
        %1674 = vset.pattern.permute.xlu0 3
        %1675 = vperm.xlu0 %1674, %v277
        %v1676 = vpop.permute.xlu0 %1675
        %1678 = vset.pattern.permute.xlu0 3
        %1679 = vperm.xlu0 %1678, %v278
        %v1680 = vpop.permute.xlu0 %1679
        %1682 = vset.pattern.permute.xlu0 3
        %1683 = vperm.xlu0 %1682, %v279
        %v1684 = vpop.permute.xlu0 %1683
        %1686 = vset.pattern.permute.xlu0 3
        %1687 = vperm.xlu0 %1686, %v280
        %v1688 = vpop.permute.xlu0 %1687
        %1690 = vset.pattern.permute.xlu0 3
        %1691 = vperm.xlu0 %1690, %v281
        %v1692 = vpop.permute.xlu0 %1691
        %v1694 = vmul.f32 %v1212, %v1568
        %v1695 = vmul.f32 %v1211, %v1572
        %v1696 = vmul.f32 %v1210, %v1576
        %v1697 = vmul.f32 %v1209, %v1580
        %v1698 = vmul.f32 %v1208, %v1584
        %v1699 = vmul.f32 %v1207, %v1588
        %v1700 = vmul.f32 %v1206, %v1592
        %v1701 = vmul.f32 %v1205, %v1596
        %v1702 = vmul.f32 %v1204, %v1600
        %v1703 = vmul.f32 %v1203, %v1604
        %v1704 = vmul.f32 %v1202, %v1608
        %v1705 = vmul.f32 %v1201, %v1612
        %v1706 = vmul.f32 %v1200, %v1616
        %v1707 = vmul.f32 %v1199, %v1620
        %v1708 = vmul.f32 %v1198, %v1624
        %v1709 = vmul.f32 %v1197, %v1628
        %v1710 = vmul.f32 %v1196, %v1632
        %v1711 = vmul.f32 %v1195, %v1636
        %v1712 = vmul.f32 %v1194, %v1640
        %v1713 = vmul.f32 %v1193, %v1644
        %v1714 = vmul.f32 %v1192, %v1648
        %v1715 = vmul.f32 %v1191, %v1652
        %v1716 = vmul.f32 %v1190, %v1656
        %v1717 = vmul.f32 %v1189, %v1660
        %v1718 = vmul.f32 %v1188, %v1664
        %v1719 = vmul.f32 %v1187, %v1668
        %v1720 = vmul.f32 %v1186, %v1672
        %v1721 = vmul.f32 %v1185, %v1676
        %v1722 = vmul.f32 %v1184, %v1680
        %v1723 = vmul.f32 %v1183, %v1684
        %v1724 = vmul.f32 %v1182, %v1688
        %v1725 = vmul.f32 %v1213, %v1692
        %1727 = vset.pattern.permute.xlu0 1
        %1728 = vperm.xlu0 %1727, %v666
        %v1729 = vpop.permute.xlu0 %1728
        %1732 = vset.pattern.permute.xlu0 1
        %1733 = vperm.xlu0 %1732, %v667
        %v1734 = vpop.permute.xlu0 %1733
        %1737 = vset.pattern.permute.xlu0 1
        %1738 = vperm.xlu0 %1737, %v668
        %v1739 = vpop.permute.xlu0 %1738
        %1742 = vset.pattern.permute.xlu0 1
        %1743 = vperm.xlu0 %1742, %v669
        %v1744 = vpop.permute.xlu0 %1743
        %1747 = vset.pattern.permute.xlu0 1
        %1748 = vperm.xlu0 %1747, %v670
        %v1749 = vpop.permute.xlu0 %1748
        %1752 = vset.pattern.permute.xlu0 1
        %1753 = vperm.xlu0 %1752, %v671
        %v1754 = vpop.permute.xlu0 %1753
        %1757 = vset.pattern.permute.xlu0 1
        %1758 = vperm.xlu0 %1757, %v672
        %v1759 = vpop.permute.xlu0 %1758
        %1762 = vset.pattern.permute.xlu0 1
        %1763 = vperm.xlu0 %1762, %v673
        %v1764 = vpop.permute.xlu0 %1763
        %1767 = vset.pattern.permute.xlu0 1
        %1768 = vperm.xlu0 %1767, %v674
        %v1769 = vpop.permute.xlu0 %1768
        %1772 = vset.pattern.permute.xlu0 1
        %1773 = vperm.xlu0 %1772, %v675
        %v1774 = vpop.permute.xlu0 %1773
        %1777 = vset.pattern.permute.xlu0 1
        %1778 = vperm.xlu0 %1777, %v676
        %v1779 = vpop.permute.xlu0 %1778
        %1782 = vset.pattern.permute.xlu0 1
        %1783 = vperm.xlu0 %1782, %v677
        %v1784 = vpop.permute.xlu0 %1783
        %1787 = vset.pattern.permute.xlu0 1
        %1788 = vperm.xlu0 %1787, %v678
        %v1789 = vpop.permute.xlu0 %1788
        %1792 = vset.pattern.permute.xlu0 1
        %1793 = vperm.xlu0 %1792, %v679
        %v1794 = vpop.permute.xlu0 %1793
        %1797 = vset.pattern.permute.xlu0 1
        %1798 = vperm.xlu0 %1797, %v680
        %v1799 = vpop.permute.xlu0 %1798
        %1802 = vset.pattern.permute.xlu0 1
        %1803 = vperm.xlu0 %1802, %v681
        %v1804 = vpop.permute.xlu0 %1803
        %1807 = vset.pattern.permute.xlu0 1
        %1808 = vperm.xlu0 %1807, %v682
        %v1809 = vpop.permute.xlu0 %1808
        %1812 = vset.pattern.permute.xlu0 1
        %1813 = vperm.xlu0 %1812, %v683
        %v1814 = vpop.permute.xlu0 %1813
        %1817 = vset.pattern.permute.xlu0 1
        %1818 = vperm.xlu0 %1817, %v684
        %v1819 = vpop.permute.xlu0 %1818
        %1822 = vset.pattern.permute.xlu0 1
        %1823 = vperm.xlu0 %1822, %v685
        %v1824 = vpop.permute.xlu0 %1823
        %1827 = vset.pattern.permute.xlu0 1
        %1828 = vperm.xlu0 %1827, %v686
        %v1829 = vpop.permute.xlu0 %1828
        %1832 = vset.pattern.permute.xlu0 1
        %1833 = vperm.xlu0 %1832, %v687
        %v1834 = vpop.permute.xlu0 %1833
        %1837 = vset.pattern.permute.xlu0 1
        %1838 = vperm.xlu0 %1837, %v688
        %v1839 = vpop.permute.xlu0 %1838
        %1842 = vset.pattern.permute.xlu0 1
        %1843 = vperm.xlu0 %1842, %v689
        %v1844 = vpop.permute.xlu0 %1843
        %1847 = vset.pattern.permute.xlu0 1
        %1848 = vperm.xlu0 %1847, %v690
        %v1849 = vpop.permute.xlu0 %1848
        %1852 = vset.pattern.permute.xlu0 1
        %1853 = vperm.xlu0 %1852, %v691
        %v1854 = vpop.permute.xlu0 %1853
        %1857 = vset.pattern.permute.xlu0 1
        %1858 = vperm.xlu0 %1857, %v692
        %v1859 = vpop.permute.xlu0 %1858
        %1862 = vset.pattern.permute.xlu0 1
        %1863 = vperm.xlu0 %1862, %v693
        %v1864 = vpop.permute.xlu0 %1863
        %1867 = vset.pattern.permute.xlu0 1
        %1868 = vperm.xlu0 %1867, %v694
        %v1869 = vpop.permute.xlu0 %1868
        %1872 = vset.pattern.permute.xlu0 1
        %1873 = vperm.xlu0 %1872, %v695
        %v1874 = vpop.permute.xlu0 %1873
        %1877 = vset.pattern.permute.xlu0 1
        %1878 = vperm.xlu0 %1877, %v696
        %v1879 = vpop.permute.xlu0 %1878
        %1882 = vset.pattern.permute.xlu0 1
        %1883 = vperm.xlu0 %1882, %v697
        %v1884 = vpop.permute.xlu0 %1883
        %v1886 = vmul.f32 %v794, %v1729
        %v1887 = vmul.f32 %v793, %v1734
        %v1888 = vmul.f32 %v792, %v1739
        %v1889 = vmul.f32 %v791, %v1744
        %v1890 = vmul.f32 %v790, %v1749
        %v1891 = vmul.f32 %v789, %v1754
        %v1892 = vmul.f32 %v788, %v1759
        %v1893 = vmul.f32 %v787, %v1764
        %v1894 = vmul.f32 %v786, %v1769
        %v1895 = vmul.f32 %v785, %v1774
        %v1896 = vmul.f32 %v784, %v1779
        %v1897 = vmul.f32 %v783, %v1784
        %v1898 = vmul.f32 %v782, %v1789
        %v1899 = vmul.f32 %v781, %v1794
        %v1900 = vmul.f32 %v780, %v1799
        %v1901 = vmul.f32 %v779, %v1804
        %v1902 = vmul.f32 %v778, %v1809
        %v1903 = vmul.f32 %v777, %v1814
        %v1904 = vmul.f32 %v776, %v1819
        %v1905 = vmul.f32 %v775, %v1824
        %v1906 = vmul.f32 %v774, %v1829
        %v1907 = vmul.f32 %v773, %v1834
        %v1908 = vmul.f32 %v772, %v1839
        %v1909 = vmul.f32 %v771, %v1844
        %v1910 = vmul.f32 %v770, %v1849
        %v1911 = vmul.f32 %v769, %v1854
        %v1912 = vmul.f32 %v768, %v1859
        %v1913 = vmul.f32 %v767, %v1864
        %v1914 = vmul.f32 %v766, %v1869
        %v1915 = vmul.f32 %v765, %v1874
        %v1916 = vmul.f32 %v796, %v1879
        %v1917 = vmul.f32 %v795, %v1884
        %1918 = vset.pattern.permute.xlu0 1
        %1919 = vperm.xlu0 %1918, %v250
        %v1920 = vpop.permute.xlu0 %1919
        %1922 = vset.pattern.permute.xlu0 1
        %1923 = vperm.xlu0 %1922, %v251
        %v1924 = vpop.permute.xlu0 %1923
        %1926 = vset.pattern.permute.xlu0 1
        %1927 = vperm.xlu0 %1926, %v252
        %v1928 = vpop.permute.xlu0 %1927
        %1930 = vset.pattern.permute.xlu0 1
        %1931 = vperm.xlu0 %1930, %v253
        %v1932 = vpop.permute.xlu0 %1931
        %1934 = vset.pattern.permute.xlu0 1
        %1935 = vperm.xlu0 %1934, %v254
        %v1936 = vpop.permute.xlu0 %1935
        %1938 = vset.pattern.permute.xlu0 1
        %1939 = vperm.xlu0 %1938, %v255
        %v1940 = vpop.permute.xlu0 %1939
        %1942 = vset.pattern.permute.xlu0 1
        %1943 = vperm.xlu0 %1942, %v256
        %v1944 = vpop.permute.xlu0 %1943
        %1946 = vset.pattern.permute.xlu0 1
        %1947 = vperm.xlu0 %1946, %v257
        %v1948 = vpop.permute.xlu0 %1947
        %1950 = vset.pattern.permute.xlu0 1
        %1951 = vperm.xlu0 %1950, %v258
        %v1952 = vpop.permute.xlu0 %1951
        %1954 = vset.pattern.permute.xlu0 1
        %1955 = vperm.xlu0 %1954, %v259
        %v1956 = vpop.permute.xlu0 %1955
        %1958 = vset.pattern.permute.xlu0 1
        %1959 = vperm.xlu0 %1958, %v260
        %v1960 = vpop.permute.xlu0 %1959
        %1962 = vset.pattern.permute.xlu0 1
        %1963 = vperm.xlu0 %1962, %v261
        %v1964 = vpop.permute.xlu0 %1963
        %1966 = vset.pattern.permute.xlu0 1
        %1967 = vperm.xlu0 %1966, %v262
        %v1968 = vpop.permute.xlu0 %1967
        %1970 = vset.pattern.permute.xlu0 1
        %1971 = vperm.xlu0 %1970, %v263
        %v1972 = vpop.permute.xlu0 %1971
        %1974 = vset.pattern.permute.xlu0 1
        %1975 = vperm.xlu0 %1974, %v264
        %v1976 = vpop.permute.xlu0 %1975
        %1978 = vset.pattern.permute.xlu0 1
        %1979 = vperm.xlu0 %1978, %v265
        %v1980 = vpop.permute.xlu0 %1979
        %1982 = vset.pattern.permute.xlu0 1
        %1983 = vperm.xlu0 %1982, %v266
        %v1984 = vpop.permute.xlu0 %1983
        %1986 = vset.pattern.permute.xlu0 1
        %1987 = vperm.xlu0 %1986, %v267
        %v1988 = vpop.permute.xlu0 %1987
        %1990 = vset.pattern.permute.xlu0 1
        %1991 = vperm.xlu0 %1990, %v268
        %v1992 = vpop.permute.xlu0 %1991
        %1994 = vset.pattern.permute.xlu0 1
        %1995 = vperm.xlu0 %1994, %v269
        %v1996 = vpop.permute.xlu0 %1995
        %1998 = vset.pattern.permute.xlu0 1
        %1999 = vperm.xlu0 %1998, %v270
        %v2000 = vpop.permute.xlu0 %1999
        %2002 = vset.pattern.permute.xlu0 1
        %2003 = vperm.xlu0 %2002, %v271
        %v2004 = vpop.permute.xlu0 %2003
        %2006 = vset.pattern.permute.xlu0 1
        %2007 = vperm.xlu0 %2006, %v272
        %v2008 = vpop.permute.xlu0 %2007
        %2010 = vset.pattern.permute.xlu0 1
        %2011 = vperm.xlu0 %2010, %v273
        %v2012 = vpop.permute.xlu0 %2011
        %2014 = vset.pattern.permute.xlu0 1
        %2015 = vperm.xlu0 %2014, %v274
        %v2016 = vpop.permute.xlu0 %2015
        %2018 = vset.pattern.permute.xlu0 1
        %2019 = vperm.xlu0 %2018, %v275
        %v2020 = vpop.permute.xlu0 %2019
        %2022 = vset.pattern.permute.xlu0 1
        %2023 = vperm.xlu0 %2022, %v276
        %v2024 = vpop.permute.xlu0 %2023
        %2026 = vset.pattern.permute.xlu0 1
        %2027 = vperm.xlu0 %2026, %v277
        %v2028 = vpop.permute.xlu0 %2027
        %2030 = vset.pattern.permute.xlu0 1
        %2031 = vperm.xlu0 %2030, %v278
        %v2032 = vpop.permute.xlu0 %2031
        %2034 = vset.pattern.permute.xlu0 1
        %2035 = vperm.xlu0 %2034, %v279
        %v2036 = vpop.permute.xlu0 %2035
        %2038 = vset.pattern.permute.xlu0 1
        %2039 = vperm.xlu0 %2038, %v280
        %v2040 = vpop.permute.xlu0 %2039
        %2042 = vset.pattern.permute.xlu0 1
        %2043 = vperm.xlu0 %2042, %v281
        %v2044 = vpop.permute.xlu0 %2043
        %v2046 = vmul.f32 %v700, %v1920
        %v2047 = vmul.f32 %v701, %v1924
        %v2048 = vmul.f32 %v702, %v1928
        %v2049 = vmul.f32 %v703, %v1932
        %v2050 = vmul.f32 %v704, %v1936
        %v2051 = vmul.f32 %v705, %v1940
        %v2052 = vmul.f32 %v706, %v1944
        %v2053 = vmul.f32 %v707, %v1948
        %v2054 = vmul.f32 %v708, %v1952
        %v2055 = vmul.f32 %v709, %v1956
        %v2056 = vmul.f32 %v710, %v1960
        %v2057 = vmul.f32 %v711, %v1964
        %v2058 = vmul.f32 %v712, %v1968
        %v2059 = vmul.f32 %v713, %v1972
        %v2060 = vmul.f32 %v714, %v1976
        %v2061 = vmul.f32 %v715, %v1980
        %v2062 = vmul.f32 %v716, %v1984
        %v2063 = vmul.f32 %v717, %v1988
        %v2064 = vmul.f32 %v718, %v1992
        %v2065 = vmul.f32 %v719, %v1996
        %v2066 = vmul.f32 %v720, %v2000
        %v2067 = vmul.f32 %v721, %v2004
        %v2068 = vmul.f32 %v722, %v2008
        %v2069 = vmul.f32 %v723, %v2012
        %v2070 = vmul.f32 %v724, %v2016
        %v2071 = vmul.f32 %v725, %v2020
        %v2072 = vmul.f32 %v726, %v2024
        %v2073 = vmul.f32 %v727, %v2028
        %v2074 = vmul.f32 %v728, %v2032
        %v2075 = vmul.f32 %v729, %v2036
        %v2076 = vmul.f32 %v698, %v2040
        %v2077 = vmul.f32 %v699, %v2044
        %2078 = vset.pattern.permute.xlu0 1
        %2079 = vperm.xlu0 %2078, %v410
        %v2080 = vpop.permute.xlu0 %2079
        %2082 = vset.pattern.permute.xlu0 1
        %2083 = vperm.xlu0 %2082, %v411
        %v2084 = vpop.permute.xlu0 %2083
        %2086 = vset.pattern.permute.xlu0 1
        %2087 = vperm.xlu0 %2086, %v412
        %v2088 = vpop.permute.xlu0 %2087
        %2090 = vset.pattern.permute.xlu0 1
        %2091 = vperm.xlu0 %2090, %v413
        %v2092 = vpop.permute.xlu0 %2091
        %2094 = vset.pattern.permute.xlu0 1
        %2095 = vperm.xlu0 %2094, %v414
        %v2096 = vpop.permute.xlu0 %2095
        %2098 = vset.pattern.permute.xlu0 1
        %2099 = vperm.xlu0 %2098, %v415
        %v2100 = vpop.permute.xlu0 %2099
        %2102 = vset.pattern.permute.xlu0 1
        %2103 = vperm.xlu0 %2102, %v416
        %v2104 = vpop.permute.xlu0 %2103
        %2106 = vset.pattern.permute.xlu0 1
        %2107 = vperm.xlu0 %2106, %v417
        %v2108 = vpop.permute.xlu0 %2107
        %2110 = vset.pattern.permute.xlu0 1
        %2111 = vperm.xlu0 %2110, %v418
        %v2112 = vpop.permute.xlu0 %2111
        %2114 = vset.pattern.permute.xlu0 1
        %2115 = vperm.xlu0 %2114, %v419
        %v2116 = vpop.permute.xlu0 %2115
        %2118 = vset.pattern.permute.xlu0 1
        %2119 = vperm.xlu0 %2118, %v420
        %v2120 = vpop.permute.xlu0 %2119
        %2122 = vset.pattern.permute.xlu0 1
        %2123 = vperm.xlu0 %2122, %v421
        %v2124 = vpop.permute.xlu0 %2123
        %2126 = vset.pattern.permute.xlu0 1
        %2127 = vperm.xlu0 %2126, %v422
        %v2128 = vpop.permute.xlu0 %2127
        %2130 = vset.pattern.permute.xlu0 1
        %2131 = vperm.xlu0 %2130, %v423
        %v2132 = vpop.permute.xlu0 %2131
        %2134 = vset.pattern.permute.xlu0 1
        %2135 = vperm.xlu0 %2134, %v424
        %v2136 = vpop.permute.xlu0 %2135
        %2138 = vset.pattern.permute.xlu0 1
        %2139 = vperm.xlu0 %2138, %v425
        %v2140 = vpop.permute.xlu0 %2139
        %2142 = vset.pattern.permute.xlu0 1
        %2143 = vperm.xlu0 %2142, %v426
        %v2144 = vpop.permute.xlu0 %2143
        %2146 = vset.pattern.permute.xlu0 1
        %2147 = vperm.xlu0 %2146, %v427
        %v2148 = vpop.permute.xlu0 %2147
        %2150 = vset.pattern.permute.xlu0 1
        %2151 = vperm.xlu0 %2150, %v428
        %v2152 = vpop.permute.xlu0 %2151
        %2154 = vset.pattern.permute.xlu0 1
        %2155 = vperm.xlu0 %2154, %v429
        %v2156 = vpop.permute.xlu0 %2155
        %2158 = vset.pattern.permute.xlu0 1
        %2159 = vperm.xlu0 %2158, %v430
        %v2160 = vpop.permute.xlu0 %2159
        %2162 = vset.pattern.permute.xlu0 1
        %2163 = vperm.xlu0 %2162, %v431
        %v2164 = vpop.permute.xlu0 %2163
        %2166 = vset.pattern.permute.xlu0 1
        %2167 = vperm.xlu0 %2166, %v432
        %v2168 = vpop.permute.xlu0 %2167
        %2170 = vset.pattern.permute.xlu0 1
        %2171 = vperm.xlu0 %2170, %v433
        %v2172 = vpop.permute.xlu0 %2171
        %2174 = vset.pattern.permute.xlu0 1
        %2175 = vperm.xlu0 %2174, %v434
        %v2176 = vpop.permute.xlu0 %2175
        %2178 = vset.pattern.permute.xlu0 1
        %2179 = vperm.xlu0 %2178, %v435
        %v2180 = vpop.permute.xlu0 %2179
        %2182 = vset.pattern.permute.xlu0 1
        %2183 = vperm.xlu0 %2182, %v436
        %v2184 = vpop.permute.xlu0 %2183
        %2186 = vset.pattern.permute.xlu0 1
        %2187 = vperm.xlu0 %2186, %v437
        %v2188 = vpop.permute.xlu0 %2187
        %2190 = vset.pattern.permute.xlu0 1
        %2191 = vperm.xlu0 %2190, %v438
        %v2192 = vpop.permute.xlu0 %2191
        %2194 = vset.pattern.permute.xlu0 1
        %2195 = vperm.xlu0 %2194, %v439
        %v2196 = vpop.permute.xlu0 %2195
        %2198 = vset.pattern.permute.xlu0 1
        %2199 = vperm.xlu0 %2198, %v440
        %v2200 = vpop.permute.xlu0 %2199
        %2202 = vset.pattern.permute.xlu0 1
        %2203 = vperm.xlu0 %2202, %v441
        %v2204 = vpop.permute.xlu0 %2203
        %v2206 = vmul.f32 %v1210, %v2080
        %v2207 = vmul.f32 %v1209, %v2084
        %v2208 = vmul.f32 %v1208, %v2088
        %v2209 = vmul.f32 %v1207, %v2092
        %v2210 = vmul.f32 %v1206, %v2096
        %v2211 = vmul.f32 %v1205, %v2100
        %v2212 = vmul.f32 %v1204, %v2104
        %v2213 = vmul.f32 %v1203, %v2108
        %v2214 = vmul.f32 %v1202, %v2112
        %v2215 = vmul.f32 %v1201, %v2116
        %v2216 = vmul.f32 %v1200, %v2120
        %v2217 = vmul.f32 %v1199, %v2124
        %v2218 = vmul.f32 %v1198, %v2128
        %v2219 = vmul.f32 %v1197, %v2132
        %v2220 = vmul.f32 %v1196, %v2136
        %v2221 = vmul.f32 %v1195, %v2140
        %v2222 = vmul.f32 %v1194, %v2144
        %v2223 = vmul.f32 %v1193, %v2148
        %v2224 = vmul.f32 %v1192, %v2152
        %v2225 = vmul.f32 %v1191, %v2156
        %v2226 = vmul.f32 %v1190, %v2160
        %v2227 = vmul.f32 %v1189, %v2164
        %v2228 = vmul.f32 %v1188, %v2168
        %v2229 = vmul.f32 %v1187, %v2172
        %v2230 = vmul.f32 %v1186, %v2176
        %v2231 = vmul.f32 %v1185, %v2180
        %v2232 = vmul.f32 %v1184, %v2184
        %v2233 = vmul.f32 %v1183, %v2188
        %v2234 = vmul.f32 %v1182, %v2192
        %v2235 = vmul.f32 %v1213, %v2196
        %v2236 = vmul.f32 %v1212, %v2200
        %v2237 = vmul.f32 %v1211, %v2204
        %v2238 = vld [vmem:[%s1] sm:$0xff]
        %v2239 = vld [vmem:[%s1 + $0x8] sm:$0xff]
        %v2240 = vld [vmem:[%s1 + $0x10] sm:$0xff]
        %v2241 = vld [vmem:[%s1 + $0x18] sm:$0xff]
        %v2242 = vld [vmem:[%s1 + $0x20] sm:$0xff]
        %v2243 = vld [vmem:[%s1 + $0x28] sm:$0xff]
        %v2244 = vld [vmem:[%s1 + $0x30] sm:$0xff]
        %v2245 = vld [vmem:[%s1 + $0x38] sm:$0xff]
        %v2246 = vld [vmem:[%s1 + $0x40] sm:$0xff]
        %v2247 = vld [vmem:[%s1 + $0x48] sm:$0xff]
        %v2248 = vld [vmem:[%s1 + $0x50] sm:$0xff]
        %v2249 = vld [vmem:[%s1 + $0x58] sm:$0xff]
        %v2250 = vld [vmem:[%s1 + $0x60] sm:$0xff]
        %v2251 = vld [vmem:[%s1 + $0x68] sm:$0xff]
        %v2252 = vld [vmem:[%s1 + $0x70] sm:$0xff]
        %v2253 = vld [vmem:[%s1 + $0x78] sm:$0xff]
        %v2254 = vld [vmem:[%s1 + $0x80] sm:$0xff]
        %v2255 = vld [vmem:[%s1 + $0x88] sm:$0xff]
        %v2256 = vld [vmem:[%s1 + $0x90] sm:$0xff]
        %v2257 = vld [vmem:[%s1 + $0x98] sm:$0xff]
        %v2258 = vld [vmem:[%s1 + $0xa0] sm:$0xff]
        %v2259 = vld [vmem:[%s1 + $0xa8] sm:$0xff]
        %v2260 = vld [vmem:[%s1 + $0xb0] sm:$0xff]
        %v2261 = vld [vmem:[%s1 + $0xb8] sm:$0xff]
        %v2262 = vld [vmem:[%s1 + $0xc0] sm:$0xff]
        %v2263 = vld [vmem:[%s1 + $0xc8] sm:$0xff]
        %v2264 = vld [vmem:[%s1 + $0xd0] sm:$0xff]
        %v2265 = vld [vmem:[%s1 + $0xd8] sm:$0xff]
        %v2266 = vld [vmem:[%s1 + $0xe0] sm:$0xff]
        %v2267 = vld [vmem:[%s1 + $0xe8] sm:$0xff]
        %v2268 = vld [vmem:[%s1 + $0xf0] sm:$0xff]
        %v2269 = vld [vmem:[%s1 + $0xf8] sm:$0xff]
        %v2270 = vld [vmem:[%s1 + $0x100] sm:$0xff]
        %v2271 = vld [vmem:[%s1 + $0x108] sm:$0xff]
        %v2272 = vld [vmem:[%s1 + $0x110] sm:$0xff]
        %v2273 = vld [vmem:[%s1 + $0x118] sm:$0xff]
        %v2274 = vld [vmem:[%s1 + $0x120] sm:$0xff]
        %v2275 = vld [vmem:[%s1 + $0x128] sm:$0xff]
        %v2276 = vld [vmem:[%s1 + $0x130] sm:$0xff]
        %v2277 = vld [vmem:[%s1 + $0x138] sm:$0xff]
        %v2278 = vld [vmem:[%s1 + $0x140] sm:$0xff]
        %v2279 = vld [vmem:[%s1 + $0x148] sm:$0xff]
        %v2280 = vld [vmem:[%s1 + $0x150] sm:$0xff]
        %v2281 = vld [vmem:[%s1 + $0x158] sm:$0xff]
        %v2282 = vld [vmem:[%s1 + $0x160] sm:$0xff]
        %v2283 = vld [vmem:[%s1 + $0x168] sm:$0xff]
        %v2284 = vld [vmem:[%s1 + $0x170] sm:$0xff]
        %v2285 = vld [vmem:[%s1 + $0x178] sm:$0xff]
        %v2286 = vld [vmem:[%s1 + $0x180] sm:$0xff]
        %v2287 = vld [vmem:[%s1 + $0x188] sm:$0xff]
        %v2288 = vld [vmem:[%s1 + $0x190] sm:$0xff]
        %v2289 = vld [vmem:[%s1 + $0x198] sm:$0xff]
        %v2290 = vld [vmem:[%s1 + $0x1a0] sm:$0xff]
        %v2291 = vld [vmem:[%s1 + $0x1a8] sm:$0xff]
        %v2292 = vld [vmem:[%s1 + $0x1b0] sm:$0xff]
        %v2293 = vld [vmem:[%s1 + $0x1b8] sm:$0xff]
        %v2294 = vld [vmem:[%s1 + $0x1c0] sm:$0xff]
        %v2295 = vld [vmem:[%s1 + $0x1c8] sm:$0xff]
        %v2296 = vld [vmem:[%s1 + $0x1d0] sm:$0xff]
        %v2297 = vld [vmem:[%s1 + $0x1d8] sm:$0xff]
        %v2298 = vld [vmem:[%s1 + $0x1e0] sm:$0xff]
        %v2299 = vld [vmem:[%s1 + $0x1e8] sm:$0xff]
        %v2300 = vld [vmem:[%s1 + $0x1f0] sm:$0xff]
        %v2301 = vld [vmem:[%s1 + $0x1f8] sm:$0xff]
        %v2302 = vld [vmem:[%s1 + $0x200] sm:$0xff]
        %v2303 = vld [vmem:[%s1 + $0x208] sm:$0xff]
        %v2304 = vld [vmem:[%s1 + $0x210] sm:$0xff]
        %v2305 = vld [vmem:[%s1 + $0x218] sm:$0xff]
        %v2306 = vld [vmem:[%s1 + $0x220] sm:$0xff]
        %v2307 = vld [vmem:[%s1 + $0x228] sm:$0xff]
        %v2308 = vld [vmem:[%s1 + $0x230] sm:$0xff]
        %v2309 = vld [vmem:[%s1 + $0x238] sm:$0xff]
        %v2310 = vld [vmem:[%s1 + $0x240] sm:$0xff]
        %v2311 = vld [vmem:[%s1 + $0x248] sm:$0xff]
        %v2312 = vld [vmem:[%s1 + $0x250] sm:$0xff]
        %v2313 = vld [vmem:[%s1 + $0x258] sm:$0xff]
        %v2314 = vld [vmem:[%s1 + $0x260] sm:$0xff]
        %v2315 = vld [vmem:[%s1 + $0x268] sm:$0xff]
        %v2316 = vld [vmem:[%s1 + $0x270] sm:$0xff]
        %v2317 = vld [vmem:[%s1 + $0x278] sm:$0xff]
        %v2318 = vld [vmem:[%s1 + $0x280] sm:$0xff]
        %v2319 = vld [vmem:[%s1 + $0x288] sm:$0xff]
        %v2320 = vld [vmem:[%s1 + $0x290] sm:$0xff]
        %v2321 = vld [vmem:[%s1 + $0x298] sm:$0xff]
        %v2322 = vld [vmem:[%s1 + $0x2a0] sm:$0xff]
        %v2323 = vld [vmem:[%s1 + $0x2a8] sm:$0xff]
        %v2324 = vld [vmem:[%s1 + $0x2b0] sm:$0xff]
        %v2325 = vld [vmem:[%s1 + $0x2b8] sm:$0xff]
        %v2326 = vld [vmem:[%s1 + $0x2c0] sm:$0xff]
        %v2327 = vld [vmem:[%s1 + $0x2c8] sm:$0xff]
        %v2328 = vld [vmem:[%s1 + $0x2d0] sm:$0xff]
        %v2329 = vld [vmem:[%s1 + $0x2d8] sm:$0xff]
        %v2330 = vld [vmem:[%s1 + $0x2e0] sm:$0xff]
        %v2331 = vld [vmem:[%s1 + $0x2e8] sm:$0xff]
        %v2332 = vld [vmem:[%s1 + $0x2f0] sm:$0xff]
        %v2333 = vld [vmem:[%s1 + $0x2f8] sm:$0xff]
        %v2334 = vld [vmem:[%s1 + $0x300] sm:$0xff]
        %v2335 = vld [vmem:[%s1 + $0x308] sm:$0xff]
        %v2336 = vld [vmem:[%s1 + $0x310] sm:$0xff]
        %v2337 = vld [vmem:[%s1 + $0x318] sm:$0xff]
        %v2338 = vld [vmem:[%s1 + $0x320] sm:$0xff]
        %v2339 = vld [vmem:[%s1 + $0x328] sm:$0xff]
        %v2340 = vld [vmem:[%s1 + $0x330] sm:$0xff]
        %v2341 = vld [vmem:[%s1 + $0x338] sm:$0xff]
        %v2342 = vld [vmem:[%s1 + $0x340] sm:$0xff]
        %v2343 = vld [vmem:[%s1 + $0x348] sm:$0xff]
        %v2344 = vld [vmem:[%s1 + $0x350] sm:$0xff]
        %v2345 = vld [vmem:[%s1 + $0x358] sm:$0xff]
        %v2346 = vld [vmem:[%s1 + $0x360] sm:$0xff]
        %v2347 = vld [vmem:[%s1 + $0x368] sm:$0xff]
        %v2348 = vld [vmem:[%s1 + $0x370] sm:$0xff]
        %v2349 = vld [vmem:[%s1 + $0x378] sm:$0xff]
        %v2350 = vld [vmem:[%s1 + $0x380] sm:$0xff]
        %v2351 = vld [vmem:[%s1 + $0x388] sm:$0xff]
        %v2352 = vld [vmem:[%s1 + $0x390] sm:$0xff]
        %v2353 = vld [vmem:[%s1 + $0x398] sm:$0xff]
        %v2354 = vld [vmem:[%s1 + $0x3a0] sm:$0xff]
        %v2355 = vld [vmem:[%s1 + $0x3a8] sm:$0xff]
        %v2356 = vld [vmem:[%s1 + $0x3b0] sm:$0xff]
        %v2357 = vld [vmem:[%s1 + $0x3b8] sm:$0xff]
        %v2358 = vld [vmem:[%s1 + $0x3c0] sm:$0xff]
        %v2359 = vld [vmem:[%s1 + $0x3c8] sm:$0xff]
        %v2360 = vld [vmem:[%s1 + $0x3d0] sm:$0xff]
        %v2361 = vld [vmem:[%s1 + $0x3d8] sm:$0xff]
        %v2362 = vld [vmem:[%s1 + $0x3e0] sm:$0xff]
        %v2363 = vld [vmem:[%s1 + $0x3e8] sm:$0xff]
        %v2364 = vld [vmem:[%s1 + $0x3f0] sm:$0xff]
        %v2365 = vld [vmem:[%s1 + $0x3f8] sm:$0xff]
        %v2366 = vld [vmem:[%s1 + $0x400] sm:$0xff]
        %v2367 = vld [vmem:[%s1 + $0x408] sm:$0xff]
        %v2368 = vld [vmem:[%s1 + $0x410] sm:$0xff]
        %v2369 = vld [vmem:[%s1 + $0x418] sm:$0xff]
        %v2370 = vld [vmem:[%s1 + $0x420] sm:$0xff]
        %v2371 = vld [vmem:[%s1 + $0x428] sm:$0xff]
        %v2372 = vld [vmem:[%s1 + $0x430] sm:$0xff]
        %v2373 = vld [vmem:[%s1 + $0x438] sm:$0xff]
        %v2374 = vld [vmem:[%s1 + $0x440] sm:$0xff]
        %v2375 = vld [vmem:[%s1 + $0x448] sm:$0xff]
        %v2376 = vld [vmem:[%s1 + $0x450] sm:$0xff]
        %v2377 = vld [vmem:[%s1 + $0x458] sm:$0xff]
        %v2378 = vld [vmem:[%s1 + $0x460] sm:$0xff]
        %v2379 = vld [vmem:[%s1 + $0x468] sm:$0xff]
        %v2380 = vld [vmem:[%s1 + $0x470] sm:$0xff]
        %v2381 = vld [vmem:[%s1 + $0x478] sm:$0xff]
        %2382 = vmatpush.msra.mxu0 %v2253
        %2383 = vmatpush.msra.mxu0 %v2252
        %2384 = vmatpush.msra.mxu0 %v2251
        %2385 = vmatpush.msra.mxu0 %v2250
        %2386 = vmatpush.msra.mxu0 %v2249
        %2387 = vmatpush.msra.mxu0 %v2248
        %2388 = vmatpush.msra.mxu0 %v2247
        %2389 = vmatpush.msra.mxu0 %v2246
        %2390 = vmatpush.msra.mxu0 %v2245
        %2391 = vmatpush.msra.mxu0 %v2244
        %2392 = vmatpush.msra.mxu0 %v2243
        %2393 = vmatpush.msra.mxu0 %v2242
        %2394 = vmatpush.msra.mxu0 %v2241
        %2395 = vmatpush.msra.mxu0 %v2240
        %2396 = vmatpush.msra.mxu0 %v2239
        %2397 = vmatpush.msra.mxu0 %v2238
        %2398 = vmatmul.f32.gmra.mxu0 %v957
        %v2399 = vpop.f32.mrf.mxu0
        %v2400 = vadd.f32 0.0, %v2399
        %2401 = vmatmul.f32.gmra.mxu0 %v958
        %v2402 = vpop.f32.mrf.mxu0
        %v2403 = vadd.f32 0.0, %v2402
        %2404 = vmatmul.f32.gmra.mxu0 %v959
        %v2405 = vpop.f32.mrf.mxu0
        %v2406 = vadd.f32 0.0, %v2405
        %2407 = vmatmul.f32.gmra.mxu0 %v960
        %v2408 = vpop.f32.mrf.mxu0
        %v2409 = vadd.f32 0.0, %v2408
        %2410 = vmatmul.f32.gmra.mxu0 %v961
        %v2411 = vpop.f32.mrf.mxu0
        %v2412 = vadd.f32 0.0, %v2411
        %2413 = vmatmul.f32.gmra.mxu0 %v962
        %v2414 = vpop.f32.mrf.mxu0
        %v2415 = vadd.f32 0.0, %v2414
        %2416 = vmatmul.f32.gmra.mxu0 %v963
        %v2417 = vpop.f32.mrf.mxu0
        %v2418 = vadd.f32 0.0, %v2417
        %2419 = vmatmul.f32.gmra.mxu0 %v964
        %v2420 = vpop.f32.mrf.mxu0
        %v2421 = vadd.f32 0.0, %v2420
        %2422 = vmatmul.f32.gmra.mxu0 %v965
        %v2423 = vpop.f32.mrf.mxu0
        %v2424 = vadd.f32 0.0, %v2423
        %2425 = vmatmul.f32.gmra.mxu0 %v966
        %v2426 = vpop.f32.mrf.mxu0
        %v2427 = vadd.f32 0.0, %v2426
        %2428 = vmatmul.f32.gmra.mxu0 %v967
        %v2429 = vpop.f32.mrf.mxu0
        %v2430 = vadd.f32 0.0, %v2429
        %2431 = vmatmul.f32.gmra.mxu0 %v968
        %v2432 = vpop.f32.mrf.mxu0
        %v2433 = vadd.f32 0.0, %v2432
        %2434 = vmatmul.f32.gmra.mxu0 %v969
        %v2435 = vpop.f32.mrf.mxu0
        %v2436 = vadd.f32 0.0, %v2435
        %2437 = vmatmul.f32.gmra.mxu0 %v970
        %v2438 = vpop.f32.mrf.mxu0
        %v2439 = vadd.f32 0.0, %v2438
        %2440 = vmatmul.f32.gmra.mxu0 %v971
        %v2441 = vpop.f32.mrf.mxu0
        %v2442 = vadd.f32 0.0, %v2441
        %2443 = vmatmul.f32.gmra.mxu0 %v972
        %v2444 = vpop.f32.mrf.mxu0
        %v2445 = vadd.f32 0.0, %v2444
        %2446 = vmatmul.f32.gmra.mxu0 %v973
        %v2447 = vpop.f32.mrf.mxu0
        %v2448 = vadd.f32 0.0, %v2447
        %2449 = vmatmul.f32.gmra.mxu0 %v974
        %v2450 = vpop.f32.mrf.mxu0
        %v2451 = vadd.f32 0.0, %v2450
        %2452 = vmatmul.f32.gmra.mxu0 %v975
        %v2453 = vpop.f32.mrf.mxu0
        %v2454 = vadd.f32 0.0, %v2453
        %2455 = vmatmul.f32.gmra.mxu0 %v976
        %v2456 = vpop.f32.mrf.mxu0
        %v2457 = vadd.f32 0.0, %v2456
        %2458 = vmatmul.f32.gmra.mxu0 %v977
        %v2459 = vpop.f32.mrf.mxu0
        %v2460 = vadd.f32 0.0, %v2459
        %2461 = vmatmul.f32.gmra.mxu0 %v978
        %v2462 = vpop.f32.mrf.mxu0
        %v2463 = vadd.f32 0.0, %v2462
        %2464 = vmatmul.f32.gmra.mxu0 %v979
        %v2465 = vpop.f32.mrf.mxu0
        %v2466 = vadd.f32 0.0, %v2465
        %2467 = vmatmul.f32.gmra.mxu0 %v980
        %v2468 = vpop.f32.mrf.mxu0
        %v2469 = vadd.f32 0.0, %v2468
        %2470 = vmatmul.f32.gmra.mxu0 %v981
        %v2471 = vpop.f32.mrf.mxu0
        %v2472 = vadd.f32 0.0, %v2471
        %2473 = vmatmul.f32.gmra.mxu0 %v982
        %v2474 = vpop.f32.mrf.mxu0
        %v2475 = vadd.f32 0.0, %v2474
        %2476 = vmatmul.f32.gmra.mxu0 %v983
        %v2477 = vpop.f32.mrf.mxu0
        %v2478 = vadd.f32 0.0, %v2477
        %2479 = vmatmul.f32.gmra.mxu0 %v984
        %v2480 = vpop.f32.mrf.mxu0
        %v2481 = vadd.f32 0.0, %v2480
        %2482 = vmatmul.f32.gmra.mxu0 %v985
        %v2483 = vpop.f32.mrf.mxu0
        %v2484 = vadd.f32 0.0, %v2483
        %2485 = vmatmul.f32.gmra.mxu0 %v986
        %v2486 = vpop.f32.mrf.mxu0
        %v2487 = vadd.f32 0.0, %v2486
        %2488 = vmatmul.f32.gmra.mxu0 %v987
        %v2489 = vpop.f32.mrf.mxu0
        %v2490 = vadd.f32 0.0, %v2489
        %2491 = vmatmul.f32.gmra.mxu0 %v988
        %v2492 = vpop.f32.mrf.mxu0
        %v2493 = vadd.f32 0.0, %v2492
        %2494 = vdwg.mxu0
        %2495 = vmatpush.msra.mxu0 %v2269
        %2496 = vmatpush.msra.mxu0 %v2268
        %2497 = vmatpush.msra.mxu0 %v2267
        %2498 = vmatpush.msra.mxu0 %v2266
        %2499 = vmatpush.msra.mxu0 %v2265
        %2500 = vmatpush.msra.mxu0 %v2264
        %2501 = vmatpush.msra.mxu0 %v2263
        %2502 = vmatpush.msra.mxu0 %v2262
        %2503 = vmatpush.msra.mxu0 %v2261
        %2504 = vmatpush.msra.mxu0 %v2260
        %2505 = vmatpush.msra.mxu0 %v2259
        %2506 = vmatpush.msra.mxu0 %v2258
        %2507 = vmatpush.msra.mxu0 %v2257
        %2508 = vmatpush.msra.mxu0 %v2256
        %2509 = vmatpush.msra.mxu0 %v2255
        %2510 = vmatpush.msra.mxu0 %v2254
        %2511 = vmatmul.f32.gmra.mxu0 %v1117
        %v2512 = vpop.f32.mrf.mxu0
        %v2513 = vadd.f32 %v2400, %v2512
        %2514 = vmatmul.f32.gmra.mxu0 %v1118
        %v2515 = vpop.f32.mrf.mxu0
        %v2516 = vadd.f32 %v2403, %v2515
        %2517 = vmatmul.f32.gmra.mxu0 %v1119
        %v2518 = vpop.f32.mrf.mxu0
        %v2519 = vadd.f32 %v2406, %v2518
        %2520 = vmatmul.f32.gmra.mxu0 %v1120
        %v2521 = vpop.f32.mrf.mxu0
        %v2522 = vadd.f32 %v2409, %v2521
        %2523 = vmatmul.f32.gmra.mxu0 %v1121
        %v2524 = vpop.f32.mrf.mxu0
        %v2525 = vadd.f32 %v2412, %v2524
        %2526 = vmatmul.f32.gmra.mxu0 %v1122
        %v2527 = vpop.f32.mrf.mxu0
        %v2528 = vadd.f32 %v2415, %v2527
        %2529 = vmatmul.f32.gmra.mxu0 %v1123
        %v2530 = vpop.f32.mrf.mxu0
        %v2531 = vadd.f32 %v2418, %v2530
        %2532 = vmatmul.f32.gmra.mxu0 %v1124
        %v2533 = vpop.f32.mrf.mxu0
        %v2534 = vadd.f32 %v2421, %v2533
        %2535 = vmatmul.f32.gmra.mxu0 %v1125
        %v2536 = vpop.f32.mrf.mxu0
        %v2537 = vadd.f32 %v2424, %v2536
        %2538 = vmatmul.f32.gmra.mxu0 %v1126
        %v2539 = vpop.f32.mrf.mxu0
        %v2540 = vadd.f32 %v2427, %v2539
        %2541 = vmatmul.f32.gmra.mxu0 %v1127
        %v2542 = vpop.f32.mrf.mxu0
        %v2543 = vadd.f32 %v2430, %v2542
        %2544 = vmatmul.f32.gmra.mxu0 %v1128
        %v2545 = vpop.f32.mrf.mxu0
        %v2546 = vadd.f32 %v2433, %v2545
        %2547 = vmatmul.f32.gmra.mxu0 %v1129
        %v2548 = vpop.f32.mrf.mxu0
        %v2549 = vadd.f32 %v2436, %v2548
        %2550 = vmatmul.f32.gmra.mxu0 %v1130
        %v2551 = vpop.f32.mrf.mxu0
        %v2552 = vadd.f32 %v2439, %v2551
        %2553 = vmatmul.f32.gmra.mxu0 %v1131
        %v2554 = vpop.f32.mrf.mxu0
        %v2555 = vadd.f32 %v2442, %v2554
        %2556 = vmatmul.f32.gmra.mxu0 %v1132
        %v2557 = vpop.f32.mrf.mxu0
        %v2558 = vadd.f32 %v2445, %v2557
        %2559 = vmatmul.f32.gmra.mxu0 %v1133
        %v2560 = vpop.f32.mrf.mxu0
        %v2561 = vadd.f32 %v2448, %v2560
        %2562 = vmatmul.f32.gmra.mxu0 %v1134
        %v2563 = vpop.f32.mrf.mxu0
        %v2564 = vadd.f32 %v2451, %v2563
        %2565 = vmatmul.f32.gmra.mxu0 %v1135
        %v2566 = vpop.f32.mrf.mxu0
        %v2567 = vadd.f32 %v2454, %v2566
        %2568 = vmatmul.f32.gmra.mxu0 %v1136
        %v2569 = vpop.f32.mrf.mxu0
        %v2570 = vadd.f32 %v2457, %v2569
        %2571 = vmatmul.f32.gmra.mxu0 %v1137
        %v2572 = vpop.f32.mrf.mxu0
        %v2573 = vadd.f32 %v2460, %v2572
        %2574 = vmatmul.f32.gmra.mxu0 %v1138
        %v2575 = vpop.f32.mrf.mxu0
        %v2576 = vadd.f32 %v2463, %v2575
        %2577 = vmatmul.f32.gmra.mxu0 %v1139
        %v2578 = vpop.f32.mrf.mxu0
        %v2579 = vadd.f32 %v2466, %v2578
        %2580 = vmatmul.f32.gmra.mxu0 %v1140
        %v2581 = vpop.f32.mrf.mxu0
        %v2582 = vadd.f32 %v2469, %v2581
        %2583 = vmatmul.f32.gmra.mxu0 %v1141
        %v2584 = vpop.f32.mrf.mxu0
        %v2585 = vadd.f32 %v2472, %v2584
        %2586 = vmatmul.f32.gmra.mxu0 %v1142
        %v2587 = vpop.f32.mrf.mxu0
        %v2588 = vadd.f32 %v2475, %v2587
        %2589 = vmatmul.f32.gmra.mxu0 %v1143
        %v2590 = vpop.f32.mrf.mxu0
        %v2591 = vadd.f32 %v2478, %v2590
        %2592 = vmatmul.f32.gmra.mxu0 %v1144
        %v2593 = vpop.f32.mrf.mxu0
        %v2594 = vadd.f32 %v2481, %v2593
        %2595 = vmatmul.f32.gmra.mxu0 %v1145
        %v2596 = vpop.f32.mrf.mxu0
        %v2597 = vadd.f32 %v2484, %v2596
        %2598 = vmatmul.f32.gmra.mxu0 %v1146
        %v2599 = vpop.f32.mrf.mxu0
        %v2600 = vadd.f32 %v2487, %v2599
        %2601 = vmatmul.f32.gmra.mxu0 %v1147
        %v2602 = vpop.f32.mrf.mxu0
        %v2603 = vadd.f32 %v2490, %v2602
        %2604 = vmatmul.f32.gmra.mxu0 %v1148
        %v2605 = vpop.f32.mrf.mxu0
        %v2606 = vadd.f32 %v2493, %v2605
        %2607 = vdwg.mxu0
        %2608 = vmatpush.msra.mxu0 %v2285
        %2609 = vmatpush.msra.mxu0 %v2284
        %2610 = vmatpush.msra.mxu0 %v2283
        %2611 = vmatpush.msra.mxu0 %v2282
        %2612 = vmatpush.msra.mxu0 %v2281
        %2613 = vmatpush.msra.mxu0 %v2280
        %2614 = vmatpush.msra.mxu0 %v2279
        %2615 = vmatpush.msra.mxu0 %v2278
        %2616 = vmatpush.msra.mxu0 %v2277
        %2617 = vmatpush.msra.mxu0 %v2276
        %2618 = vmatpush.msra.mxu0 %v2275
        %2619 = vmatpush.msra.mxu0 %v2274
        %2620 = vmatpush.msra.mxu0 %v2273
        %2621 = vmatpush.msra.mxu0 %v2272
        %2622 = vmatpush.msra.mxu0 %v2271
        %2623 = vmatpush.msra.mxu0 %v2270
        %2624 = vmatmul.f32.gmra.mxu0 %v1374
        %v2625 = vpop.f32.mrf.mxu0
        %v2626 = vadd.f32 %v2513, %v2625
        %2627 = vmatmul.f32.gmra.mxu0 %v1375
        %v2628 = vpop.f32.mrf.mxu0
        %v2629 = vadd.f32 %v2516, %v2628
        %2630 = vmatmul.f32.gmra.mxu0 %v1376
        %v2631 = vpop.f32.mrf.mxu0
        %v2632 = vadd.f32 %v2519, %v2631
        %2633 = vmatmul.f32.gmra.mxu0 %v1377
        %v2634 = vpop.f32.mrf.mxu0
        %v2635 = vadd.f32 %v2522, %v2634
        %2636 = vmatmul.f32.gmra.mxu0 %v1378
        %v2637 = vpop.f32.mrf.mxu0
        %v2638 = vadd.f32 %v2525, %v2637
        %2639 = vmatmul.f32.gmra.mxu0 %v1379
        %v2640 = vpop.f32.mrf.mxu0
        %v2641 = vadd.f32 %v2528, %v2640
        %2642 = vmatmul.f32.gmra.mxu0 %v1380
        %v2643 = vpop.f32.mrf.mxu0
        %v2644 = vadd.f32 %v2531, %v2643
        %2645 = vmatmul.f32.gmra.mxu0 %v1381
        %v2646 = vpop.f32.mrf.mxu0
        %v2647 = vadd.f32 %v2534, %v2646
        %2648 = vmatmul.f32.gmra.mxu0 %v1382
        %v2649 = vpop.f32.mrf.mxu0
        %v2650 = vadd.f32 %v2537, %v2649
        %2651 = vmatmul.f32.gmra.mxu0 %v1383
        %v2652 = vpop.f32.mrf.mxu0
        %v2653 = vadd.f32 %v2540, %v2652
        %2654 = vmatmul.f32.gmra.mxu0 %v1384
        %v2655 = vpop.f32.mrf.mxu0
        %v2656 = vadd.f32 %v2543, %v2655
        %2657 = vmatmul.f32.gmra.mxu0 %v1385
        %v2658 = vpop.f32.mrf.mxu0
        %v2659 = vadd.f32 %v2546, %v2658
        %2660 = vmatmul.f32.gmra.mxu0 %v1386
        %v2661 = vpop.f32.mrf.mxu0
        %v2662 = vadd.f32 %v2549, %v2661
        %2663 = vmatmul.f32.gmra.mxu0 %v1387
        %v2664 = vpop.f32.mrf.mxu0
        %v2665 = vadd.f32 %v2552, %v2664
        %2666 = vmatmul.f32.gmra.mxu0 %v1388
        %v2667 = vpop.f32.mrf.mxu0
        %v2668 = vadd.f32 %v2555, %v2667
        %2669 = vmatmul.f32.gmra.mxu0 %v1389
        %v2670 = vpop.f32.mrf.mxu0
        %v2671 = vadd.f32 %v2558, %v2670
        %2672 = vmatmul.f32.gmra.mxu0 %v1390
        %v2673 = vpop.f32.mrf.mxu0
        %v2674 = vadd.f32 %v2561, %v2673
        %2675 = vmatmul.f32.gmra.mxu0 %v1391
        %v2676 = vpop.f32.mrf.mxu0
        %v2677 = vadd.f32 %v2564, %v2676
        %2678 = vmatmul.f32.gmra.mxu0 %v1392
        %v2679 = vpop.f32.mrf.mxu0
        %v2680 = vadd.f32 %v2567, %v2679
        %2681 = vmatmul.f32.gmra.mxu0 %v1393
        %v2682 = vpop.f32.mrf.mxu0
        %v2683 = vadd.f32 %v2570, %v2682
        %2684 = vmatmul.f32.gmra.mxu0 %v1394
        %v2685 = vpop.f32.mrf.mxu0
        %v2686 = vadd.f32 %v2573, %v2685
        %2687 = vmatmul.f32.gmra.mxu0 %v1395
        %v2688 = vpop.f32.mrf.mxu0
        %v2689 = vadd.f32 %v2576, %v2688
        %2690 = vmatmul.f32.gmra.mxu0 %v1396
        %v2691 = vpop.f32.mrf.mxu0
        %v2692 = vadd.f32 %v2579, %v2691
        %2693 = vmatmul.f32.gmra.mxu0 %v1397
        %v2694 = vpop.f32.mrf.mxu0
        %v2695 = vadd.f32 %v2582, %v2694
        %2696 = vmatmul.f32.gmra.mxu0 %v1398
        %v2697 = vpop.f32.mrf.mxu0
        %v2698 = vadd.f32 %v2585, %v2697
        %2699 = vmatmul.f32.gmra.mxu0 %v1399
        %v2700 = vpop.f32.mrf.mxu0
        %v2701 = vadd.f32 %v2588, %v2700
        %2702 = vmatmul.f32.gmra.mxu0 %v1400
        %v2703 = vpop.f32.mrf.mxu0
        %v2704 = vadd.f32 %v2591, %v2703
        %2705 = vmatmul.f32.gmra.mxu0 %v1401
        %v2706 = vpop.f32.mrf.mxu0
        %v2707 = vadd.f32 %v2594, %v2706
        %2708 = vmatmul.f32.gmra.mxu0 %v1402
        %v2709 = vpop.f32.mrf.mxu0
        %v2710 = vadd.f32 %v2597, %v2709
        %2711 = vmatmul.f32.gmra.mxu0 %v1403
        %v2712 = vpop.f32.mrf.mxu0
        %v2713 = vadd.f32 %v2600, %v2712
        %2714 = vmatmul.f32.gmra.mxu0 %v1404
        %v2715 = vpop.f32.mrf.mxu0
        %v2716 = vadd.f32 %v2603, %v2715
        %2717 = vmatmul.f32.gmra.mxu0 %v1405
        %v2718 = vpop.f32.mrf.mxu0
        %v2719 = vadd.f32 %v2606, %v2718
        %2720 = vdwg.mxu0
        %2721 = vmatpush.msra.mxu0 %v2301
        %2722 = vmatpush.msra.mxu0 %v2300
        %2723 = vmatpush.msra.mxu0 %v2299
        %2724 = vmatpush.msra.mxu0 %v2298
        %2725 = vmatpush.msra.mxu0 %v2297
        %2726 = vmatpush.msra.mxu0 %v2296
        %2727 = vmatpush.msra.mxu0 %v2295
        %2728 = vmatpush.msra.mxu0 %v2294
        %2729 = vmatpush.msra.mxu0 %v2293
        %2730 = vmatpush.msra.mxu0 %v2292
        %2731 = vmatpush.msra.mxu0 %v2291
        %2732 = vmatpush.msra.mxu0 %v2290
        %2733 = vmatpush.msra.mxu0 %v2289
        %2734 = vmatpush.msra.mxu0 %v2288
        %2735 = vmatpush.msra.mxu0 %v2287
        %2736 = vmatpush.msra.mxu0 %v2286
        %2737 = vmatmul.f32.gmra.mxu0 %v1534
        %v2738 = vpop.f32.mrf.mxu0
        %v2739 = vadd.f32 %v2626, %v2738
        %2740 = vmatmul.f32.gmra.mxu0 %v1535
        %v2741 = vpop.f32.mrf.mxu0
        %v2742 = vadd.f32 %v2629, %v2741
        %2743 = vmatmul.f32.gmra.mxu0 %v1536
        %v2744 = vpop.f32.mrf.mxu0
        %v2745 = vadd.f32 %v2632, %v2744
        %2746 = vmatmul.f32.gmra.mxu0 %v1537
        %v2747 = vpop.f32.mrf.mxu0
        %v2748 = vadd.f32 %v2635, %v2747
        %2749 = vmatmul.f32.gmra.mxu0 %v1538
        %v2750 = vpop.f32.mrf.mxu0
        %v2751 = vadd.f32 %v2638, %v2750
        %2752 = vmatmul.f32.gmra.mxu0 %v1539
        %v2753 = vpop.f32.mrf.mxu0
        %v2754 = vadd.f32 %v2641, %v2753
        %2755 = vmatmul.f32.gmra.mxu0 %v1540
        %v2756 = vpop.f32.mrf.mxu0
        %v2757 = vadd.f32 %v2644, %v2756
        %2758 = vmatmul.f32.gmra.mxu0 %v1541
        %v2759 = vpop.f32.mrf.mxu0
        %v2760 = vadd.f32 %v2647, %v2759
        %2761 = vmatmul.f32.gmra.mxu0 %v1542
        %v2762 = vpop.f32.mrf.mxu0
        %v2763 = vadd.f32 %v2650, %v2762
        %2764 = vmatmul.f32.gmra.mxu0 %v1543
        %v2765 = vpop.f32.mrf.mxu0
        %v2766 = vadd.f32 %v2653, %v2765
        %2767 = vmatmul.f32.gmra.mxu0 %v1544
        %v2768 = vpop.f32.mrf.mxu0
        %v2769 = vadd.f32 %v2656, %v2768
        %2770 = vmatmul.f32.gmra.mxu0 %v1545
        %v2771 = vpop.f32.mrf.mxu0
        %v2772 = vadd.f32 %v2659, %v2771
        %2773 = vmatmul.f32.gmra.mxu0 %v1546
        %v2774 = vpop.f32.mrf.mxu0
        %v2775 = vadd.f32 %v2662, %v2774
        %2776 = vmatmul.f32.gmra.mxu0 %v1547
        %v2777 = vpop.f32.mrf.mxu0
        %v2778 = vadd.f32 %v2665, %v2777
        %2779 = vmatmul.f32.gmra.mxu0 %v1548
        %v2780 = vpop.f32.mrf.mxu0
        %v2781 = vadd.f32 %v2668, %v2780
        %2782 = vmatmul.f32.gmra.mxu0 %v1549
        %v2783 = vpop.f32.mrf.mxu0
        %v2784 = vadd.f32 %v2671, %v2783
        %2785 = vmatmul.f32.gmra.mxu0 %v1550
        %v2786 = vpop.f32.mrf.mxu0
        %v2787 = vadd.f32 %v2674, %v2786
        %2788 = vmatmul.f32.gmra.mxu0 %v1551
        %v2789 = vpop.f32.mrf.mxu0
        %v2790 = vadd.f32 %v2677, %v2789
        %2791 = vmatmul.f32.gmra.mxu0 %v1552
        %v2792 = vpop.f32.mrf.mxu0
        %v2793 = vadd.f32 %v2680, %v2792
        %2794 = vmatmul.f32.gmra.mxu0 %v1553
        %v2795 = vpop.f32.mrf.mxu0
        %v2796 = vadd.f32 %v2683, %v2795
        %2797 = vmatmul.f32.gmra.mxu0 %v1554
        %v2798 = vpop.f32.mrf.mxu0
        %v2799 = vadd.f32 %v2686, %v2798
        %2800 = vmatmul.f32.gmra.mxu0 %v1555
        %v2801 = vpop.f32.mrf.mxu0
        %v2802 = vadd.f32 %v2689, %v2801
        %2803 = vmatmul.f32.gmra.mxu0 %v1556
        %v2804 = vpop.f32.mrf.mxu0
        %v2805 = vadd.f32 %v2692, %v2804
        %2806 = vmatmul.f32.gmra.mxu0 %v1557
        %v2807 = vpop.f32.mrf.mxu0
        %v2808 = vadd.f32 %v2695, %v2807
        %2809 = vmatmul.f32.gmra.mxu0 %v1558
        %v2810 = vpop.f32.mrf.mxu0
        %v2811 = vadd.f32 %v2698, %v2810
        %2812 = vmatmul.f32.gmra.mxu0 %v1559
        %v2813 = vpop.f32.mrf.mxu0
        %v2814 = vadd.f32 %v2701, %v2813
        %2815 = vmatmul.f32.gmra.mxu0 %v1560
        %v2816 = vpop.f32.mrf.mxu0
        %v2817 = vadd.f32 %v2704, %v2816
        %2818 = vmatmul.f32.gmra.mxu0 %v1561
        %v2819 = vpop.f32.mrf.mxu0
        %v2820 = vadd.f32 %v2707, %v2819
        %2821 = vmatmul.f32.gmra.mxu0 %v1562
        %v2822 = vpop.f32.mrf.mxu0
        %v2823 = vadd.f32 %v2710, %v2822
        %2824 = vmatmul.f32.gmra.mxu0 %v1563
        %v2825 = vpop.f32.mrf.mxu0
        %v2826 = vadd.f32 %v2713, %v2825
        %2827 = vmatmul.f32.gmra.mxu0 %v1564
        %v2828 = vpop.f32.mrf.mxu0
        %v2829 = vadd.f32 %v2716, %v2828
        %2830 = vmatmul.f32.gmra.mxu0 %v1565
        %v2831 = vpop.f32.mrf.mxu0
        %v2832 = vadd.f32 %v2719, %v2831
        %2833 = vdwg.mxu0
        %2834 = vmatpush.msra.mxu0 %v2317
        %2835 = vmatpush.msra.mxu0 %v2316
        %2836 = vmatpush.msra.mxu0 %v2315
        %2837 = vmatpush.msra.mxu0 %v2314
        %2838 = vmatpush.msra.mxu0 %v2313
        %2839 = vmatpush.msra.mxu0 %v2312
        %2840 = vmatpush.msra.mxu0 %v2311
        %2841 = vmatpush.msra.mxu0 %v2310
        %2842 = vmatpush.msra.mxu0 %v2309
        %2843 = vmatpush.msra.mxu0 %v2308
        %2844 = vmatpush.msra.mxu0 %v2307
        %2845 = vmatpush.msra.mxu0 %v2306
        %2846 = vmatpush.msra.mxu0 %v2305
        %2847 = vmatpush.msra.mxu0 %v2304
        %2848 = vmatpush.msra.mxu0 %v2303
        %2849 = vmatpush.msra.mxu0 %v2302
        %2850 = vmatmul.f32.gmra.mxu0 %v698
        %v2851 = vpop.f32.mrf.mxu0
        %v2852 = vadd.f32 %v2739, %v2851
        %2853 = vmatmul.f32.gmra.mxu0 %v699
        %v2854 = vpop.f32.mrf.mxu0
        %v2855 = vadd.f32 %v2742, %v2854
        %2856 = vmatmul.f32.gmra.mxu0 %v700
        %v2857 = vpop.f32.mrf.mxu0
        %v2858 = vadd.f32 %v2745, %v2857
        %2859 = vmatmul.f32.gmra.mxu0 %v701
        %v2860 = vpop.f32.mrf.mxu0
        %v2861 = vadd.f32 %v2748, %v2860
        %2862 = vmatmul.f32.gmra.mxu0 %v702
        %v2863 = vpop.f32.mrf.mxu0
        %v2864 = vadd.f32 %v2751, %v2863
        %2865 = vmatmul.f32.gmra.mxu0 %v703
        %v2866 = vpop.f32.mrf.mxu0
        %v2867 = vadd.f32 %v2754, %v2866
        %2868 = vmatmul.f32.gmra.mxu0 %v704
        %v2869 = vpop.f32.mrf.mxu0
        %v2870 = vadd.f32 %v2757, %v2869
        %2871 = vmatmul.f32.gmra.mxu0 %v705
        %v2872 = vpop.f32.mrf.mxu0
        %v2873 = vadd.f32 %v2760, %v2872
        %2874 = vmatmul.f32.gmra.mxu0 %v706
        %v2875 = vpop.f32.mrf.mxu0
        %v2876 = vadd.f32 %v2763, %v2875
        %2877 = vmatmul.f32.gmra.mxu0 %v707
        %v2878 = vpop.f32.mrf.mxu0
        %v2879 = vadd.f32 %v2766, %v2878
        %2880 = vmatmul.f32.gmra.mxu0 %v708
        %v2881 = vpop.f32.mrf.mxu0
        %v2882 = vadd.f32 %v2769, %v2881
        %2883 = vmatmul.f32.gmra.mxu0 %v709
        %v2884 = vpop.f32.mrf.mxu0
        %v2885 = vadd.f32 %v2772, %v2884
        %2886 = vmatmul.f32.gmra.mxu0 %v710
        %v2887 = vpop.f32.mrf.mxu0
        %v2888 = vadd.f32 %v2775, %v2887
        %2889 = vmatmul.f32.gmra.mxu0 %v711
        %v2890 = vpop.f32.mrf.mxu0
        %v2891 = vadd.f32 %v2778, %v2890
        %2892 = vmatmul.f32.gmra.mxu0 %v712
        %v2893 = vpop.f32.mrf.mxu0
        %v2894 = vadd.f32 %v2781, %v2893
        %2895 = vmatmul.f32.gmra.mxu0 %v713
        %v2896 = vpop.f32.mrf.mxu0
        %v2897 = vadd.f32 %v2784, %v2896
        %2898 = vmatmul.f32.gmra.mxu0 %v714
        %v2899 = vpop.f32.mrf.mxu0
        %v2900 = vadd.f32 %v2787, %v2899
        %2901 = vmatmul.f32.gmra.mxu0 %v715
        %v2902 = vpop.f32.mrf.mxu0
        %v2903 = vadd.f32 %v2790, %v2902
        %2904 = vmatmul.f32.gmra.mxu0 %v716
        %v2905 = vpop.f32.mrf.mxu0
        %v2906 = vadd.f32 %v2793, %v2905
        %2907 = vmatmul.f32.gmra.mxu0 %v717
        %v2908 = vpop.f32.mrf.mxu0
        %v2909 = vadd.f32 %v2796, %v2908
        %2910 = vmatmul.f32.gmra.mxu0 %v718
        %v2911 = vpop.f32.mrf.mxu0
        %v2912 = vadd.f32 %v2799, %v2911
        %2913 = vmatmul.f32.gmra.mxu0 %v719
        %v2914 = vpop.f32.mrf.mxu0
        %v2915 = vadd.f32 %v2802, %v2914
        %2916 = vmatmul.f32.gmra.mxu0 %v720
        %v2917 = vpop.f32.mrf.mxu0
        %v2918 = vadd.f32 %v2805, %v2917
        %2919 = vmatmul.f32.gmra.mxu0 %v721
        %v2920 = vpop.f32.mrf.mxu0
        %v2921 = vadd.f32 %v2808, %v2920
        %2922 = vmatmul.f32.gmra.mxu0 %v722
        %v2923 = vpop.f32.mrf.mxu0
        %v2924 = vadd.f32 %v2811, %v2923
        %2925 = vmatmul.f32.gmra.mxu0 %v723
        %v2926 = vpop.f32.mrf.mxu0
        %v2927 = vadd.f32 %v2814, %v2926
        %2928 = vmatmul.f32.gmra.mxu0 %v724
        %v2929 = vpop.f32.mrf.mxu0
        %v2930 = vadd.f32 %v2817, %v2929
        %2931 = vmatmul.f32.gmra.mxu0 %v725
        %v2932 = vpop.f32.mrf.mxu0
        %v2933 = vadd.f32 %v2820, %v2932
        %2934 = vmatmul.f32.gmra.mxu0 %v726
        %v2935 = vpop.f32.mrf.mxu0
        %v2936 = vadd.f32 %v2823, %v2935
        %2937 = vmatmul.f32.gmra.mxu0 %v727
        %v2938 = vpop.f32.mrf.mxu0
        %v2939 = vadd.f32 %v2826, %v2938
        %2940 = vmatmul.f32.gmra.mxu0 %v728
        %v2941 = vpop.f32.mrf.mxu0
        %v2942 = vadd.f32 %v2829, %v2941
        %2943 = vmatmul.f32.gmra.mxu0 %v729
        %v2944 = vpop.f32.mrf.mxu0
        %v2945 = vadd.f32 %v2832, %v2944
        %2946 = vdwg.mxu0
        %2947 = vmatpush.msra.mxu0 %v2333
        %2948 = vmatpush.msra.mxu0 %v2332
        %2949 = vmatpush.msra.mxu0 %v2331
        %2950 = vmatpush.msra.mxu0 %v2330
        %2951 = vmatpush.msra.mxu0 %v2329
        %2952 = vmatpush.msra.mxu0 %v2328
        %2953 = vmatpush.msra.mxu0 %v2327
        %2954 = vmatpush.msra.mxu0 %v2326
        %2955 = vmatpush.msra.mxu0 %v2325
        %2956 = vmatpush.msra.mxu0 %v2324
        %2957 = vmatpush.msra.mxu0 %v2323
        %2958 = vmatpush.msra.mxu0 %v2322
        %2959 = vmatpush.msra.mxu0 %v2321
        %2960 = vmatpush.msra.mxu0 %v2320
        %2961 = vmatpush.msra.mxu0 %v2319
        %2962 = vmatpush.msra.mxu0 %v2318
        %2963 = vmatmul.f32.gmra.mxu0 %v1694
        %v2964 = vpop.f32.mrf.mxu0
        %v2965 = vadd.f32 %v2852, %v2964
        %2966 = vmatmul.f32.gmra.mxu0 %v1695
        %v2967 = vpop.f32.mrf.mxu0
        %v2968 = vadd.f32 %v2855, %v2967
        %2969 = vmatmul.f32.gmra.mxu0 %v1696
        %v2970 = vpop.f32.mrf.mxu0
        %v2971 = vadd.f32 %v2858, %v2970
        %2972 = vmatmul.f32.gmra.mxu0 %v1697
        %v2973 = vpop.f32.mrf.mxu0
        %v2974 = vadd.f32 %v2861, %v2973
        %2975 = vmatmul.f32.gmra.mxu0 %v1698
        %v2976 = vpop.f32.mrf.mxu0
        %v2977 = vadd.f32 %v2864, %v2976
        %2978 = vmatmul.f32.gmra.mxu0 %v1699
        %v2979 = vpop.f32.mrf.mxu0
        %v2980 = vadd.f32 %v2867, %v2979
        %2981 = vmatmul.f32.gmra.mxu0 %v1700
        %v2982 = vpop.f32.mrf.mxu0
        %v2983 = vadd.f32 %v2870, %v2982
        %2984 = vmatmul.f32.gmra.mxu0 %v1701
        %v2985 = vpop.f32.mrf.mxu0
        %v2986 = vadd.f32 %v2873, %v2985
        %2987 = vmatmul.f32.gmra.mxu0 %v1702
        %v2988 = vpop.f32.mrf.mxu0
        %v2989 = vadd.f32 %v2876, %v2988
        %2990 = vmatmul.f32.gmra.mxu0 %v1703
        %v2991 = vpop.f32.mrf.mxu0
        %v2992 = vadd.f32 %v2879, %v2991
        %2993 = vmatmul.f32.gmra.mxu0 %v1704
        %v2994 = vpop.f32.mrf.mxu0
        %v2995 = vadd.f32 %v2882, %v2994
        %2996 = vmatmul.f32.gmra.mxu0 %v1705
        %v2997 = vpop.f32.mrf.mxu0
        %v2998 = vadd.f32 %v2885, %v2997
        %2999 = vmatmul.f32.gmra.mxu0 %v1706
        %v3000 = vpop.f32.mrf.mxu0
        %v3001 = vadd.f32 %v2888, %v3000
        %3002 = vmatmul.f32.gmra.mxu0 %v1707
        %v3003 = vpop.f32.mrf.mxu0
        %v3004 = vadd.f32 %v2891, %v3003
        %3005 = vmatmul.f32.gmra.mxu0 %v1708
        %v3006 = vpop.f32.mrf.mxu0
        %v3007 = vadd.f32 %v2894, %v3006
        %3008 = vmatmul.f32.gmra.mxu0 %v1709
        %v3009 = vpop.f32.mrf.mxu0
        %v3010 = vadd.f32 %v2897, %v3009
        %3011 = vmatmul.f32.gmra.mxu0 %v1710
        %v3012 = vpop.f32.mrf.mxu0
        %v3013 = vadd.f32 %v2900, %v3012
        %3014 = vmatmul.f32.gmra.mxu0 %v1711
        %v3015 = vpop.f32.mrf.mxu0
        %v3016 = vadd.f32 %v2903, %v3015
        %3017 = vmatmul.f32.gmra.mxu0 %v1712
        %v3018 = vpop.f32.mrf.mxu0
        %v3019 = vadd.f32 %v2906, %v3018
        %3020 = vmatmul.f32.gmra.mxu0 %v1713
        %v3021 = vpop.f32.mrf.mxu0
        %v3022 = vadd.f32 %v2909, %v3021
        %3023 = vmatmul.f32.gmra.mxu0 %v1714
        %v3024 = vpop.f32.mrf.mxu0
        %v3025 = vadd.f32 %v2912, %v3024
        %3026 = vmatmul.f32.gmra.mxu0 %v1715
        %v3027 = vpop.f32.mrf.mxu0
        %v3028 = vadd.f32 %v2915, %v3027
        %3029 = vmatmul.f32.gmra.mxu0 %v1716
        %v3030 = vpop.f32.mrf.mxu0
        %v3031 = vadd.f32 %v2918, %v3030
        %3032 = vmatmul.f32.gmra.mxu0 %v1717
        %v3033 = vpop.f32.mrf.mxu0
        %v3034 = vadd.f32 %v2921, %v3033
        %3035 = vmatmul.f32.gmra.mxu0 %v1718
        %v3036 = vpop.f32.mrf.mxu0
        %v3037 = vadd.f32 %v2924, %v3036
        %3038 = vmatmul.f32.gmra.mxu0 %v1719
        %v3039 = vpop.f32.mrf.mxu0
        %v3040 = vadd.f32 %v2927, %v3039
        %3041 = vmatmul.f32.gmra.mxu0 %v1720
        %v3042 = vpop.f32.mrf.mxu0
        %v3043 = vadd.f32 %v2930, %v3042
        %3044 = vmatmul.f32.gmra.mxu0 %v1721
        %v3045 = vpop.f32.mrf.mxu0
        %v3046 = vadd.f32 %v2933, %v3045
        %3047 = vmatmul.f32.gmra.mxu0 %v1722
        %v3048 = vpop.f32.mrf.mxu0
        %v3049 = vadd.f32 %v2936, %v3048
        %3050 = vmatmul.f32.gmra.mxu0 %v1723
        %v3051 = vpop.f32.mrf.mxu0
        %v3052 = vadd.f32 %v2939, %v3051
        %3053 = vmatmul.f32.gmra.mxu0 %v1724
        %v3054 = vpop.f32.mrf.mxu0
        %v3055 = vadd.f32 %v2942, %v3054
        %3056 = vmatmul.f32.gmra.mxu0 %v1725
        %v3057 = vpop.f32.mrf.mxu0
        %v3058 = vadd.f32 %v2945, %v3057
        %3059 = vdwg.mxu0
        %3060 = vmatpush.msra.mxu0 %v2349
        %3061 = vmatpush.msra.mxu0 %v2348
        %3062 = vmatpush.msra.mxu0 %v2347
        %3063 = vmatpush.msra.mxu0 %v2346
        %3064 = vmatpush.msra.mxu0 %v2345
        %3065 = vmatpush.msra.mxu0 %v2344
        %3066 = vmatpush.msra.mxu0 %v2343
        %3067 = vmatpush.msra.mxu0 %v2342
        %3068 = vmatpush.msra.mxu0 %v2341
        %3069 = vmatpush.msra.mxu0 %v2340
        %3070 = vmatpush.msra.mxu0 %v2339
        %3071 = vmatpush.msra.mxu0 %v2338
        %3072 = vmatpush.msra.mxu0 %v2337
        %3073 = vmatpush.msra.mxu0 %v2336
        %3074 = vmatpush.msra.mxu0 %v2335
        %3075 = vmatpush.msra.mxu0 %v2334
        %3076 = vmatmul.f32.gmra.mxu0 %v1886
        %v3077 = vpop.f32.mrf.mxu0
        %v3078 = vadd.f32 %v2965, %v3077
        %3079 = vmatmul.f32.gmra.mxu0 %v1887
        %v3080 = vpop.f32.mrf.mxu0
        %v3081 = vadd.f32 %v2968, %v3080
        %3082 = vmatmul.f32.gmra.mxu0 %v1888
        %v3083 = vpop.f32.mrf.mxu0
        %v3084 = vadd.f32 %v2971, %v3083
        %3085 = vmatmul.f32.gmra.mxu0 %v1889
        %v3086 = vpop.f32.mrf.mxu0
        %v3087 = vadd.f32 %v2974, %v3086
        %3088 = vmatmul.f32.gmra.mxu0 %v1890
        %v3089 = vpop.f32.mrf.mxu0
        %v3090 = vadd.f32 %v2977, %v3089
        %3091 = vmatmul.f32.gmra.mxu0 %v1891
        %v3092 = vpop.f32.mrf.mxu0
        %v3093 = vadd.f32 %v2980, %v3092
        %3094 = vmatmul.f32.gmra.mxu0 %v1892
        %v3095 = vpop.f32.mrf.mxu0
        %v3096 = vadd.f32 %v2983, %v3095
        %3097 = vmatmul.f32.gmra.mxu0 %v1893
        %v3098 = vpop.f32.mrf.mxu0
        %v3099 = vadd.f32 %v2986, %v3098
        %3100 = vmatmul.f32.gmra.mxu0 %v1894
        %v3101 = vpop.f32.mrf.mxu0
        %v3102 = vadd.f32 %v2989, %v3101
        %3103 = vmatmul.f32.gmra.mxu0 %v1895
        %v3104 = vpop.f32.mrf.mxu0
        %v3105 = vadd.f32 %v2992, %v3104
        %3106 = vmatmul.f32.gmra.mxu0 %v1896
        %v3107 = vpop.f32.mrf.mxu0
        %v3108 = vadd.f32 %v2995, %v3107
        %3109 = vmatmul.f32.gmra.mxu0 %v1897
        %v3110 = vpop.f32.mrf.mxu0
        %v3111 = vadd.f32 %v2998, %v3110
        %3112 = vmatmul.f32.gmra.mxu0 %v1898
        %v3113 = vpop.f32.mrf.mxu0
        %v3114 = vadd.f32 %v3001, %v3113
        %3115 = vmatmul.f32.gmra.mxu0 %v1899
        %v3116 = vpop.f32.mrf.mxu0
        %v3117 = vadd.f32 %v3004, %v3116
        %3118 = vmatmul.f32.gmra.mxu0 %v1900
        %v3119 = vpop.f32.mrf.mxu0
        %v3120 = vadd.f32 %v3007, %v3119
        %3121 = vmatmul.f32.gmra.mxu0 %v1901
        %v3122 = vpop.f32.mrf.mxu0
        %v3123 = vadd.f32 %v3010, %v3122
        %3124 = vmatmul.f32.gmra.mxu0 %v1902
        %v3125 = vpop.f32.mrf.mxu0
        %v3126 = vadd.f32 %v3013, %v3125
        %3127 = vmatmul.f32.gmra.mxu0 %v1903
        %v3128 = vpop.f32.mrf.mxu0
        %v3129 = vadd.f32 %v3016, %v3128
        %3130 = vmatmul.f32.gmra.mxu0 %v1904
        %v3131 = vpop.f32.mrf.mxu0
        %v3132 = vadd.f32 %v3019, %v3131
        %3133 = vmatmul.f32.gmra.mxu0 %v1905
        %v3134 = vpop.f32.mrf.mxu0
        %v3135 = vadd.f32 %v3022, %v3134
        %3136 = vmatmul.f32.gmra.mxu0 %v1906
        %v3137 = vpop.f32.mrf.mxu0
        %v3138 = vadd.f32 %v3025, %v3137
        %3139 = vmatmul.f32.gmra.mxu0 %v1907
        %v3140 = vpop.f32.mrf.mxu0
        %v3141 = vadd.f32 %v3028, %v3140
        %3142 = vmatmul.f32.gmra.mxu0 %v1908
        %v3143 = vpop.f32.mrf.mxu0
        %v3144 = vadd.f32 %v3031, %v3143
        %3145 = vmatmul.f32.gmra.mxu0 %v1909
        %v3146 = vpop.f32.mrf.mxu0
        %v3147 = vadd.f32 %v3034, %v3146
        %3148 = vmatmul.f32.gmra.mxu0 %v1910
        %v3149 = vpop.f32.mrf.mxu0
        %v3150 = vadd.f32 %v3037, %v3149
        %3151 = vmatmul.f32.gmra.mxu0 %v1911
        %v3152 = vpop.f32.mrf.mxu0
        %v3153 = vadd.f32 %v3040, %v3152
        %3154 = vmatmul.f32.gmra.mxu0 %v1912
        %v3155 = vpop.f32.mrf.mxu0
        %v3156 = vadd.f32 %v3043, %v3155
        %3157 = vmatmul.f32.gmra.mxu0 %v1913
        %v3158 = vpop.f32.mrf.mxu0
        %v3159 = vadd.f32 %v3046, %v3158
        %3160 = vmatmul.f32.gmra.mxu0 %v1914
        %v3161 = vpop.f32.mrf.mxu0
        %v3162 = vadd.f32 %v3049, %v3161
        %3163 = vmatmul.f32.gmra.mxu0 %v1915
        %v3164 = vpop.f32.mrf.mxu0
        %v3165 = vadd.f32 %v3052, %v3164
        %3166 = vmatmul.f32.gmra.mxu0 %v1916
        %v3167 = vpop.f32.mrf.mxu0
        %v3168 = vadd.f32 %v3055, %v3167
        %3169 = vmatmul.f32.gmra.mxu0 %v1917
        %v3170 = vpop.f32.mrf.mxu0
        %v3171 = vadd.f32 %v3058, %v3170
        %3172 = vdwg.mxu0
        %3173 = vmatpush.msra.mxu0 %v2365
        %3174 = vmatpush.msra.mxu0 %v2364
        %3175 = vmatpush.msra.mxu0 %v2363
        %3176 = vmatpush.msra.mxu0 %v2362
        %3177 = vmatpush.msra.mxu0 %v2361
        %3178 = vmatpush.msra.mxu0 %v2360
        %3179 = vmatpush.msra.mxu0 %v2359
        %3180 = vmatpush.msra.mxu0 %v2358
        %3181 = vmatpush.msra.mxu0 %v2357
        %3182 = vmatpush.msra.mxu0 %v2356
        %3183 = vmatpush.msra.mxu0 %v2355
        %3184 = vmatpush.msra.mxu0 %v2354
        %3185 = vmatpush.msra.mxu0 %v2353
        %3186 = vmatpush.msra.mxu0 %v2352
        %3187 = vmatpush.msra.mxu0 %v2351
        %3188 = vmatpush.msra.mxu0 %v2350
        %3189 = vmatmul.f32.gmra.mxu0 %v2046
        %v3190 = vpop.f32.mrf.mxu0
        %v3191 = vadd.f32 %v3078, %v3190
        %3192 = vmatmul.f32.gmra.mxu0 %v2047
        %v3193 = vpop.f32.mrf.mxu0
        %v3194 = vadd.f32 %v3081, %v3193
        %3195 = vmatmul.f32.gmra.mxu0 %v2048
        %v3196 = vpop.f32.mrf.mxu0
        %v3197 = vadd.f32 %v3084, %v3196
        %3198 = vmatmul.f32.gmra.mxu0 %v2049
        %v3199 = vpop.f32.mrf.mxu0
        %v3200 = vadd.f32 %v3087, %v3199
        %3201 = vmatmul.f32.gmra.mxu0 %v2050
        %v3202 = vpop.f32.mrf.mxu0
        %v3203 = vadd.f32 %v3090, %v3202
        %3204 = vmatmul.f32.gmra.mxu0 %v2051
        %v3205 = vpop.f32.mrf.mxu0
        %v3206 = vadd.f32 %v3093, %v3205
        %3207 = vmatmul.f32.gmra.mxu0 %v2052
        %v3208 = vpop.f32.mrf.mxu0
        %v3209 = vadd.f32 %v3096, %v3208
        %3210 = vmatmul.f32.gmra.mxu0 %v2053
        %v3211 = vpop.f32.mrf.mxu0
        %v3212 = vadd.f32 %v3099, %v3211
        %3213 = vmatmul.f32.gmra.mxu0 %v2054
        %v3214 = vpop.f32.mrf.mxu0
        %v3215 = vadd.f32 %v3102, %v3214
        %3216 = vmatmul.f32.gmra.mxu0 %v2055
        %v3217 = vpop.f32.mrf.mxu0
        %v3218 = vadd.f32 %v3105, %v3217
        %3219 = vmatmul.f32.gmra.mxu0 %v2056
        %v3220 = vpop.f32.mrf.mxu0
        %v3221 = vadd.f32 %v3108, %v3220
        %3222 = vmatmul.f32.gmra.mxu0 %v2057
        %v3223 = vpop.f32.mrf.mxu0
        %v3224 = vadd.f32 %v3111, %v3223
        %3225 = vmatmul.f32.gmra.mxu0 %v2058
        %v3226 = vpop.f32.mrf.mxu0
        %v3227 = vadd.f32 %v3114, %v3226
        %3228 = vmatmul.f32.gmra.mxu0 %v2059
        %v3229 = vpop.f32.mrf.mxu0
        %v3230 = vadd.f32 %v3117, %v3229
        %3231 = vmatmul.f32.gmra.mxu0 %v2060
        %v3232 = vpop.f32.mrf.mxu0
        %v3233 = vadd.f32 %v3120, %v3232
        %3234 = vmatmul.f32.gmra.mxu0 %v2061
        %v3235 = vpop.f32.mrf.mxu0
        %v3236 = vadd.f32 %v3123, %v3235
        %3237 = vmatmul.f32.gmra.mxu0 %v2062
        %v3238 = vpop.f32.mrf.mxu0
        %v3239 = vadd.f32 %v3126, %v3238
        %3240 = vmatmul.f32.gmra.mxu0 %v2063
        %v3241 = vpop.f32.mrf.mxu0
        %v3242 = vadd.f32 %v3129, %v3241
        %3243 = vmatmul.f32.gmra.mxu0 %v2064
        %v3244 = vpop.f32.mrf.mxu0
        %v3245 = vadd.f32 %v3132, %v3244
        %3246 = vmatmul.f32.gmra.mxu0 %v2065
        %v3247 = vpop.f32.mrf.mxu0
        %v3248 = vadd.f32 %v3135, %v3247
        %3249 = vmatmul.f32.gmra.mxu0 %v2066
        %v3250 = vpop.f32.mrf.mxu0
        %v3251 = vadd.f32 %v3138, %v3250
        %3252 = vmatmul.f32.gmra.mxu0 %v2067
        %v3253 = vpop.f32.mrf.mxu0
        %v3254 = vadd.f32 %v3141, %v3253
        %3255 = vmatmul.f32.gmra.mxu0 %v2068
        %v3256 = vpop.f32.mrf.mxu0
        %v3257 = vadd.f32 %v3144, %v3256
        %3258 = vmatmul.f32.gmra.mxu0 %v2069
        %v3259 = vpop.f32.mrf.mxu0
        %v3260 = vadd.f32 %v3147, %v3259
        %3261 = vmatmul.f32.gmra.mxu0 %v2070
        %v3262 = vpop.f32.mrf.mxu0
        %v3263 = vadd.f32 %v3150, %v3262
        %3264 = vmatmul.f32.gmra.mxu0 %v2071
        %v3265 = vpop.f32.mrf.mxu0
        %v3266 = vadd.f32 %v3153, %v3265
        %3267 = vmatmul.f32.gmra.mxu0 %v2072
        %v3268 = vpop.f32.mrf.mxu0
        %v3269 = vadd.f32 %v3156, %v3268
        %3270 = vmatmul.f32.gmra.mxu0 %v2073
        %v3271 = vpop.f32.mrf.mxu0
        %v3272 = vadd.f32 %v3159, %v3271
        %3273 = vmatmul.f32.gmra.mxu0 %v2074
        %v3274 = vpop.f32.mrf.mxu0
        %v3275 = vadd.f32 %v3162, %v3274
        %3276 = vmatmul.f32.gmra.mxu0 %v2075
        %v3277 = vpop.f32.mrf.mxu0
        %v3278 = vadd.f32 %v3165, %v3277
        %3279 = vmatmul.f32.gmra.mxu0 %v2076
        %v3280 = vpop.f32.mrf.mxu0
        %v3281 = vadd.f32 %v3168, %v3280
        %3282 = vmatmul.f32.gmra.mxu0 %v2077
        %v3283 = vpop.f32.mrf.mxu0
        %v3284 = vadd.f32 %v3171, %v3283
        %3285 = vdwg.mxu0
        %3286 = vmatpush.msra.mxu0 %v2381
        %3287 = vmatpush.msra.mxu0 %v2380
        %3288 = vmatpush.msra.mxu0 %v2379
        %3289 = vmatpush.msra.mxu0 %v2378
        %3290 = vmatpush.msra.mxu0 %v2377
        %3291 = vmatpush.msra.mxu0 %v2376
        %3292 = vmatpush.msra.mxu0 %v2375
        %3293 = vmatpush.msra.mxu0 %v2374
        %3294 = vmatpush.msra.mxu0 %v2373
        %3295 = vmatpush.msra.mxu0 %v2372
        %3296 = vmatpush.msra.mxu0 %v2371
        %3297 = vmatpush.msra.mxu0 %v2370
        %3298 = vmatpush.msra.mxu0 %v2369
        %3299 = vmatpush.msra.mxu0 %v2368
        %3300 = vmatpush.msra.mxu0 %v2367
        %3301 = vmatpush.msra.mxu0 %v2366
        %3302 = vmatmul.f32.gmra.mxu0 %v2206
        %v3303 = vpop.f32.mrf.mxu0
        %v3304 = vadd.f32 %v3191, %v3303
        %3305 = vmatmul.f32.gmra.mxu0 %v2207
        %v3306 = vpop.f32.mrf.mxu0
        %v3307 = vadd.f32 %v3194, %v3306
        %3308 = vmatmul.f32.gmra.mxu0 %v2208
        %v3309 = vpop.f32.mrf.mxu0
        %v3310 = vadd.f32 %v3197, %v3309
        %3311 = vmatmul.f32.gmra.mxu0 %v2209
        %v3312 = vpop.f32.mrf.mxu0
        %v3313 = vadd.f32 %v3200, %v3312
        %3314 = vmatmul.f32.gmra.mxu0 %v2210
        %v3315 = vpop.f32.mrf.mxu0
        %v3316 = vadd.f32 %v3203, %v3315
        %3317 = vmatmul.f32.gmra.mxu0 %v2211
        %v3318 = vpop.f32.mrf.mxu0
        %v3319 = vadd.f32 %v3206, %v3318
        %3320 = vmatmul.f32.gmra.mxu0 %v2212
        %v3321 = vpop.f32.mrf.mxu0
        %v3322 = vadd.f32 %v3209, %v3321
        %3323 = vmatmul.f32.gmra.mxu0 %v2213
        %v3324 = vpop.f32.mrf.mxu0
        %v3325 = vadd.f32 %v3212, %v3324
        %3326 = vmatmul.f32.gmra.mxu0 %v2214
        %v3327 = vpop.f32.mrf.mxu0
        %v3328 = vadd.f32 %v3215, %v3327
        %3329 = vmatmul.f32.gmra.mxu0 %v2215
        %v3330 = vpop.f32.mrf.mxu0
        %v3331 = vadd.f32 %v3218, %v3330
        %3332 = vmatmul.f32.gmra.mxu0 %v2216
        %v3333 = vpop.f32.mrf.mxu0
        %v3334 = vadd.f32 %v3221, %v3333
        %3335 = vmatmul.f32.gmra.mxu0 %v2217
        %v3336 = vpop.f32.mrf.mxu0
        %v3337 = vadd.f32 %v3224, %v3336
        %3338 = vmatmul.f32.gmra.mxu0 %v2218
        %v3339 = vpop.f32.mrf.mxu0
        %v3340 = vadd.f32 %v3227, %v3339
        %3341 = vmatmul.f32.gmra.mxu0 %v2219
        %v3342 = vpop.f32.mrf.mxu0
        %v3343 = vadd.f32 %v3230, %v3342
        %3344 = vmatmul.f32.gmra.mxu0 %v2220
        %v3345 = vpop.f32.mrf.mxu0
        %v3346 = vadd.f32 %v3233, %v3345
        %3347 = vmatmul.f32.gmra.mxu0 %v2221
        %v3348 = vpop.f32.mrf.mxu0
        %v3349 = vadd.f32 %v3236, %v3348
        %3350 = vmatmul.f32.gmra.mxu0 %v2222
        %v3351 = vpop.f32.mrf.mxu0
        %v3352 = vadd.f32 %v3239, %v3351
        %3353 = vmatmul.f32.gmra.mxu0 %v2223
        %v3354 = vpop.f32.mrf.mxu0
        %v3355 = vadd.f32 %v3242, %v3354
        %3356 = vmatmul.f32.gmra.mxu0 %v2224
        %v3357 = vpop.f32.mrf.mxu0
        %v3358 = vadd.f32 %v3245, %v3357
        %3359 = vmatmul.f32.gmra.mxu0 %v2225
        %v3360 = vpop.f32.mrf.mxu0
        %v3361 = vadd.f32 %v3248, %v3360
        %3362 = vmatmul.f32.gmra.mxu0 %v2226
        %v3363 = vpop.f32.mrf.mxu0
        %v3364 = vadd.f32 %v3251, %v3363
        %3365 = vmatmul.f32.gmra.mxu0 %v2227
        %v3366 = vpop.f32.mrf.mxu0
        %v3367 = vadd.f32 %v3254, %v3366
        %3368 = vmatmul.f32.gmra.mxu0 %v2228
        %v3369 = vpop.f32.mrf.mxu0
        %v3370 = vadd.f32 %v3257, %v3369
        %3371 = vmatmul.f32.gmra.mxu0 %v2229
        %v3372 = vpop.f32.mrf.mxu0
        %v3373 = vadd.f32 %v3260, %v3372
        %3374 = vmatmul.f32.gmra.mxu0 %v2230
        %v3375 = vpop.f32.mrf.mxu0
        %v3376 = vadd.f32 %v3263, %v3375
        %3377 = vmatmul.f32.gmra.mxu0 %v2231
        %v3378 = vpop.f32.mrf.mxu0
        %v3379 = vadd.f32 %v3266, %v3378
        %3380 = vmatmul.f32.gmra.mxu0 %v2232
        %v3381 = vpop.f32.mrf.mxu0
        %v3382 = vadd.f32 %v3269, %v3381
        %3383 = vmatmul.f32.gmra.mxu0 %v2233
        %v3384 = vpop.f32.mrf.mxu0
        %v3385 = vadd.f32 %v3272, %v3384
        %3386 = vmatmul.f32.gmra.mxu0 %v2234
        %v3387 = vpop.f32.mrf.mxu0
        %v3388 = vadd.f32 %v3275, %v3387
        %3389 = vmatmul.f32.gmra.mxu0 %v2235
        %v3390 = vpop.f32.mrf.mxu0
        %v3391 = vadd.f32 %v3278, %v3390
        %3392 = vmatmul.f32.gmra.mxu0 %v2236
        %v3393 = vpop.f32.mrf.mxu0
        %v3394 = vadd.f32 %v3281, %v3393
        %3395 = vmatmul.f32.gmra.mxu0 %v2237
        %v3396 = vpop.f32.mrf.mxu0
        %v3397 = vadd.f32 %v3284, %v3396
        %3398 = vdwg.mxu0
        %v3399 = vperm.slane %v249, 0
        %v3400 = vmul.f32 %v3304, %v3399
        %v3401 = vmul.f32 %v3307, %v3399
        %v3402 = vmul.f32 %v3310, %v3399
        %v3403 = vmul.f32 %v3313, %v3399
        %v3404 = vmul.f32 %v3316, %v3399
        %v3405 = vmul.f32 %v3319, %v3399
        %v3406 = vmul.f32 %v3322, %v3399
        %v3407 = vmul.f32 %v3325, %v3399
        %v3408 = vmul.f32 %v3328, %v3399
        %v3409 = vmul.f32 %v3331, %v3399
        %v3410 = vmul.f32 %v3334, %v3399
        %v3411 = vmul.f32 %v3337, %v3399
        %v3412 = vmul.f32 %v3340, %v3399
        %v3413 = vmul.f32 %v3343, %v3399
        %v3414 = vmul.f32 %v3346, %v3399
        %v3415 = vmul.f32 %v3349, %v3399
        %v3416 = vmul.f32 %v3352, %v3399
        %v3417 = vmul.f32 %v3355, %v3399
        %v3418 = vmul.f32 %v3358, %v3399
        %v3419 = vmul.f32 %v3361, %v3399
        %v3420 = vmul.f32 %v3364, %v3399
        %v3421 = vmul.f32 %v3367, %v3399
        %v3422 = vmul.f32 %v3370, %v3399
        %v3423 = vmul.f32 %v3373, %v3399
        %v3424 = vmul.f32 %v3376, %v3399
        %v3425 = vmul.f32 %v3379, %v3399
        %v3426 = vmul.f32 %v3382, %v3399
        %v3427 = vmul.f32 %v3385, %v3399
        %v3428 = vmul.f32 %v3388, %v3399
        %v3429 = vmul.f32 %v3391, %v3399
        %v3430 = vmul.f32 %v3394, %v3399
        %v3431 = vmul.f32 %v3397, %v3399
        %v3432 = vperm.slane %v249, 1
        %v3433 = vadd.f32 %v3400, %v3432
        %v3434 = vadd.f32 %v3401, %v3432
        %v3435 = vadd.f32 %v3402, %v3432
        %v3436 = vadd.f32 %v3403, %v3432
        %v3437 = vadd.f32 %v3404, %v3432
        %v3438 = vadd.f32 %v3405, %v3432
        %v3439 = vadd.f32 %v3406, %v3432
        %v3440 = vadd.f32 %v3407, %v3432
        %v3441 = vadd.f32 %v3408, %v3432
        %v3442 = vadd.f32 %v3409, %v3432
        %v3443 = vadd.f32 %v3410, %v3432
        %v3444 = vadd.f32 %v3411, %v3432
        %v3445 = vadd.f32 %v3412, %v3432
        %v3446 = vadd.f32 %v3413, %v3432
        %v3447 = vadd.f32 %v3414, %v3432
        %v3448 = vadd.f32 %v3415, %v3432
        %v3449 = vadd.f32 %v3416, %v3432
        %v3450 = vadd.f32 %v3417, %v3432
        %v3451 = vadd.f32 %v3418, %v3432
        %v3452 = vadd.f32 %v3419, %v3432
        %v3453 = vadd.f32 %v3420, %v3432
        %v3454 = vadd.f32 %v3421, %v3432
        %v3455 = vadd.f32 %v3422, %v3432
        %v3456 = vadd.f32 %v3423, %v3432
        %v3457 = vadd.f32 %v3424, %v3432
        %v3458 = vadd.f32 %v3425, %v3432
        %v3459 = vadd.f32 %v3426, %v3432
        %v3460 = vadd.f32 %v3427, %v3432
        %v3461 = vadd.f32 %v3428, %v3432
        %v3462 = vadd.f32 %v3429, %v3432
        %v3463 = vadd.f32 %v3430, %v3432
        %v3464 = vadd.f32 %v3431, %v3432
        %v3465 = vmax.f32 %v3433, 0.0
        %v3466 = vmax.f32 %v3434, 0.0
        %v3467 = vmax.f32 %v3435, 0.0
        %v3468 = vmax.f32 %v3436, 0.0
        %v3469 = vmax.f32 %v3437, 0.0
        %v3470 = vmax.f32 %v3438, 0.0
        %v3471 = vmax.f32 %v3439, 0.0
        %v3472 = vmax.f32 %v3440, 0.0
        %v3473 = vmax.f32 %v3441, 0.0
        %v3474 = vmax.f32 %v3442, 0.0
        %v3475 = vmax.f32 %v3443, 0.0
        %v3476 = vmax.f32 %v3444, 0.0
        %v3477 = vmax.f32 %v3445, 0.0
        %v3478 = vmax.f32 %v3446, 0.0
        %v3479 = vmax.f32 %v3447, 0.0
        %v3480 = vmax.f32 %v3448, 0.0
        %v3481 = vmax.f32 %v3449, 0.0
        %v3482 = vmax.f32 %v3450, 0.0
        %v3483 = vmax.f32 %v3451, 0.0
        %v3484 = vmax.f32 %v3452, 0.0
        %v3485 = vmax.f32 %v3453, 0.0
        %v3486 = vmax.f32 %v3454, 0.0
        %v3487 = vmax.f32 %v3455, 0.0
        %v3488 = vmax.f32 %v3456, 0.0
        %v3489 = vmax.f32 %v3457, 0.0
        %v3490 = vmax.f32 %v3458, 0.0
        %v3491 = vmax.f32 %v3459, 0.0
        %v3492 = vmax.f32 %v3460, 0.0
        %v3493 = vmax.f32 %v3461, 0.0
        %v3494 = vmax.f32 %v3462, 0.0
        %v3495 = vmax.f32 %v3463, 0.0
        %v3496 = vmax.f32 %v3464, 0.0
        %3497 = vst [vmem:[#allocation2] sm:$0xff] %v3465
        %3498 = vst [vmem:[#allocation2 + $0x8] sm:$0xff] %v3466
        %3499 = vst [vmem:[#allocation2 + $0x10] sm:$0xff] %v3467
        %3500 = vst [vmem:[#allocation2 + $0x18] sm:$0xff] %v3468
        %3501 = vst [vmem:[#allocation2 + $0x20] sm:$0xff] %v3469
        %3502 = vst [vmem:[#allocation2 + $0x28] sm:$0xff] %v3470
        %3503 = vst [vmem:[#allocation2 + $0x30] sm:$0xff] %v3471
        %3504 = vst [vmem:[#allocation2 + $0x38] sm:$0xff] %v3472
        %3505 = vst [vmem:[#allocation2 + $0x40] sm:$0xff] %v3473
        %3506 = vst [vmem:[#allocation2 + $0x48] sm:$0xff] %v3474
        %3507 = vst [vmem:[#allocation2 + $0x50] sm:$0xff] %v3475
        %3508 = vst [vmem:[#allocation2 + $0x58] sm:$0xff] %v3476
        %3509 = vst [vmem:[#allocation2 + $0x60] sm:$0xff] %v3477
        %3510 = vst [vmem:[#allocation2 + $0x68] sm:$0xff] %v3478
        %3511 = vst [vmem:[#allocation2 + $0x70] sm:$0xff] %v3479
        %3512 = vst [vmem:[#allocation2 + $0x78] sm:$0xff] %v3480
        %3513 = vst [vmem:[#allocation2 + $0x80] sm:$0xff] %v3481
        %3514 = vst [vmem:[#allocation2 + $0x88] sm:$0xff] %v3482
        %3515 = vst [vmem:[#allocation2 + $0x90] sm:$0xff] %v3483
        %3516 = vst [vmem:[#allocation2 + $0x98] sm:$0xff] %v3484
        %3517 = vst [vmem:[#allocation2 + $0xa0] sm:$0xff] %v3485
        %3518 = vst [vmem:[#allocation2 + $0xa8] sm:$0xff] %v3486
        %3519 = vst [vmem:[#allocation2 + $0xb0] sm:$0xff] %v3487
        %3520 = vst [vmem:[#allocation2 + $0xb8] sm:$0xff] %v3488
        %3521 = vst [vmem:[#allocation2 + $0xc0] sm:$0xff] %v3489
        %3522 = vst [vmem:[#allocation2 + $0xc8] sm:$0xff] %v3490
        %3523 = vst [vmem:[#allocation2 + $0xd0] sm:$0xff] %v3491
        %3524 = vst [vmem:[#allocation2 + $0xd8] sm:$0xff] %v3492
        %3525 = vst [vmem:[#allocation2 + $0xe0] sm:$0xff] %v3493
        %3526 = vst [vmem:[#allocation2 + $0xe8] sm:$0xff] %v3494
        %3527 = vst [vmem:[#allocation2 + $0xf0] sm:$0xff] %v3495
        %3528 = vst [vmem:[#allocation2 + $0xf8] sm:$0xff] %v3496
        %v3529 = vld [vmem:[#allocation2] sm:$0xff]
        %v3530 = vld [vmem:[#allocation2 + $0x8] sm:$0xff]
        %v3531 = vld [vmem:[#allocation2 + $0x10] sm:$0xff]
        %v3532 = vld [vmem:[#allocation2 + $0x18] sm:$0xff]
        %v3533 = vld [vmem:[#allocation2 + $0x20] sm:$0xff]
        %v3534 = vld [vmem:[#allocation2 + $0x28] sm:$0xff]
        %v3535 = vld [vmem:[#allocation2 + $0x30] sm:$0xff]
        %v3536 = vld [vmem:[#allocation2 + $0x38] sm:$0xff]
        %v3537 = vld [vmem:[#allocation2 + $0x40] sm:$0xff]
        %v3538 = vld [vmem:[#allocation2 + $0x48] sm:$0xff]
        %v3539 = vld [vmem:[#allocation2 + $0x50] sm:$0xff]
        %v3540 = vld [vmem:[#allocation2 + $0x58] sm:$0xff]
        %v3541 = vld [vmem:[#allocation2 + $0x60] sm:$0xff]
        %v3542 = vld [vmem:[#allocation2 + $0x68] sm:$0xff]
        %v3543 = vld [vmem:[#allocation2 + $0x70] sm:$0xff]
        %v3544 = vld [vmem:[#allocation2 + $0x78] sm:$0xff]
        %v3545 = vld [vmem:[#allocation2 + $0x80] sm:$0xff]
        %v3546 = vld [vmem:[#allocation2 + $0x88] sm:$0xff]
        %v3547 = vld [vmem:[#allocation2 + $0x90] sm:$0xff]
        %v3548 = vld [vmem:[#allocation2 + $0x98] sm:$0xff]
        %v3549 = vld [vmem:[#allocation2 + $0xa0] sm:$0xff]
        %v3550 = vld [vmem:[#allocation2 + $0xa8] sm:$0xff]
        %v3551 = vld [vmem:[#allocation2 + $0xb0] sm:$0xff]
        %v3552 = vld [vmem:[#allocation2 + $0xb8] sm:$0xff]
        %v3553 = vld [vmem:[#allocation2 + $0xc0] sm:$0xff]
        %v3554 = vld [vmem:[#allocation2 + $0xc8] sm:$0xff]
        %v3555 = vld [vmem:[#allocation2 + $0xd0] sm:$0xff]
        %v3556 = vld [vmem:[#allocation2 + $0xd8] sm:$0xff]
        %v3557 = vld [vmem:[#allocation2 + $0xe0] sm:$0xff]
        %v3558 = vld [vmem:[#allocation2 + $0xe8] sm:$0xff]
        %v3559 = vld [vmem:[#allocation2 + $0xf0] sm:$0xff]
        %v3560 = vld [vmem:[#allocation2 + $0xf8] sm:$0xff]
        %v3561 = vrot.slane %v3529, 7
        %v3562 = vrot.slane %v3530, 7
        %v3563 = vrot.slane %v3531, 7
        %v3564 = vrot.slane %v3532, 7
        %v3565 = vrot.slane %v3533, 7
        %v3566 = vrot.slane %v3534, 7
        %v3567 = vrot.slane %v3535, 7
        %v3568 = vrot.slane %v3536, 7
        %v3569 = vrot.slane %v3537, 7
        %v3570 = vrot.slane %v3538, 7
        %v3571 = vrot.slane %v3539, 7
        %v3572 = vrot.slane %v3540, 7
        %v3573 = vrot.slane %v3541, 7
        %v3574 = vrot.slane %v3542, 7
        %v3575 = vrot.slane %v3543, 7
        %v3576 = vrot.slane %v3544, 7
        %v3577 = vrot.slane %v3545, 7
        %v3578 = vrot.slane %v3546, 7
        %v3579 = vrot.slane %v3547, 7
        %v3580 = vrot.slane %v3548, 7
        %v3581 = vrot.slane %v3549, 7
        %v3582 = vrot.slane %v3550, 7
        %v3583 = vrot.slane %v3551, 7
        %v3584 = vrot.slane %v3552, 7
        %v3585 = vrot.slane %v3553, 7
        %v3586 = vrot.slane %v3554, 7
        %v3587 = vrot.slane %v3555, 7
        %v3588 = vrot.slane %v3556, 7
        %v3589 = vrot.slane %v3557, 7
        %v3590 = vrot.slane %v3558, 7
        %v3591 = vrot.slane %v3559, 7
        %v3592 = vrot.slane %v3560, 7
        %v3593 = vsel %vm764, %v3591, %v3592
        %v3594 = vsel %vm764, %v3590, %v3591
        %v3595 = vsel %vm764, %v3589, %v3590
        %v3596 = vsel %vm764, %v3588, %v3589
        %v3597 = vsel %vm764, %v3587, %v3588
        %v3598 = vsel %vm764, %v3586, %v3587
        %v3599 = vsel %vm764, %v3585, %v3586
        %v3600 = vsel %vm764, %v3584, %v3585
        %v3601 = vsel %vm764, %v3583, %v3584
        %v3602 = vsel %vm764, %v3582, %v3583
        %v3603 = vsel %vm764, %v3581, %v3582
        %v3604 = vsel %vm764, %v3580, %v3581
        %v3605 = vsel %vm764, %v3579, %v3580
        %v3606 = vsel %vm764, %v3578, %v3579
        %v3607 = vsel %vm764, %v3577, %v3578
        %v3608 = vsel %vm764, %v3576, %v3577
        %v3609 = vsel %vm764, %v3575, %v3576
        %v3610 = vsel %vm764, %v3574, %v3575
        %v3611 = vsel %vm764, %v3573, %v3574
        %v3612 = vsel %vm764, %v3572, %v3573
        %v3613 = vsel %vm764, %v3571, %v3572
        %v3614 = vsel %vm764, %v3570, %v3571
        %v3615 = vsel %vm764, %v3569, %v3570
        %v3616 = vsel %vm764, %v3568, %v3569
        %v3617 = vsel %vm764, %v3567, %v3568
        %v3618 = vsel %vm764, %v3566, %v3567
        %v3619 = vsel %vm764, %v3565, %v3566
        %v3620 = vsel %vm764, %v3564, %v3565
        %v3621 = vsel %vm764, %v3563, %v3564
        %v3622 = vsel %vm764, %v3562, %v3563
        %v3623 = vsel %vm764, %v3561, %v3562
        %v3624 = vsel %vm764, %v3592, %v3561
        %v3625 = vmul.f32 %v3594, %v800
        %v3626 = vmul.f32 %v3593, %v805
        %v3627 = vmul.f32 %v3624, %v810
        %v3628 = vmul.f32 %v3623, %v815
        %v3629 = vmul.f32 %v3622, %v820
        %v3630 = vmul.f32 %v3621, %v825
        %v3631 = vmul.f32 %v3620, %v830
        %v3632 = vmul.f32 %v3619, %v835
        %v3633 = vmul.f32 %v3618, %v840
        %v3634 = vmul.f32 %v3617, %v845
        %v3635 = vmul.f32 %v3616, %v850
        %v3636 = vmul.f32 %v3615, %v855
        %v3637 = vmul.f32 %v3614, %v860
        %v3638 = vmul.f32 %v3613, %v865
        %v3639 = vmul.f32 %v3612, %v870
        %v3640 = vmul.f32 %v3611, %v875
        %v3641 = vmul.f32 %v3610, %v880
        %v3642 = vmul.f32 %v3609, %v885
        %v3643 = vmul.f32 %v3608, %v890
        %v3644 = vmul.f32 %v3607, %v895
        %v3645 = vmul.f32 %v3606, %v900
        %v3646 = vmul.f32 %v3605, %v905
        %v3647 = vmul.f32 %v3604, %v910
        %v3648 = vmul.f32 %v3603, %v915
        %v3649 = vmul.f32 %v3602, %v920
        %v3650 = vmul.f32 %v3601, %v925
        %v3651 = vmul.f32 %v3600, %v930
        %v3652 = vmul.f32 %v3599, %v935
        %v3653 = vmul.f32 %v3598, %v940
        %v3654 = vmul.f32 %v3597, %v945
        %v3655 = vmul.f32 %v3596, %v950
        %v3656 = vmul.f32 %v3595, %v955
        %v3657 = vmul.f32 %v3559, %v991
        %v3658 = vmul.f32 %v3560, %v995
        %v3659 = vmul.f32 %v3529, %v999
        %v3660 = vmul.f32 %v3530, %v1003
        %v3661 = vmul.f32 %v3531, %v1007
        %v3662 = vmul.f32 %v3532, %v1011
        %v3663 = vmul.f32 %v3533, %v1015
        %v3664 = vmul.f32 %v3534, %v1019
        %v3665 = vmul.f32 %v3535, %v1023
        %v3666 = vmul.f32 %v3536, %v1027
        %v3667 = vmul.f32 %v3537, %v1031
        %v3668 = vmul.f32 %v3538, %v1035
        %v3669 = vmul.f32 %v3539, %v1039
        %v3670 = vmul.f32 %v3540, %v1043
        %v3671 = vmul.f32 %v3541, %v1047
        %v3672 = vmul.f32 %v3542, %v1051
        %v3673 = vmul.f32 %v3543, %v1055
        %v3674 = vmul.f32 %v3544, %v1059
        %v3675 = vmul.f32 %v3545, %v1063
        %v3676 = vmul.f32 %v3546, %v1067
        %v3677 = vmul.f32 %v3547, %v1071
        %v3678 = vmul.f32 %v3548, %v1075
        %v3679 = vmul.f32 %v3549, %v1079
        %v3680 = vmul.f32 %v3550, %v1083
        %v3681 = vmul.f32 %v3551, %v1087
        %v3682 = vmul.f32 %v3552, %v1091
        %v3683 = vmul.f32 %v3553, %v1095
        %v3684 = vmul.f32 %v3554, %v1099
        %v3685 = vmul.f32 %v3555, %v1103
        %v3686 = vmul.f32 %v3556, %v1107
        %v3687 = vmul.f32 %v3557, %v1111
        %v3688 = vmul.f32 %v3558, %v1115
        %v3689 = vrot.slane %v3529, 1
        %v3690 = vrot.slane %v3530, 1
        %v3691 = vrot.slane %v3531, 1
        %v3692 = vrot.slane %v3532, 1
        %v3693 = vrot.slane %v3533, 1
        %v3694 = vrot.slane %v3534, 1
        %v3695 = vrot.slane %v3535, 1
        %v3696 = vrot.slane %v3536, 1
        %v3697 = vrot.slane %v3537, 1
        %v3698 = vrot.slane %v3538, 1
        %v3699 = vrot.slane %v3539, 1
        %v3700 = vrot.slane %v3540, 1
        %v3701 = vrot.slane %v3541, 1
        %v3702 = vrot.slane %v3542, 1
        %v3703 = vrot.slane %v3543, 1
        %v3704 = vrot.slane %v3544, 1
        %v3705 = vrot.slane %v3545, 1
        %v3706 = vrot.slane %v3546, 1
        %v3707 = vrot.slane %v3547, 1
        %v3708 = vrot.slane %v3548, 1
        %v3709 = vrot.slane %v3549, 1
        %v3710 = vrot.slane %v3550, 1
        %v3711 = vrot.slane %v3551, 1
        %v3712 = vrot.slane %v3552, 1
        %v3713 = vrot.slane %v3553, 1
        %v3714 = vrot.slane %v3554, 1
        %v3715 = vrot.slane %v3555, 1
        %v3716 = vrot.slane %v3556, 1
        %v3717 = vrot.slane %v3557, 1
        %v3718 = vrot.slane %v3558, 1
        %v3719 = vrot.slane %v3559, 1
        %v3720 = vrot.slane %v3560, 1
        %v3721 = vsel %vm1181, %v3719, %v3720
        %v3722 = vsel %vm1181, %v3718, %v3719
        %v3723 = vsel %vm1181, %v3717, %v3718
        %v3724 = vsel %vm1181, %v3716, %v3717
        %v3725 = vsel %vm1181, %v3715, %v3716
        %v3726 = vsel %vm1181, %v3714, %v3715
        %v3727 = vsel %vm1181, %v3713, %v3714
        %v3728 = vsel %vm1181, %v3712, %v3713
        %v3729 = vsel %vm1181, %v3711, %v3712
        %v3730 = vsel %vm1181, %v3710, %v3711
        %v3731 = vsel %vm1181, %v3709, %v3710
        %v3732 = vsel %vm1181, %v3708, %v3709
        %v3733 = vsel %vm1181, %v3707, %v3708
        %v3734 = vsel %vm1181, %v3706, %v3707
        %v3735 = vsel %vm1181, %v3705, %v3706
        %v3736 = vsel %vm1181, %v3704, %v3705
        %v3737 = vsel %vm1181, %v3703, %v3704
        %v3738 = vsel %vm1181, %v3702, %v3703
        %v3739 = vsel %vm1181, %v3701, %v3702
        %v3740 = vsel %vm1181, %v3700, %v3701
        %v3741 = vsel %vm1181, %v3699, %v3700
        %v3742 = vsel %vm1181, %v3698, %v3699
        %v3743 = vsel %vm1181, %v3697, %v3698
        %v3744 = vsel %vm1181, %v3696, %v3697
        %v3745 = vsel %vm1181, %v3695, %v3696
        %v3746 = vsel %vm1181, %v3694, %v3695
        %v3747 = vsel %vm1181, %v3693, %v3694
        %v3748 = vsel %vm1181, %v3692, %v3693
        %v3749 = vsel %vm1181, %v3691, %v3692
        %v3750 = vsel %vm1181, %v3690, %v3691
        %v3751 = vsel %vm1181, %v3689, %v3690
        %v3752 = vsel %vm1181, %v3720, %v3689
        %v3753 = vmul.f32 %v3721, %v1217
        %v3754 = vmul.f32 %v3752, %v1222
        %v3755 = vmul.f32 %v3751, %v1227
        %v3756 = vmul.f32 %v3750, %v1232
        %v3757 = vmul.f32 %v3749, %v1237
        %v3758 = vmul.f32 %v3748, %v1242
        %v3759 = vmul.f32 %v3747, %v1247
        %v3760 = vmul.f32 %v3746, %v1252
        %v3761 = vmul.f32 %v3745, %v1257
        %v3762 = vmul.f32 %v3744, %v1262
        %v3763 = vmul.f32 %v3743, %v1267
        %v3764 = vmul.f32 %v3742, %v1272
        %v3765 = vmul.f32 %v3741, %v1277
        %v3766 = vmul.f32 %v3740, %v1282
        %v3767 = vmul.f32 %v3739, %v1287
        %v3768 = vmul.f32 %v3738, %v1292
        %v3769 = vmul.f32 %v3737, %v1297
        %v3770 = vmul.f32 %v3736, %v1302
        %v3771 = vmul.f32 %v3735, %v1307
        %v3772 = vmul.f32 %v3734, %v1312
        %v3773 = vmul.f32 %v3733, %v1317
        %v3774 = vmul.f32 %v3732, %v1322
        %v3775 = vmul.f32 %v3731, %v1327
        %v3776 = vmul.f32 %v3730, %v1332
        %v3777 = vmul.f32 %v3729, %v1337
        %v3778 = vmul.f32 %v3728, %v1342
        %v3779 = vmul.f32 %v3727, %v1347
        %v3780 = vmul.f32 %v3726, %v1352
        %v3781 = vmul.f32 %v3725, %v1357
        %v3782 = vmul.f32 %v3724, %v1362
        %v3783 = vmul.f32 %v3723, %v1367
        %v3784 = vmul.f32 %v3722, %v1372
        %v3785 = vmul.f32 %v3624, %v1408
        %v3786 = vmul.f32 %v3623, %v1412
        %v3787 = vmul.f32 %v3622, %v1416
        %v3788 = vmul.f32 %v3621, %v1420
        %v3789 = vmul.f32 %v3620, %v1424
        %v3790 = vmul.f32 %v3619, %v1428
        %v3791 = vmul.f32 %v3618, %v1432
        %v3792 = vmul.f32 %v3617, %v1436
        %v3793 = vmul.f32 %v3616, %v1440
        %v3794 = vmul.f32 %v3615, %v1444
        %v3795 = vmul.f32 %v3614, %v1448
        %v3796 = vmul.f32 %v3613, %v1452
        %v3797 = vmul.f32 %v3612, %v1456
        %v3798 = vmul.f32 %v3611, %v1460
        %v3799 = vmul.f32 %v3610, %v1464
        %v3800 = vmul.f32 %v3609, %v1468
        %v3801 = vmul.f32 %v3608, %v1472
        %v3802 = vmul.f32 %v3607, %v1476
        %v3803 = vmul.f32 %v3606, %v1480
        %v3804 = vmul.f32 %v3605, %v1484
        %v3805 = vmul.f32 %v3604, %v1488
        %v3806 = vmul.f32 %v3603, %v1492
        %v3807 = vmul.f32 %v3602, %v1496
        %v3808 = vmul.f32 %v3601, %v1500
        %v3809 = vmul.f32 %v3600, %v1504
        %v3810 = vmul.f32 %v3599, %v1508
        %v3811 = vmul.f32 %v3598, %v1512
        %v3812 = vmul.f32 %v3597, %v1516
        %v3813 = vmul.f32 %v3596, %v1520
        %v3814 = vmul.f32 %v3595, %v1524
        %v3815 = vmul.f32 %v3594, %v1528
        %v3816 = vmul.f32 %v3593, %v1532
        %v3817 = vmul.f32 %v3751, %v1568
        %v3818 = vmul.f32 %v3750, %v1572
        %v3819 = vmul.f32 %v3749, %v1576
        %v3820 = vmul.f32 %v3748, %v1580
        %v3821 = vmul.f32 %v3747, %v1584
        %v3822 = vmul.f32 %v3746, %v1588
        %v3823 = vmul.f32 %v3745, %v1592
        %v3824 = vmul.f32 %v3744, %v1596
        %v3825 = vmul.f32 %v3743, %v1600
        %v3826 = vmul.f32 %v3742, %v1604
        %v3827 = vmul.f32 %v3741, %v1608
        %v3828 = vmul.f32 %v3740, %v1612
        %v3829 = vmul.f32 %v3739, %v1616
        %v3830 = vmul.f32 %v3738, %v1620
        %v3831 = vmul.f32 %v3737, %v1624
        %v3832 = vmul.f32 %v3736, %v1628
        %v3833 = vmul.f32 %v3735, %v1632
        %v3834 = vmul.f32 %v3734, %v1636
        %v3835 = vmul.f32 %v3733, %v1640
        %v3836 = vmul.f32 %v3732, %v1644
        %v3837 = vmul.f32 %v3731, %v1648
        %v3838 = vmul.f32 %v3730, %v1652
        %v3839 = vmul.f32 %v3729, %v1656
        %v3840 = vmul.f32 %v3728, %v1660
        %v3841 = vmul.f32 %v3727, %v1664
        %v3842 = vmul.f32 %v3726, %v1668
        %v3843 = vmul.f32 %v3725, %v1672
        %v3844 = vmul.f32 %v3724, %v1676
        %v3845 = vmul.f32 %v3723, %v1680
        %v3846 = vmul.f32 %v3722, %v1684
        %v3847 = vmul.f32 %v3721, %v1688
        %v3848 = vmul.f32 %v3752, %v1692
        %v3849 = vmul.f32 %v3622, %v1729
        %v3850 = vmul.f32 %v3621, %v1734
        %v3851 = vmul.f32 %v3620, %v1739
        %v3852 = vmul.f32 %v3619, %v1744
        %v3853 = vmul.f32 %v3618, %v1749
        %v3854 = vmul.f32 %v3617, %v1754
        %v3855 = vmul.f32 %v3616, %v1759
        %v3856 = vmul.f32 %v3615, %v1764
        %v3857 = vmul.f32 %v3614, %v1769
        %v3858 = vmul.f32 %v3613, %v1774
        %v3859 = vmul.f32 %v3612, %v1779
        %v3860 = vmul.f32 %v3611, %v1784
        %v3861 = vmul.f32 %v3610, %v1789
        %v3862 = vmul.f32 %v3609, %v1794
        %v3863 = vmul.f32 %v3608, %v1799
        %v3864 = vmul.f32 %v3607, %v1804
        %v3865 = vmul.f32 %v3606, %v1809
        %v3866 = vmul.f32 %v3605, %v1814
        %v3867 = vmul.f32 %v3604, %v1819
        %v3868 = vmul.f32 %v3603, %v1824
        %v3869 = vmul.f32 %v3602, %v1829
        %v3870 = vmul.f32 %v3601, %v1834
        %v3871 = vmul.f32 %v3600, %v1839
        %v3872 = vmul.f32 %v3599, %v1844
        %v3873 = vmul.f32 %v3598, %v1849
        %v3874 = vmul.f32 %v3597, %v1854
        %v3875 = vmul.f32 %v3596, %v1859
        %v3876 = vmul.f32 %v3595, %v1864
        %v3877 = vmul.f32 %v3594, %v1869
        %v3878 = vmul.f32 %v3593, %v1874
        %v3879 = vmul.f32 %v3624, %v1879
        %v3880 = vmul.f32 %v3623, %v1884
        %v3881 = vmul.f32 %v3531, %v1920
        %v3882 = vmul.f32 %v3532, %v1924
        %v3883 = vmul.f32 %v3533, %v1928
        %v3884 = vmul.f32 %v3534, %v1932
        %v3885 = vmul.f32 %v3535, %v1936
        %v3886 = vmul.f32 %v3536, %v1940
        %v3887 = vmul.f32 %v3537, %v1944
        %v3888 = vmul.f32 %v3538, %v1948
        %v3889 = vmul.f32 %v3539, %v1952
        %v3890 = vmul.f32 %v3540, %v1956
        %v3891 = vmul.f32 %v3541, %v1960
        %v3892 = vmul.f32 %v3542, %v1964
        %v3893 = vmul.f32 %v3543, %v1968
        %v3894 = vmul.f32 %v3544, %v1972
        %v3895 = vmul.f32 %v3545, %v1976
        %v3896 = vmul.f32 %v3546, %v1980
        %v3897 = vmul.f32 %v3547, %v1984
        %v3898 = vmul.f32 %v3548, %v1988
        %v3899 = vmul.f32 %v3549, %v1992
        %v3900 = vmul.f32 %v3550, %v1996
        %v3901 = vmul.f32 %v3551, %v2000
        %v3902 = vmul.f32 %v3552, %v2004
        %v3903 = vmul.f32 %v3553, %v2008
        %v3904 = vmul.f32 %v3554, %v2012
        %v3905 = vmul.f32 %v3555, %v2016
        %v3906 = vmul.f32 %v3556, %v2020
        %v3907 = vmul.f32 %v3557, %v2024
        %v3908 = vmul.f32 %v3558, %v2028
        %v3909 = vmul.f32 %v3559, %v2032
        %v3910 = vmul.f32 %v3560, %v2036
        %v3911 = vmul.f32 %v3529, %v2040
        %v3912 = vmul.f32 %v3530, %v2044
        %v3913 = vmul.f32 %v3749, %v2080
        %v3914 = vmul.f32 %v3748, %v2084
        %v3915 = vmul.f32 %v3747, %v2088
        %v3916 = vmul.f32 %v3746, %v2092
        %v3917 = vmul.f32 %v3745, %v2096
        %v3918 = vmul.f32 %v3744, %v2100
        %v3919 = vmul.f32 %v3743, %v2104
        %v3920 = vmul.f32 %v3742, %v2108
        %v3921 = vmul.f32 %v3741, %v2112
        %v3922 = vmul.f32 %v3740, %v2116
        %v3923 = vmul.f32 %v3739, %v2120
        %v3924 = vmul.f32 %v3738, %v2124
        %v3925 = vmul.f32 %v3737, %v2128
        %v3926 = vmul.f32 %v3736, %v2132
        %v3927 = vmul.f32 %v3735, %v2136
        %v3928 = vmul.f32 %v3734, %v2140
        %v3929 = vmul.f32 %v3733, %v2144
        %v3930 = vmul.f32 %v3732, %v2148
        %v3931 = vmul.f32 %v3731, %v2152
        %v3932 = vmul.f32 %v3730, %v2156
        %v3933 = vmul.f32 %v3729, %v2160
        %v3934 = vmul.f32 %v3728, %v2164
        %v3935 = vmul.f32 %v3727, %v2168
        %v3936 = vmul.f32 %v3726, %v2172
        %v3937 = vmul.f32 %v3725, %v2176
        %v3938 = vmul.f32 %v3724, %v2180
        %v3939 = vmul.f32 %v3723, %v2184
        %v3940 = vmul.f32 %v3722, %v2188
        %v3941 = vmul.f32 %v3721, %v2192
        %v3942 = vmul.f32 %v3752, %v2196
        %v3943 = vmul.f32 %v3751, %v2200
        %v3944 = vmul.f32 %v3750, %v2204
        %v3945 = vld [vmem:[%s2] sm:$0xff]
        %v3946 = vld [vmem:[%s2 + $0x8] sm:$0xff]
        %v3947 = vld [vmem:[%s2 + $0x10] sm:$0xff]
        %v3948 = vld [vmem:[%s2 + $0x18] sm:$0xff]
        %v3949 = vld [vmem:[%s2 + $0x20] sm:$0xff]
        %v3950 = vld [vmem:[%s2 + $0x28] sm:$0xff]
        %v3951 = vld [vmem:[%s2 + $0x30] sm:$0xff]
        %v3952 = vld [vmem:[%s2 + $0x38] sm:$0xff]
        %v3953 = vld [vmem:[%s2 + $0x40] sm:$0xff]
        %v3954 = vld [vmem:[%s2 + $0x48] sm:$0xff]
        %v3955 = vld [vmem:[%s2 + $0x50] sm:$0xff]
        %v3956 = vld [vmem:[%s2 + $0x58] sm:$0xff]
        %v3957 = vld [vmem:[%s2 + $0x60] sm:$0xff]
        %v3958 = vld [vmem:[%s2 + $0x68] sm:$0xff]
        %v3959 = vld [vmem:[%s2 + $0x70] sm:$0xff]
        %v3960 = vld [vmem:[%s2 + $0x78] sm:$0xff]
        %v3961 = vld [vmem:[%s2 + $0x80] sm:$0xff]
        %v3962 = vld [vmem:[%s2 + $0x88] sm:$0xff]
        %v3963 = vld [vmem:[%s2 + $0x90] sm:$0xff]
        %v3964 = vld [vmem:[%s2 + $0x98] sm:$0xff]
        %v3965 = vld [vmem:[%s2 + $0xa0] sm:$0xff]
        %v3966 = vld [vmem:[%s2 + $0xa8] sm:$0xff]
        %v3967 = vld [vmem:[%s2 + $0xb0] sm:$0xff]
        %v3968 = vld [vmem:[%s2 + $0xb8] sm:$0xff]
        %v3969 = vld [vmem:[%s2 + $0xc0] sm:$0xff]
        %v3970 = vld [vmem:[%s2 + $0xc8] sm:$0xff]
        %v3971 = vld [vmem:[%s2 + $0xd0] sm:$0xff]
        %v3972 = vld [vmem:[%s2 + $0xd8] sm:$0xff]
        %v3973 = vld [vmem:[%s2 + $0xe0] sm:$0xff]
        %v3974 = vld [vmem:[%s2 + $0xe8] sm:$0xff]
        %v3975 = vld [vmem:[%s2 + $0xf0] sm:$0xff]
        %v3976 = vld [vmem:[%s2 + $0xf8] sm:$0xff]
        %v3977 = vld [vmem:[%s2 + $0x100] sm:$0xff]
        %v3978 = vld [vmem:[%s2 + $0x108] sm:$0xff]
        %v3979 = vld [vmem:[%s2 + $0x110] sm:$0xff]
        %v3980 = vld [vmem:[%s2 + $0x118] sm:$0xff]
        %v3981 = vld [vmem:[%s2 + $0x120] sm:$0xff]
        %v3982 = vld [vmem:[%s2 + $0x128] sm:$0xff]
        %v3983 = vld [vmem:[%s2 + $0x130] sm:$0xff]
        %v3984 = vld [vmem:[%s2 + $0x138] sm:$0xff]
        %v3985 = vld [vmem:[%s2 + $0x140] sm:$0xff]
        %v3986 = vld [vmem:[%s2 + $0x148] sm:$0xff]
        %v3987 = vld [vmem:[%s2 + $0x150] sm:$0xff]
        %v3988 = vld [vmem:[%s2 + $0x158] sm:$0xff]
        %v3989 = vld [vmem:[%s2 + $0x160] sm:$0xff]
        %v3990 = vld [vmem:[%s2 + $0x168] sm:$0xff]
        %v3991 = vld [vmem:[%s2 + $0x170] sm:$0xff]
        %v3992 = vld [vmem:[%s2 + $0x178] sm:$0xff]
        %v3993 = vld [vmem:[%s2 + $0x180] sm:$0xff]
        %v3994 = vld [vmem:[%s2 + $0x188] sm:$0xff]
        %v3995 = vld [vmem:[%s2 + $0x190] sm:$0xff]
        %v3996 = vld [vmem:[%s2 + $0x198] sm:$0xff]
        %v3997 = vld [vmem:[%s2 + $0x1a0] sm:$0xff]
        %v3998 = vld [vmem:[%s2 + $0x1a8] sm:$0xff]
        %v3999 = vld [vmem:[%s2 + $0x1b0] sm:$0xff]
        %v4000 = vld [vmem:[%s2 + $0x1b8] sm:$0xff]
        %v4001 = vld [vmem:[%s2 + $0x1c0] sm:$0xff]
        %v4002 = vld [vmem:[%s2 + $0x1c8] sm:$0xff]
        %v4003 = vld [vmem:[%s2 + $0x1d0] sm:$0xff]
        %v4004 = vld [vmem:[%s2 + $0x1d8] sm:$0xff]
        %v4005 = vld [vmem:[%s2 + $0x1e0] sm:$0xff]
        %v4006 = vld [vmem:[%s2 + $0x1e8] sm:$0xff]
        %v4007 = vld [vmem:[%s2 + $0x1f0] sm:$0xff]
        %v4008 = vld [vmem:[%s2 + $0x1f8] sm:$0xff]
        %v4009 = vld [vmem:[%s2 + $0x200] sm:$0xff]
        %v4010 = vld [vmem:[%s2 + $0x208] sm:$0xff]
        %v4011 = vld [vmem:[%s2 + $0x210] sm:$0xff]
        %v4012 = vld [vmem:[%s2 + $0x218] sm:$0xff]
        %v4013 = vld [vmem:[%s2 + $0x220] sm:$0xff]
        %v4014 = vld [vmem:[%s2 + $0x228] sm:$0xff]
        %v4015 = vld [vmem:[%s2 + $0x230] sm:$0xff]
        %v4016 = vld [vmem:[%s2 + $0x238] sm:$0xff]
        %v4017 = vld [vmem:[%s2 + $0x240] sm:$0xff]
        %v4018 = vld [vmem:[%s2 + $0x248] sm:$0xff]
        %v4019 = vld [vmem:[%s2 + $0x250] sm:$0xff]
        %v4020 = vld [vmem:[%s2 + $0x258] sm:$0xff]
        %v4021 = vld [vmem:[%s2 + $0x260] sm:$0xff]
        %v4022 = vld [vmem:[%s2 + $0x268] sm:$0xff]
        %v4023 = vld [vmem:[%s2 + $0x270] sm:$0xff]
        %v4024 = vld [vmem:[%s2 + $0x278] sm:$0xff]
        %v4025 = vld [vmem:[%s2 + $0x280] sm:$0xff]
        %v4026 = vld [vmem:[%s2 + $0x288] sm:$0xff]
        %v4027 = vld [vmem:[%s2 + $0x290] sm:$0xff]
        %v4028 = vld [vmem:[%s2 + $0x298] sm:$0xff]
        %v4029 = vld [vmem:[%s2 + $0x2a0] sm:$0xff]
        %v4030 = vld [vmem:[%s2 + $0x2a8] sm:$0xff]
        %v4031 = vld [vmem:[%s2 + $0x2b0] sm:$0xff]
        %v4032 = vld [vmem:[%s2 + $0x2b8] sm:$0xff]
        %v4033 = vld [vmem:[%s2 + $0x2c0] sm:$0xff]
        %v4034 = vld [vmem:[%s2 + $0x2c8] sm:$0xff]
        %v4035 = vld [vmem:[%s2 + $0x2d0] sm:$0xff]
        %v4036 = vld [vmem:[%s2 + $0x2d8] sm:$0xff]
        %v4037 = vld [vmem:[%s2 + $0x2e0] sm:$0xff]
        %v4038 = vld [vmem:[%s2 + $0x2e8] sm:$0xff]
        %v4039 = vld [vmem:[%s2 + $0x2f0] sm:$0xff]
        %v4040 = vld [vmem:[%s2 + $0x2f8] sm:$0xff]
        %v4041 = vld [vmem:[%s2 + $0x300] sm:$0xff]
        %v4042 = vld [vmem:[%s2 + $0x308] sm:$0xff]
        %v4043 = vld [vmem:[%s2 + $0x310] sm:$0xff]
        %v4044 = vld [vmem:[%s2 + $0x318] sm:$0xff]
        %v4045 = vld [vmem:[%s2 + $0x320] sm:$0xff]
        %v4046 = vld [vmem:[%s2 + $0x328] sm:$0xff]
        %v4047 = vld [vmem:[%s2 + $0x330] sm:$0xff]
        %v4048 = vld [vmem:[%s2 + $0x338] sm:$0xff]
        %v4049 = vld [vmem:[%s2 + $0x340] sm:$0xff]
        %v4050 = vld [vmem:[%s2 + $0x348] sm:$0xff]
        %v4051 = vld [vmem:[%s2 + $0x350] sm:$0xff]
        %v4052 = vld [vmem:[%s2 + $0x358] sm:$0xff]
        %v4053 = vld [vmem:[%s2 + $0x360] sm:$0xff]
        %v4054 = vld [vmem:[%s2 + $0x368] sm:$0xff]
        %v4055 = vld [vmem:[%s2 + $0x370] sm:$0xff]
        %v4056 = vld [vmem:[%s2 + $0x378] sm:$0xff]
        %v4057 = vld [vmem:[%s2 + $0x380] sm:$0xff]
        %v4058 = vld [vmem:[%s2 + $0x388] sm:$0xff]
        %v4059 = vld [vmem:[%s2 + $0x390] sm:$0xff]
        %v4060 = vld [vmem:[%s2 + $0x398] sm:$0xff]
        %v4061 = vld [vmem:[%s2 + $0x3a0] sm:$0xff]
        %v4062 = vld [vmem:[%s2 + $0x3a8] sm:$0xff]
        %v4063 = vld [vmem:[%s2 + $0x3b0] sm:$0xff]
        %v4064 = vld [vmem:[%s2 + $0x3b8] sm:$0xff]
        %v4065 = vld [vmem:[%s2 + $0x3c0] sm:$0xff]
        %v4066 = vld [vmem:[%s2 + $0x3c8] sm:$0xff]
        %v4067 = vld [vmem:[%s2 + $0x3d0] sm:$0xff]
        %v4068 = vld [vmem:[%s2 + $0x3d8] sm:$0xff]
        %v4069 = vld [vmem:[%s2 + $0x3e0] sm:$0xff]
        %v4070 = vld [vmem:[%s2 + $0x3e8] sm:$0xff]
        %v4071 = vld [vmem:[%s2 + $0x3f0] sm:$0xff]
        %v4072 = vld [vmem:[%s2 + $0x3f8] sm:$0xff]
        %v4073 = vld [vmem:[%s2 + $0x400] sm:$0xff]
        %v4074 = vld [vmem:[%s2 + $0x408] sm:$0xff]
        %v4075 = vld [vmem:[%s2 + $0x410] sm:$0xff]
        %v4076 = vld [vmem:[%s2 + $0x418] sm:$0xff]
        %v4077 = vld [vmem:[%s2 + $0x420] sm:$0xff]
        %v4078 = vld [vmem:[%s2 + $0x428] sm:$0xff]
        %v4079 = vld [vmem:[%s2 + $0x430] sm:$0xff]
        %v4080 = vld [vmem:[%s2 + $0x438] sm:$0xff]
        %v4081 = vld [vmem:[%s2 + $0x440] sm:$0xff]
        %v4082 = vld [vmem:[%s2 + $0x448] sm:$0xff]
        %v4083 = vld [vmem:[%s2 + $0x450] sm:$0xff]
        %v4084 = vld [vmem:[%s2 + $0x458] sm:$0xff]
        %v4085 = vld [vmem:[%s2 + $0x460] sm:$0xff]
        %v4086 = vld [vmem:[%s2 + $0x468] sm:$0xff]
        %v4087 = vld [vmem:[%s2 + $0x470] sm:$0xff]
        %v4088 = vld [vmem:[%s2 + $0x478] sm:$0xff]
        %4089 = vmatpush.msra.mxu0 %v3960
        %4090 = vmatpush.msra.mxu0 %v3959
        %4091 = vmatpush.msra.mxu0 %v3958
        %4092 = vmatpush.msra.mxu0 %v3957
        %4093 = vmatpush.msra.mxu0 %v3956
        %4094 = vmatpush.msra.mxu0 %v3955
        %4095 = vmatpush.msra.mxu0 %v3954
        %4096 = vmatpush.msra.mxu0 %v3953
        %4097 = vmatpush.msra.mxu0 %v3952
        %4098 = vmatpush.msra.mxu0 %v3951
        %4099 = vmatpush.msra.mxu0 %v3950
        %4100 = vmatpush.msra.mxu0 %v3949
        %4101 = vmatpush.msra.mxu0 %v3948
        %4102 = vmatpush.msra.mxu0 %v3947
        %4103 = vmatpush.msra.mxu0 %v3946
        %4104 = vmatpush.msra.mxu0 %v3945
        %4105 = vmatmul.f32.gmra.mxu0 %v3625
        %v4106 = vpop.f32.mrf.mxu0
        %v4107 = vadd.f32 0.0, %v4106
        %4108 = vmatmul.f32.gmra.mxu0 %v3626
        %v4109 = vpop.f32.mrf.mxu0
        %v4110 = vadd.f32 0.0, %v4109
        %4111 = vmatmul.f32.gmra.mxu0 %v3627
        %v4112 = vpop.f32.mrf.mxu0
        %v4113 = vadd.f32 0.0, %v4112
        %4114 = vmatmul.f32.gmra.mxu0 %v3628
        %v4115 = vpop.f32.mrf.mxu0
        %v4116 = vadd.f32 0.0, %v4115
        %4117 = vmatmul.f32.gmra.mxu0 %v3629
        %v4118 = vpop.f32.mrf.mxu0
        %v4119 = vadd.f32 0.0, %v4118
        %4120 = vmatmul.f32.gmra.mxu0 %v3630
        %v4121 = vpop.f32.mrf.mxu0
        %v4122 = vadd.f32 0.0, %v4121
        %4123 = vmatmul.f32.gmra.mxu0 %v3631
        %v4124 = vpop.f32.mrf.mxu0
        %v4125 = vadd.f32 0.0, %v4124
        %4126 = vmatmul.f32.gmra.mxu0 %v3632
        %v4127 = vpop.f32.mrf.mxu0
        %v4128 = vadd.f32 0.0, %v4127
        %4129 = vmatmul.f32.gmra.mxu0 %v3633
        %v4130 = vpop.f32.mrf.mxu0
        %v4131 = vadd.f32 0.0, %v4130
        %4132 = vmatmul.f32.gmra.mxu0 %v3634
        %v4133 = vpop.f32.mrf.mxu0
        %v4134 = vadd.f32 0.0, %v4133
        %4135 = vmatmul.f32.gmra.mxu0 %v3635
        %v4136 = vpop.f32.mrf.mxu0
        %v4137 = vadd.f32 0.0, %v4136
        %4138 = vmatmul.f32.gmra.mxu0 %v3636
        %v4139 = vpop.f32.mrf.mxu0
        %v4140 = vadd.f32 0.0, %v4139
        %4141 = vmatmul.f32.gmra.mxu0 %v3637
        %v4142 = vpop.f32.mrf.mxu0
        %v4143 = vadd.f32 0.0, %v4142
        %4144 = vmatmul.f32.gmra.mxu0 %v3638
        %v4145 = vpop.f32.mrf.mxu0
        %v4146 = vadd.f32 0.0, %v4145
        %4147 = vmatmul.f32.gmra.mxu0 %v3639
        %v4148 = vpop.f32.mrf.mxu0
        %v4149 = vadd.f32 0.0, %v4148
        %4150 = vmatmul.f32.gmra.mxu0 %v3640
        %v4151 = vpop.f32.mrf.mxu0
        %v4152 = vadd.f32 0.0, %v4151
        %4153 = vmatmul.f32.gmra.mxu0 %v3641
        %v4154 = vpop.f32.mrf.mxu0
        %v4155 = vadd.f32 0.0, %v4154
        %4156 = vmatmul.f32.gmra.mxu0 %v3642
        %v4157 = vpop.f32.mrf.mxu0
        %v4158 = vadd.f32 0.0, %v4157
        %4159 = vmatmul.f32.gmra.mxu0 %v3643
        %v4160 = vpop.f32.mrf.mxu0
        %v4161 = vadd.f32 0.0, %v4160
        %4162 = vmatmul.f32.gmra.mxu0 %v3644
        %v4163 = vpop.f32.mrf.mxu0
        %v4164 = vadd.f32 0.0, %v4163
        %4165 = vmatmul.f32.gmra.mxu0 %v3645
        %v4166 = vpop.f32.mrf.mxu0
        %v4167 = vadd.f32 0.0, %v4166
        %4168 = vmatmul.f32.gmra.mxu0 %v3646
        %v4169 = vpop.f32.mrf.mxu0
        %v4170 = vadd.f32 0.0, %v4169
        %4171 = vmatmul.f32.gmra.mxu0 %v3647
        %v4172 = vpop.f32.mrf.mxu0
        %v4173 = vadd.f32 0.0, %v4172
        %4174 = vmatmul.f32.gmra.mxu0 %v3648
        %v4175 = vpop.f32.mrf.mxu0
        %v4176 = vadd.f32 0.0, %v4175
        %4177 = vmatmul.f32.gmra.mxu0 %v3649
        %v4178 = vpop.f32.mrf.mxu0
        %v4179 = vadd.f32 0.0, %v4178
        %4180 = vmatmul.f32.gmra.mxu0 %v3650
        %v4181 = vpop.f32.mrf.mxu0
        %v4182 = vadd.f32 0.0, %v4181
        %4183 = vmatmul.f32.gmra.mxu0 %v3651
        %v4184 = vpop.f32.mrf.mxu0
        %v4185 = vadd.f32 0.0, %v4184
        %4186 = vmatmul.f32.gmra.mxu0 %v3652
        %v4187 = vpop.f32.mrf.mxu0
        %v4188 = vadd.f32 0.0, %v4187
        %4189 = vmatmul.f32.gmra.mxu0 %v3653
        %v4190 = vpop.f32.mrf.mxu0
        %v4191 = vadd.f32 0.0, %v4190
        %4192 = vmatmul.f32.gmra.mxu0 %v3654
        %v4193 = vpop.f32.mrf.mxu0
        %v4194 = vadd.f32 0.0, %v4193
        %4195 = vmatmul.f32.gmra.mxu0 %v3655
        %v4196 = vpop.f32.mrf.mxu0
        %v4197 = vadd.f32 0.0, %v4196
        %4198 = vmatmul.f32.gmra.mxu0 %v3656
        %v4199 = vpop.f32.mrf.mxu0
        %v4200 = vadd.f32 0.0, %v4199
        %4201 = vdwg.mxu0
        %4202 = vmatpush.msra.mxu0 %v3976
        %4203 = vmatpush.msra.mxu0 %v3975
        %4204 = vmatpush.msra.mxu0 %v3974
        %4205 = vmatpush.msra.mxu0 %v3973
        %4206 = vmatpush.msra.mxu0 %v3972
        %4207 = vmatpush.msra.mxu0 %v3971
        %4208 = vmatpush.msra.mxu0 %v3970
        %4209 = vmatpush.msra.mxu0 %v3969
        %4210 = vmatpush.msra.mxu0 %v3968
        %4211 = vmatpush.msra.mxu0 %v3967
        %4212 = vmatpush.msra.mxu0 %v3966
        %4213 = vmatpush.msra.mxu0 %v3965
        %4214 = vmatpush.msra.mxu0 %v3964
        %4215 = vmatpush.msra.mxu0 %v3963
        %4216 = vmatpush.msra.mxu0 %v3962
        %4217 = vmatpush.msra.mxu0 %v3961
        %4218 = vmatmul.f32.gmra.mxu0 %v3657
        %v4219 = vpop.f32.mrf.mxu0
        %v4220 = vadd.f32 %v4107, %v4219
        %4221 = vmatmul.f32.gmra.mxu0 %v3658
        %v4222 = vpop.f32.mrf.mxu0
        %v4223 = vadd.f32 %v4110, %v4222
        %4224 = vmatmul.f32.gmra.mxu0 %v3659
        %v4225 = vpop.f32.mrf.mxu0
        %v4226 = vadd.f32 %v4113, %v4225
        %4227 = vmatmul.f32.gmra.mxu0 %v3660
        %v4228 = vpop.f32.mrf.mxu0
        %v4229 = vadd.f32 %v4116, %v4228
        %4230 = vmatmul.f32.gmra.mxu0 %v3661
        %v4231 = vpop.f32.mrf.mxu0
        %v4232 = vadd.f32 %v4119, %v4231
        %4233 = vmatmul.f32.gmra.mxu0 %v3662
        %v4234 = vpop.f32.mrf.mxu0
        %v4235 = vadd.f32 %v4122, %v4234
        %4236 = vmatmul.f32.gmra.mxu0 %v3663
        %v4237 = vpop.f32.mrf.mxu0
        %v4238 = vadd.f32 %v4125, %v4237
        %4239 = vmatmul.f32.gmra.mxu0 %v3664
        %v4240 = vpop.f32.mrf.mxu0
        %v4241 = vadd.f32 %v4128, %v4240
        %4242 = vmatmul.f32.gmra.mxu0 %v3665
        %v4243 = vpop.f32.mrf.mxu0
        %v4244 = vadd.f32 %v4131, %v4243
        %4245 = vmatmul.f32.gmra.mxu0 %v3666
        %v4246 = vpop.f32.mrf.mxu0
        %v4247 = vadd.f32 %v4134, %v4246
        %4248 = vmatmul.f32.gmra.mxu0 %v3667
        %v4249 = vpop.f32.mrf.mxu0
        %v4250 = vadd.f32 %v4137, %v4249
        %4251 = vmatmul.f32.gmra.mxu0 %v3668
        %v4252 = vpop.f32.mrf.mxu0
        %v4253 = vadd.f32 %v4140, %v4252
        %4254 = vmatmul.f32.gmra.mxu0 %v3669
        %v4255 = vpop.f32.mrf.mxu0
        %v4256 = vadd.f32 %v4143, %v4255
        %4257 = vmatmul.f32.gmra.mxu0 %v3670
        %v4258 = vpop.f32.mrf.mxu0
        %v4259 = vadd.f32 %v4146, %v4258
        %4260 = vmatmul.f32.gmra.mxu0 %v3671
        %v4261 = vpop.f32.mrf.mxu0
        %v4262 = vadd.f32 %v4149, %v4261
        %4263 = vmatmul.f32.gmra.mxu0 %v3672
        %v4264 = vpop.f32.mrf.mxu0
        %v4265 = vadd.f32 %v4152, %v4264
        %4266 = vmatmul.f32.gmra.mxu0 %v3673
        %v4267 = vpop.f32.mrf.mxu0
        %v4268 = vadd.f32 %v4155, %v4267
        %4269 = vmatmul.f32.gmra.mxu0 %v3674
        %v4270 = vpop.f32.mrf.mxu0
        %v4271 = vadd.f32 %v4158, %v4270
        %4272 = vmatmul.f32.gmra.mxu0 %v3675
        %v4273 = vpop.f32.mrf.mxu0
        %v4274 = vadd.f32 %v4161, %v4273
        %4275 = vmatmul.f32.gmra.mxu0 %v3676
        %v4276 = vpop.f32.mrf.mxu0
        %v4277 = vadd.f32 %v4164, %v4276
        %4278 = vmatmul.f32.gmra.mxu0 %v3677
        %v4279 = vpop.f32.mrf.mxu0
        %v4280 = vadd.f32 %v4167, %v4279
        %4281 = vmatmul.f32.gmra.mxu0 %v3678
        %v4282 = vpop.f32.mrf.mxu0
        %v4283 = vadd.f32 %v4170, %v4282
        %4284 = vmatmul.f32.gmra.mxu0 %v3679
        %v4285 = vpop.f32.mrf.mxu0
        %v4286 = vadd.f32 %v4173, %v4285
        %4287 = vmatmul.f32.gmra.mxu0 %v3680
        %v4288 = vpop.f32.mrf.mxu0
        %v4289 = vadd.f32 %v4176, %v4288
        %4290 = vmatmul.f32.gmra.mxu0 %v3681
        %v4291 = vpop.f32.mrf.mxu0
        %v4292 = vadd.f32 %v4179, %v4291
        %4293 = vmatmul.f32.gmra.mxu0 %v3682
        %v4294 = vpop.f32.mrf.mxu0
        %v4295 = vadd.f32 %v4182, %v4294
        %4296 = vmatmul.f32.gmra.mxu0 %v3683
        %v4297 = vpop.f32.mrf.mxu0
        %v4298 = vadd.f32 %v4185, %v4297
        %4299 = vmatmul.f32.gmra.mxu0 %v3684
        %v4300 = vpop.f32.mrf.mxu0
        %v4301 = vadd.f32 %v4188, %v4300
        %4302 = vmatmul.f32.gmra.mxu0 %v3685
        %v4303 = vpop.f32.mrf.mxu0
        %v4304 = vadd.f32 %v4191, %v4303
        %4305 = vmatmul.f32.gmra.mxu0 %v3686
        %v4306 = vpop.f32.mrf.mxu0
        %v4307 = vadd.f32 %v4194, %v4306
        %4308 = vmatmul.f32.gmra.mxu0 %v3687
        %v4309 = vpop.f32.mrf.mxu0
        %v4310 = vadd.f32 %v4197, %v4309
        %4311 = vmatmul.f32.gmra.mxu0 %v3688
        %v4312 = vpop.f32.mrf.mxu0
        %v4313 = vadd.f32 %v4200, %v4312
        %4314 = vdwg.mxu0
        %4315 = vmatpush.msra.mxu0 %v3992
        %4316 = vmatpush.msra.mxu0 %v3991
        %4317 = vmatpush.msra.mxu0 %v3990
        %4318 = vmatpush.msra.mxu0 %v3989
        %4319 = vmatpush.msra.mxu0 %v3988
        %4320 = vmatpush.msra.mxu0 %v3987
        %4321 = vmatpush.msra.mxu0 %v3986
        %4322 = vmatpush.msra.mxu0 %v3985
        %4323 = vmatpush.msra.mxu0 %v3984
        %4324 = vmatpush.msra.mxu0 %v3983
        %4325 = vmatpush.msra.mxu0 %v3982
        %4326 = vmatpush.msra.mxu0 %v3981
        %4327 = vmatpush.msra.mxu0 %v3980
        %4328 = vmatpush.msra.mxu0 %v3979
        %4329 = vmatpush.msra.mxu0 %v3978
        %4330 = vmatpush.msra.mxu0 %v3977
        %4331 = vmatmul.f32.gmra.mxu0 %v3753
        %v4332 = vpop.f32.mrf.mxu0
        %v4333 = vadd.f32 %v4220, %v4332
        %4334 = vmatmul.f32.gmra.mxu0 %v3754
        %v4335 = vpop.f32.mrf.mxu0
        %v4336 = vadd.f32 %v4223, %v4335
        %4337 = vmatmul.f32.gmra.mxu0 %v3755
        %v4338 = vpop.f32.mrf.mxu0
        %v4339 = vadd.f32 %v4226, %v4338
        %4340 = vmatmul.f32.gmra.mxu0 %v3756
        %v4341 = vpop.f32.mrf.mxu0
        %v4342 = vadd.f32 %v4229, %v4341
        %4343 = vmatmul.f32.gmra.mxu0 %v3757
        %v4344 = vpop.f32.mrf.mxu0
        %v4345 = vadd.f32 %v4232, %v4344
        %4346 = vmatmul.f32.gmra.mxu0 %v3758
        %v4347 = vpop.f32.mrf.mxu0
        %v4348 = vadd.f32 %v4235, %v4347
        %4349 = vmatmul.f32.gmra.mxu0 %v3759
        %v4350 = vpop.f32.mrf.mxu0
        %v4351 = vadd.f32 %v4238, %v4350
        %4352 = vmatmul.f32.gmra.mxu0 %v3760
        %v4353 = vpop.f32.mrf.mxu0
        %v4354 = vadd.f32 %v4241, %v4353
        %4355 = vmatmul.f32.gmra.mxu0 %v3761
        %v4356 = vpop.f32.mrf.mxu0
        %v4357 = vadd.f32 %v4244, %v4356
        %4358 = vmatmul.f32.gmra.mxu0 %v3762
        %v4359 = vpop.f32.mrf.mxu0
        %v4360 = vadd.f32 %v4247, %v4359
        %4361 = vmatmul.f32.gmra.mxu0 %v3763
        %v4362 = vpop.f32.mrf.mxu0
        %v4363 = vadd.f32 %v4250, %v4362
        %4364 = vmatmul.f32.gmra.mxu0 %v3764
        %v4365 = vpop.f32.mrf.mxu0
        %v4366 = vadd.f32 %v4253, %v4365
        %4367 = vmatmul.f32.gmra.mxu0 %v3765
        %v4368 = vpop.f32.mrf.mxu0
        %v4369 = vadd.f32 %v4256, %v4368
        %4370 = vmatmul.f32.gmra.mxu0 %v3766
        %v4371 = vpop.f32.mrf.mxu0
        %v4372 = vadd.f32 %v4259, %v4371
        %4373 = vmatmul.f32.gmra.mxu0 %v3767
        %v4374 = vpop.f32.mrf.mxu0
        %v4375 = vadd.f32 %v4262, %v4374
        %4376 = vmatmul.f32.gmra.mxu0 %v3768
        %v4377 = vpop.f32.mrf.mxu0
        %v4378 = vadd.f32 %v4265, %v4377
        %4379 = vmatmul.f32.gmra.mxu0 %v3769
        %v4380 = vpop.f32.mrf.mxu0
        %v4381 = vadd.f32 %v4268, %v4380
        %4382 = vmatmul.f32.gmra.mxu0 %v3770
        %v4383 = vpop.f32.mrf.mxu0
        %v4384 = vadd.f32 %v4271, %v4383
        %4385 = vmatmul.f32.gmra.mxu0 %v3771
        %v4386 = vpop.f32.mrf.mxu0
        %v4387 = vadd.f32 %v4274, %v4386
        %4388 = vmatmul.f32.gmra.mxu0 %v3772
        %v4389 = vpop.f32.mrf.mxu0
        %v4390 = vadd.f32 %v4277, %v4389
        %4391 = vmatmul.f32.gmra.mxu0 %v3773
        %v4392 = vpop.f32.mrf.mxu0
        %v4393 = vadd.f32 %v4280, %v4392
        %4394 = vmatmul.f32.gmra.mxu0 %v3774
        %v4395 = vpop.f32.mrf.mxu0
        %v4396 = vadd.f32 %v4283, %v4395
        %4397 = vmatmul.f32.gmra.mxu0 %v3775
        %v4398 = vpop.f32.mrf.mxu0
        %v4399 = vadd.f32 %v4286, %v4398
        %4400 = vmatmul.f32.gmra.mxu0 %v3776
        %v4401 = vpop.f32.mrf.mxu0
        %v4402 = vadd.f32 %v4289, %v4401
        %4403 = vmatmul.f32.gmra.mxu0 %v3777
        %v4404 = vpop.f32.mrf.mxu0
        %v4405 = vadd.f32 %v4292, %v4404
        %4406 = vmatmul.f32.gmra.mxu0 %v3778
        %v4407 = vpop.f32.mrf.mxu0
        %v4408 = vadd.f32 %v4295, %v4407
        %4409 = vmatmul.f32.gmra.mxu0 %v3779
        %v4410 = vpop.f32.mrf.mxu0
        %v4411 = vadd.f32 %v4298, %v4410
        %4412 = vmatmul.f32.gmra.mxu0 %v3780
        %v4413 = vpop.f32.mrf.mxu0
        %v4414 = vadd.f32 %v4301, %v4413
        %4415 = vmatmul.f32.gmra.mxu0 %v3781
        %v4416 = vpop.f32.mrf.mxu0
        %v4417 = vadd.f32 %v4304, %v4416
        %4418 = vmatmul.f32.gmra.mxu0 %v3782
        %v4419 = vpop.f32.mrf.mxu0
        %v4420 = vadd.f32 %v4307, %v4419
        %4421 = vmatmul.f32.gmra.mxu0 %v3783
        %v4422 = vpop.f32.mrf.mxu0
        %v4423 = vadd.f32 %v4310, %v4422
        %4424 = vmatmul.f32.gmra.mxu0 %v3784
        %v4425 = vpop.f32.mrf.mxu0
        %v4426 = vadd.f32 %v4313, %v4425
        %4427 = vdwg.mxu0
        %4428 = vmatpush.msra.mxu0 %v4008
        %4429 = vmatpush.msra.mxu0 %v4007
        %4430 = vmatpush.msra.mxu0 %v4006
        %4431 = vmatpush.msra.mxu0 %v4005
        %4432 = vmatpush.msra.mxu0 %v4004
        %4433 = vmatpush.msra.mxu0 %v4003
        %4434 = vmatpush.msra.mxu0 %v4002
        %4435 = vmatpush.msra.mxu0 %v4001
        %4436 = vmatpush.msra.mxu0 %v4000
        %4437 = vmatpush.msra.mxu0 %v3999
        %4438 = vmatpush.msra.mxu0 %v3998
        %4439 = vmatpush.msra.mxu0 %v3997
        %4440 = vmatpush.msra.mxu0 %v3996
        %4441 = vmatpush.msra.mxu0 %v3995
        %4442 = vmatpush.msra.mxu0 %v3994
        %4443 = vmatpush.msra.mxu0 %v3993
        %4444 = vmatmul.f32.gmra.mxu0 %v3785
        %v4445 = vpop.f32.mrf.mxu0
        %v4446 = vadd.f32 %v4333, %v4445
        %4447 = vmatmul.f32.gmra.mxu0 %v3786
        %v4448 = vpop.f32.mrf.mxu0
        %v4449 = vadd.f32 %v4336, %v4448
        %4450 = vmatmul.f32.gmra.mxu0 %v3787
        %v4451 = vpop.f32.mrf.mxu0
        %v4452 = vadd.f32 %v4339, %v4451
        %4453 = vmatmul.f32.gmra.mxu0 %v3788
        %v4454 = vpop.f32.mrf.mxu0
        %v4455 = vadd.f32 %v4342, %v4454
        %4456 = vmatmul.f32.gmra.mxu0 %v3789
        %v4457 = vpop.f32.mrf.mxu0
        %v4458 = vadd.f32 %v4345, %v4457
        %4459 = vmatmul.f32.gmra.mxu0 %v3790
        %v4460 = vpop.f32.mrf.mxu0
        %v4461 = vadd.f32 %v4348, %v4460
        %4462 = vmatmul.f32.gmra.mxu0 %v3791
        %v4463 = vpop.f32.mrf.mxu0
        %v4464 = vadd.f32 %v4351, %v4463
        %4465 = vmatmul.f32.gmra.mxu0 %v3792
        %v4466 = vpop.f32.mrf.mxu0
        %v4467 = vadd.f32 %v4354, %v4466
        %4468 = vmatmul.f32.gmra.mxu0 %v3793
        %v4469 = vpop.f32.mrf.mxu0
        %v4470 = vadd.f32 %v4357, %v4469
        %4471 = vmatmul.f32.gmra.mxu0 %v3794
        %v4472 = vpop.f32.mrf.mxu0
        %v4473 = vadd.f32 %v4360, %v4472
        %4474 = vmatmul.f32.gmra.mxu0 %v3795
        %v4475 = vpop.f32.mrf.mxu0
        %v4476 = vadd.f32 %v4363, %v4475
        %4477 = vmatmul.f32.gmra.mxu0 %v3796
        %v4478 = vpop.f32.mrf.mxu0
        %v4479 = vadd.f32 %v4366, %v4478
        %4480 = vmatmul.f32.gmra.mxu0 %v3797
        %v4481 = vpop.f32.mrf.mxu0
        %v4482 = vadd.f32 %v4369, %v4481
        %4483 = vmatmul.f32.gmra.mxu0 %v3798
        %v4484 = vpop.f32.mrf.mxu0
        %v4485 = vadd.f32 %v4372, %v4484
        %4486 = vmatmul.f32.gmra.mxu0 %v3799
        %v4487 = vpop.f32.mrf.mxu0
        %v4488 = vadd.f32 %v4375, %v4487
        %4489 = vmatmul.f32.gmra.mxu0 %v3800
        %v4490 = vpop.f32.mrf.mxu0
        %v4491 = vadd.f32 %v4378, %v4490
        %4492 = vmatmul.f32.gmra.mxu0 %v3801
        %v4493 = vpop.f32.mrf.mxu0
        %v4494 = vadd.f32 %v4381, %v4493
        %4495 = vmatmul.f32.gmra.mxu0 %v3802
        %v4496 = vpop.f32.mrf.mxu0
        %v4497 = vadd.f32 %v4384, %v4496
        %4498 = vmatmul.f32.gmra.mxu0 %v3803
        %v4499 = vpop.f32.mrf.mxu0
        %v4500 = vadd.f32 %v4387, %v4499
        %4501 = vmatmul.f32.gmra.mxu0 %v3804
        %v4502 = vpop.f32.mrf.mxu0
        %v4503 = vadd.f32 %v4390, %v4502
        %4504 = vmatmul.f32.gmra.mxu0 %v3805
        %v4505 = vpop.f32.mrf.mxu0
        %v4506 = vadd.f32 %v4393, %v4505
        %4507 = vmatmul.f32.gmra.mxu0 %v3806
        %v4508 = vpop.f32.mrf.mxu0
        %v4509 = vadd.f32 %v4396, %v4508
        %4510 = vmatmul.f32.gmra.mxu0 %v3807
        %v4511 = vpop.f32.mrf.mxu0
        %v4512 = vadd.f32 %v4399, %v4511
        %4513 = vmatmul.f32.gmra.mxu0 %v3808
        %v4514 = vpop.f32.mrf.mxu0
        %v4515 = vadd.f32 %v4402, %v4514
        %4516 = vmatmul.f32.gmra.mxu0 %v3809
        %v4517 = vpop.f32.mrf.mxu0
        %v4518 = vadd.f32 %v4405, %v4517
        %4519 = vmatmul.f32.gmra.mxu0 %v3810
        %v4520 = vpop.f32.mrf.mxu0
        %v4521 = vadd.f32 %v4408, %v4520
        %4522 = vmatmul.f32.gmra.mxu0 %v3811
        %v4523 = vpop.f32.mrf.mxu0
        %v4524 = vadd.f32 %v4411, %v4523
        %4525 = vmatmul.f32.gmra.mxu0 %v3812
        %v4526 = vpop.f32.mrf.mxu0
        %v4527 = vadd.f32 %v4414, %v4526
        %4528 = vmatmul.f32.gmra.mxu0 %v3813
        %v4529 = vpop.f32.mrf.mxu0
        %v4530 = vadd.f32 %v4417, %v4529
        %4531 = vmatmul.f32.gmra.mxu0 %v3814
        %v4532 = vpop.f32.mrf.mxu0
        %v4533 = vadd.f32 %v4420, %v4532
        %4534 = vmatmul.f32.gmra.mxu0 %v3815
        %v4535 = vpop.f32.mrf.mxu0
        %v4536 = vadd.f32 %v4423, %v4535
        %4537 = vmatmul.f32.gmra.mxu0 %v3816
        %v4538 = vpop.f32.mrf.mxu0
        %v4539 = vadd.f32 %v4426, %v4538
        %4540 = vdwg.mxu0
        %4541 = vmatpush.msra.mxu0 %v4024
        %4542 = vmatpush.msra.mxu0 %v4023
        %4543 = vmatpush.msra.mxu0 %v4022
        %4544 = vmatpush.msra.mxu0 %v4021
        %4545 = vmatpush.msra.mxu0 %v4020
        %4546 = vmatpush.msra.mxu0 %v4019
        %4547 = vmatpush.msra.mxu0 %v4018
        %4548 = vmatpush.msra.mxu0 %v4017
        %4549 = vmatpush.msra.mxu0 %v4016
        %4550 = vmatpush.msra.mxu0 %v4015
        %4551 = vmatpush.msra.mxu0 %v4014
        %4552 = vmatpush.msra.mxu0 %v4013
        %4553 = vmatpush.msra.mxu0 %v4012
        %4554 = vmatpush.msra.mxu0 %v4011
        %4555 = vmatpush.msra.mxu0 %v4010
        %4556 = vmatpush.msra.mxu0 %v4009
        %4557 = vmatmul.f32.gmra.mxu0 %v3529
        %v4558 = vpop.f32.mrf.mxu0
        %v4559 = vadd.f32 %v4446, %v4558
        %4560 = vmatmul.f32.gmra.mxu0 %v3530
        %v4561 = vpop.f32.mrf.mxu0
        %v4562 = vadd.f32 %v4449, %v4561
        %4563 = vmatmul.f32.gmra.mxu0 %v3531
        %v4564 = vpop.f32.mrf.mxu0
        %v4565 = vadd.f32 %v4452, %v4564
        %4566 = vmatmul.f32.gmra.mxu0 %v3532
        %v4567 = vpop.f32.mrf.mxu0
        %v4568 = vadd.f32 %v4455, %v4567
        %4569 = vmatmul.f32.gmra.mxu0 %v3533
        %v4570 = vpop.f32.mrf.mxu0
        %v4571 = vadd.f32 %v4458, %v4570
        %4572 = vmatmul.f32.gmra.mxu0 %v3534
        %v4573 = vpop.f32.mrf.mxu0
        %v4574 = vadd.f32 %v4461, %v4573
        %4575 = vmatmul.f32.gmra.mxu0 %v3535
        %v4576 = vpop.f32.mrf.mxu0
        %v4577 = vadd.f32 %v4464, %v4576
        %4578 = vmatmul.f32.gmra.mxu0 %v3536
        %v4579 = vpop.f32.mrf.mxu0
        %v4580 = vadd.f32 %v4467, %v4579
        %4581 = vmatmul.f32.gmra.mxu0 %v3537
        %v4582 = vpop.f32.mrf.mxu0
        %v4583 = vadd.f32 %v4470, %v4582
        %4584 = vmatmul.f32.gmra.mxu0 %v3538
        %v4585 = vpop.f32.mrf.mxu0
        %v4586 = vadd.f32 %v4473, %v4585
        %4587 = vmatmul.f32.gmra.mxu0 %v3539
        %v4588 = vpop.f32.mrf.mxu0
        %v4589 = vadd.f32 %v4476, %v4588
        %4590 = vmatmul.f32.gmra.mxu0 %v3540
        %v4591 = vpop.f32.mrf.mxu0
        %v4592 = vadd.f32 %v4479, %v4591
        %4593 = vmatmul.f32.gmra.mxu0 %v3541
        %v4594 = vpop.f32.mrf.mxu0
        %v4595 = vadd.f32 %v4482, %v4594
        %4596 = vmatmul.f32.gmra.mxu0 %v3542
        %v4597 = vpop.f32.mrf.mxu0
        %v4598 = vadd.f32 %v4485, %v4597
        %4599 = vmatmul.f32.gmra.mxu0 %v3543
        %v4600 = vpop.f32.mrf.mxu0
        %v4601 = vadd.f32 %v4488, %v4600
        %4602 = vmatmul.f32.gmra.mxu0 %v3544
        %v4603 = vpop.f32.mrf.mxu0
        %v4604 = vadd.f32 %v4491, %v4603
        %4605 = vmatmul.f32.gmra.mxu0 %v3545
        %v4606 = vpop.f32.mrf.mxu0
        %v4607 = vadd.f32 %v4494, %v4606
        %4608 = vmatmul.f32.gmra.mxu0 %v3546
        %v4609 = vpop.f32.mrf.mxu0
        %v4610 = vadd.f32 %v4497, %v4609
        %4611 = vmatmul.f32.gmra.mxu0 %v3547
        %v4612 = vpop.f32.mrf.mxu0
        %v4613 = vadd.f32 %v4500, %v4612
        %4614 = vmatmul.f32.gmra.mxu0 %v3548
        %v4615 = vpop.f32.mrf.mxu0
        %v4616 = vadd.f32 %v4503, %v4615
        %4617 = vmatmul.f32.gmra.mxu0 %v3549
        %v4618 = vpop.f32.mrf.mxu0
        %v4619 = vadd.f32 %v4506, %v4618
        %4620 = vmatmul.f32.gmra.mxu0 %v3550
        %v4621 = vpop.f32.mrf.mxu0
        %v4622 = vadd.f32 %v4509, %v4621
        %4623 = vmatmul.f32.gmra.mxu0 %v3551
        %v4624 = vpop.f32.mrf.mxu0
        %v4625 = vadd.f32 %v4512, %v4624
        %4626 = vmatmul.f32.gmra.mxu0 %v3552
        %v4627 = vpop.f32.mrf.mxu0
        %v4628 = vadd.f32 %v4515, %v4627
        %4629 = vmatmul.f32.gmra.mxu0 %v3553
        %v4630 = vpop.f32.mrf.mxu0
        %v4631 = vadd.f32 %v4518, %v4630
        %4632 = vmatmul.f32.gmra.mxu0 %v3554
        %v4633 = vpop.f32.mrf.mxu0
        %v4634 = vadd.f32 %v4521, %v4633
        %4635 = vmatmul.f32.gmra.mxu0 %v3555
        %v4636 = vpop.f32.mrf.mxu0
        %v4637 = vadd.f32 %v4524, %v4636
        %4638 = vmatmul.f32.gmra.mxu0 %v3556
        %v4639 = vpop.f32.mrf.mxu0
        %v4640 = vadd.f32 %v4527, %v4639
        %4641 = vmatmul.f32.gmra.mxu0 %v3557
        %v4642 = vpop.f32.mrf.mxu0
        %v4643 = vadd.f32 %v4530, %v4642
        %4644 = vmatmul.f32.gmra.mxu0 %v3558
        %v4645 = vpop.f32.mrf.mxu0
        %v4646 = vadd.f32 %v4533, %v4645
        %4647 = vmatmul.f32.gmra.mxu0 %v3559
        %v4648 = vpop.f32.mrf.mxu0
        %v4649 = vadd.f32 %v4536, %v4648
        %4650 = vmatmul.f32.gmra.mxu0 %v3560
        %v4651 = vpop.f32.mrf.mxu0
        %v4652 = vadd.f32 %v4539, %v4651
        %4653 = vdwg.mxu0
        %4654 = vmatpush.msra.mxu0 %v4040
        %4655 = vmatpush.msra.mxu0 %v4039
        %4656 = vmatpush.msra.mxu0 %v4038
        %4657 = vmatpush.msra.mxu0 %v4037
        %4658 = vmatpush.msra.mxu0 %v4036
        %4659 = vmatpush.msra.mxu0 %v4035
        %4660 = vmatpush.msra.mxu0 %v4034
        %4661 = vmatpush.msra.mxu0 %v4033
        %4662 = vmatpush.msra.mxu0 %v4032
        %4663 = vmatpush.msra.mxu0 %v4031
        %4664 = vmatpush.msra.mxu0 %v4030
        %4665 = vmatpush.msra.mxu0 %v4029
        %4666 = vmatpush.msra.mxu0 %v4028
        %4667 = vmatpush.msra.mxu0 %v4027
        %4668 = vmatpush.msra.mxu0 %v4026
        %4669 = vmatpush.msra.mxu0 %v4025
        %4670 = vmatmul.f32.gmra.mxu0 %v3817
        %v4671 = vpop.f32.mrf.mxu0
        %v4672 = vadd.f32 %v4559, %v4671
        %4673 = vmatmul.f32.gmra.mxu0 %v3818
        %v4674 = vpop.f32.mrf.mxu0
        %v4675 = vadd.f32 %v4562, %v4674
        %4676 = vmatmul.f32.gmra.mxu0 %v3819
        %v4677 = vpop.f32.mrf.mxu0
        %v4678 = vadd.f32 %v4565, %v4677
        %4679 = vmatmul.f32.gmra.mxu0 %v3820
        %v4680 = vpop.f32.mrf.mxu0
        %v4681 = vadd.f32 %v4568, %v4680
        %4682 = vmatmul.f32.gmra.mxu0 %v3821
        %v4683 = vpop.f32.mrf.mxu0
        %v4684 = vadd.f32 %v4571, %v4683
        %4685 = vmatmul.f32.gmra.mxu0 %v3822
        %v4686 = vpop.f32.mrf.mxu0
        %v4687 = vadd.f32 %v4574, %v4686
        %4688 = vmatmul.f32.gmra.mxu0 %v3823
        %v4689 = vpop.f32.mrf.mxu0
        %v4690 = vadd.f32 %v4577, %v4689
        %4691 = vmatmul.f32.gmra.mxu0 %v3824
        %v4692 = vpop.f32.mrf.mxu0
        %v4693 = vadd.f32 %v4580, %v4692
        %4694 = vmatmul.f32.gmra.mxu0 %v3825
        %v4695 = vpop.f32.mrf.mxu0
        %v4696 = vadd.f32 %v4583, %v4695
        %4697 = vmatmul.f32.gmra.mxu0 %v3826
        %v4698 = vpop.f32.mrf.mxu0
        %v4699 = vadd.f32 %v4586, %v4698
        %4700 = vmatmul.f32.gmra.mxu0 %v3827
        %v4701 = vpop.f32.mrf.mxu0
        %v4702 = vadd.f32 %v4589, %v4701
        %4703 = vmatmul.f32.gmra.mxu0 %v3828
        %v4704 = vpop.f32.mrf.mxu0
        %v4705 = vadd.f32 %v4592, %v4704
        %4706 = vmatmul.f32.gmra.mxu0 %v3829
        %v4707 = vpop.f32.mrf.mxu0
        %v4708 = vadd.f32 %v4595, %v4707
        %4709 = vmatmul.f32.gmra.mxu0 %v3830
        %v4710 = vpop.f32.mrf.mxu0
        %v4711 = vadd.f32 %v4598, %v4710
        %4712 = vmatmul.f32.gmra.mxu0 %v3831
        %v4713 = vpop.f32.mrf.mxu0
        %v4714 = vadd.f32 %v4601, %v4713
        %4715 = vmatmul.f32.gmra.mxu0 %v3832
        %v4716 = vpop.f32.mrf.mxu0
        %v4717 = vadd.f32 %v4604, %v4716
        %4718 = vmatmul.f32.gmra.mxu0 %v3833
        %v4719 = vpop.f32.mrf.mxu0
        %v4720 = vadd.f32 %v4607, %v4719
        %4721 = vmatmul.f32.gmra.mxu0 %v3834
        %v4722 = vpop.f32.mrf.mxu0
        %v4723 = vadd.f32 %v4610, %v4722
        %4724 = vmatmul.f32.gmra.mxu0 %v3835
        %v4725 = vpop.f32.mrf.mxu0
        %v4726 = vadd.f32 %v4613, %v4725
        %4727 = vmatmul.f32.gmra.mxu0 %v3836
        %v4728 = vpop.f32.mrf.mxu0
        %v4729 = vadd.f32 %v4616, %v4728
        %4730 = vmatmul.f32.gmra.mxu0 %v3837
        %v4731 = vpop.f32.mrf.mxu0
        %v4732 = vadd.f32 %v4619, %v4731
        %4733 = vmatmul.f32.gmra.mxu0 %v3838
        %v4734 = vpop.f32.mrf.mxu0
        %v4735 = vadd.f32 %v4622, %v4734
        %4736 = vmatmul.f32.gmra.mxu0 %v3839
        %v4737 = vpop.f32.mrf.mxu0
        %v4738 = vadd.f32 %v4625, %v4737
        %4739 = vmatmul.f32.gmra.mxu0 %v3840
        %v4740 = vpop.f32.mrf.mxu0
        %v4741 = vadd.f32 %v4628, %v4740
        %4742 = vmatmul.f32.gmra.mxu0 %v3841
        %v4743 = vpop.f32.mrf.mxu0
        %v4744 = vadd.f32 %v4631, %v4743
        %4745 = vmatmul.f32.gmra.mxu0 %v3842
        %v4746 = vpop.f32.mrf.mxu0
        %v4747 = vadd.f32 %v4634, %v4746
        %4748 = vmatmul.f32.gmra.mxu0 %v3843
        %v4749 = vpop.f32.mrf.mxu0
        %v4750 = vadd.f32 %v4637, %v4749
        %4751 = vmatmul.f32.gmra.mxu0 %v3844
        %v4752 = vpop.f32.mrf.mxu0
        %v4753 = vadd.f32 %v4640, %v4752
        %4754 = vmatmul.f32.gmra.mxu0 %v3845
        %v4755 = vpop.f32.mrf.mxu0
        %v4756 = vadd.f32 %v4643, %v4755
        %4757 = vmatmul.f32.gmra.mxu0 %v3846
        %v4758 = vpop.f32.mrf.mxu0
        %v4759 = vadd.f32 %v4646, %v4758
        %4760 = vmatmul.f32.gmra.mxu0 %v3847
        %v4761 = vpop.f32.mrf.mxu0
        %v4762 = vadd.f32 %v4649, %v4761
        %4763 = vmatmul.f32.gmra.mxu0 %v3848
        %v4764 = vpop.f32.mrf.mxu0
        %v4765 = vadd.f32 %v4652, %v4764
        %4766 = vdwg.mxu0
        %4767 = vmatpush.msra.mxu0 %v4056
        %4768 = vmatpush.msra.mxu0 %v4055
        %4769 = vmatpush.msra.mxu0 %v4054
        %4770 = vmatpush.msra.mxu0 %v4053
        %4771 = vmatpush.msra.mxu0 %v4052
        %4772 = vmatpush.msra.mxu0 %v4051
        %4773 = vmatpush.msra.mxu0 %v4050
        %4774 = vmatpush.msra.mxu0 %v4049
        %4775 = vmatpush.msra.mxu0 %v4048
        %4776 = vmatpush.msra.mxu0 %v4047
        %4777 = vmatpush.msra.mxu0 %v4046
        %4778 = vmatpush.msra.mxu0 %v4045
        %4779 = vmatpush.msra.mxu0 %v4044
        %4780 = vmatpush.msra.mxu0 %v4043
        %4781 = vmatpush.msra.mxu0 %v4042
        %4782 = vmatpush.msra.mxu0 %v4041
        %4783 = vmatmul.f32.gmra.mxu0 %v3849
        %v4784 = vpop.f32.mrf.mxu0
        %v4785 = vadd.f32 %v4672, %v4784
        %4786 = vmatmul.f32.gmra.mxu0 %v3850
        %v4787 = vpop.f32.mrf.mxu0
        %v4788 = vadd.f32 %v4675, %v4787
        %4789 = vmatmul.f32.gmra.mxu0 %v3851
        %v4790 = vpop.f32.mrf.mxu0
        %v4791 = vadd.f32 %v4678, %v4790
        %4792 = vmatmul.f32.gmra.mxu0 %v3852
        %v4793 = vpop.f32.mrf.mxu0
        %v4794 = vadd.f32 %v4681, %v4793
        %4795 = vmatmul.f32.gmra.mxu0 %v3853
        %v4796 = vpop.f32.mrf.mxu0
        %v4797 = vadd.f32 %v4684, %v4796
        %4798 = vmatmul.f32.gmra.mxu0 %v3854
        %v4799 = vpop.f32.mrf.mxu0
        %v4800 = vadd.f32 %v4687, %v4799
        %4801 = vmatmul.f32.gmra.mxu0 %v3855
        %v4802 = vpop.f32.mrf.mxu0
        %v4803 = vadd.f32 %v4690, %v4802
        %4804 = vmatmul.f32.gmra.mxu0 %v3856
        %v4805 = vpop.f32.mrf.mxu0
        %v4806 = vadd.f32 %v4693, %v4805
        %4807 = vmatmul.f32.gmra.mxu0 %v3857
        %v4808 = vpop.f32.mrf.mxu0
        %v4809 = vadd.f32 %v4696, %v4808
        %4810 = vmatmul.f32.gmra.mxu0 %v3858
        %v4811 = vpop.f32.mrf.mxu0
        %v4812 = vadd.f32 %v4699, %v4811
        %4813 = vmatmul.f32.gmra.mxu0 %v3859
        %v4814 = vpop.f32.mrf.mxu0
        %v4815 = vadd.f32 %v4702, %v4814
        %4816 = vmatmul.f32.gmra.mxu0 %v3860
        %v4817 = vpop.f32.mrf.mxu0
        %v4818 = vadd.f32 %v4705, %v4817
        %4819 = vmatmul.f32.gmra.mxu0 %v3861
        %v4820 = vpop.f32.mrf.mxu0
        %v4821 = vadd.f32 %v4708, %v4820
        %4822 = vmatmul.f32.gmra.mxu0 %v3862
        %v4823 = vpop.f32.mrf.mxu0
        %v4824 = vadd.f32 %v4711, %v4823
        %4825 = vmatmul.f32.gmra.mxu0 %v3863
        %v4826 = vpop.f32.mrf.mxu0
        %v4827 = vadd.f32 %v4714, %v4826
        %4828 = vmatmul.f32.gmra.mxu0 %v3864
        %v4829 = vpop.f32.mrf.mxu0
        %v4830 = vadd.f32 %v4717, %v4829
        %4831 = vmatmul.f32.gmra.mxu0 %v3865
        %v4832 = vpop.f32.mrf.mxu0
        %v4833 = vadd.f32 %v4720, %v4832
        %4834 = vmatmul.f32.gmra.mxu0 %v3866
        %v4835 = vpop.f32.mrf.mxu0
        %v4836 = vadd.f32 %v4723, %v4835
        %4837 = vmatmul.f32.gmra.mxu0 %v3867
        %v4838 = vpop.f32.mrf.mxu0
        %v4839 = vadd.f32 %v4726, %v4838
        %4840 = vmatmul.f32.gmra.mxu0 %v3868
        %v4841 = vpop.f32.mrf.mxu0
        %v4842 = vadd.f32 %v4729, %v4841
        %4843 = vmatmul.f32.gmra.mxu0 %v3869
        %v4844 = vpop.f32.mrf.mxu0
        %v4845 = vadd.f32 %v4732, %v4844
        %4846 = vmatmul.f32.gmra.mxu0 %v3870
        %v4847 = vpop.f32.mrf.mxu0
        %v4848 = vadd.f32 %v4735, %v4847
        %4849 = vmatmul.f32.gmra.mxu0 %v3871
        %v4850 = vpop.f32.mrf.mxu0
        %v4851 = vadd.f32 %v4738, %v4850
        %4852 = vmatmul.f32.gmra.mxu0 %v3872
        %v4853 = vpop.f32.mrf.mxu0
        %v4854 = vadd.f32 %v4741, %v4853
        %4855 = vmatmul.f32.gmra.mxu0 %v3873
        %v4856 = vpop.f32.mrf.mxu0
        %v4857 = vadd.f32 %v4744, %v4856
        %4858 = vmatmul.f32.gmra.mxu0 %v3874
        %v4859 = vpop.f32.mrf.mxu0
        %v4860 = vadd.f32 %v4747, %v4859
        %4861 = vmatmul.f32.gmra.mxu0 %v3875
        %v4862 = vpop.f32.mrf.mxu0
        %v4863 = vadd.f32 %v4750, %v4862
        %4864 = vmatmul.f32.gmra.mxu0 %v3876
        %v4865 = vpop.f32.mrf.mxu0
        %v4866 = vadd.f32 %v4753, %v4865
        %4867 = vmatmul.f32.gmra.mxu0 %v3877
        %v4868 = vpop.f32.mrf.mxu0
        %v4869 = vadd.f32 %v4756, %v4868
        %4870 = vmatmul.f32.gmra.mxu0 %v3878
        %v4871 = vpop.f32.mrf.mxu0
        %v4872 = vadd.f32 %v4759, %v4871
        %4873 = vmatmul.f32.gmra.mxu0 %v3879
        %v4874 = vpop.f32.mrf.mxu0
        %v4875 = vadd.f32 %v4762, %v4874
        %4876 = vmatmul.f32.gmra.mxu0 %v3880
        %v4877 = vpop.f32.mrf.mxu0
        %v4878 = vadd.f32 %v4765, %v4877
        %4879 = vdwg.mxu0
        %4880 = vmatpush.msra.mxu0 %v4072
        %4881 = vmatpush.msra.mxu0 %v4071
        %4882 = vmatpush.msra.mxu0 %v4070
        %4883 = vmatpush.msra.mxu0 %v4069
        %4884 = vmatpush.msra.mxu0 %v4068
        %4885 = vmatpush.msra.mxu0 %v4067
        %4886 = vmatpush.msra.mxu0 %v4066
        %4887 = vmatpush.msra.mxu0 %v4065
        %4888 = vmatpush.msra.mxu0 %v4064
        %4889 = vmatpush.msra.mxu0 %v4063
        %4890 = vmatpush.msra.mxu0 %v4062
        %4891 = vmatpush.msra.mxu0 %v4061
        %4892 = vmatpush.msra.mxu0 %v4060
        %4893 = vmatpush.msra.mxu0 %v4059
        %4894 = vmatpush.msra.mxu0 %v4058
        %4895 = vmatpush.msra.mxu0 %v4057
        %4896 = vmatmul.f32.gmra.mxu0 %v3881
        %v4897 = vpop.f32.mrf.mxu0
        %v4898 = vadd.f32 %v4785, %v4897
        %4899 = vmatmul.f32.gmra.mxu0 %v3882
        %v4900 = vpop.f32.mrf.mxu0
        %v4901 = vadd.f32 %v4788, %v4900
        %4902 = vmatmul.f32.gmra.mxu0 %v3883
        %v4903 = vpop.f32.mrf.mxu0
        %v4904 = vadd.f32 %v4791, %v4903
        %4905 = vmatmul.f32.gmra.mxu0 %v3884
        %v4906 = vpop.f32.mrf.mxu0
        %v4907 = vadd.f32 %v4794, %v4906
        %4908 = vmatmul.f32.gmra.mxu0 %v3885
        %v4909 = vpop.f32.mrf.mxu0
        %v4910 = vadd.f32 %v4797, %v4909
        %4911 = vmatmul.f32.gmra.mxu0 %v3886
        %v4912 = vpop.f32.mrf.mxu0
        %v4913 = vadd.f32 %v4800, %v4912
        %4914 = vmatmul.f32.gmra.mxu0 %v3887
        %v4915 = vpop.f32.mrf.mxu0
        %v4916 = vadd.f32 %v4803, %v4915
        %4917 = vmatmul.f32.gmra.mxu0 %v3888
        %v4918 = vpop.f32.mrf.mxu0
        %v4919 = vadd.f32 %v4806, %v4918
        %4920 = vmatmul.f32.gmra.mxu0 %v3889
        %v4921 = vpop.f32.mrf.mxu0
        %v4922 = vadd.f32 %v4809, %v4921
        %4923 = vmatmul.f32.gmra.mxu0 %v3890
        %v4924 = vpop.f32.mrf.mxu0
        %v4925 = vadd.f32 %v4812, %v4924
        %4926 = vmatmul.f32.gmra.mxu0 %v3891
        %v4927 = vpop.f32.mrf.mxu0
        %v4928 = vadd.f32 %v4815, %v4927
        %4929 = vmatmul.f32.gmra.mxu0 %v3892
        %v4930 = vpop.f32.mrf.mxu0
        %v4931 = vadd.f32 %v4818, %v4930
        %4932 = vmatmul.f32.gmra.mxu0 %v3893
        %v4933 = vpop.f32.mrf.mxu0
        %v4934 = vadd.f32 %v4821, %v4933
        %4935 = vmatmul.f32.gmra.mxu0 %v3894
        %v4936 = vpop.f32.mrf.mxu0
        %v4937 = vadd.f32 %v4824, %v4936
        %4938 = vmatmul.f32.gmra.mxu0 %v3895
        %v4939 = vpop.f32.mrf.mxu0
        %v4940 = vadd.f32 %v4827, %v4939
        %4941 = vmatmul.f32.gmra.mxu0 %v3896
        %v4942 = vpop.f32.mrf.mxu0
        %v4943 = vadd.f32 %v4830, %v4942
        %4944 = vmatmul.f32.gmra.mxu0 %v3897
        %v4945 = vpop.f32.mrf.mxu0
        %v4946 = vadd.f32 %v4833, %v4945
        %4947 = vmatmul.f32.gmra.mxu0 %v3898
        %v4948 = vpop.f32.mrf.mxu0
        %v4949 = vadd.f32 %v4836, %v4948
        %4950 = vmatmul.f32.gmra.mxu0 %v3899
        %v4951 = vpop.f32.mrf.mxu0
        %v4952 = vadd.f32 %v4839, %v4951
        %4953 = vmatmul.f32.gmra.mxu0 %v3900
        %v4954 = vpop.f32.mrf.mxu0
        %v4955 = vadd.f32 %v4842, %v4954
        %4956 = vmatmul.f32.gmra.mxu0 %v3901
        %v4957 = vpop.f32.mrf.mxu0
        %v4958 = vadd.f32 %v4845, %v4957
        %4959 = vmatmul.f32.gmra.mxu0 %v3902
        %v4960 = vpop.f32.mrf.mxu0
        %v4961 = vadd.f32 %v4848, %v4960
        %4962 = vmatmul.f32.gmra.mxu0 %v3903
        %v4963 = vpop.f32.mrf.mxu0
        %v4964 = vadd.f32 %v4851, %v4963
        %4965 = vmatmul.f32.gmra.mxu0 %v3904
        %v4966 = vpop.f32.mrf.mxu0
        %v4967 = vadd.f32 %v4854, %v4966
        %4968 = vmatmul.f32.gmra.mxu0 %v3905
        %v4969 = vpop.f32.mrf.mxu0
        %v4970 = vadd.f32 %v4857, %v4969
        %4971 = vmatmul.f32.gmra.mxu0 %v3906
        %v4972 = vpop.f32.mrf.mxu0
        %v4973 = vadd.f32 %v4860, %v4972
        %4974 = vmatmul.f32.gmra.mxu0 %v3907
        %v4975 = vpop.f32.mrf.mxu0
        %v4976 = vadd.f32 %v4863, %v4975
        %4977 = vmatmul.f32.gmra.mxu0 %v3908
        %v4978 = vpop.f32.mrf.mxu0
        %v4979 = vadd.f32 %v4866, %v4978
        %4980 = vmatmul.f32.gmra.mxu0 %v3909
        %v4981 = vpop.f32.mrf.mxu0
        %v4982 = vadd.f32 %v4869, %v4981
        %4983 = vmatmul.f32.gmra.mxu0 %v3910
        %v4984 = vpop.f32.mrf.mxu0
        %v4985 = vadd.f32 %v4872, %v4984
        %4986 = vmatmul.f32.gmra.mxu0 %v3911
        %v4987 = vpop.f32.mrf.mxu0
        %v4988 = vadd.f32 %v4875, %v4987
        %4989 = vmatmul.f32.gmra.mxu0 %v3912
        %v4990 = vpop.f32.mrf.mxu0
        %v4991 = vadd.f32 %v4878, %v4990
        %4992 = vdwg.mxu0
        %4993 = vmatpush.msra.mxu0 %v4088
        %4994 = vmatpush.msra.mxu0 %v4087
        %4995 = vmatpush.msra.mxu0 %v4086
        %4996 = vmatpush.msra.mxu0 %v4085
        %4997 = vmatpush.msra.mxu0 %v4084
        %4998 = vmatpush.msra.mxu0 %v4083
        %4999 = vmatpush.msra.mxu0 %v4082
        %5000 = vmatpush.msra.mxu0 %v4081
        %5001 = vmatpush.msra.mxu0 %v4080
        %5002 = vmatpush.msra.mxu0 %v4079
        %5003 = vmatpush.msra.mxu0 %v4078
        %5004 = vmatpush.msra.mxu0 %v4077
        %5005 = vmatpush.msra.mxu0 %v4076
        %5006 = vmatpush.msra.mxu0 %v4075
        %5007 = vmatpush.msra.mxu0 %v4074
        %5008 = vmatpush.msra.mxu0 %v4073
        %5009 = vmatmul.f32.gmra.mxu0 %v3913
        %v5010 = vpop.f32.mrf.mxu0
        %v5011 = vadd.f32 %v4898, %v5010
        %5012 = vmatmul.f32.gmra.mxu0 %v3914
        %v5013 = vpop.f32.mrf.mxu0
        %v5014 = vadd.f32 %v4901, %v5013
        %5015 = vmatmul.f32.gmra.mxu0 %v3915
        %v5016 = vpop.f32.mrf.mxu0
        %v5017 = vadd.f32 %v4904, %v5016
        %5018 = vmatmul.f32.gmra.mxu0 %v3916
        %v5019 = vpop.f32.mrf.mxu0
        %v5020 = vadd.f32 %v4907, %v5019
        %5021 = vmatmul.f32.gmra.mxu0 %v3917
        %v5022 = vpop.f32.mrf.mxu0
        %v5023 = vadd.f32 %v4910, %v5022
        %5024 = vmatmul.f32.gmra.mxu0 %v3918
        %v5025 = vpop.f32.mrf.mxu0
        %v5026 = vadd.f32 %v4913, %v5025
        %5027 = vmatmul.f32.gmra.mxu0 %v3919
        %v5028 = vpop.f32.mrf.mxu0
        %v5029 = vadd.f32 %v4916, %v5028
        %5030 = vmatmul.f32.gmra.mxu0 %v3920
        %v5031 = vpop.f32.mrf.mxu0
        %v5032 = vadd.f32 %v4919, %v5031
        %5033 = vmatmul.f32.gmra.mxu0 %v3921
        %v5034 = vpop.f32.mrf.mxu0
        %v5035 = vadd.f32 %v4922, %v5034
        %5036 = vmatmul.f32.gmra.mxu0 %v3922
        %v5037 = vpop.f32.mrf.mxu0
        %v5038 = vadd.f32 %v4925, %v5037
        %5039 = vmatmul.f32.gmra.mxu0 %v3923
        %v5040 = vpop.f32.mrf.mxu0
        %v5041 = vadd.f32 %v4928, %v5040
        %5042 = vmatmul.f32.gmra.mxu0 %v3924
        %v5043 = vpop.f32.mrf.mxu0
        %v5044 = vadd.f32 %v4931, %v5043
        %5045 = vmatmul.f32.gmra.mxu0 %v3925
        %v5046 = vpop.f32.mrf.mxu0
        %v5047 = vadd.f32 %v4934, %v5046
        %5048 = vmatmul.f32.gmra.mxu0 %v3926
        %v5049 = vpop.f32.mrf.mxu0
        %v5050 = vadd.f32 %v4937, %v5049
        %5051 = vmatmul.f32.gmra.mxu0 %v3927
        %v5052 = vpop.f32.mrf.mxu0
        %v5053 = vadd.f32 %v4940, %v5052
        %5054 = vmatmul.f32.gmra.mxu0 %v3928
        %v5055 = vpop.f32.mrf.mxu0
        %v5056 = vadd.f32 %v4943, %v5055
        %5057 = vmatmul.f32.gmra.mxu0 %v3929
        %v5058 = vpop.f32.mrf.mxu0
        %v5059 = vadd.f32 %v4946, %v5058
        %5060 = vmatmul.f32.gmra.mxu0 %v3930
        %v5061 = vpop.f32.mrf.mxu0
        %v5062 = vadd.f32 %v4949, %v5061
        %5063 = vmatmul.f32.gmra.mxu0 %v3931
        %v5064 = vpop.f32.mrf.mxu0
        %v5065 = vadd.f32 %v4952, %v5064
        %5066 = vmatmul.f32.gmra.mxu0 %v3932
        %v5067 = vpop.f32.mrf.mxu0
        %v5068 = vadd.f32 %v4955, %v5067
        %5069 = vmatmul.f32.gmra.mxu0 %v3933
        %v5070 = vpop.f32.mrf.mxu0
        %v5071 = vadd.f32 %v4958, %v5070
        %5072 = vmatmul.f32.gmra.mxu0 %v3934
        %v5073 = vpop.f32.mrf.mxu0
        %v5074 = vadd.f32 %v4961, %v5073
        %5075 = vmatmul.f32.gmra.mxu0 %v3935
        %v5076 = vpop.f32.mrf.mxu0
        %v5077 = vadd.f32 %v4964, %v5076
        %5078 = vmatmul.f32.gmra.mxu0 %v3936
        %v5079 = vpop.f32.mrf.mxu0
        %v5080 = vadd.f32 %v4967, %v5079
        %5081 = vmatmul.f32.gmra.mxu0 %v3937
        %v5082 = vpop.f32.mrf.mxu0
        %v5083 = vadd.f32 %v4970, %v5082
        %5084 = vmatmul.f32.gmra.mxu0 %v3938
        %v5085 = vpop.f32.mrf.mxu0
        %v5086 = vadd.f32 %v4973, %v5085
        %5087 = vmatmul.f32.gmra.mxu0 %v3939
        %v5088 = vpop.f32.mrf.mxu0
        %v5089 = vadd.f32 %v4976, %v5088
        %5090 = vmatmul.f32.gmra.mxu0 %v3940
        %v5091 = vpop.f32.mrf.mxu0
        %v5092 = vadd.f32 %v4979, %v5091
        %5093 = vmatmul.f32.gmra.mxu0 %v3941
        %v5094 = vpop.f32.mrf.mxu0
        %v5095 = vadd.f32 %v4982, %v5094
        %5096 = vmatmul.f32.gmra.mxu0 %v3942
        %v5097 = vpop.f32.mrf.mxu0
        %v5098 = vadd.f32 %v4985, %v5097
        %5099 = vmatmul.f32.gmra.mxu0 %v3943
        %v5100 = vpop.f32.mrf.mxu0
        %v5101 = vadd.f32 %v4988, %v5100
        %5102 = vmatmul.f32.gmra.mxu0 %v3944
        %v5103 = vpop.f32.mrf.mxu0
        %v5104 = vadd.f32 %v4991, %v5103
        %5105 = vdwg.mxu0
        %v5106 = vperm.slane %v249, 2
        %v5107 = vmul.f32 %v5011, %v5106
        %v5108 = vmul.f32 %v5014, %v5106
        %v5109 = vmul.f32 %v5017, %v5106
        %v5110 = vmul.f32 %v5020, %v5106
        %v5111 = vmul.f32 %v5023, %v5106
        %v5112 = vmul.f32 %v5026, %v5106
        %v5113 = vmul.f32 %v5029, %v5106
        %v5114 = vmul.f32 %v5032, %v5106
        %v5115 = vmul.f32 %v5035, %v5106
        %v5116 = vmul.f32 %v5038, %v5106
        %v5117 = vmul.f32 %v5041, %v5106
        %v5118 = vmul.f32 %v5044, %v5106
        %v5119 = vmul.f32 %v5047, %v5106
        %v5120 = vmul.f32 %v5050, %v5106
        %v5121 = vmul.f32 %v5053, %v5106
        %v5122 = vmul.f32 %v5056, %v5106
        %v5123 = vmul.f32 %v5059, %v5106
        %v5124 = vmul.f32 %v5062, %v5106
        %v5125 = vmul.f32 %v5065, %v5106
        %v5126 = vmul.f32 %v5068, %v5106
        %v5127 = vmul.f32 %v5071, %v5106
        %v5128 = vmul.f32 %v5074, %v5106
        %v5129 = vmul.f32 %v5077, %v5106
        %v5130 = vmul.f32 %v5080, %v5106
        %v5131 = vmul.f32 %v5083, %v5106
        %v5132 = vmul.f32 %v5086, %v5106
        %v5133 = vmul.f32 %v5089, %v5106
        %v5134 = vmul.f32 %v5092, %v5106
        %v5135 = vmul.f32 %v5095, %v5106
        %v5136 = vmul.f32 %v5098, %v5106
        %v5137 = vmul.f32 %v5101, %v5106
        %v5138 = vmul.f32 %v5104, %v5106
        %v5139 = vperm.slane %v249, 3
        %v5140 = vadd.f32 %v5107, %v5139
        %v5141 = vadd.f32 %v5108, %v5139
        %v5142 = vadd.f32 %v5109, %v5139
        %v5143 = vadd.f32 %v5110, %v5139
        %v5144 = vadd.f32 %v5111, %v5139
        %v5145 = vadd.f32 %v5112, %v5139
        %v5146 = vadd.f32 %v5113, %v5139
        %v5147 = vadd.f32 %v5114, %v5139
        %v5148 = vadd.f32 %v5115, %v5139
        %v5149 = vadd.f32 %v5116, %v5139
        %v5150 = vadd.f32 %v5117, %v5139
        %v5151 = vadd.f32 %v5118, %v5139
        %v5152 = vadd.f32 %v5119, %v5139
        %v5153 = vadd.f32 %v5120, %v5139
        %v5154 = vadd.f32 %v5121, %v5139
        %v5155 = vadd.f32 %v5122, %v5139
        %v5156 = vadd.f32 %v5123, %v5139
        %v5157 = vadd.f32 %v5124, %v5139
        %v5158 = vadd.f32 %v5125, %v5139
        %v5159 = vadd.f32 %v5126, %v5139
        %v5160 = vadd.f32 %v5127, %v5139
        %v5161 = vadd.f32 %v5128, %v5139
        %v5162 = vadd.f32 %v5129, %v5139
        %v5163 = vadd.f32 %v5130, %v5139
        %v5164 = vadd.f32 %v5131, %v5139
        %v5165 = vadd.f32 %v5132, %v5139
        %v5166 = vadd.f32 %v5133, %v5139
        %v5167 = vadd.f32 %v5134, %v5139
        %v5168 = vadd.f32 %v5135, %v5139
        %v5169 = vadd.f32 %v5136, %v5139
        %v5170 = vadd.f32 %v5137, %v5139
        %v5171 = vadd.f32 %v5138, %v5139
        %v5172 = vmax.f32 %v5140, 0.0
        %v5173 = vmax.f32 %v5141, 0.0
        %v5174 = vmax.f32 %v5142, 0.0
        %v5175 = vmax.f32 %v5143, 0.0
        %v5176 = vmax.f32 %v5144, 0.0
        %v5177 = vmax.f32 %v5145, 0.0
        %v5178 = vmax.f32 %v5146, 0.0
        %v5179 = vmax.f32 %v5147, 0.0
        %v5180 = vmax.f32 %v5148, 0.0
        %v5181 = vmax.f32 %v5149, 0.0
        %v5182 = vmax.f32 %v5150, 0.0
        %v5183 = vmax.f32 %v5151, 0.0
        %v5184 = vmax.f32 %v5152, 0.0
        %v5185 = vmax.f32 %v5153, 0.0
        %v5186 = vmax.f32 %v5154, 0.0
        %v5187 = vmax.f32 %v5155, 0.0
        %v5188 = vmax.f32 %v5156, 0.0
        %v5189 = vmax.f32 %v5157, 0.0
        %v5190 = vmax.f32 %v5158, 0.0
        %v5191 = vmax.f32 %v5159, 0.0
        %v5192 = vmax.f32 %v5160, 0.0
        %v5193 = vmax.f32 %v5161, 0.0
        %v5194 = vmax.f32 %v5162, 0.0
        %v5195 = vmax.f32 %v5163, 0.0
        %v5196 = vmax.f32 %v5164, 0.0
        %v5197 = vmax.f32 %v5165, 0.0
        %v5198 = vmax.f32 %v5166, 0.0
        %v5199 = vmax.f32 %v5167, 0.0
        %v5200 = vmax.f32 %v5168, 0.0
        %v5201 = vmax.f32 %v5169, 0.0
        %v5202 = vmax.f32 %v5170, 0.0
        %v5203 = vmax.f32 %v5171, 0.0
        %5204 = vst [vmem:[#allocation3] sm:$0xff] %v5172
        %5205 = vst [vmem:[#allocation3 + $0x8] sm:$0xff] %v5173
        %5206 = vst [vmem:[#allocation3 + $0x10] sm:$0xff] %v5174
        %5207 = vst [vmem:[#allocation3 + $0x18] sm:$0xff] %v5175
        %5208 = vst [vmem:[#allocation3 + $0x20] sm:$0xff] %v5176
        %5209 = vst [vmem:[#allocation3 + $0x28] sm:$0xff] %v5177
        %5210 = vst [vmem:[#allocation3 + $0x30] sm:$0xff] %v5178
        %5211 = vst [vmem:[#allocation3 + $0x38] sm:$0xff] %v5179
        %5212 = vst [vmem:[#allocation3 + $0x40] sm:$0xff] %v5180
        %5213 = vst [vmem:[#allocation3 + $0x48] sm:$0xff] %v5181
        %5214 = vst [vmem:[#allocation3 + $0x50] sm:$0xff] %v5182
        %5215 = vst [vmem:[#allocation3 + $0x58] sm:$0xff] %v5183
        %5216 = vst [vmem:[#allocation3 + $0x60] sm:$0xff] %v5184
        %5217 = vst [vmem:[#allocation3 + $0x68] sm:$0xff] %v5185
        %5218 = vst [vmem:[#allocation3 + $0x70] sm:$0xff] %v5186
        %5219 = vst [vmem:[#allocation3 + $0x78] sm:$0xff] %v5187
        %5220 = vst [vmem:[#allocation3 + $0x80] sm:$0xff] %v5188
        %5221 = vst [vmem:[#allocation3 + $0x88] sm:$0xff] %v5189
        %5222 = vst [vmem:[#allocation3 + $0x90] sm:$0xff] %v5190
        %5223 = vst [vmem:[#allocation3 + $0x98] sm:$0xff] %v5191
        %5224 = vst [vmem:[#allocation3 + $0xa0] sm:$0xff] %v5192
        %5225 = vst [vmem:[#allocation3 + $0xa8] sm:$0xff] %v5193
        %5226 = vst [vmem:[#allocation3 + $0xb0] sm:$0xff] %v5194
        %5227 = vst [vmem:[#allocation3 + $0xb8] sm:$0xff] %v5195
        %5228 = vst [vmem:[#allocation3 + $0xc0] sm:$0xff] %v5196
        %5229 = vst [vmem:[#allocation3 + $0xc8] sm:$0xff] %v5197
        %5230 = vst [vmem:[#allocation3 + $0xd0] sm:$0xff] %v5198
        %5231 = vst [vmem:[#allocation3 + $0xd8] sm:$0xff] %v5199
        %5232 = vst [vmem:[#allocation3 + $0xe0] sm:$0xff] %v5200
        %5233 = vst [vmem:[#allocation3 + $0xe8] sm:$0xff] %v5201
        %5234 = vst [vmem:[#allocation3 + $0xf0] sm:$0xff] %v5202
        %5235 = vst [vmem:[#allocation3 + $0xf8] sm:$0xff] %v5203
        %v5236 = vld [vmem:[#allocation3] sm:$0xff]
        %v5237 = vld [vmem:[#allocation3 + $0x8] sm:$0xff]
        %v5238 = vld [vmem:[#allocation3 + $0x10] sm:$0xff]
        %v5239 = vld [vmem:[#allocation3 + $0x18] sm:$0xff]
        %v5240 = vld [vmem:[#allocation3 + $0x20] sm:$0xff]
        %v5241 = vld [vmem:[#allocation3 + $0x28] sm:$0xff]
        %v5242 = vld [vmem:[#allocation3 + $0x30] sm:$0xff]
        %v5243 = vld [vmem:[#allocation3 + $0x38] sm:$0xff]
        %v5244 = vld [vmem:[#allocation3 + $0x40] sm:$0xff]
        %v5245 = vld [vmem:[#allocation3 + $0x48] sm:$0xff]
        %v5246 = vld [vmem:[#allocation3 + $0x50] sm:$0xff]
        %v5247 = vld [vmem:[#allocation3 + $0x58] sm:$0xff]
        %v5248 = vld [vmem:[#allocation3 + $0x60] sm:$0xff]
        %v5249 = vld [vmem:[#allocation3 + $0x68] sm:$0xff]
        %v5250 = vld [vmem:[#allocation3 + $0x70] sm:$0xff]
        %v5251 = vld [vmem:[#allocation3 + $0x78] sm:$0xff]
        %v5252 = vld [vmem:[#allocation3 + $0x80] sm:$0xff]
        %v5253 = vld [vmem:[#allocation3 + $0x88] sm:$0xff]
        %v5254 = vld [vmem:[#allocation3 + $0x90] sm:$0xff]
        %v5255 = vld [vmem:[#allocation3 + $0x98] sm:$0xff]
        %v5256 = vld [vmem:[#allocation3 + $0xa0] sm:$0xff]
        %v5257 = vld [vmem:[#allocation3 + $0xa8] sm:$0xff]
        %v5258 = vld [vmem:[#allocation3 + $0xb0] sm:$0xff]
        %v5259 = vld [vmem:[#allocation3 + $0xb8] sm:$0xff]
        %v5260 = vld [vmem:[#allocation3 + $0xc0] sm:$0xff]
        %v5261 = vld [vmem:[#allocation3 + $0xc8] sm:$0xff]
        %v5262 = vld [vmem:[#allocation3 + $0xd0] sm:$0xff]
        %v5263 = vld [vmem:[#allocation3 + $0xd8] sm:$0xff]
        %v5264 = vld [vmem:[#allocation3 + $0xe0] sm:$0xff]
        %v5265 = vld [vmem:[#allocation3 + $0xe8] sm:$0xff]
        %v5266 = vld [vmem:[#allocation3 + $0xf0] sm:$0xff]
        %v5267 = vld [vmem:[#allocation3 + $0xf8] sm:$0xff]
        %v5268 = vld [vmem:[#allocation2] sm:$0xff]
        %v5269 = vld [vmem:[#allocation2 + $0x8] sm:$0xff]
        %v5270 = vld [vmem:[#allocation2 + $0x10] sm:$0xff]
        %v5271 = vld [vmem:[#allocation2 + $0x18] sm:$0xff]
        %v5272 = vld [vmem:[#allocation2 + $0x20] sm:$0xff]
        %v5273 = vld [vmem:[#allocation2 + $0x28] sm:$0xff]
        %v5274 = vld [vmem:[#allocation2 + $0x30] sm:$0xff]
        %v5275 = vld [vmem:[#allocation2 + $0x38] sm:$0xff]
        %v5276 = vld [vmem:[#allocation2 + $0x40] sm:$0xff]
        %v5277 = vld [vmem:[#allocation2 + $0x48] sm:$0xff]
        %v5278 = vld [vmem:[#allocation2 + $0x50] sm:$0xff]
        %v5279 = vld [vmem:[#allocation2 + $0x58] sm:$0xff]
        %v5280 = vld [vmem:[#allocation2 + $0x60] sm:$0xff]
        %v5281 = vld [vmem:[#allocation2 + $0x68] sm:$0xff]
        %v5282 = vld [vmem:[#allocation2 + $0x70] sm:$0xff]
        %v5283 = vld [vmem:[#allocation2 + $0x78] sm:$0xff]
        %v5284 = vld [vmem:[#allocation2 + $0x80] sm:$0xff]
        %v5285 = vld [vmem:[#allocation2 + $0x88] sm:$0xff]
        %v5286 = vld [vmem:[#allocation2 + $0x90] sm:$0xff]
        %v5287 = vld [vmem:[#allocation2 + $0x98] sm:$0xff]
        %v5288 = vld [vmem:[#allocation2 + $0xa0] sm:$0xff]
        %v5289 = vld [vmem:[#allocation2 + $0xa8] sm:$0xff]
        %v5290 = vld [vmem:[#allocation2 + $0xb0] sm:$0xff]
        %v5291 = vld [vmem:[#allocation2 + $0xb8] sm:$0xff]
        %v5292 = vld [vmem:[#allocation2 + $0xc0] sm:$0xff]
        %v5293 = vld [vmem:[#allocation2 + $0xc8] sm:$0xff]
        %v5294 = vld [vmem:[#allocation2 + $0xd0] sm:$0xff]
        %v5295 = vld [vmem:[#allocation2 + $0xd8] sm:$0xff]
        %v5296 = vld [vmem:[#allocation2 + $0xe0] sm:$0xff]
        %v5297 = vld [vmem:[#allocation2 + $0xe8] sm:$0xff]
        %v5298 = vld [vmem:[#allocation2 + $0xf0] sm:$0xff]
        %v5299 = vld [vmem:[#allocation2 + $0xf8] sm:$0xff]
        %v5300 = vrot.slane %v5236, 7
        %v5301 = vrot.slane %v5237, 7
        %v5302 = vrot.slane %v5238, 7
        %v5303 = vrot.slane %v5239, 7
        %v5304 = vrot.slane %v5240, 7
        %v5305 = vrot.slane %v5241, 7
        %v5306 = vrot.slane %v5242, 7
        %v5307 = vrot.slane %v5243, 7
        %v5308 = vrot.slane %v5244, 7
        %v5309 = vrot.slane %v5245, 7
        %v5310 = vrot.slane %v5246, 7
        %v5311 = vrot.slane %v5247, 7
        %v5312 = vrot.slane %v5248, 7
        %v5313 = vrot.slane %v5249, 7
        %v5314 = vrot.slane %v5250, 7
        %v5315 = vrot.slane %v5251, 7
        %v5316 = vrot.slane %v5252, 7
        %v5317 = vrot.slane %v5253, 7
        %v5318 = vrot.slane %v5254, 7
        %v5319 = vrot.slane %v5255, 7
        %v5320 = vrot.slane %v5256, 7
        %v5321 = vrot.slane %v5257, 7
        %v5322 = vrot.slane %v5258, 7
        %v5323 = vrot.slane %v5259, 7
        %v5324 = vrot.slane %v5260, 7
        %v5325 = vrot.slane %v5261, 7
        %v5326 = vrot.slane %v5262, 7
        %v5327 = vrot.slane %v5263, 7
        %v5328 = vrot.slane %v5264, 7
        %v5329 = vrot.slane %v5265, 7
        %v5330 = vrot.slane %v5266, 7
        %v5331 = vrot.slane %v5267, 7
        %v5332 = vsel %vm764, %v5330, %v5331
        %v5333 = vsel %vm764, %v5329, %v5330
        %v5334 = vsel %vm764, %v5328, %v5329
        %v5335 = vsel %vm764, %v5327, %v5328
        %v5336 = vsel %vm764, %v5326, %v5327
        %v5337 = vsel %vm764, %v5325, %v5326
        %v5338 = vsel %vm764, %v5324, %v5325
        %v5339 = vsel %vm764, %v5323, %v5324
        %v5340 = vsel %vm764, %v5322, %v5323
        %v5341 = vsel %vm764, %v5321, %v5322
        %v5342 = vsel %vm764, %v5320, %v5321
        %v5343 = vsel %vm764, %v5319, %v5320
        %v5344 = vsel %vm764, %v5318, %v5319
        %v5345 = vsel %vm764, %v5317, %v5318
        %v5346 = vsel %vm764, %v5316, %v5317
        %v5347 = vsel %vm764, %v5315, %v5316
        %v5348 = vsel %vm764, %v5314, %v5315
        %v5349 = vsel %vm764, %v5313, %v5314
        %v5350 = vsel %vm764, %v5312, %v5313
        %v5351 = vsel %vm764, %v5311, %v5312
        %v5352 = vsel %vm764, %v5310, %v5311
        %v5353 = vsel %vm764, %v5309, %v5310
        %v5354 = vsel %vm764, %v5308, %v5309
        %v5355 = vsel %vm764, %v5307, %v5308
        %v5356 = vsel %vm764, %v5306, %v5307
        %v5357 = vsel %vm764, %v5305, %v5306
        %v5358 = vsel %vm764, %v5304, %v5305
        %v5359 = vsel %vm764, %v5303, %v5304
        %v5360 = vsel %vm764, %v5302, %v5303
        %v5361 = vsel %vm764, %v5301, %v5302
        %v5362 = vsel %vm764, %v5300, %v5301
        %v5363 = vsel %vm764, %v5331, %v5300
        %v5364 = vmul.f32 %v5333, %v800
        %v5365 = vmul.f32 %v5332, %v805
        %v5366 = vmul.f32 %v5363, %v810
        %v5367 = vmul.f32 %v5362, %v815
        %v5368 = vmul.f32 %v5361, %v820
        %v5369 = vmul.f32 %v5360, %v825
        %v5370 = vmul.f32 %v5359, %v830
        %v5371 = vmul.f32 %v5358, %v835
        %v5372 = vmul.f32 %v5357, %v840
        %v5373 = vmul.f32 %v5356, %v845
        %v5374 = vmul.f32 %v5355, %v850
        %v5375 = vmul.f32 %v5354, %v855
        %v5376 = vmul.f32 %v5353, %v860
        %v5377 = vmul.f32 %v5352, %v865
        %v5378 = vmul.f32 %v5351, %v870
        %v5379 = vmul.f32 %v5350, %v875
        %v5380 = vmul.f32 %v5349, %v880
        %v5381 = vmul.f32 %v5348, %v885
        %v5382 = vmul.f32 %v5347, %v890
        %v5383 = vmul.f32 %v5346, %v895
        %v5384 = vmul.f32 %v5345, %v900
        %v5385 = vmul.f32 %v5344, %v905
        %v5386 = vmul.f32 %v5343, %v910
        %v5387 = vmul.f32 %v5342, %v915
        %v5388 = vmul.f32 %v5341, %v920
        %v5389 = vmul.f32 %v5340, %v925
        %v5390 = vmul.f32 %v5339, %v930
        %v5391 = vmul.f32 %v5338, %v935
        %v5392 = vmul.f32 %v5337, %v940
        %v5393 = vmul.f32 %v5336, %v945
        %v5394 = vmul.f32 %v5335, %v950
        %v5395 = vmul.f32 %v5334, %v955
        %v5396 = vmul.f32 %v5266, %v991
        %v5397 = vmul.f32 %v5267, %v995
        %v5398 = vmul.f32 %v5236, %v999
        %v5399 = vmul.f32 %v5237, %v1003
        %v5400 = vmul.f32 %v5238, %v1007
        %v5401 = vmul.f32 %v5239, %v1011
        %v5402 = vmul.f32 %v5240, %v1015
        %v5403 = vmul.f32 %v5241, %v1019
        %v5404 = vmul.f32 %v5242, %v1023
        %v5405 = vmul.f32 %v5243, %v1027
        %v5406 = vmul.f32 %v5244, %v1031
        %v5407 = vmul.f32 %v5245, %v1035
        %v5408 = vmul.f32 %v5246, %v1039
        %v5409 = vmul.f32 %v5247, %v1043
        %v5410 = vmul.f32 %v5248, %v1047
        %v5411 = vmul.f32 %v5249, %v1051
        %v5412 = vmul.f32 %v5250, %v1055
        %v5413 = vmul.f32 %v5251, %v1059
        %v5414 = vmul.f32 %v5252, %v1063
        %v5415 = vmul.f32 %v5253, %v1067
        %v5416 = vmul.f32 %v5254, %v1071
        %v5417 = vmul.f32 %v5255, %v1075
        %v5418 = vmul.f32 %v5256, %v1079
        %v5419 = vmul.f32 %v5257, %v1083
        %v5420 = vmul.f32 %v5258, %v1087
        %v5421 = vmul.f32 %v5259, %v1091
        %v5422 = vmul.f32 %v5260, %v1095
        %v5423 = vmul.f32 %v5261, %v1099
        %v5424 = vmul.f32 %v5262, %v1103
        %v5425 = vmul.f32 %v5263, %v1107
        %v5426 = vmul.f32 %v5264, %v1111
        %v5427 = vmul.f32 %v5265, %v1115
        %v5428 = vrot.slane %v5236, 1
        %v5429 = vrot.slane %v5237, 1
        %v5430 = vrot.slane %v5238, 1
        %v5431 = vrot.slane %v5239, 1
        %v5432 = vrot.slane %v5240, 1
        %v5433 = vrot.slane %v5241, 1
        %v5434 = vrot.slane %v5242, 1
        %v5435 = vrot.slane %v5243, 1
        %v5436 = vrot.slane %v5244, 1
        %v5437 = vrot.slane %v5245, 1
        %v5438 = vrot.slane %v5246, 1
        %v5439 = vrot.slane %v5247, 1
        %v5440 = vrot.slane %v5248, 1
        %v5441 = vrot.slane %v5249, 1
        %v5442 = vrot.slane %v5250, 1
        %v5443 = vrot.slane %v5251, 1
        %v5444 = vrot.slane %v5252, 1
        %v5445 = vrot.slane %v5253, 1
        %v5446 = vrot.slane %v5254, 1
        %v5447 = vrot.slane %v5255, 1
        %v5448 = vrot.slane %v5256, 1
        %v5449 = vrot.slane %v5257, 1
        %v5450 = vrot.slane %v5258, 1
        %v5451 = vrot.slane %v5259, 1
        %v5452 = vrot.slane %v5260, 1
        %v5453 = vrot.slane %v5261, 1
        %v5454 = vrot.slane %v5262, 1
        %v5455 = vrot.slane %v5263, 1
        %v5456 = vrot.slane %v5264, 1
        %v5457 = vrot.slane %v5265, 1
        %v5458 = vrot.slane %v5266, 1
        %v5459 = vrot.slane %v5267, 1
        %v5460 = vsel %vm1181, %v5458, %v5459
        %v5461 = vsel %vm1181, %v5457, %v5458
        %v5462 = vsel %vm1181, %v5456, %v5457
        %v5463 = vsel %vm1181, %v5455, %v5456
        %v5464 = vsel %vm1181, %v5454, %v5455
        %v5465 = vsel %vm1181, %v5453, %v5454
        %v5466 = vsel %vm1181, %v5452, %v5453
        %v5467 = vsel %vm1181, %v5451, %v5452
        %v5468 = vsel %vm1181, %v5450, %v5451
        %v5469 = vsel %vm1181, %v5449, %v5450
        %v5470 = vsel %vm1181, %v5448, %v5449
        %v5471 = vsel %vm1181, %v5447, %v5448
        %v5472 = vsel %vm1181, %v5446, %v5447
        %v5473 = vsel %vm1181, %v5445, %v5446
        %v5474 = vsel %vm1181, %v5444, %v5445
        %v5475 = vsel %vm1181, %v5443, %v5444
        %v5476 = vsel %vm1181, %v5442, %v5443
        %v5477 = vsel %vm1181, %v5441, %v5442
        %v5478 = vsel %vm1181, %v5440, %v5441
        %v5479 = vsel %vm1181, %v5439, %v5440
        %v5480 = vsel %vm1181, %v5438, %v5439
        %v5481 = vsel %vm1181, %v5437, %v5438
        %v5482 = vsel %vm1181, %v5436, %v5437
        %v5483 = vsel %vm1181, %v5435, %v5436
        %v5484 = vsel %vm1181, %v5434, %v5435
        %v5485 = vsel %vm1181, %v5433, %v5434
        %v5486 = vsel %vm1181, %v5432, %v5433
        %v5487 = vsel %vm1181, %v5431, %v5432
        %v5488 = vsel %vm1181, %v5430, %v5431
        %v5489 = vsel %vm1181, %v5429, %v5430
        %v5490 = vsel %vm1181, %v5428, %v5429
        %v5491 = vsel %vm1181, %v5459, %v5428
        %v5492 = vmul.f32 %v5460, %v1217
        %v5493 = vmul.f32 %v5491, %v1222
        %v5494 = vmul.f32 %v5490, %v1227
        %v5495 = vmul.f32 %v5489, %v1232
        %v5496 = vmul.f32 %v5488, %v1237
        %v5497 = vmul.f32 %v5487, %v1242
        %v5498 = vmul.f32 %v5486, %v1247
        %v5499 = vmul.f32 %v5485, %v1252
        %v5500 = vmul.f32 %v5484, %v1257
        %v5501 = vmul.f32 %v5483, %v1262
        %v5502 = vmul.f32 %v5482, %v1267
        %v5503 = vmul.f32 %v5481, %v1272
        %v5504 = vmul.f32 %v5480, %v1277
        %v5505 = vmul.f32 %v5479, %v1282
        %v5506 = vmul.f32 %v5478, %v1287
        %v5507 = vmul.f32 %v5477, %v1292
        %v5508 = vmul.f32 %v5476, %v1297
        %v5509 = vmul.f32 %v5475, %v1302
        %v5510 = vmul.f32 %v5474, %v1307
        %v5511 = vmul.f32 %v5473, %v1312
        %v5512 = vmul.f32 %v5472, %v1317
        %v5513 = vmul.f32 %v5471, %v1322
        %v5514 = vmul.f32 %v5470, %v1327
        %v5515 = vmul.f32 %v5469, %v1332
        %v5516 = vmul.f32 %v5468, %v1337
        %v5517 = vmul.f32 %v5467, %v1342
        %v5518 = vmul.f32 %v5466, %v1347
        %v5519 = vmul.f32 %v5465, %v1352
        %v5520 = vmul.f32 %v5464, %v1357
        %v5521 = vmul.f32 %v5463, %v1362
        %v5522 = vmul.f32 %v5462, %v1367
        %v5523 = vmul.f32 %v5461, %v1372
        %v5524 = vmul.f32 %v5363, %v1408
        %v5525 = vmul.f32 %v5362, %v1412
        %v5526 = vmul.f32 %v5361, %v1416
        %v5527 = vmul.f32 %v5360, %v1420
        %v5528 = vmul.f32 %v5359, %v1424
        %v5529 = vmul.f32 %v5358, %v1428
        %v5530 = vmul.f32 %v5357, %v1432
        %v5531 = vmul.f32 %v5356, %v1436
        %v5532 = vmul.f32 %v5355, %v1440
        %v5533 = vmul.f32 %v5354, %v1444
        %v5534 = vmul.f32 %v5353, %v1448
        %v5535 = vmul.f32 %v5352, %v1452
        %v5536 = vmul.f32 %v5351, %v1456
        %v5537 = vmul.f32 %v5350, %v1460
        %v5538 = vmul.f32 %v5349, %v1464
        %v5539 = vmul.f32 %v5348, %v1468
        %v5540 = vmul.f32 %v5347, %v1472
        %v5541 = vmul.f32 %v5346, %v1476
        %v5542 = vmul.f32 %v5345, %v1480
        %v5543 = vmul.f32 %v5344, %v1484
        %v5544 = vmul.f32 %v5343, %v1488
        %v5545 = vmul.f32 %v5342, %v1492
        %v5546 = vmul.f32 %v5341, %v1496
        %v5547 = vmul.f32 %v5340, %v1500
        %v5548 = vmul.f32 %v5339, %v1504
        %v5549 = vmul.f32 %v5338, %v1508
        %v5550 = vmul.f32 %v5337, %v1512
        %v5551 = vmul.f32 %v5336, %v1516
        %v5552 = vmul.f32 %v5335, %v1520
        %v5553 = vmul.f32 %v5334, %v1524
        %v5554 = vmul.f32 %v5333, %v1528
        %v5555 = vmul.f32 %v5332, %v1532
        %v5556 = vmul.f32 %v5490, %v1568
        %v5557 = vmul.f32 %v5489, %v1572
        %v5558 = vmul.f32 %v5488, %v1576
        %v5559 = vmul.f32 %v5487, %v1580
        %v5560 = vmul.f32 %v5486, %v1584
        %v5561 = vmul.f32 %v5485, %v1588
        %v5562 = vmul.f32 %v5484, %v1592
        %v5563 = vmul.f32 %v5483, %v1596
        %v5564 = vmul.f32 %v5482, %v1600
        %v5565 = vmul.f32 %v5481, %v1604
        %v5566 = vmul.f32 %v5480, %v1608
        %v5567 = vmul.f32 %v5479, %v1612
        %v5568 = vmul.f32 %v5478, %v1616
        %v5569 = vmul.f32 %v5477, %v1620
        %v5570 = vmul.f32 %v5476, %v1624
        %v5571 = vmul.f32 %v5475, %v1628
        %v5572 = vmul.f32 %v5474, %v1632
        %v5573 = vmul.f32 %v5473, %v1636
        %v5574 = vmul.f32 %v5472, %v1640
        %v5575 = vmul.f32 %v5471, %v1644
        %v5576 = vmul.f32 %v5470, %v1648
        %v5577 = vmul.f32 %v5469, %v1652
        %v5578 = vmul.f32 %v5468, %v1656
        %v5579 = vmul.f32 %v5467, %v1660
        %v5580 = vmul.f32 %v5466, %v1664
        %v5581 = vmul.f32 %v5465, %v1668
        %v5582 = vmul.f32 %v5464, %v1672
        %v5583 = vmul.f32 %v5463, %v1676
        %v5584 = vmul.f32 %v5462, %v1680
        %v5585 = vmul.f32 %v5461, %v1684
        %v5586 = vmul.f32 %v5460, %v1688
        %v5587 = vmul.f32 %v5491, %v1692
        %v5588 = vmul.f32 %v5361, %v1729
        %v5589 = vmul.f32 %v5360, %v1734
        %v5590 = vmul.f32 %v5359, %v1739
        %v5591 = vmul.f32 %v5358, %v1744
        %v5592 = vmul.f32 %v5357, %v1749
        %v5593 = vmul.f32 %v5356, %v1754
        %v5594 = vmul.f32 %v5355, %v1759
        %v5595 = vmul.f32 %v5354, %v1764
        %v5596 = vmul.f32 %v5353, %v1769
        %v5597 = vmul.f32 %v5352, %v1774
        %v5598 = vmul.f32 %v5351, %v1779
        %v5599 = vmul.f32 %v5350, %v1784
        %v5600 = vmul.f32 %v5349, %v1789
        %v5601 = vmul.f32 %v5348, %v1794
        %v5602 = vmul.f32 %v5347, %v1799
        %v5603 = vmul.f32 %v5346, %v1804
        %v5604 = vmul.f32 %v5345, %v1809
        %v5605 = vmul.f32 %v5344, %v1814
        %v5606 = vmul.f32 %v5343, %v1819
        %v5607 = vmul.f32 %v5342, %v1824
        %v5608 = vmul.f32 %v5341, %v1829
        %v5609 = vmul.f32 %v5340, %v1834
        %v5610 = vmul.f32 %v5339, %v1839
        %v5611 = vmul.f32 %v5338, %v1844
        %v5612 = vmul.f32 %v5337, %v1849
        %v5613 = vmul.f32 %v5336, %v1854
        %v5614 = vmul.f32 %v5335, %v1859
        %v5615 = vmul.f32 %v5334, %v1864
        %v5616 = vmul.f32 %v5333, %v1869
        %v5617 = vmul.f32 %v5332, %v1874
        %v5618 = vmul.f32 %v5363, %v1879
        %v5619 = vmul.f32 %v5362, %v1884
        %v5620 = vmul.f32 %v5238, %v1920
        %v5621 = vmul.f32 %v5239, %v1924
        %v5622 = vmul.f32 %v5240, %v1928
        %v5623 = vmul.f32 %v5241, %v1932
        %v5624 = vmul.f32 %v5242, %v1936
        %v5625 = vmul.f32 %v5243, %v1940
        %v5626 = vmul.f32 %v5244, %v1944
        %v5627 = vmul.f32 %v5245, %v1948
        %v5628 = vmul.f32 %v5246, %v1952
        %v5629 = vmul.f32 %v5247, %v1956
        %v5630 = vmul.f32 %v5248, %v1960
        %v5631 = vmul.f32 %v5249, %v1964
        %v5632 = vmul.f32 %v5250, %v1968
        %v5633 = vmul.f32 %v5251, %v1972
        %v5634 = vmul.f32 %v5252, %v1976
        %v5635 = vmul.f32 %v5253, %v1980
        %v5636 = vmul.f32 %v5254, %v1984
        %v5637 = vmul.f32 %v5255, %v1988
        %v5638 = vmul.f32 %v5256, %v1992
        %v5639 = vmul.f32 %v5257, %v1996
        %v5640 = vmul.f32 %v5258, %v2000
        %v5641 = vmul.f32 %v5259, %v2004
        %v5642 = vmul.f32 %v5260, %v2008
        %v5643 = vmul.f32 %v5261, %v2012
        %v5644 = vmul.f32 %v5262, %v2016
        %v5645 = vmul.f32 %v5263, %v2020
        %v5646 = vmul.f32 %v5264, %v2024
        %v5647 = vmul.f32 %v5265, %v2028
        %v5648 = vmul.f32 %v5266, %v2032
        %v5649 = vmul.f32 %v5267, %v2036
        %v5650 = vmul.f32 %v5236, %v2040
        %v5651 = vmul.f32 %v5237, %v2044
        %v5652 = vmul.f32 %v5488, %v2080
        %v5653 = vmul.f32 %v5487, %v2084
        %v5654 = vmul.f32 %v5486, %v2088
        %v5655 = vmul.f32 %v5485, %v2092
        %v5656 = vmul.f32 %v5484, %v2096
        %v5657 = vmul.f32 %v5483, %v2100
        %v5658 = vmul.f32 %v5482, %v2104
        %v5659 = vmul.f32 %v5481, %v2108
        %v5660 = vmul.f32 %v5480, %v2112
        %v5661 = vmul.f32 %v5479, %v2116
        %v5662 = vmul.f32 %v5478, %v2120
        %v5663 = vmul.f32 %v5477, %v2124
        %v5664 = vmul.f32 %v5476, %v2128
        %v5665 = vmul.f32 %v5475, %v2132
        %v5666 = vmul.f32 %v5474, %v2136
        %v5667 = vmul.f32 %v5473, %v2140
        %v5668 = vmul.f32 %v5472, %v2144
        %v5669 = vmul.f32 %v5471, %v2148
        %v5670 = vmul.f32 %v5470, %v2152
        %v5671 = vmul.f32 %v5469, %v2156
        %v5672 = vmul.f32 %v5468, %v2160
        %v5673 = vmul.f32 %v5467, %v2164
        %v5674 = vmul.f32 %v5466, %v2168
        %v5675 = vmul.f32 %v5465, %v2172
        %v5676 = vmul.f32 %v5464, %v2176
        %v5677 = vmul.f32 %v5463, %v2180
        %v5678 = vmul.f32 %v5462, %v2184
        %v5679 = vmul.f32 %v5461, %v2188
        %v5680 = vmul.f32 %v5460, %v2192
        %v5681 = vmul.f32 %v5491, %v2196
        %v5682 = vmul.f32 %v5490, %v2200
        %v5683 = vmul.f32 %v5489, %v2204
        %v5684 = vld [vmem:[%s3] sm:$0xff]
        %v5685 = vld [vmem:[%s3 + $0x8] sm:$0xff]
        %v5686 = vld [vmem:[%s3 + $0x10] sm:$0xff]
        %v5687 = vld [vmem:[%s3 + $0x18] sm:$0xff]
        %v5688 = vld [vmem:[%s3 + $0x20] sm:$0xff]
        %v5689 = vld [vmem:[%s3 + $0x28] sm:$0xff]
        %v5690 = vld [vmem:[%s3 + $0x30] sm:$0xff]
        %v5691 = vld [vmem:[%s3 + $0x38] sm:$0xff]
        %v5692 = vld [vmem:[%s3 + $0x40] sm:$0xff]
        %v5693 = vld [vmem:[%s3 + $0x48] sm:$0xff]
        %v5694 = vld [vmem:[%s3 + $0x50] sm:$0xff]
        %v5695 = vld [vmem:[%s3 + $0x58] sm:$0xff]
        %v5696 = vld [vmem:[%s3 + $0x60] sm:$0xff]
        %v5697 = vld [vmem:[%s3 + $0x68] sm:$0xff]
        %v5698 = vld [vmem:[%s3 + $0x70] sm:$0xff]
        %v5699 = vld [vmem:[%s3 + $0x78] sm:$0xff]
        %v5700 = vld [vmem:[%s3 + $0x80] sm:$0xff]
        %v5701 = vld [vmem:[%s3 + $0x88] sm:$0xff]
        %v5702 = vld [vmem:[%s3 + $0x90] sm:$0xff]
        %v5703 = vld [vmem:[%s3 + $0x98] sm:$0xff]
        %v5704 = vld [vmem:[%s3 + $0xa0] sm:$0xff]
        %v5705 = vld [vmem:[%s3 + $0xa8] sm:$0xff]
        %v5706 = vld [vmem:[%s3 + $0xb0] sm:$0xff]
        %v5707 = vld [vmem:[%s3 + $0xb8] sm:$0xff]
        %v5708 = vld [vmem:[%s3 + $0xc0] sm:$0xff]
        %v5709 = vld [vmem:[%s3 + $0xc8] sm:$0xff]
        %v5710 = vld [vmem:[%s3 + $0xd0] sm:$0xff]
        %v5711 = vld [vmem:[%s3 + $0xd8] sm:$0xff]
        %v5712 = vld [vmem:[%s3 + $0xe0] sm:$0xff]
        %v5713 = vld [vmem:[%s3 + $0xe8] sm:$0xff]
        %v5714 = vld [vmem:[%s3 + $0xf0] sm:$0xff]
        %v5715 = vld [vmem:[%s3 + $0xf8] sm:$0xff]
        %v5716 = vld [vmem:[%s3 + $0x100] sm:$0xff]
        %v5717 = vld [vmem:[%s3 + $0x108] sm:$0xff]
        %v5718 = vld [vmem:[%s3 + $0x110] sm:$0xff]
        %v5719 = vld [vmem:[%s3 + $0x118] sm:$0xff]
        %v5720 = vld [vmem:[%s3 + $0x120] sm:$0xff]
        %v5721 = vld [vmem:[%s3 + $0x128] sm:$0xff]
        %v5722 = vld [vmem:[%s3 + $0x130] sm:$0xff]
        %v5723 = vld [vmem:[%s3 + $0x138] sm:$0xff]
        %v5724 = vld [vmem:[%s3 + $0x140] sm:$0xff]
        %v5725 = vld [vmem:[%s3 + $0x148] sm:$0xff]
        %v5726 = vld [vmem:[%s3 + $0x150] sm:$0xff]
        %v5727 = vld [vmem:[%s3 + $0x158] sm:$0xff]
        %v5728 = vld [vmem:[%s3 + $0x160] sm:$0xff]
        %v5729 = vld [vmem:[%s3 + $0x168] sm:$0xff]
        %v5730 = vld [vmem:[%s3 + $0x170] sm:$0xff]
        %v5731 = vld [vmem:[%s3 + $0x178] sm:$0xff]
        %v5732 = vld [vmem:[%s3 + $0x180] sm:$0xff]
        %v5733 = vld [vmem:[%s3 + $0x188] sm:$0xff]
        %v5734 = vld [vmem:[%s3 + $0x190] sm:$0xff]
        %v5735 = vld [vmem:[%s3 + $0x198] sm:$0xff]
        %v5736 = vld [vmem:[%s3 + $0x1a0] sm:$0xff]
        %v5737 = vld [vmem:[%s3 + $0x1a8] sm:$0xff]
        %v5738 = vld [vmem:[%s3 + $0x1b0] sm:$0xff]
        %v5739 = vld [vmem:[%s3 + $0x1b8] sm:$0xff]
        %v5740 = vld [vmem:[%s3 + $0x1c0] sm:$0xff]
        %v5741 = vld [vmem:[%s3 + $0x1c8] sm:$0xff]
        %v5742 = vld [vmem:[%s3 + $0x1d0] sm:$0xff]
        %v5743 = vld [vmem:[%s3 + $0x1d8] sm:$0xff]
        %v5744 = vld [vmem:[%s3 + $0x1e0] sm:$0xff]
        %v5745 = vld [vmem:[%s3 + $0x1e8] sm:$0xff]
        %v5746 = vld [vmem:[%s3 + $0x1f0] sm:$0xff]
        %v5747 = vld [vmem:[%s3 + $0x1f8] sm:$0xff]
        %v5748 = vld [vmem:[%s3 + $0x200] sm:$0xff]
        %v5749 = vld [vmem:[%s3 + $0x208] sm:$0xff]
        %v5750 = vld [vmem:[%s3 + $0x210] sm:$0xff]
        %v5751 = vld [vmem:[%s3 + $0x218] sm:$0xff]
        %v5752 = vld [vmem:[%s3 + $0x220] sm:$0xff]
        %v5753 = vld [vmem:[%s3 + $0x228] sm:$0xff]
        %v5754 = vld [vmem:[%s3 + $0x230] sm:$0xff]
        %v5755 = vld [vmem:[%s3 + $0x238] sm:$0xff]
        %v5756 = vld [vmem:[%s3 + $0x240] sm:$0xff]
        %v5757 = vld [vmem:[%s3 + $0x248] sm:$0xff]
        %v5758 = vld [vmem:[%s3 + $0x250] sm:$0xff]
        %v5759 = vld [vmem:[%s3 + $0x258] sm:$0xff]
        %v5760 = vld [vmem:[%s3 + $0x260] sm:$0xff]
        %v5761 = vld [vmem:[%s3 + $0x268] sm:$0xff]
        %v5762 = vld [vmem:[%s3 + $0x270] sm:$0xff]
        %v5763 = vld [vmem:[%s3 + $0x278] sm:$0xff]
        %v5764 = vld [vmem:[%s3 + $0x280] sm:$0xff]
        %v5765 = vld [vmem:[%s3 + $0x288] sm:$0xff]
        %v5766 = vld [vmem:[%s3 + $0x290] sm:$0xff]
        %v5767 = vld [vmem:[%s3 + $0x298] sm:$0xff]
        %v5768 = vld [vmem:[%s3 + $0x2a0] sm:$0xff]
        %v5769 = vld [vmem:[%s3 + $0x2a8] sm:$0xff]
        %v5770 = vld [vmem:[%s3 + $0x2b0] sm:$0xff]
        %v5771 = vld [vmem:[%s3 + $0x2b8] sm:$0xff]
        %v5772 = vld [vmem:[%s3 + $0x2c0] sm:$0xff]
        %v5773 = vld [vmem:[%s3 + $0x2c8] sm:$0xff]
        %v5774 = vld [vmem:[%s3 + $0x2d0] sm:$0xff]
        %v5775 = vld [vmem:[%s3 + $0x2d8] sm:$0xff]
        %v5776 = vld [vmem:[%s3 + $0x2e0] sm:$0xff]
        %v5777 = vld [vmem:[%s3 + $0x2e8] sm:$0xff]
        %v5778 = vld [vmem:[%s3 + $0x2f0] sm:$0xff]
        %v5779 = vld [vmem:[%s3 + $0x2f8] sm:$0xff]
        %v5780 = vld [vmem:[%s3 + $0x300] sm:$0xff]
        %v5781 = vld [vmem:[%s3 + $0x308] sm:$0xff]
        %v5782 = vld [vmem:[%s3 + $0x310] sm:$0xff]
        %v5783 = vld [vmem:[%s3 + $0x318] sm:$0xff]
        %v5784 = vld [vmem:[%s3 + $0x320] sm:$0xff]
        %v5785 = vld [vmem:[%s3 + $0x328] sm:$0xff]
        %v5786 = vld [vmem:[%s3 + $0x330] sm:$0xff]
        %v5787 = vld [vmem:[%s3 + $0x338] sm:$0xff]
        %v5788 = vld [vmem:[%s3 + $0x340] sm:$0xff]
        %v5789 = vld [vmem:[%s3 + $0x348] sm:$0xff]
        %v5790 = vld [vmem:[%s3 + $0x350] sm:$0xff]
        %v5791 = vld [vmem:[%s3 + $0x358] sm:$0xff]
        %v5792 = vld [vmem:[%s3 + $0x360] sm:$0xff]
        %v5793 = vld [vmem:[%s3 + $0x368] sm:$0xff]
        %v5794 = vld [vmem:[%s3 + $0x370] sm:$0xff]
        %v5795 = vld [vmem:[%s3 + $0x378] sm:$0xff]
        %v5796 = vld [vmem:[%s3 + $0x380] sm:$0xff]
        %v5797 = vld [vmem:[%s3 + $0x388] sm:$0xff]
        %v5798 = vld [vmem:[%s3 + $0x390] sm:$0xff]
        %v5799 = vld [vmem:[%s3 + $0x398] sm:$0xff]
        %v5800 = vld [vmem:[%s3 + $0x3a0] sm:$0xff]
        %v5801 = vld [vmem:[%s3 + $0x3a8] sm:$0xff]
        %v5802 = vld [vmem:[%s3 + $0x3b0] sm:$0xff]
        %v5803 = vld [vmem:[%s3 + $0x3b8] sm:$0xff]
        %v5804 = vld [vmem:[%s3 + $0x3c0] sm:$0xff]
        %v5805 = vld [vmem:[%s3 + $0x3c8] sm:$0xff]
        %v5806 = vld [vmem:[%s3 + $0x3d0] sm:$0xff]
        %v5807 = vld [vmem:[%s3 + $0x3d8] sm:$0xff]
        %v5808 = vld [vmem:[%s3 + $0x3e0] sm:$0xff]
        %v5809 = vld [vmem:[%s3 + $0x3e8] sm:$0xff]
        %v5810 = vld [vmem:[%s3 + $0x3f0] sm:$0xff]
        %v5811 = vld [vmem:[%s3 + $0x3f8] sm:$0xff]
        %v5812 = vld [vmem:[%s3 + $0x400] sm:$0xff]
        %v5813 = vld [vmem:[%s3 + $0x408] sm:$0xff]
        %v5814 = vld [vmem:[%s3 + $0x410] sm:$0xff]
        %v5815 = vld [vmem:[%s3 + $0x418] sm:$0xff]
        %v5816 = vld [vmem:[%s3 + $0x420] sm:$0xff]
        %v5817 = vld [vmem:[%s3 + $0x428] sm:$0xff]
        %v5818 = vld [vmem:[%s3 + $0x430] sm:$0xff]
        %v5819 = vld [vmem:[%s3 + $0x438] sm:$0xff]
        %v5820 = vld [vmem:[%s3 + $0x440] sm:$0xff]
        %v5821 = vld [vmem:[%s3 + $0x448] sm:$0xff]
        %v5822 = vld [vmem:[%s3 + $0x450] sm:$0xff]
        %v5823 = vld [vmem:[%s3 + $0x458] sm:$0xff]
        %v5824 = vld [vmem:[%s3 + $0x460] sm:$0xff]
        %v5825 = vld [vmem:[%s3 + $0x468] sm:$0xff]
        %v5826 = vld [vmem:[%s3 + $0x470] sm:$0xff]
        %v5827 = vld [vmem:[%s3 + $0x478] sm:$0xff]
        %5828 = vmatpush.msra.mxu0 %v5699
        %5829 = vmatpush.msra.mxu0 %v5698
        %5830 = vmatpush.msra.mxu0 %v5697
        %5831 = vmatpush.msra.mxu0 %v5696
        %5832 = vmatpush.msra.mxu0 %v5695
        %5833 = vmatpush.msra.mxu0 %v5694
        %5834 = vmatpush.msra.mxu0 %v5693
        %5835 = vmatpush.msra.mxu0 %v5692
        %5836 = vmatpush.msra.mxu0 %v5691
        %5837 = vmatpush.msra.mxu0 %v5690
        %5838 = vmatpush.msra.mxu0 %v5689
        %5839 = vmatpush.msra.mxu0 %v5688
        %5840 = vmatpush.msra.mxu0 %v5687
        %5841 = vmatpush.msra.mxu0 %v5686
        %5842 = vmatpush.msra.mxu0 %v5685
        %5843 = vmatpush.msra.mxu0 %v5684
        %5844 = vmatmul.f32.gmra.mxu0 %v5364
        %v5845 = vpop.f32.mrf.mxu0
        %v5846 = vadd.f32 0.0, %v5845
        %5847 = vmatmul.f32.gmra.mxu0 %v5365
        %v5848 = vpop.f32.mrf.mxu0
        %v5849 = vadd.f32 0.0, %v5848
        %5850 = vmatmul.f32.gmra.mxu0 %v5366
        %v5851 = vpop.f32.mrf.mxu0
        %v5852 = vadd.f32 0.0, %v5851
        %5853 = vmatmul.f32.gmra.mxu0 %v5367
        %v5854 = vpop.f32.mrf.mxu0
        %v5855 = vadd.f32 0.0, %v5854
        %5856 = vmatmul.f32.gmra.mxu0 %v5368
        %v5857 = vpop.f32.mrf.mxu0
        %v5858 = vadd.f32 0.0, %v5857
        %5859 = vmatmul.f32.gmra.mxu0 %v5369
        %v5860 = vpop.f32.mrf.mxu0
        %v5861 = vadd.f32 0.0, %v5860
        %5862 = vmatmul.f32.gmra.mxu0 %v5370
        %v5863 = vpop.f32.mrf.mxu0
        %v5864 = vadd.f32 0.0, %v5863
        %5865 = vmatmul.f32.gmra.mxu0 %v5371
        %v5866 = vpop.f32.mrf.mxu0
        %v5867 = vadd.f32 0.0, %v5866
        %5868 = vmatmul.f32.gmra.mxu0 %v5372
        %v5869 = vpop.f32.mrf.mxu0
        %v5870 = vadd.f32 0.0, %v5869
        %5871 = vmatmul.f32.gmra.mxu0 %v5373
        %v5872 = vpop.f32.mrf.mxu0
        %v5873 = vadd.f32 0.0, %v5872
        %5874 = vmatmul.f32.gmra.mxu0 %v5374
        %v5875 = vpop.f32.mrf.mxu0
        %v5876 = vadd.f32 0.0, %v5875
        %5877 = vmatmul.f32.gmra.mxu0 %v5375
        %v5878 = vpop.f32.mrf.mxu0
        %v5879 = vadd.f32 0.0, %v5878
        %5880 = vmatmul.f32.gmra.mxu0 %v5376
        %v5881 = vpop.f32.mrf.mxu0
        %v5882 = vadd.f32 0.0, %v5881
        %5883 = vmatmul.f32.gmra.mxu0 %v5377
        %v5884 = vpop.f32.mrf.mxu0
        %v5885 = vadd.f32 0.0, %v5884
        %5886 = vmatmul.f32.gmra.mxu0 %v5378
        %v5887 = vpop.f32.mrf.mxu0
        %v5888 = vadd.f32 0.0, %v5887
        %5889 = vmatmul.f32.gmra.mxu0 %v5379
        %v5890 = vpop.f32.mrf.mxu0
        %v5891 = vadd.f32 0.0, %v5890
        %5892 = vmatmul.f32.gmra.mxu0 %v5380
        %v5893 = vpop.f32.mrf.mxu0
        %v5894 = vadd.f32 0.0, %v5893
        %5895 = vmatmul.f32.gmra.mxu0 %v5381
        %v5896 = vpop.f32.mrf.mxu0
        %v5897 = vadd.f32 0.0, %v5896
        %5898 = vmatmul.f32.gmra.mxu0 %v5382
        %v5899 = vpop.f32.mrf.mxu0
        %v5900 = vadd.f32 0.0, %v5899
        %5901 = vmatmul.f32.gmra.mxu0 %v5383
        %v5902 = vpop.f32.mrf.mxu0
        %v5903 = vadd.f32 0.0, %v5902
        %5904 = vmatmul.f32.gmra.mxu0 %v5384
        %v5905 = vpop.f32.mrf.mxu0
        %v5906 = vadd.f32 0.0, %v5905
        %5907 = vmatmul.f32.gmra.mxu0 %v5385
        %v5908 = vpop.f32.mrf.mxu0
        %v5909 = vadd.f32 0.0, %v5908
        %5910 = vmatmul.f32.gmra.mxu0 %v5386
        %v5911 = vpop.f32.mrf.mxu0
        %v5912 = vadd.f32 0.0, %v5911
        %5913 = vmatmul.f32.gmra.mxu0 %v5387
        %v5914 = vpop.f32.mrf.mxu0
        %v5915 = vadd.f32 0.0, %v5914
        %5916 = vmatmul.f32.gmra.mxu0 %v5388
        %v5917 = vpop.f32.mrf.mxu0
        %v5918 = vadd.f32 0.0, %v5917
        %5919 = vmatmul.f32.gmra.mxu0 %v5389
        %v5920 = vpop.f32.mrf.mxu0
        %v5921 = vadd.f32 0.0, %v5920
        %5922 = vmatmul.f32.gmra.mxu0 %v5390
        %v5923 = vpop.f32.mrf.mxu0
        %v5924 = vadd.f32 0.0, %v5923
        %5925 = vmatmul.f32.gmra.mxu0 %v5391
        %v5926 = vpop.f32.mrf.mxu0
        %v5927 = vadd.f32 0.0, %v5926
        %5928 = vmatmul.f32.gmra.mxu0 %v5392
        %v5929 = vpop.f32.mrf.mxu0
        %v5930 = vadd.f32 0.0, %v5929
        %5931 = vmatmul.f32.gmra.mxu0 %v5393
        %v5932 = vpop.f32.mrf.mxu0
        %v5933 = vadd.f32 0.0, %v5932
        %5934 = vmatmul.f32.gmra.mxu0 %v5394
        %v5935 = vpop.f32.mrf.mxu0
        %v5936 = vadd.f32 0.0, %v5935
        %5937 = vmatmul.f32.gmra.mxu0 %v5395
        %v5938 = vpop.f32.mrf.mxu0
        %v5939 = vadd.f32 0.0, %v5938
        %5940 = vdwg.mxu0
        %5941 = vmatpush.msra.mxu0 %v5715
        %5942 = vmatpush.msra.mxu0 %v5714
        %5943 = vmatpush.msra.mxu0 %v5713
        %5944 = vmatpush.msra.mxu0 %v5712
        %5945 = vmatpush.msra.mxu0 %v5711
        %5946 = vmatpush.msra.mxu0 %v5710
        %5947 = vmatpush.msra.mxu0 %v5709
        %5948 = vmatpush.msra.mxu0 %v5708
        %5949 = vmatpush.msra.mxu0 %v5707
        %5950 = vmatpush.msra.mxu0 %v5706
        %5951 = vmatpush.msra.mxu0 %v5705
        %5952 = vmatpush.msra.mxu0 %v5704
        %5953 = vmatpush.msra.mxu0 %v5703
        %5954 = vmatpush.msra.mxu0 %v5702
        %5955 = vmatpush.msra.mxu0 %v5701
        %5956 = vmatpush.msra.mxu0 %v5700
        %5957 = vmatmul.f32.gmra.mxu0 %v5396
        %v5958 = vpop.f32.mrf.mxu0
        %v5959 = vadd.f32 %v5846, %v5958
        %5960 = vmatmul.f32.gmra.mxu0 %v5397
        %v5961 = vpop.f32.mrf.mxu0
        %v5962 = vadd.f32 %v5849, %v5961
        %5963 = vmatmul.f32.gmra.mxu0 %v5398
        %v5964 = vpop.f32.mrf.mxu0
        %v5965 = vadd.f32 %v5852, %v5964
        %5966 = vmatmul.f32.gmra.mxu0 %v5399
        %v5967 = vpop.f32.mrf.mxu0
        %v5968 = vadd.f32 %v5855, %v5967
        %5969 = vmatmul.f32.gmra.mxu0 %v5400
        %v5970 = vpop.f32.mrf.mxu0
        %v5971 = vadd.f32 %v5858, %v5970
        %5972 = vmatmul.f32.gmra.mxu0 %v5401
        %v5973 = vpop.f32.mrf.mxu0
        %v5974 = vadd.f32 %v5861, %v5973
        %5975 = vmatmul.f32.gmra.mxu0 %v5402
        %v5976 = vpop.f32.mrf.mxu0
        %v5977 = vadd.f32 %v5864, %v5976
        %5978 = vmatmul.f32.gmra.mxu0 %v5403
        %v5979 = vpop.f32.mrf.mxu0
        %v5980 = vadd.f32 %v5867, %v5979
        %5981 = vmatmul.f32.gmra.mxu0 %v5404
        %v5982 = vpop.f32.mrf.mxu0
        %v5983 = vadd.f32 %v5870, %v5982
        %5984 = vmatmul.f32.gmra.mxu0 %v5405
        %v5985 = vpop.f32.mrf.mxu0
        %v5986 = vadd.f32 %v5873, %v5985
        %5987 = vmatmul.f32.gmra.mxu0 %v5406
        %v5988 = vpop.f32.mrf.mxu0
        %v5989 = vadd.f32 %v5876, %v5988
        %5990 = vmatmul.f32.gmra.mxu0 %v5407
        %v5991 = vpop.f32.mrf.mxu0
        %v5992 = vadd.f32 %v5879, %v5991
        %5993 = vmatmul.f32.gmra.mxu0 %v5408
        %v5994 = vpop.f32.mrf.mxu0
        %v5995 = vadd.f32 %v5882, %v5994
        %5996 = vmatmul.f32.gmra.mxu0 %v5409
        %v5997 = vpop.f32.mrf.mxu0
        %v5998 = vadd.f32 %v5885, %v5997
        %5999 = vmatmul.f32.gmra.mxu0 %v5410
        %v6000 = vpop.f32.mrf.mxu0
        %v6001 = vadd.f32 %v5888, %v6000
        %6002 = vmatmul.f32.gmra.mxu0 %v5411
        %v6003 = vpop.f32.mrf.mxu0
        %v6004 = vadd.f32 %v5891, %v6003
        %6005 = vmatmul.f32.gmra.mxu0 %v5412
        %v6006 = vpop.f32.mrf.mxu0
        %v6007 = vadd.f32 %v5894, %v6006
        %6008 = vmatmul.f32.gmra.mxu0 %v5413
        %v6009 = vpop.f32.mrf.mxu0
        %v6010 = vadd.f32 %v5897, %v6009
        %6011 = vmatmul.f32.gmra.mxu0 %v5414
        %v6012 = vpop.f32.mrf.mxu0
        %v6013 = vadd.f32 %v5900, %v6012
        %6014 = vmatmul.f32.gmra.mxu0 %v5415
        %v6015 = vpop.f32.mrf.mxu0
        %v6016 = vadd.f32 %v5903, %v6015
        %6017 = vmatmul.f32.gmra.mxu0 %v5416
        %v6018 = vpop.f32.mrf.mxu0
        %v6019 = vadd.f32 %v5906, %v6018
        %6020 = vmatmul.f32.gmra.mxu0 %v5417
        %v6021 = vpop.f32.mrf.mxu0
        %v6022 = vadd.f32 %v5909, %v6021
        %6023 = vmatmul.f32.gmra.mxu0 %v5418
        %v6024 = vpop.f32.mrf.mxu0
        %v6025 = vadd.f32 %v5912, %v6024
        %6026 = vmatmul.f32.gmra.mxu0 %v5419
        %v6027 = vpop.f32.mrf.mxu0
        %v6028 = vadd.f32 %v5915, %v6027
        %6029 = vmatmul.f32.gmra.mxu0 %v5420
        %v6030 = vpop.f32.mrf.mxu0
        %v6031 = vadd.f32 %v5918, %v6030
        %6032 = vmatmul.f32.gmra.mxu0 %v5421
        %v6033 = vpop.f32.mrf.mxu0
        %v6034 = vadd.f32 %v5921, %v6033
        %6035 = vmatmul.f32.gmra.mxu0 %v5422
        %v6036 = vpop.f32.mrf.mxu0
        %v6037 = vadd.f32 %v5924, %v6036
        %6038 = vmatmul.f32.gmra.mxu0 %v5423
        %v6039 = vpop.f32.mrf.mxu0
        %v6040 = vadd.f32 %v5927, %v6039
        %6041 = vmatmul.f32.gmra.mxu0 %v5424
        %v6042 = vpop.f32.mrf.mxu0
        %v6043 = vadd.f32 %v5930, %v6042
        %6044 = vmatmul.f32.gmra.mxu0 %v5425
        %v6045 = vpop.f32.mrf.mxu0
        %v6046 = vadd.f32 %v5933, %v6045
        %6047 = vmatmul.f32.gmra.mxu0 %v5426
        %v6048 = vpop.f32.mrf.mxu0
        %v6049 = vadd.f32 %v5936, %v6048
        %6050 = vmatmul.f32.gmra.mxu0 %v5427
        %v6051 = vpop.f32.mrf.mxu0
        %v6052 = vadd.f32 %v5939, %v6051
        %6053 = vdwg.mxu0
        %6054 = vmatpush.msra.mxu0 %v5731
        %6055 = vmatpush.msra.mxu0 %v5730
        %6056 = vmatpush.msra.mxu0 %v5729
        %6057 = vmatpush.msra.mxu0 %v5728
        %6058 = vmatpush.msra.mxu0 %v5727
        %6059 = vmatpush.msra.mxu0 %v5726
        %6060 = vmatpush.msra.mxu0 %v5725
        %6061 = vmatpush.msra.mxu0 %v5724
        %6062 = vmatpush.msra.mxu0 %v5723
        %6063 = vmatpush.msra.mxu0 %v5722
        %6064 = vmatpush.msra.mxu0 %v5721
        %6065 = vmatpush.msra.mxu0 %v5720
        %6066 = vmatpush.msra.mxu0 %v5719
        %6067 = vmatpush.msra.mxu0 %v5718
        %6068 = vmatpush.msra.mxu0 %v5717
        %6069 = vmatpush.msra.mxu0 %v5716
        %6070 = vmatmul.f32.gmra.mxu0 %v5492
        %v6071 = vpop.f32.mrf.mxu0
        %v6072 = vadd.f32 %v5959, %v6071
        %6073 = vmatmul.f32.gmra.mxu0 %v5493
        %v6074 = vpop.f32.mrf.mxu0
        %v6075 = vadd.f32 %v5962, %v6074
        %6076 = vmatmul.f32.gmra.mxu0 %v5494
        %v6077 = vpop.f32.mrf.mxu0
        %v6078 = vadd.f32 %v5965, %v6077
        %6079 = vmatmul.f32.gmra.mxu0 %v5495
        %v6080 = vpop.f32.mrf.mxu0
        %v6081 = vadd.f32 %v5968, %v6080
        %6082 = vmatmul.f32.gmra.mxu0 %v5496
        %v6083 = vpop.f32.mrf.mxu0
        %v6084 = vadd.f32 %v5971, %v6083
        %6085 = vmatmul.f32.gmra.mxu0 %v5497
        %v6086 = vpop.f32.mrf.mxu0
        %v6087 = vadd.f32 %v5974, %v6086
        %6088 = vmatmul.f32.gmra.mxu0 %v5498
        %v6089 = vpop.f32.mrf.mxu0
        %v6090 = vadd.f32 %v5977, %v6089
        %6091 = vmatmul.f32.gmra.mxu0 %v5499
        %v6092 = vpop.f32.mrf.mxu0
        %v6093 = vadd.f32 %v5980, %v6092
        %6094 = vmatmul.f32.gmra.mxu0 %v5500
        %v6095 = vpop.f32.mrf.mxu0
        %v6096 = vadd.f32 %v5983, %v6095
        %6097 = vmatmul.f32.gmra.mxu0 %v5501
        %v6098 = vpop.f32.mrf.mxu0
        %v6099 = vadd.f32 %v5986, %v6098
        %6100 = vmatmul.f32.gmra.mxu0 %v5502
        %v6101 = vpop.f32.mrf.mxu0
        %v6102 = vadd.f32 %v5989, %v6101
        %6103 = vmatmul.f32.gmra.mxu0 %v5503
        %v6104 = vpop.f32.mrf.mxu0
        %v6105 = vadd.f32 %v5992, %v6104
        %6106 = vmatmul.f32.gmra.mxu0 %v5504
        %v6107 = vpop.f32.mrf.mxu0
        %v6108 = vadd.f32 %v5995, %v6107
        %6109 = vmatmul.f32.gmra.mxu0 %v5505
        %v6110 = vpop.f32.mrf.mxu0
        %v6111 = vadd.f32 %v5998, %v6110
        %6112 = vmatmul.f32.gmra.mxu0 %v5506
        %v6113 = vpop.f32.mrf.mxu0
        %v6114 = vadd.f32 %v6001, %v6113
        %6115 = vmatmul.f32.gmra.mxu0 %v5507
        %v6116 = vpop.f32.mrf.mxu0
        %v6117 = vadd.f32 %v6004, %v6116
        %6118 = vmatmul.f32.gmra.mxu0 %v5508
        %v6119 = vpop.f32.mrf.mxu0
        %v6120 = vadd.f32 %v6007, %v6119
        %6121 = vmatmul.f32.gmra.mxu0 %v5509
        %v6122 = vpop.f32.mrf.mxu0
        %v6123 = vadd.f32 %v6010, %v6122
        %6124 = vmatmul.f32.gmra.mxu0 %v5510
        %v6125 = vpop.f32.mrf.mxu0
        %v6126 = vadd.f32 %v6013, %v6125
        %6127 = vmatmul.f32.gmra.mxu0 %v5511
        %v6128 = vpop.f32.mrf.mxu0
        %v6129 = vadd.f32 %v6016, %v6128
        %6130 = vmatmul.f32.gmra.mxu0 %v5512
        %v6131 = vpop.f32.mrf.mxu0
        %v6132 = vadd.f32 %v6019, %v6131
        %6133 = vmatmul.f32.gmra.mxu0 %v5513
        %v6134 = vpop.f32.mrf.mxu0
        %v6135 = vadd.f32 %v6022, %v6134
        %6136 = vmatmul.f32.gmra.mxu0 %v5514
        %v6137 = vpop.f32.mrf.mxu0
        %v6138 = vadd.f32 %v6025, %v6137
        %6139 = vmatmul.f32.gmra.mxu0 %v5515
        %v6140 = vpop.f32.mrf.mxu0
        %v6141 = vadd.f32 %v6028, %v6140
        %6142 = vmatmul.f32.gmra.mxu0 %v5516
        %v6143 = vpop.f32.mrf.mxu0
        %v6144 = vadd.f32 %v6031, %v6143
        %6145 = vmatmul.f32.gmra.mxu0 %v5517
        %v6146 = vpop.f32.mrf.mxu0
        %v6147 = vadd.f32 %v6034, %v6146
        %6148 = vmatmul.f32.gmra.mxu0 %v5518
        %v6149 = vpop.f32.mrf.mxu0
        %v6150 = vadd.f32 %v6037, %v6149
        %6151 = vmatmul.f32.gmra.mxu0 %v5519
        %v6152 = vpop.f32.mrf.mxu0
        %v6153 = vadd.f32 %v6040, %v6152
        %6154 = vmatmul.f32.gmra.mxu0 %v5520
        %v6155 = vpop.f32.mrf.mxu0
        %v6156 = vadd.f32 %v6043, %v6155
        %6157 = vmatmul.f32.gmra.mxu0 %v5521
        %v6158 = vpop.f32.mrf.mxu0
        %v6159 = vadd.f32 %v6046, %v6158
        %6160 = vmatmul.f32.gmra.mxu0 %v5522
        %v6161 = vpop.f32.mrf.mxu0
        %v6162 = vadd.f32 %v6049, %v6161
        %6163 = vmatmul.f32.gmra.mxu0 %v5523
        %v6164 = vpop.f32.mrf.mxu0
        %v6165 = vadd.f32 %v6052, %v6164
        %6166 = vdwg.mxu0
        %6167 = vmatpush.msra.mxu0 %v5747
        %6168 = vmatpush.msra.mxu0 %v5746
        %6169 = vmatpush.msra.mxu0 %v5745
        %6170 = vmatpush.msra.mxu0 %v5744
        %6171 = vmatpush.msra.mxu0 %v5743
        %6172 = vmatpush.msra.mxu0 %v5742
        %6173 = vmatpush.msra.mxu0 %v5741
        %6174 = vmatpush.msra.mxu0 %v5740
        %6175 = vmatpush.msra.mxu0 %v5739
        %6176 = vmatpush.msra.mxu0 %v5738
        %6177 = vmatpush.msra.mxu0 %v5737
        %6178 = vmatpush.msra.mxu0 %v5736
        %6179 = vmatpush.msra.mxu0 %v5735
        %6180 = vmatpush.msra.mxu0 %v5734
        %6181 = vmatpush.msra.mxu0 %v5733
        %6182 = vmatpush.msra.mxu0 %v5732
        %6183 = vmatmul.f32.gmra.mxu0 %v5524
        %v6184 = vpop.f32.mrf.mxu0
        %v6185 = vadd.f32 %v6072, %v6184
        %6186 = vmatmul.f32.gmra.mxu0 %v5525
        %v6187 = vpop.f32.mrf.mxu0
        %v6188 = vadd.f32 %v6075, %v6187
        %6189 = vmatmul.f32.gmra.mxu0 %v5526
        %v6190 = vpop.f32.mrf.mxu0
        %v6191 = vadd.f32 %v6078, %v6190
        %6192 = vmatmul.f32.gmra.mxu0 %v5527
        %v6193 = vpop.f32.mrf.mxu0
        %v6194 = vadd.f32 %v6081, %v6193
        %6195 = vmatmul.f32.gmra.mxu0 %v5528
        %v6196 = vpop.f32.mrf.mxu0
        %v6197 = vadd.f32 %v6084, %v6196
        %6198 = vmatmul.f32.gmra.mxu0 %v5529
        %v6199 = vpop.f32.mrf.mxu0
        %v6200 = vadd.f32 %v6087, %v6199
        %6201 = vmatmul.f32.gmra.mxu0 %v5530
        %v6202 = vpop.f32.mrf.mxu0
        %v6203 = vadd.f32 %v6090, %v6202
        %6204 = vmatmul.f32.gmra.mxu0 %v5531
        %v6205 = vpop.f32.mrf.mxu0
        %v6206 = vadd.f32 %v6093, %v6205
        %6207 = vmatmul.f32.gmra.mxu0 %v5532
        %v6208 = vpop.f32.mrf.mxu0
        %v6209 = vadd.f32 %v6096, %v6208
        %6210 = vmatmul.f32.gmra.mxu0 %v5533
        %v6211 = vpop.f32.mrf.mxu0
        %v6212 = vadd.f32 %v6099, %v6211
        %6213 = vmatmul.f32.gmra.mxu0 %v5534
        %v6214 = vpop.f32.mrf.mxu0
        %v6215 = vadd.f32 %v6102, %v6214
        %6216 = vmatmul.f32.gmra.mxu0 %v5535
        %v6217 = vpop.f32.mrf.mxu0
        %v6218 = vadd.f32 %v6105, %v6217
        %6219 = vmatmul.f32.gmra.mxu0 %v5536
        %v6220 = vpop.f32.mrf.mxu0
        %v6221 = vadd.f32 %v6108, %v6220
        %6222 = vmatmul.f32.gmra.mxu0 %v5537
        %v6223 = vpop.f32.mrf.mxu0
        %v6224 = vadd.f32 %v6111, %v6223
        %6225 = vmatmul.f32.gmra.mxu0 %v5538
        %v6226 = vpop.f32.mrf.mxu0
        %v6227 = vadd.f32 %v6114, %v6226
        %6228 = vmatmul.f32.gmra.mxu0 %v5539
        %v6229 = vpop.f32.mrf.mxu0
        %v6230 = vadd.f32 %v6117, %v6229
        %6231 = vmatmul.f32.gmra.mxu0 %v5540
        %v6232 = vpop.f32.mrf.mxu0
        %v6233 = vadd.f32 %v6120, %v6232
        %6234 = vmatmul.f32.gmra.mxu0 %v5541
        %v6235 = vpop.f32.mrf.mxu0
        %v6236 = vadd.f32 %v6123, %v6235
        %6237 = vmatmul.f32.gmra.mxu0 %v5542
        %v6238 = vpop.f32.mrf.mxu0
        %v6239 = vadd.f32 %v6126, %v6238
        %6240 = vmatmul.f32.gmra.mxu0 %v5543
        %v6241 = vpop.f32.mrf.mxu0
        %v6242 = vadd.f32 %v6129, %v6241
        %6243 = vmatmul.f32.gmra.mxu0 %v5544
        %v6244 = vpop.f32.mrf.mxu0
        %v6245 = vadd.f32 %v6132, %v6244
        %6246 = vmatmul.f32.gmra.mxu0 %v5545
        %v6247 = vpop.f32.mrf.mxu0
        %v6248 = vadd.f32 %v6135, %v6247
        %6249 = vmatmul.f32.gmra.mxu0 %v5546
        %v6250 = vpop.f32.mrf.mxu0
        %v6251 = vadd.f32 %v6138, %v6250
        %6252 = vmatmul.f32.gmra.mxu0 %v5547
        %v6253 = vpop.f32.mrf.mxu0
        %v6254 = vadd.f32 %v6141, %v6253
        %6255 = vmatmul.f32.gmra.mxu0 %v5548
        %v6256 = vpop.f32.mrf.mxu0
        %v6257 = vadd.f32 %v6144, %v6256
        %6258 = vmatmul.f32.gmra.mxu0 %v5549
        %v6259 = vpop.f32.mrf.mxu0
        %v6260 = vadd.f32 %v6147, %v6259
        %6261 = vmatmul.f32.gmra.mxu0 %v5550
        %v6262 = vpop.f32.mrf.mxu0
        %v6263 = vadd.f32 %v6150, %v6262
        %6264 = vmatmul.f32.gmra.mxu0 %v5551
        %v6265 = vpop.f32.mrf.mxu0
        %v6266 = vadd.f32 %v6153, %v6265
        %6267 = vmatmul.f32.gmra.mxu0 %v5552
        %v6268 = vpop.f32.mrf.mxu0
        %v6269 = vadd.f32 %v6156, %v6268
        %6270 = vmatmul.f32.gmra.mxu0 %v5553
        %v6271 = vpop.f32.mrf.mxu0
        %v6272 = vadd.f32 %v6159, %v6271
        %6273 = vmatmul.f32.gmra.mxu0 %v5554
        %v6274 = vpop.f32.mrf.mxu0
        %v6275 = vadd.f32 %v6162, %v6274
        %6276 = vmatmul.f32.gmra.mxu0 %v5555
        %v6277 = vpop.f32.mrf.mxu0
        %v6278 = vadd.f32 %v6165, %v6277
        %6279 = vdwg.mxu0
        %6280 = vmatpush.msra.mxu0 %v5763
        %6281 = vmatpush.msra.mxu0 %v5762
        %6282 = vmatpush.msra.mxu0 %v5761
        %6283 = vmatpush.msra.mxu0 %v5760
        %6284 = vmatpush.msra.mxu0 %v5759
        %6285 = vmatpush.msra.mxu0 %v5758
        %6286 = vmatpush.msra.mxu0 %v5757
        %6287 = vmatpush.msra.mxu0 %v5756
        %6288 = vmatpush.msra.mxu0 %v5755
        %6289 = vmatpush.msra.mxu0 %v5754
        %6290 = vmatpush.msra.mxu0 %v5753
        %6291 = vmatpush.msra.mxu0 %v5752
        %6292 = vmatpush.msra.mxu0 %v5751
        %6293 = vmatpush.msra.mxu0 %v5750
        %6294 = vmatpush.msra.mxu0 %v5749
        %6295 = vmatpush.msra.mxu0 %v5748
        %6296 = vmatmul.f32.gmra.mxu0 %v5236
        %v6297 = vpop.f32.mrf.mxu0
        %v6298 = vadd.f32 %v6185, %v6297
        %6299 = vmatmul.f32.gmra.mxu0 %v5237
        %v6300 = vpop.f32.mrf.mxu0
        %v6301 = vadd.f32 %v6188, %v6300
        %6302 = vmatmul.f32.gmra.mxu0 %v5238
        %v6303 = vpop.f32.mrf.mxu0
        %v6304 = vadd.f32 %v6191, %v6303
        %6305 = vmatmul.f32.gmra.mxu0 %v5239
        %v6306 = vpop.f32.mrf.mxu0
        %v6307 = vadd.f32 %v6194, %v6306
        %6308 = vmatmul.f32.gmra.mxu0 %v5240
        %v6309 = vpop.f32.mrf.mxu0
        %v6310 = vadd.f32 %v6197, %v6309
        %6311 = vmatmul.f32.gmra.mxu0 %v5241
        %v6312 = vpop.f32.mrf.mxu0
        %v6313 = vadd.f32 %v6200, %v6312
        %6314 = vmatmul.f32.gmra.mxu0 %v5242
        %v6315 = vpop.f32.mrf.mxu0
        %v6316 = vadd.f32 %v6203, %v6315
        %6317 = vmatmul.f32.gmra.mxu0 %v5243
        %v6318 = vpop.f32.mrf.mxu0
        %v6319 = vadd.f32 %v6206, %v6318
        %6320 = vmatmul.f32.gmra.mxu0 %v5244
        %v6321 = vpop.f32.mrf.mxu0
        %v6322 = vadd.f32 %v6209, %v6321
        %6323 = vmatmul.f32.gmra.mxu0 %v5245
        %v6324 = vpop.f32.mrf.mxu0
        %v6325 = vadd.f32 %v6212, %v6324
        %6326 = vmatmul.f32.gmra.mxu0 %v5246
        %v6327 = vpop.f32.mrf.mxu0
        %v6328 = vadd.f32 %v6215, %v6327
        %6329 = vmatmul.f32.gmra.mxu0 %v5247
        %v6330 = vpop.f32.mrf.mxu0
        %v6331 = vadd.f32 %v6218, %v6330
        %6332 = vmatmul.f32.gmra.mxu0 %v5248
        %v6333 = vpop.f32.mrf.mxu0
        %v6334 = vadd.f32 %v6221, %v6333
        %6335 = vmatmul.f32.gmra.mxu0 %v5249
        %v6336 = vpop.f32.mrf.mxu0
        %v6337 = vadd.f32 %v6224, %v6336
        %6338 = vmatmul.f32.gmra.mxu0 %v5250
        %v6339 = vpop.f32.mrf.mxu0
        %v6340 = vadd.f32 %v6227, %v6339
        %6341 = vmatmul.f32.gmra.mxu0 %v5251
        %v6342 = vpop.f32.mrf.mxu0
        %v6343 = vadd.f32 %v6230, %v6342
        %6344 = vmatmul.f32.gmra.mxu0 %v5252
        %v6345 = vpop.f32.mrf.mxu0
        %v6346 = vadd.f32 %v6233, %v6345
        %6347 = vmatmul.f32.gmra.mxu0 %v5253
        %v6348 = vpop.f32.mrf.mxu0
        %v6349 = vadd.f32 %v6236, %v6348
        %6350 = vmatmul.f32.gmra.mxu0 %v5254
        %v6351 = vpop.f32.mrf.mxu0
        %v6352 = vadd.f32 %v6239, %v6351
        %6353 = vmatmul.f32.gmra.mxu0 %v5255
        %v6354 = vpop.f32.mrf.mxu0
        %v6355 = vadd.f32 %v6242, %v6354
        %6356 = vmatmul.f32.gmra.mxu0 %v5256
        %v6357 = vpop.f32.mrf.mxu0
        %v6358 = vadd.f32 %v6245, %v6357
        %6359 = vmatmul.f32.gmra.mxu0 %v5257
        %v6360 = vpop.f32.mrf.mxu0
        %v6361 = vadd.f32 %v6248, %v6360
        %6362 = vmatmul.f32.gmra.mxu0 %v5258
        %v6363 = vpop.f32.mrf.mxu0
        %v6364 = vadd.f32 %v6251, %v6363
        %6365 = vmatmul.f32.gmra.mxu0 %v5259
        %v6366 = vpop.f32.mrf.mxu0
        %v6367 = vadd.f32 %v6254, %v6366
        %6368 = vmatmul.f32.gmra.mxu0 %v5260
        %v6369 = vpop.f32.mrf.mxu0
        %v6370 = vadd.f32 %v6257, %v6369
        %6371 = vmatmul.f32.gmra.mxu0 %v5261
        %v6372 = vpop.f32.mrf.mxu0
        %v6373 = vadd.f32 %v6260, %v6372
        %6374 = vmatmul.f32.gmra.mxu0 %v5262
        %v6375 = vpop.f32.mrf.mxu0
        %v6376 = vadd.f32 %v6263, %v6375
        %6377 = vmatmul.f32.gmra.mxu0 %v5263
        %v6378 = vpop.f32.mrf.mxu0
        %v6379 = vadd.f32 %v6266, %v6378
        %6380 = vmatmul.f32.gmra.mxu0 %v5264
        %v6381 = vpop.f32.mrf.mxu0
        %v6382 = vadd.f32 %v6269, %v6381
        %6383 = vmatmul.f32.gmra.mxu0 %v5265
        %v6384 = vpop.f32.mrf.mxu0
        %v6385 = vadd.f32 %v6272, %v6384
        %6386 = vmatmul.f32.gmra.mxu0 %v5266
        %v6387 = vpop.f32.mrf.mxu0
        %v6388 = vadd.f32 %v6275, %v6387
        %6389 = vmatmul.f32.gmra.mxu0 %v5267
        %v6390 = vpop.f32.mrf.mxu0
        %v6391 = vadd.f32 %v6278, %v6390
        %6392 = vdwg.mxu0
        %6393 = vmatpush.msra.mxu0 %v5779
        %6394 = vmatpush.msra.mxu0 %v5778
        %6395 = vmatpush.msra.mxu0 %v5777
        %6396 = vmatpush.msra.mxu0 %v5776
        %6397 = vmatpush.msra.mxu0 %v5775
        %6398 = vmatpush.msra.mxu0 %v5774
        %6399 = vmatpush.msra.mxu0 %v5773
        %6400 = vmatpush.msra.mxu0 %v5772
        %6401 = vmatpush.msra.mxu0 %v5771
        %6402 = vmatpush.msra.mxu0 %v5770
        %6403 = vmatpush.msra.mxu0 %v5769
        %6404 = vmatpush.msra.mxu0 %v5768
        %6405 = vmatpush.msra.mxu0 %v5767
        %6406 = vmatpush.msra.mxu0 %v5766
        %6407 = vmatpush.msra.mxu0 %v5765
        %6408 = vmatpush.msra.mxu0 %v5764
        %6409 = vmatmul.f32.gmra.mxu0 %v5556
        %v6410 = vpop.f32.mrf.mxu0
        %v6411 = vadd.f32 %v6298, %v6410
        %6412 = vmatmul.f32.gmra.mxu0 %v5557
        %v6413 = vpop.f32.mrf.mxu0
        %v6414 = vadd.f32 %v6301, %v6413
        %6415 = vmatmul.f32.gmra.mxu0 %v5558
        %v6416 = vpop.f32.mrf.mxu0
        %v6417 = vadd.f32 %v6304, %v6416
        %6418 = vmatmul.f32.gmra.mxu0 %v5559
        %v6419 = vpop.f32.mrf.mxu0
        %v6420 = vadd.f32 %v6307, %v6419
        %6421 = vmatmul.f32.gmra.mxu0 %v5560
        %v6422 = vpop.f32.mrf.mxu0
        %v6423 = vadd.f32 %v6310, %v6422
        %6424 = vmatmul.f32.gmra.mxu0 %v5561
        %v6425 = vpop.f32.mrf.mxu0
        %v6426 = vadd.f32 %v6313, %v6425
        %6427 = vmatmul.f32.gmra.mxu0 %v5562
        %v6428 = vpop.f32.mrf.mxu0
        %v6429 = vadd.f32 %v6316, %v6428
        %6430 = vmatmul.f32.gmra.mxu0 %v5563
        %v6431 = vpop.f32.mrf.mxu0
        %v6432 = vadd.f32 %v6319, %v6431
        %6433 = vmatmul.f32.gmra.mxu0 %v5564
        %v6434 = vpop.f32.mrf.mxu0
        %v6435 = vadd.f32 %v6322, %v6434
        %6436 = vmatmul.f32.gmra.mxu0 %v5565
        %v6437 = vpop.f32.mrf.mxu0
        %v6438 = vadd.f32 %v6325, %v6437
        %6439 = vmatmul.f32.gmra.mxu0 %v5566
        %v6440 = vpop.f32.mrf.mxu0
        %v6441 = vadd.f32 %v6328, %v6440
        %6442 = vmatmul.f32.gmra.mxu0 %v5567
        %v6443 = vpop.f32.mrf.mxu0
        %v6444 = vadd.f32 %v6331, %v6443
        %6445 = vmatmul.f32.gmra.mxu0 %v5568
        %v6446 = vpop.f32.mrf.mxu0
        %v6447 = vadd.f32 %v6334, %v6446
        %6448 = vmatmul.f32.gmra.mxu0 %v5569
        %v6449 = vpop.f32.mrf.mxu0
        %v6450 = vadd.f32 %v6337, %v6449
        %6451 = vmatmul.f32.gmra.mxu0 %v5570
        %v6452 = vpop.f32.mrf.mxu0
        %v6453 = vadd.f32 %v6340, %v6452
        %6454 = vmatmul.f32.gmra.mxu0 %v5571
        %v6455 = vpop.f32.mrf.mxu0
        %v6456 = vadd.f32 %v6343, %v6455
        %6457 = vmatmul.f32.gmra.mxu0 %v5572
        %v6458 = vpop.f32.mrf.mxu0
        %v6459 = vadd.f32 %v6346, %v6458
        %6460 = vmatmul.f32.gmra.mxu0 %v5573
        %v6461 = vpop.f32.mrf.mxu0
        %v6462 = vadd.f32 %v6349, %v6461
        %6463 = vmatmul.f32.gmra.mxu0 %v5574
        %v6464 = vpop.f32.mrf.mxu0
        %v6465 = vadd.f32 %v6352, %v6464
        %6466 = vmatmul.f32.gmra.mxu0 %v5575
        %v6467 = vpop.f32.mrf.mxu0
        %v6468 = vadd.f32 %v6355, %v6467
        %6469 = vmatmul.f32.gmra.mxu0 %v5576
        %v6470 = vpop.f32.mrf.mxu0
        %v6471 = vadd.f32 %v6358, %v6470
        %6472 = vmatmul.f32.gmra.mxu0 %v5577
        %v6473 = vpop.f32.mrf.mxu0
        %v6474 = vadd.f32 %v6361, %v6473
        %6475 = vmatmul.f32.gmra.mxu0 %v5578
        %v6476 = vpop.f32.mrf.mxu0
        %v6477 = vadd.f32 %v6364, %v6476
        %6478 = vmatmul.f32.gmra.mxu0 %v5579
        %v6479 = vpop.f32.mrf.mxu0
        %v6480 = vadd.f32 %v6367, %v6479
        %6481 = vmatmul.f32.gmra.mxu0 %v5580
        %v6482 = vpop.f32.mrf.mxu0
        %v6483 = vadd.f32 %v6370, %v6482
        %6484 = vmatmul.f32.gmra.mxu0 %v5581
        %v6485 = vpop.f32.mrf.mxu0
        %v6486 = vadd.f32 %v6373, %v6485
        %6487 = vmatmul.f32.gmra.mxu0 %v5582
        %v6488 = vpop.f32.mrf.mxu0
        %v6489 = vadd.f32 %v6376, %v6488
        %6490 = vmatmul.f32.gmra.mxu0 %v5583
        %v6491 = vpop.f32.mrf.mxu0
        %v6492 = vadd.f32 %v6379, %v6491
        %6493 = vmatmul.f32.gmra.mxu0 %v5584
        %v6494 = vpop.f32.mrf.mxu0
        %v6495 = vadd.f32 %v6382, %v6494
        %6496 = vmatmul.f32.gmra.mxu0 %v5585
        %v6497 = vpop.f32.mrf.mxu0
        %v6498 = vadd.f32 %v6385, %v6497
        %6499 = vmatmul.f32.gmra.mxu0 %v5586
        %v6500 = vpop.f32.mrf.mxu0
        %v6501 = vadd.f32 %v6388, %v6500
        %6502 = vmatmul.f32.gmra.mxu0 %v5587
        %v6503 = vpop.f32.mrf.mxu0
        %v6504 = vadd.f32 %v6391, %v6503
        %6505 = vdwg.mxu0
        %6506 = vmatpush.msra.mxu0 %v5795
        %6507 = vmatpush.msra.mxu0 %v5794
        %6508 = vmatpush.msra.mxu0 %v5793
        %6509 = vmatpush.msra.mxu0 %v5792
        %6510 = vmatpush.msra.mxu0 %v5791
        %6511 = vmatpush.msra.mxu0 %v5790
        %6512 = vmatpush.msra.mxu0 %v5789
        %6513 = vmatpush.msra.mxu0 %v5788
        %6514 = vmatpush.msra.mxu0 %v5787
        %6515 = vmatpush.msra.mxu0 %v5786
        %6516 = vmatpush.msra.mxu0 %v5785
        %6517 = vmatpush.msra.mxu0 %v5784
        %6518 = vmatpush.msra.mxu0 %v5783
        %6519 = vmatpush.msra.mxu0 %v5782
        %6520 = vmatpush.msra.mxu0 %v5781
        %6521 = vmatpush.msra.mxu0 %v5780
        %6522 = vmatmul.f32.gmra.mxu0 %v5588
        %v6523 = vpop.f32.mrf.mxu0
        %v6524 = vadd.f32 %v6411, %v6523
        %6525 = vmatmul.f32.gmra.mxu0 %v5589
        %v6526 = vpop.f32.mrf.mxu0
        %v6527 = vadd.f32 %v6414, %v6526
        %6528 = vmatmul.f32.gmra.mxu0 %v5590
        %v6529 = vpop.f32.mrf.mxu0
        %v6530 = vadd.f32 %v6417, %v6529
        %6531 = vmatmul.f32.gmra.mxu0 %v5591
        %v6532 = vpop.f32.mrf.mxu0
        %v6533 = vadd.f32 %v6420, %v6532
        %6534 = vmatmul.f32.gmra.mxu0 %v5592
        %v6535 = vpop.f32.mrf.mxu0
        %v6536 = vadd.f32 %v6423, %v6535
        %6537 = vmatmul.f32.gmra.mxu0 %v5593
        %v6538 = vpop.f32.mrf.mxu0
        %v6539 = vadd.f32 %v6426, %v6538
        %6540 = vmatmul.f32.gmra.mxu0 %v5594
        %v6541 = vpop.f32.mrf.mxu0
        %v6542 = vadd.f32 %v6429, %v6541
        %6543 = vmatmul.f32.gmra.mxu0 %v5595
        %v6544 = vpop.f32.mrf.mxu0
        %v6545 = vadd.f32 %v6432, %v6544
        %6546 = vmatmul.f32.gmra.mxu0 %v5596
        %v6547 = vpop.f32.mrf.mxu0
        %v6548 = vadd.f32 %v6435, %v6547
        %6549 = vmatmul.f32.gmra.mxu0 %v5597
        %v6550 = vpop.f32.mrf.mxu0
        %v6551 = vadd.f32 %v6438, %v6550
        %6552 = vmatmul.f32.gmra.mxu0 %v5598
        %v6553 = vpop.f32.mrf.mxu0
        %v6554 = vadd.f32 %v6441, %v6553
        %6555 = vmatmul.f32.gmra.mxu0 %v5599
        %v6556 = vpop.f32.mrf.mxu0
        %v6557 = vadd.f32 %v6444, %v6556
        %6558 = vmatmul.f32.gmra.mxu0 %v5600
        %v6559 = vpop.f32.mrf.mxu0
        %v6560 = vadd.f32 %v6447, %v6559
        %6561 = vmatmul.f32.gmra.mxu0 %v5601
        %v6562 = vpop.f32.mrf.mxu0
        %v6563 = vadd.f32 %v6450, %v6562
        %6564 = vmatmul.f32.gmra.mxu0 %v5602
        %v6565 = vpop.f32.mrf.mxu0
        %v6566 = vadd.f32 %v6453, %v6565
        %6567 = vmatmul.f32.gmra.mxu0 %v5603
        %v6568 = vpop.f32.mrf.mxu0
        %v6569 = vadd.f32 %v6456, %v6568
        %6570 = vmatmul.f32.gmra.mxu0 %v5604
        %v6571 = vpop.f32.mrf.mxu0
        %v6572 = vadd.f32 %v6459, %v6571
        %6573 = vmatmul.f32.gmra.mxu0 %v5605
        %v6574 = vpop.f32.mrf.mxu0
        %v6575 = vadd.f32 %v6462, %v6574
        %6576 = vmatmul.f32.gmra.mxu0 %v5606
        %v6577 = vpop.f32.mrf.mxu0
        %v6578 = vadd.f32 %v6465, %v6577
        %6579 = vmatmul.f32.gmra.mxu0 %v5607
        %v6580 = vpop.f32.mrf.mxu0
        %v6581 = vadd.f32 %v6468, %v6580
        %6582 = vmatmul.f32.gmra.mxu0 %v5608
        %v6583 = vpop.f32.mrf.mxu0
        %v6584 = vadd.f32 %v6471, %v6583
        %6585 = vmatmul.f32.gmra.mxu0 %v5609
        %v6586 = vpop.f32.mrf.mxu0
        %v6587 = vadd.f32 %v6474, %v6586
        %6588 = vmatmul.f32.gmra.mxu0 %v5610
        %v6589 = vpop.f32.mrf.mxu0
        %v6590 = vadd.f32 %v6477, %v6589
        %6591 = vmatmul.f32.gmra.mxu0 %v5611
        %v6592 = vpop.f32.mrf.mxu0
        %v6593 = vadd.f32 %v6480, %v6592
        %6594 = vmatmul.f32.gmra.mxu0 %v5612
        %v6595 = vpop.f32.mrf.mxu0
        %v6596 = vadd.f32 %v6483, %v6595
        %6597 = vmatmul.f32.gmra.mxu0 %v5613
        %v6598 = vpop.f32.mrf.mxu0
        %v6599 = vadd.f32 %v6486, %v6598
        %6600 = vmatmul.f32.gmra.mxu0 %v5614
        %v6601 = vpop.f32.mrf.mxu0
        %v6602 = vadd.f32 %v6489, %v6601
        %6603 = vmatmul.f32.gmra.mxu0 %v5615
        %v6604 = vpop.f32.mrf.mxu0
        %v6605 = vadd.f32 %v6492, %v6604
        %6606 = vmatmul.f32.gmra.mxu0 %v5616
        %v6607 = vpop.f32.mrf.mxu0
        %v6608 = vadd.f32 %v6495, %v6607
        %6609 = vmatmul.f32.gmra.mxu0 %v5617
        %v6610 = vpop.f32.mrf.mxu0
        %v6611 = vadd.f32 %v6498, %v6610
        %6612 = vmatmul.f32.gmra.mxu0 %v5618
        %v6613 = vpop.f32.mrf.mxu0
        %v6614 = vadd.f32 %v6501, %v6613
        %6615 = vmatmul.f32.gmra.mxu0 %v5619
        %v6616 = vpop.f32.mrf.mxu0
        %v6617 = vadd.f32 %v6504, %v6616
        %6618 = vdwg.mxu0
        %6619 = vmatpush.msra.mxu0 %v5811
        %6620 = vmatpush.msra.mxu0 %v5810
        %6621 = vmatpush.msra.mxu0 %v5809
        %6622 = vmatpush.msra.mxu0 %v5808
        %6623 = vmatpush.msra.mxu0 %v5807
        %6624 = vmatpush.msra.mxu0 %v5806
        %6625 = vmatpush.msra.mxu0 %v5805
        %6626 = vmatpush.msra.mxu0 %v5804
        %6627 = vmatpush.msra.mxu0 %v5803
        %6628 = vmatpush.msra.mxu0 %v5802
        %6629 = vmatpush.msra.mxu0 %v5801
        %6630 = vmatpush.msra.mxu0 %v5800
        %6631 = vmatpush.msra.mxu0 %v5799
        %6632 = vmatpush.msra.mxu0 %v5798
        %6633 = vmatpush.msra.mxu0 %v5797
        %6634 = vmatpush.msra.mxu0 %v5796
        %6635 = vmatmul.f32.gmra.mxu0 %v5620
        %v6636 = vpop.f32.mrf.mxu0
        %v6637 = vadd.f32 %v6524, %v6636
        %6638 = vmatmul.f32.gmra.mxu0 %v5621
        %v6639 = vpop.f32.mrf.mxu0
        %v6640 = vadd.f32 %v6527, %v6639
        %6641 = vmatmul.f32.gmra.mxu0 %v5622
        %v6642 = vpop.f32.mrf.mxu0
        %v6643 = vadd.f32 %v6530, %v6642
        %6644 = vmatmul.f32.gmra.mxu0 %v5623
        %v6645 = vpop.f32.mrf.mxu0
        %v6646 = vadd.f32 %v6533, %v6645
        %6647 = vmatmul.f32.gmra.mxu0 %v5624
        %v6648 = vpop.f32.mrf.mxu0
        %v6649 = vadd.f32 %v6536, %v6648
        %6650 = vmatmul.f32.gmra.mxu0 %v5625
        %v6651 = vpop.f32.mrf.mxu0
        %v6652 = vadd.f32 %v6539, %v6651
        %6653 = vmatmul.f32.gmra.mxu0 %v5626
        %v6654 = vpop.f32.mrf.mxu0
        %v6655 = vadd.f32 %v6542, %v6654
        %6656 = vmatmul.f32.gmra.mxu0 %v5627
        %v6657 = vpop.f32.mrf.mxu0
        %v6658 = vadd.f32 %v6545, %v6657
        %6659 = vmatmul.f32.gmra.mxu0 %v5628
        %v6660 = vpop.f32.mrf.mxu0
        %v6661 = vadd.f32 %v6548, %v6660
        %6662 = vmatmul.f32.gmra.mxu0 %v5629
        %v6663 = vpop.f32.mrf.mxu0
        %v6664 = vadd.f32 %v6551, %v6663
        %6665 = vmatmul.f32.gmra.mxu0 %v5630
        %v6666 = vpop.f32.mrf.mxu0
        %v6667 = vadd.f32 %v6554, %v6666
        %6668 = vmatmul.f32.gmra.mxu0 %v5631
        %v6669 = vpop.f32.mrf.mxu0
        %v6670 = vadd.f32 %v6557, %v6669
        %6671 = vmatmul.f32.gmra.mxu0 %v5632
        %v6672 = vpop.f32.mrf.mxu0
        %v6673 = vadd.f32 %v6560, %v6672
        %6674 = vmatmul.f32.gmra.mxu0 %v5633
        %v6675 = vpop.f32.mrf.mxu0
        %v6676 = vadd.f32 %v6563, %v6675
        %6677 = vmatmul.f32.gmra.mxu0 %v5634
        %v6678 = vpop.f32.mrf.mxu0
        %v6679 = vadd.f32 %v6566, %v6678
        %6680 = vmatmul.f32.gmra.mxu0 %v5635
        %v6681 = vpop.f32.mrf.mxu0
        %v6682 = vadd.f32 %v6569, %v6681
        %6683 = vmatmul.f32.gmra.mxu0 %v5636
        %v6684 = vpop.f32.mrf.mxu0
        %v6685 = vadd.f32 %v6572, %v6684
        %6686 = vmatmul.f32.gmra.mxu0 %v5637
        %v6687 = vpop.f32.mrf.mxu0
        %v6688 = vadd.f32 %v6575, %v6687
        %6689 = vmatmul.f32.gmra.mxu0 %v5638
        %v6690 = vpop.f32.mrf.mxu0
        %v6691 = vadd.f32 %v6578, %v6690
        %6692 = vmatmul.f32.gmra.mxu0 %v5639
        %v6693 = vpop.f32.mrf.mxu0
        %v6694 = vadd.f32 %v6581, %v6693
        %6695 = vmatmul.f32.gmra.mxu0 %v5640
        %v6696 = vpop.f32.mrf.mxu0
        %v6697 = vadd.f32 %v6584, %v6696
        %6698 = vmatmul.f32.gmra.mxu0 %v5641
        %v6699 = vpop.f32.mrf.mxu0
        %v6700 = vadd.f32 %v6587, %v6699
        %6701 = vmatmul.f32.gmra.mxu0 %v5642
        %v6702 = vpop.f32.mrf.mxu0
        %v6703 = vadd.f32 %v6590, %v6702
        %6704 = vmatmul.f32.gmra.mxu0 %v5643
        %v6705 = vpop.f32.mrf.mxu0
        %v6706 = vadd.f32 %v6593, %v6705
        %6707 = vmatmul.f32.gmra.mxu0 %v5644
        %v6708 = vpop.f32.mrf.mxu0
        %v6709 = vadd.f32 %v6596, %v6708
        %6710 = vmatmul.f32.gmra.mxu0 %v5645
        %v6711 = vpop.f32.mrf.mxu0
        %v6712 = vadd.f32 %v6599, %v6711
        %6713 = vmatmul.f32.gmra.mxu0 %v5646
        %v6714 = vpop.f32.mrf.mxu0
        %v6715 = vadd.f32 %v6602, %v6714
        %6716 = vmatmul.f32.gmra.mxu0 %v5647
        %v6717 = vpop.f32.mrf.mxu0
        %v6718 = vadd.f32 %v6605, %v6717
        %6719 = vmatmul.f32.gmra.mxu0 %v5648
        %v6720 = vpop.f32.mrf.mxu0
        %v6721 = vadd.f32 %v6608, %v6720
        %6722 = vmatmul.f32.gmra.mxu0 %v5649
        %v6723 = vpop.f32.mrf.mxu0
        %v6724 = vadd.f32 %v6611, %v6723
        %6725 = vmatmul.f32.gmra.mxu0 %v5650
        %v6726 = vpop.f32.mrf.mxu0
        %v6727 = vadd.f32 %v6614, %v6726
        %6728 = vmatmul.f32.gmra.mxu0 %v5651
        %v6729 = vpop.f32.mrf.mxu0
        %v6730 = vadd.f32 %v6617, %v6729
        %6731 = vdwg.mxu0
        %6732 = vmatpush.msra.mxu0 %v5827
        %6733 = vmatpush.msra.mxu0 %v5826
        %6734 = vmatpush.msra.mxu0 %v5825
        %6735 = vmatpush.msra.mxu0 %v5824
        %6736 = vmatpush.msra.mxu0 %v5823
        %6737 = vmatpush.msra.mxu0 %v5822
        %6738 = vmatpush.msra.mxu0 %v5821
        %6739 = vmatpush.msra.mxu0 %v5820
        %6740 = vmatpush.msra.mxu0 %v5819
        %6741 = vmatpush.msra.mxu0 %v5818
        %6742 = vmatpush.msra.mxu0 %v5817
        %6743 = vmatpush.msra.mxu0 %v5816
        %6744 = vmatpush.msra.mxu0 %v5815
        %6745 = vmatpush.msra.mxu0 %v5814
        %6746 = vmatpush.msra.mxu0 %v5813
        %6747 = vmatpush.msra.mxu0 %v5812
        %6748 = vmatmul.f32.gmra.mxu0 %v5652
        %v6749 = vpop.f32.mrf.mxu0
        %v6750 = vadd.f32 %v6637, %v6749
        %6751 = vmatmul.f32.gmra.mxu0 %v5653
        %v6752 = vpop.f32.mrf.mxu0
        %v6753 = vadd.f32 %v6640, %v6752
        %6754 = vmatmul.f32.gmra.mxu0 %v5654
        %v6755 = vpop.f32.mrf.mxu0
        %v6756 = vadd.f32 %v6643, %v6755
        %6757 = vmatmul.f32.gmra.mxu0 %v5655
        %v6758 = vpop.f32.mrf.mxu0
        %v6759 = vadd.f32 %v6646, %v6758
        %6760 = vmatmul.f32.gmra.mxu0 %v5656
        %v6761 = vpop.f32.mrf.mxu0
        %v6762 = vadd.f32 %v6649, %v6761
        %6763 = vmatmul.f32.gmra.mxu0 %v5657
        %v6764 = vpop.f32.mrf.mxu0
        %v6765 = vadd.f32 %v6652, %v6764
        %6766 = vmatmul.f32.gmra.mxu0 %v5658
        %v6767 = vpop.f32.mrf.mxu0
        %v6768 = vadd.f32 %v6655, %v6767
        %6769 = vmatmul.f32.gmra.mxu0 %v5659
        %v6770 = vpop.f32.mrf.mxu0
        %v6771 = vadd.f32 %v6658, %v6770
        %6772 = vmatmul.f32.gmra.mxu0 %v5660
        %v6773 = vpop.f32.mrf.mxu0
        %v6774 = vadd.f32 %v6661, %v6773
        %6775 = vmatmul.f32.gmra.mxu0 %v5661
        %v6776 = vpop.f32.mrf.mxu0
        %v6777 = vadd.f32 %v6664, %v6776
        %6778 = vmatmul.f32.gmra.mxu0 %v5662
        %v6779 = vpop.f32.mrf.mxu0
        %v6780 = vadd.f32 %v6667, %v6779
        %6781 = vmatmul.f32.gmra.mxu0 %v5663
        %v6782 = vpop.f32.mrf.mxu0
        %v6783 = vadd.f32 %v6670, %v6782
        %6784 = vmatmul.f32.gmra.mxu0 %v5664
        %v6785 = vpop.f32.mrf.mxu0
        %v6786 = vadd.f32 %v6673, %v6785
        %6787 = vmatmul.f32.gmra.mxu0 %v5665
        %v6788 = vpop.f32.mrf.mxu0
        %v6789 = vadd.f32 %v6676, %v6788
        %6790 = vmatmul.f32.gmra.mxu0 %v5666
        %v6791 = vpop.f32.mrf.mxu0
        %v6792 = vadd.f32 %v6679, %v6791
        %6793 = vmatmul.f32.gmra.mxu0 %v5667
        %v6794 = vpop.f32.mrf.mxu0
        %v6795 = vadd.f32 %v6682, %v6794
        %6796 = vmatmul.f32.gmra.mxu0 %v5668
        %v6797 = vpop.f32.mrf.mxu0
        %v6798 = vadd.f32 %v6685, %v6797
        %6799 = vmatmul.f32.gmra.mxu0 %v5669
        %v6800 = vpop.f32.mrf.mxu0
        %v6801 = vadd.f32 %v6688, %v6800
        %6802 = vmatmul.f32.gmra.mxu0 %v5670
        %v6803 = vpop.f32.mrf.mxu0
        %v6804 = vadd.f32 %v6691, %v6803
        %6805 = vmatmul.f32.gmra.mxu0 %v5671
        %v6806 = vpop.f32.mrf.mxu0
        %v6807 = vadd.f32 %v6694, %v6806
        %6808 = vmatmul.f32.gmra.mxu0 %v5672
        %v6809 = vpop.f32.mrf.mxu0
        %v6810 = vadd.f32 %v6697, %v6809
        %6811 = vmatmul.f32.gmra.mxu0 %v5673
        %v6812 = vpop.f32.mrf.mxu0
        %v6813 = vadd.f32 %v6700, %v6812
        %6814 = vmatmul.f32.gmra.mxu0 %v5674
        %v6815 = vpop.f32.mrf.mxu0
        %v6816 = vadd.f32 %v6703, %v6815
        %6817 = vmatmul.f32.gmra.mxu0 %v5675
        %v6818 = vpop.f32.mrf.mxu0
        %v6819 = vadd.f32 %v6706, %v6818
        %6820 = vmatmul.f32.gmra.mxu0 %v5676
        %v6821 = vpop.f32.mrf.mxu0
        %v6822 = vadd.f32 %v6709, %v6821
        %6823 = vmatmul.f32.gmra.mxu0 %v5677
        %v6824 = vpop.f32.mrf.mxu0
        %v6825 = vadd.f32 %v6712, %v6824
        %6826 = vmatmul.f32.gmra.mxu0 %v5678
        %v6827 = vpop.f32.mrf.mxu0
        %v6828 = vadd.f32 %v6715, %v6827
        %6829 = vmatmul.f32.gmra.mxu0 %v5679
        %v6830 = vpop.f32.mrf.mxu0
        %v6831 = vadd.f32 %v6718, %v6830
        %6832 = vmatmul.f32.gmra.mxu0 %v5680
        %v6833 = vpop.f32.mrf.mxu0
        %v6834 = vadd.f32 %v6721, %v6833
        %6835 = vmatmul.f32.gmra.mxu0 %v5681
        %v6836 = vpop.f32.mrf.mxu0
        %v6837 = vadd.f32 %v6724, %v6836
        %6838 = vmatmul.f32.gmra.mxu0 %v5682
        %v6839 = vpop.f32.mrf.mxu0
        %v6840 = vadd.f32 %v6727, %v6839
        %6841 = vmatmul.f32.gmra.mxu0 %v5683
        %v6842 = vpop.f32.mrf.mxu0
        %v6843 = vadd.f32 %v6730, %v6842
        %6844 = vdwg.mxu0
        %v6845 = vperm.slane %v249, 4
        %v6846 = vmul.f32 %v6750, %v6845
        %v6847 = vmul.f32 %v6753, %v6845
        %v6848 = vmul.f32 %v6756, %v6845
        %v6849 = vmul.f32 %v6759, %v6845
        %v6850 = vmul.f32 %v6762, %v6845
        %v6851 = vmul.f32 %v6765, %v6845
        %v6852 = vmul.f32 %v6768, %v6845
        %v6853 = vmul.f32 %v6771, %v6845
        %v6854 = vmul.f32 %v6774, %v6845
        %v6855 = vmul.f32 %v6777, %v6845
        %v6856 = vmul.f32 %v6780, %v6845
        %v6857 = vmul.f32 %v6783, %v6845
        %v6858 = vmul.f32 %v6786, %v6845
        %v6859 = vmul.f32 %v6789, %v6845
        %v6860 = vmul.f32 %v6792, %v6845
        %v6861 = vmul.f32 %v6795, %v6845
        %v6862 = vmul.f32 %v6798, %v6845
        %v6863 = vmul.f32 %v6801, %v6845
        %v6864 = vmul.f32 %v6804, %v6845
        %v6865 = vmul.f32 %v6807, %v6845
        %v6866 = vmul.f32 %v6810, %v6845
        %v6867 = vmul.f32 %v6813, %v6845
        %v6868 = vmul.f32 %v6816, %v6845
        %v6869 = vmul.f32 %v6819, %v6845
        %v6870 = vmul.f32 %v6822, %v6845
        %v6871 = vmul.f32 %v6825, %v6845
        %v6872 = vmul.f32 %v6828, %v6845
        %v6873 = vmul.f32 %v6831, %v6845
        %v6874 = vmul.f32 %v6834, %v6845
        %v6875 = vmul.f32 %v6837, %v6845
        %v6876 = vmul.f32 %v6840, %v6845
        %v6877 = vmul.f32 %v6843, %v6845
        %v6878 = vperm.slane %v249, 5
        %v6879 = vadd.f32 %v6846, %v6878
        %v6880 = vadd.f32 %v6847, %v6878
        %v6881 = vadd.f32 %v6848, %v6878
        %v6882 = vadd.f32 %v6849, %v6878
        %v6883 = vadd.f32 %v6850, %v6878
        %v6884 = vadd.f32 %v6851, %v6878
        %v6885 = vadd.f32 %v6852, %v6878
        %v6886 = vadd.f32 %v6853, %v6878
        %v6887 = vadd.f32 %v6854, %v6878
        %v6888 = vadd.f32 %v6855, %v6878
        %v6889 = vadd.f32 %v6856, %v6878
        %v6890 = vadd.f32 %v6857, %v6878
        %v6891 = vadd.f32 %v6858, %v6878
        %v6892 = vadd.f32 %v6859, %v6878
        %v6893 = vadd.f32 %v6860, %v6878
        %v6894 = vadd.f32 %v6861, %v6878
        %v6895 = vadd.f32 %v6862, %v6878
        %v6896 = vadd.f32 %v6863, %v6878
        %v6897 = vadd.f32 %v6864, %v6878
        %v6898 = vadd.f32 %v6865, %v6878
        %v6899 = vadd.f32 %v6866, %v6878
        %v6900 = vadd.f32 %v6867, %v6878
        %v6901 = vadd.f32 %v6868, %v6878
        %v6902 = vadd.f32 %v6869, %v6878
        %v6903 = vadd.f32 %v6870, %v6878
        %v6904 = vadd.f32 %v6871, %v6878
        %v6905 = vadd.f32 %v6872, %v6878
        %v6906 = vadd.f32 %v6873, %v6878
        %v6907 = vadd.f32 %v6874, %v6878
        %v6908 = vadd.f32 %v6875, %v6878
        %v6909 = vadd.f32 %v6876, %v6878
        %v6910 = vadd.f32 %v6877, %v6878
        %v6911 = vadd.f32 %v6879, %v5268
        %v6912 = vadd.f32 %v6880, %v5269
        %v6913 = vadd.f32 %v6881, %v5270
        %v6914 = vadd.f32 %v6882, %v5271
        %v6915 = vadd.f32 %v6883, %v5272
        %v6916 = vadd.f32 %v6884, %v5273
        %v6917 = vadd.f32 %v6885, %v5274
        %v6918 = vadd.f32 %v6886, %v5275
        %v6919 = vadd.f32 %v6887, %v5276
        %v6920 = vadd.f32 %v6888, %v5277
        %v6921 = vadd.f32 %v6889, %v5278
        %v6922 = vadd.f32 %v6890, %v5279
        %v6923 = vadd.f32 %v6891, %v5280
        %v6924 = vadd.f32 %v6892, %v5281
        %v6925 = vadd.f32 %v6893, %v5282
        %v6926 = vadd.f32 %v6894, %v5283
        %v6927 = vadd.f32 %v6895, %v5284
        %v6928 = vadd.f32 %v6896, %v5285
        %v6929 = vadd.f32 %v6897, %v5286
        %v6930 = vadd.f32 %v6898, %v5287
        %v6931 = vadd.f32 %v6899, %v5288
        %v6932 = vadd.f32 %v6900, %v5289
        %v6933 = vadd.f32 %v6901, %v5290
        %v6934 = vadd.f32 %v6902, %v5291
        %v6935 = vadd.f32 %v6903, %v5292
        %v6936 = vadd.f32 %v6904, %v5293
        %v6937 = vadd.f32 %v6905, %v5294
        %v6938 = vadd.f32 %v6906, %v5295
        %v6939 = vadd.f32 %v6907, %v5296
        %v6940 = vadd.f32 %v6908, %v5297
        %v6941 = vadd.f32 %v6909, %v5298
        %v6942 = vadd.f32 %v6910, %v5299
        %v6943 = vmax.f32 %v6911, 0.0
        %v6944 = vmax.f32 %v6912, 0.0
        %v6945 = vmax.f32 %v6913, 0.0
        %v6946 = vmax.f32 %v6914, 0.0
        %v6947 = vmax.f32 %v6915, 0.0
        %v6948 = vmax.f32 %v6916, 0.0
        %v6949 = vmax.f32 %v6917, 0.0
        %v6950 = vmax.f32 %v6918, 0.0
        %v6951 = vmax.f32 %v6919, 0.0
        %v6952 = vmax.f32 %v6920, 0.0
        %v6953 = vmax.f32 %v6921, 0.0
        %v6954 = vmax.f32 %v6922, 0.0
        %v6955 = vmax.f32 %v6923, 0.0
        %v6956 = vmax.f32 %v6924, 0.0
        %v6957 = vmax.f32 %v6925, 0.0
        %v6958 = vmax.f32 %v6926, 0.0
        %v6959 = vmax.f32 %v6927, 0.0
        %v6960 = vmax.f32 %v6928, 0.0
        %v6961 = vmax.f32 %v6929, 0.0
        %v6962 = vmax.f32 %v6930, 0.0
        %v6963 = vmax.f32 %v6931, 0.0
        %v6964 = vmax.f32 %v6932, 0.0
        %v6965 = vmax.f32 %v6933, 0.0
        %v6966 = vmax.f32 %v6934, 0.0
        %v6967 = vmax.f32 %v6935, 0.0
        %v6968 = vmax.f32 %v6936, 0.0
        %v6969 = vmax.f32 %v6937, 0.0
        %v6970 = vmax.f32 %v6938, 0.0
        %v6971 = vmax.f32 %v6939, 0.0
        %v6972 = vmax.f32 %v6940, 0.0
        %v6973 = vmax.f32 %v6941, 0.0
        %v6974 = vmax.f32 %v6942, 0.0
        %v6975 = vadd.f32 %v6943, %v6944
        %v6976 = vadd.f32 %v6975, %v6945
        %v6977 = vadd.f32 %v6976, %v6946
        %v6978 = vadd.f32 %v6977, %v6947
        %v6979 = vadd.f32 %v6978, %v6948
        %v6980 = vadd.f32 %v6979, %v6949
        %v6981 = vadd.f32 %v6980, %v6950
        %v6982 = vadd.f32 %v6981, %v6951
        %v6983 = vadd.f32 %v6982, %v6952
        %v6984 = vadd.f32 %v6983, %v6953
        %v6985 = vadd.f32 %v6984, %v6954
        %v6986 = vadd.f32 %v6985, %v6955
        %v6987 = vadd.f32 %v6986, %v6956
        %v6988 = vadd.f32 %v6987, %v6957
        %v6989 = vadd.f32 %v6988, %v6958
        %v6990 = vadd.f32 %v6989, %v6959
        %v6991 = vadd.f32 %v6990, %v6960
        %v6992 = vadd.f32 %v6991, %v6961
        %v6993 = vadd.f32 %v6992, %v6962
        %v6994 = vadd.f32 %v6993, %v6963
        %v6995 = vadd.f32 %v6994, %v6964
        %v6996 = vadd.f32 %v6995, %v6965
        %v6997 = vadd.f32 %v6996, %v6966
        %v6998 = vadd.f32 %v6997, %v6967
        %v6999 = vadd.f32 %v6998, %v6968
        %v7000 = vadd.f32 %v6999, %v6969
        %v7001 = vadd.f32 %v7000, %v6970
        %v7002 = vadd.f32 %v7001, %v6971
        %v7003 = vadd.f32 %v7002, %v6972
        %v7004 = vadd.f32 %v7003, %v6973
        %v7005 = vadd.f32 %v7004, %v6974
        %v7006 = vrot.slane %v7005, 4
        %v7007 = vadd.f32 %v7005, %v7006
        %v7008 = vrot.slane %v7007, 2
        %v7009 = vadd.f32 %v7007, %v7008
        %v7010 = vrot.slane %v7009, 1
        %v7011 = vadd.f32 %v7009, %v7010
        %v7012 = vmul.f32 %v7011, 0.00390625
        %7013 = vst [vmem:[%s243] sm:$0x1] %v7012
        %s7014 = sand.u32 %s159, 1
        %s7015 = scalar_lea.sflag [#allocation5], %s7014
        %s7016 = sand.u32 %s159, 1
        %s7017 = scalar_lea.vmem [#allocation4], %s7016
        // Predicated region
        $region45: #{pretrained_models_feature.1} parent=43 // pred_check
          %p7018 = pneg %p169
        $region46: #{pretrained_models_feature.1} parent=43 // pred_check_branch
          %7020 = sbr.rel (%p7018) target = $region48
        $region47: #{pretrained_models_feature.1} parent=43 // pred_region
          %7022 = vsyncadd %s7015, 0
          %s7023 = scalar_lea.hbm %s6, %s20
          %s7025 = sshll.u32 %s7017, 4
          %s7026 = int_to_ptr.vmem [resolvable:$true] %s7025
          %s7027 = sshll.u32 %s7023, 4
          %s7028 = int_to_ptr.hbm [resolvable:$true] %s7027
          %7030 = dma.vmem_to_hbm [thread:$0]  %s7026, 16, %s7028, %s7015
        $region48: #{pretrained_models_feature.1} parent=43 // pred_fallthru
          _
      $region44: #{pretrained_models_feature.1} parent=5 // pred_fallthru
        _
      %p7031 = scmp.le.s32.totalorder 2, %s15
      // Predicated region
      $region49: #{pretrained_models_feature.1} parent=5 // pred_check
        %p7032 = pneg %p7031
      $region50: #{pretrained_models_feature.1} parent=5 // pred_check_branch
        %7034 = sbr.rel (%p7032) target = $region52
      $region51: #{pretrained_models_feature.1} parent=5 // pred_region
        %s7035 = ssub.s32 %s15, 2
        // Predicated region
        $region53: #{pretrained_models_feature.1} parent=51 // pred_check
          %p7036 = pneg %p175
        $region54: #{pretrained_models_feature.1} parent=51 // pred_check_branch
          %7038 = sbr.rel (%p7036) target = $region56
        $region55: #{pretrained_models_feature.1} parent=51 // pred_region
          %s7039 = sand.u32 %s160, 1
          %s7040 = scalar_lea.sflag [#allocation5], %s7039
          %s7041 = sand.u32 %s160, 1
          %s7042 = scalar_lea.vmem [#allocation4], %s7041
          %7044 = dma.done %s7040, 16
        $region56: #{pretrained_models_feature.1} parent=51 // pred_fallthru
          _
      $region52: #{pretrained_models_feature.1} parent=5 // pred_fallthru
        _
    $region6: #{pretrained_models_feature.1} parent=1 // loop_footer
      %s19 = sadd.s32 1, %s15
    $region7: #{pretrained_models_feature.1} parent=1 // loop_footer_branch
      %14 = sbr.rel target = $region3
    $region8: #{pretrained_models_feature.1} parent=1 // loop_exit
      _
    %7045 = vsyncpa [#allocation5], 1
    %s7046 = scalar_lea.sflag [#allocation5], 1
    %7047 = vsyncpa %s7046, 1

</llo_original>
